<compile_context>
chip_gen: v7x
topology: tpu7x:2x2x1
jax: 0.10.0
libtpu: 0.0.40
codegen_flags: <defaults>
</compile_context>

<pallas_src>
import functools

import numpy as np
import jax
import jax.numpy as jnp
from jax.experimental import pallas as pl
from jax.experimental.pallas import tpu as pltpu

NUM_CLASS = 21
HID = 50          # LSTM hidden size
LSTM_IN = 18      # 3*2*3, output width of BioCNN.hidden1


# --------------------------------------------------------------------------
# Constant index table (trace-time numpy): conv1 patch pixels for every
# (conv2 tap k=(di,dj), conv2 output position s=(oi,oj)).  6x6 input images.
# --------------------------------------------------------------------------
def _conv1_patch_index(W=6):
    idx = np.empty((3, 3, 2, 2, 9), np.int32)
    for di in range(3):
        for dj in range(3):
            for oi in range(2):
                for oj in range(2):
                    for u in range(3):
                        for v in range(3):
                            idx[di, dj, oi, oj, u * 3 + v] = \
                                (oi + di + u) * W + (oj + dj + v)
    return idx.reshape(36, 9)          # row = k*4 + s


_CONV1_PATCH_IDX = _conv1_patch_index()


# --------------------------------------------------------------------------
# Fused Pallas kernel
# --------------------------------------------------------------------------
def _fused_kernel(B, S,
                  p1_ref, w1_ref, b1_ref, w2_ref, b2_ref, wh1_ref, bh1_ref,
                  wih0_ref, whh0_ref, b0_ref, w1cat_ref, b1c_ref,
                  wout_ref, bout_ref,
                  h0a_ref, c0a_ref, h0b_ref, c0b_ref,
                  o_ref):
    nimg = S * B           # images, time-major: n = s*B + b
    c2r = 4 * nimg         # conv2 output rows, spatial-major: sp*nimg + n

    dot = functools.partial(jnp.dot, preferred_element_type=jnp.float32)

    # ---- conv1 (1->32, 3x3) + ReLU: one matmul over all patches -----------
    a1 = jnp.maximum(dot(p1_ref[...], w1_ref[...]) + b1_ref[...], 0.0)   # (9*c2r, 32)

    # ---- conv2 (32->64, 3x3) + ReLU: sum of 9 aligned tap matmuls ---------
    acc2 = dot(a1[0:c2r, :], w2_ref[0:32, :])
    for k in range(1, 9):
        acc2 = acc2 + dot(a1[k * c2r:(k + 1) * c2r, :],
                          w2_ref[k * 32:(k + 1) * 32, :])
    a2 = jnp.maximum(acc2 + b2_ref[...], 0.0)                            # (c2r, 64)

    # ---- hidden1 (256->18) + ReLU: NCHW flatten folded into the weight ----
    acc_h = dot(a2[0:nimg, :], wh1_ref[0:64, :])
    for sp in range(1, 4):
        acc_h = acc_h + dot(a2[sp * nimg:(sp + 1) * nimg, :],
                            wh1_ref[sp * 64:(sp + 1) * 64, :])
    c_out = jnp.maximum(acc_h + bh1_ref[...], 0.0)                       # (nimg, 18)

    # ---- LSTM layer-0 input projections hoisted out of the recurrence -----
    # per-gate (i, f, g, o) so every slice / matmul output is lane-aligned
    xproj = [dot(c_out, wih0_ref[g]) + b0_ref[g] for g in range(4)]      # 4 x (nimg, 50)
    whh0 = [whh0_ref[g] for g in range(4)]                               # (50, 50)
    w1c = [w1cat_ref[g] for g in range(4)]                               # (100, 50)
    b1c = [b1c_ref[g] for g in range(4)]                                 # (B, 50) pre-broadcast
    wout = wout_ref[...]
    bout = bout_ref[...]

    h_a = h0a_ref[...]
    c_a = c0a_ref[...]
    h_b = h0b_ref[...]
    c_b = c0b_ref[...]

    # S is small and static -> unroll the recurrence.
    for t in range(S):
        r0 = t * B
        # layer 0: only the recurrent h @ Whh matmuls stay on the critical path
        zi = xproj[0][r0:r0 + B, :] + dot(h_a, whh0[0])
        zf = xproj[1][r0:r0 + B, :] + dot(h_a, whh0[1])
        zg = xproj[2][r0:r0 + B, :] + dot(h_a, whh0[2])
        zo = xproj[3][r0:r0 + B, :] + dot(h_a, whh0[3])
        c_a = jax.nn.sigmoid(zf) * c_a + jax.nn.sigmoid(zi) * jnp.tanh(zg)
        h_a = jax.nn.sigmoid(zo) * jnp.tanh(c_a)

        # layer 1: one concatenated input, one matmul per gate
        cat = jnp.concatenate([h_a, h_b], axis=1)                        # (B, 100)
        zi1 = dot(cat, w1c[0]) + b1c[0]
        zf1 = dot(cat, w1c[1]) + b1c[1]
        zg1 = dot(cat, w1c[2]) + b1c[2]
        zo1 = dot(cat, w1c[3]) + b1c[3]
        c_b = jax.nn.sigmoid(zf1) * c_b + jax.nn.sigmoid(zi1) * jnp.tanh(zg1)
        h_b = jax.nn.sigmoid(zo1) * jnp.tanh(c_b)
        # TODO(synk): LSTM inter-layer dropout (p=0.8) is training-only -> identity.

    # ---- classifier on r_out[:, -1, :] == h_b, then stable log_softmax ----
    logits = dot(h_b, wout) + bout                                       # (B, 21)
    m = jnp.max(logits, axis=1, keepdims=True)
    lse = jnp.log(jnp.sum(jnp.exp(logits - m), axis=1, keepdims=True)) + m
    o_ref[...] = logits - lse


# --------------------------------------------------------------------------
# Wrapper: weight re-layout (trace-time), patch gather, single pallas_call
# --------------------------------------------------------------------------
def biocnn_lstm_forward(x, h0, c0, p):
    """x: (B, T, C, S, H, W); h0/c0: (2, B, HID); returns (B, NUM_CLASS)."""
    B, T, C, S, H, W = x.shape
    assert T == 1, "LSTM input_size=18 (=3*2*3) implies timesteps == 1"
    assert C == 1, "conv1 expects a single input channel"
    assert H == 6 and W == 6, "hidden1 (64*4 -> 18) implies 6x6 input images"

    nimg = S * B

    # images, time-major: n = s*B + b  (makes LSTM timestep slices contiguous)
    imgs = jnp.transpose(x[:, 0, 0], (1, 0, 2, 3)).reshape(nimg, H * W)

    # conv1 patches for every (conv2 tap k, conv2 position s, image n)
    pix = jnp.asarray(_CONV1_PATCH_IDX)                      # (36, 9)
    p1 = imgs[:, pix]                                        # (nimg, 36, 9)
    p1 = jnp.transpose(p1, (1, 0, 2)).reshape(36 * nimg, 9)  # row = (k*4+s)*nimg + n

    # weights, re-laid once so every in-kernel slice is aligned
    w1 = jnp.transpose(p["conv1_w"], (2, 3, 1, 0)).reshape(9, 32)
    b1 = p["conv1_b"].reshape(1, 32)
    w2 = jnp.transpose(p["conv2_w"], (2, 3, 1, 0)).reshape(9 * 32, 64)   # rows = k*32 + c
    b2 = p["conv2_b"].reshape(1, 64)
    wh1 = jnp.transpose(p["hidden1_w"].reshape(LSTM_IN, 64, 4),
                        (2, 1, 0)).reshape(4 * 64, LSTM_IN)              # rows = sp*64 + c
    bh1 = p["hidden1_b"].reshape(1, LSTM_IN)

    # LSTM weights per gate (PyTorch gate order i, f, g, o)
    wih0 = jnp.transpose(p["w_ih_l0"].reshape(4, HID, LSTM_IN), (0, 2, 1))   # (4, 18, 50)
    whh0 = jnp.transpose(p["w_hh_l0"].reshape(4, HID, HID), (0, 2, 1))       # (4, 50, 50)
    b0 = (p["b_ih_l0"] + p["b_hh_l0"]).reshape(4, 1, HID)
    wih1 = jnp.transpose(p["w_ih_l1"].reshape(4, HID, HID), (0, 2, 1))
    whh1 = jnp.transpose(p["w_hh_l1"].reshape(4, HID, HID), (0, 2, 1))
    w1cat = jnp.concatenate([wih1, whh1], axis=1)                            # (4, 100, 50)
    b1c = jnp.broadcast_to((p["b_ih_l1"] + p["b_hh_l1"]).reshape(4, 1, HID),
                           (4, B, HID))
    wout = jnp.transpose(p["linear_w"])                                      # (50, 21)
    bout = p["linear_b"].reshape(1, NUM_CLASS)

    h0a, h0b = h0[0], h0[1]
    c0a, c0b = c0[0], c0[1]

    args = (p1, w1, b1, w2, b2, wh1, bh1, wih0, whh0, b0, w1cat, b1c,
            wout, bout, h0a, c0a, h0b, c0b)

    flops = 2 * (36 * nimg * 9 * 32            # conv1
                 + 9 * (4 * nimg) * 32 * 64    # conv2
                 + 4 * nimg * 64 * LSTM_IN     # hidden1
                 + 4 * nimg * LSTM_IN * HID    # hoisted LSTM input projection
                 + S * (4 * B * HID * HID + 4 * B * 2 * HID * HID)  # recurrence
                 + B * HID * NUM_CLASS)        # classifier
    transcendentals = S * 10 * B * HID + 2 * B * NUM_CLASS
    bytes_accessed = int(sum(int(np.prod(a.shape)) for a in args) * 4
                         + B * NUM_CLASS * 4)

    vmem = pl.BlockSpec(memory_space=pltpu.MemorySpace.VMEM)
    return pl.pallas_call(
        functools.partial(_fused_kernel, B, S),
        out_shape=jax.ShapeDtypeStruct((B, NUM_CLASS), jnp.float32),
        in_specs=[vmem] * len(args),
        out_specs=vmem,
        cost_estimate=pl.CostEstimate(flops=int(flops),
                                      transcendentals=int(transcendentals),
                                      bytes_accessed=bytes_accessed),
    )(*args)


# --------------------------------------------------------------------------
# Pure-JAX reference (mirrors the PyTorch forward) for a correctness check
# --------------------------------------------------------------------------
def _reference_forward(x, h0, c0, p):
    B, T, C, S, H, W = x.shape
    N = B * T * S
    xn = jnp.transpose(x.reshape(N, C, H, W), (0, 2, 3, 1))

    def im2col(a, kh, kw):
        n, h, w, c = a.shape
        oh, ow = h - kh + 1, w - kw + 1
        cols = [a[:, i:i + oh, j:j + ow, :] for i in range(kh) for j in range(kw)]
        return jnp.stack(cols, axis=3).reshape(n * oh * ow, kh * kw * c)

    w1 = jnp.transpose(p["conv1_w"], (2, 3, 1, 0)).reshape(-1, 32)
    a1 = jax.nn.relu(im2col(xn, 3, 3) @ w1 + p["conv1_b"]).reshape(N, H - 2, W - 2, 32)
    w2 = jnp.transpose(p["conv2_w"], (2, 3, 1, 0)).reshape(-1, 64)
    a2 = jax.nn.relu(im2col(a1, 3, 3) @ w2 + p["conv2_b"]).reshape(N, H - 4, W - 4, 64)
    flat = jnp.transpose(a2, (0, 3, 1, 2)).reshape(N, -1)
    c_out = jax.nn.relu(flat @ p["hidden1_w"].T + p["hidden1_b"])
    r_in = c_out.reshape(B, S, -1)

    def lstm_layer(seq, h, c, wih, whh, bih, bhh):
        outs = []
        for t in range(seq.shape[1]):
            z = seq[:, t, :] @ wih.T + h @ whh.T + bih + bhh
            i = jax.nn.sigmoid(z[:, 0 * HID:1 * HID])
            f = jax.nn.sigmoid(z[:, 1 * HID:2 * HID])
            g = jnp.tanh(z[:, 2 * HID:3 * HID])
            o = jax.nn.sigmoid(z[:, 3 * HID:4 * HID])
            c = f * c + i * g
            h = o * jnp.tanh(c)
            outs.append(h)
        return jnp.stack(outs, axis=1), h

    out0, _ = lstm_layer(r_in, h0[0], c0[0], p["w_ih_l0"], p["w_hh_l0"],
                         p["b_ih_l0"], p["b_hh_l0"])
    out1, _ = lstm_layer(out0, h0[1], c0[1], p["w_ih_l1"], p["w_hh_l1"],
                         p["b_ih_l1"], p["b_hh_l1"])
    logits = out1[:, -1, :] @ p["linear_w"].T + p["linear_b"]
    return jax.nn.log_softmax(logits, axis=1)


# --------------------------------------------------------------------------
# Deterministic parameter init (PyTorch-style uniform bounds)
# --------------------------------------------------------------------------
def init_params(key):
    def u(k, shape, fan_in):
        bound = 1.0 / jnp.sqrt(jnp.float32(fan_in))
        return jax.random.uniform(k, shape, jnp.float32, -bound, bound)

    ks = jax.random.split(key, 18)
    p = {}
    p["conv1_w"] = u(ks[0], (32, 1, 3, 3), 1 * 9)
    p["conv1_b"] = u(ks[1], (32,), 1 * 9)
    p["conv2_w"] = u(ks[2], (64, 32, 3, 3), 32 * 9)
    p["conv2_b"] = u(ks[3], (64,), 32 * 9)
    p["hidden1_w"] = u(ks[4], (LSTM_IN, 64 * 4), 64 * 4)
    p["hidden1_b"] = u(ks[5], (LSTM_IN,), 64 * 4)
    p["w_ih_l0"] = u(ks[6], (4 * HID, LSTM_IN), HID)
    p["w_hh_l0"] = u(ks[7], (4 * HID, HID), HID)
    p["b_ih_l0"] = u(ks[8], (4 * HID,), HID)
    p["b_hh_l0"] = u(ks[9], (4 * HID,), HID)
    p["w_ih_l1"] = u(ks[10], (4 * HID, HID), HID)
    p["w_hh_l1"] = u(ks[11], (4 * HID, HID), HID)
    p["b_ih_l1"] = u(ks[12], (4 * HID,), HID)
    p["b_hh_l1"] = u(ks[13], (4 * HID,), HID)
    p["linear_w"] = u(ks[14], (NUM_CLASS, HID), HID)
    p["linear_b"] = u(ks[15], (NUM_CLASS,), HID)
    return p


if __name__ == "__main__":
    key = jax.random.PRNGKey(0)
    k_x, k_p = jax.random.split(key)

    # Shapes implied by the module: hidden1 expects 64*4 features => 6x6 input
    # images; LSTM input_size=18 => timesteps T must be 1; conv1 => C=1.
    B, T, C, S, H, W = 2, 1, 1, 8, 6, 6
    x = jax.random.normal(k_x, (B, T, C, S, H, W), jnp.float32)

    params = init_params(k_p)
    h0 = jnp.zeros((2, B, HID), jnp.float32)   # init_hidden(h, c)
    c0 = jnp.zeros((2, B, HID), jnp.float32)

    fwd = jax.jit(biocnn_lstm_forward)
    out = jax.block_until_ready(fwd(x, h0, c0, params))

    assert out.shape == (B, NUM_CLASS)
    assert bool(jnp.all(jnp.isfinite(out)))
    # log_softmax rows sum (in prob space) to ~1
    assert jnp.allclose(jnp.exp(out).sum(axis=1), 1.0, atol=1e-4)

    # cross-check against a straightforward pure-JAX reference of the module
    ref = _reference_forward(x, h0, c0, params)
    max_err = float(jnp.max(jnp.abs(out - ref)))
    assert max_err < 1e-3, f"mismatch vs reference: {max_err}"

    print("KERNEL_OK")
</pallas_src>

<mosaic_0001>
module attributes {stable_mosaic.version = 11 : i64} {
  func.func @_fused_kernel(%arg0: memref<576x9xf32, #tpu.memory_space<vmem>>, %arg1: memref<9x32xf32, #tpu.memory_space<vmem>>, %arg2: memref<1x32xf32, #tpu.memory_space<vmem>>, %arg3: memref<288x64xf32, #tpu.memory_space<vmem>>, %arg4: memref<1x64xf32, #tpu.memory_space<vmem>>, %arg5: memref<256x18xf32, #tpu.memory_space<vmem>>, %arg6: memref<1x18xf32, #tpu.memory_space<vmem>>, %arg7: memref<4x18x50xf32, #tpu.memory_space<vmem>>, %arg8: memref<4x50x50xf32, #tpu.memory_space<vmem>>, %arg9: memref<4x1x50xf32, #tpu.memory_space<vmem>>, %arg10: memref<4x100x50xf32, #tpu.memory_space<vmem>>, %arg11: memref<4x2x50xf32, #tpu.memory_space<vmem>>, %arg12: memref<50x21xf32, #tpu.memory_space<vmem>>, %arg13: memref<1x21xf32, #tpu.memory_space<vmem>>, %arg14: memref<2x50xf32, #tpu.memory_space<vmem>>, %arg15: memref<2x50xf32, #tpu.memory_space<vmem>>, %arg16: memref<2x50xf32, #tpu.memory_space<vmem>>, %arg17: memref<2x50xf32, #tpu.memory_space<vmem>>, %arg18: memref<2x21xf32, #tpu.memory_space<vmem>>) attributes {dimension_semantics = [], scalar_prefetch = 0 : i64, scratch_operands = 0 : i64, tpu.core_type = #tpu.core_type<tc>} {
    %c0 = arith.constant 0 : index
    %c0_0 = arith.constant 0 : index
    %0 = vector.load %arg0[%c0, %c0_0] : memref<576x9xf32, #tpu.memory_space<vmem>>, vector<576x9xf32>
    %c0_1 = arith.constant 0 : index
    %c0_2 = arith.constant 0 : index
    %1 = vector.load %arg1[%c0_1, %c0_2] : memref<9x32xf32, #tpu.memory_space<vmem>>, vector<9x32xf32>
    %cst = arith.constant dense<0.000000e+00> : vector<576x32xf32>
    %2 = tpu.matmul %0, %1, %cst {dimension_numbers = #tpu.dot_dimension_numbers<[1], [0], [0], [1], [0, 0, 1, 1], [], []>} : vector<576x9xf32>, vector<9x32xf32>, vector<576x32xf32> -> vector<576x32xf32>
    %c0_3 = arith.constant 0 : index
    %c0_4 = arith.constant 0 : index
    %3 = vector.load %arg2[%c0_3, %c0_4] : memref<1x32xf32, #tpu.memory_space<vmem>>, vector<1x32xf32>
    %4 = vector.broadcast %3 : vector<1x32xf32> to vector<576x32xf32>
    %5 = arith.addf %2, %4 : vector<576x32xf32>
    %cst_5 = arith.constant 0.000000e+00 : f32
    %6 = vector.broadcast %cst_5 : f32 to vector<576x32xf32>
    %7 = arith.maximumf %5, %6 : vector<576x32xf32>
    %8 = vector.extract_strided_slice %7 {offsets = [0, 0], sizes = [64, 32], strides = [1, 1]} : vector<576x32xf32> to vector<64x32xf32>
    %c0_6 = arith.constant 0 : index
    %c0_7 = arith.constant 0 : index
    %9 = vector.load %arg3[%c0_6, %c0_7] : memref<288x64xf32, #tpu.memory_space<vmem>>, vector<32x64xf32>
    %cst_8 = arith.constant dense<0.000000e+00> : vector<64x64xf32>
    %10 = tpu.matmul %8, %9, %cst_8 {dimension_numbers = #tpu.dot_dimension_numbers<[1], [0], [0], [1], [0, 0, 1, 1], [], []>} : vector<64x32xf32>, vector<32x64xf32>, vector<64x64xf32> -> vector<64x64xf32>
    %11 = vector.extract_strided_slice %7 {offsets = [64, 0], sizes = [64, 32], strides = [1, 1]} : vector<576x32xf32> to vector<64x32xf32>
    %c32 = arith.constant 32 : index
    %c0_9 = arith.constant 0 : index
    %12 = vector.load %arg3[%c32, %c0_9] : memref<288x64xf32, #tpu.memory_space<vmem>>, vector<32x64xf32>
    %cst_10 = arith.constant dense<0.000000e+00> : vector<64x64xf32>
    %13 = tpu.matmul %11, %12, %cst_10 {dimension_numbers = #tpu.dot_dimension_numbers<[1], [0], [0], [1], [0, 0, 1, 1], [], []>} : vector<64x32xf32>, vector<32x64xf32>, vector<64x64xf32> -> vector<64x64xf32>
    %14 = arith.addf %10, %13 : vector<64x64xf32>
    %15 = vector.extract_strided_slice %7 {offsets = [128, 0], sizes = [64, 32], strides = [1, 1]} : vector<576x32xf32> to vector<64x32xf32>
    %c64 = arith.constant 64 : index
    %c0_11 = arith.constant 0 : index
    %16 = vector.load %arg3[%c64, %c0_11] : memref<288x64xf32, #tpu.memory_space<vmem>>, vector<32x64xf32>
    %cst_12 = arith.constant dense<0.000000e+00> : vector<64x64xf32>
    %17 = tpu.matmul %15, %16, %cst_12 {dimension_numbers = #tpu.dot_dimension_numbers<[1], [0], [0], [1], [0, 0, 1, 1], [], []>} : vector<64x32xf32>, vector<32x64xf32>, vector<64x64xf32> -> vector<64x64xf32>
    %18 = arith.addf %14, %17 : vector<64x64xf32>
    %19 = vector.extract_strided_slice %7 {offsets = [192, 0], sizes = [64, 32], strides = [1, 1]} : vector<576x32xf32> to vector<64x32xf32>
    %c96 = arith.constant 96 : index
    %c0_13 = arith.constant 0 : index
    %20 = vector.load %arg3[%c96, %c0_13] : memref<288x64xf32, #tpu.memory_space<vmem>>, vector<32x64xf32>
    %cst_14 = arith.constant dense<0.000000e+00> : vector<64x64xf32>
    %21 = tpu.matmul %19, %20, %cst_14 {dimension_numbers = #tpu.dot_dimension_numbers<[1], [0], [0], [1], [0, 0, 1, 1], [], []>} : vector<64x32xf32>, vector<32x64xf32>, vector<64x64xf32> -> vector<64x64xf32>
    %22 = arith.addf %18, %21 : vector<64x64xf32>
    %23 = vector.extract_strided_slice %7 {offsets = [256, 0], sizes = [64, 32], strides = [1, 1]} : vector<576x32xf32> to vector<64x32xf32>
    %c128 = arith.constant 128 : index
    %c0_15 = arith.constant 0 : index
    %24 = vector.load %arg3[%c128, %c0_15] : memref<288x64xf32, #tpu.memory_space<vmem>>, vector<32x64xf32>
    %cst_16 = arith.constant dense<0.000000e+00> : vector<64x64xf32>
    %25 = tpu.matmul %23, %24, %cst_16 {dimension_numbers = #tpu.dot_dimension_numbers<[1], [0], [0], [1], [0, 0, 1, 1], [], []>} : vector<64x32xf32>, vector<32x64xf32>, vector<64x64xf32> -> vector<64x64xf32>
    %26 = arith.addf %22, %25 : vector<64x64xf32>
    %27 = vector.extract_strided_slice %7 {offsets = [320, 0], sizes = [64, 32], strides = [1, 1]} : vector<576x32xf32> to vector<64x32xf32>
    %c160 = arith.constant 160 : index
    %c0_17 = arith.constant 0 : index
    %28 = vector.load %arg3[%c160, %c0_17] : memref<288x64xf32, #tpu.memory_space<vmem>>, vector<32x64xf32>
    %cst_18 = arith.constant dense<0.000000e+00> : vector<64x64xf32>
    %29 = tpu.matmul %27, %28, %cst_18 {dimension_numbers = #tpu.dot_dimension_numbers<[1], [0], [0], [1], [0, 0, 1, 1], [], []>} : vector<64x32xf32>, vector<32x64xf32>, vector<64x64xf32> -> vector<64x64xf32>
    %30 = arith.addf %26, %29 : vector<64x64xf32>
    %31 = vector.extract_strided_slice %7 {offsets = [384, 0], sizes = [64, 32], strides = [1, 1]} : vector<576x32xf32> to vector<64x32xf32>
    %c192 = arith.constant 192 : index
    %c0_19 = arith.constant 0 : index
    %32 = vector.load %arg3[%c192, %c0_19] : memref<288x64xf32, #tpu.memory_space<vmem>>, vector<32x64xf32>
    %cst_20 = arith.constant dense<0.000000e+00> : vector<64x64xf32>
    %33 = tpu.matmul %31, %32, %cst_20 {dimension_numbers = #tpu.dot_dimension_numbers<[1], [0], [0], [1], [0, 0, 1, 1], [], []>} : vector<64x32xf32>, vector<32x64xf32>, vector<64x64xf32> -> vector<64x64xf32>
    %34 = arith.addf %30, %33 : vector<64x64xf32>
    %35 = vector.extract_strided_slice %7 {offsets = [448, 0], sizes = [64, 32], strides = [1, 1]} : vector<576x32xf32> to vector<64x32xf32>
    %c224 = arith.constant 224 : index
    %c0_21 = arith.constant 0 : index
    %36 = vector.load %arg3[%c224, %c0_21] : memref<288x64xf32, #tpu.memory_space<vmem>>, vector<32x64xf32>
    %cst_22 = arith.constant dense<0.000000e+00> : vector<64x64xf32>
    %37 = tpu.matmul %35, %36, %cst_22 {dimension_numbers = #tpu.dot_dimension_numbers<[1], [0], [0], [1], [0, 0, 1, 1], [], []>} : vector<64x32xf32>, vector<32x64xf32>, vector<64x64xf32> -> vector<64x64xf32>
    %38 = arith.addf %34, %37 : vector<64x64xf32>
    %39 = vector.extract_strided_slice %7 {offsets = [512, 0], sizes = [64, 32], strides = [1, 1]} : vector<576x32xf32> to vector<64x32xf32>
    %c256 = arith.constant 256 : index
    %c0_23 = arith.constant 0 : index
    %40 = vector.load %arg3[%c256, %c0_23] : memref<288x64xf32, #tpu.memory_space<vmem>>, vector<32x64xf32>
    %cst_24 = arith.constant dense<0.000000e+00> : vector<64x64xf32>
    %41 = tpu.matmul %39, %40, %cst_24 {dimension_numbers = #tpu.dot_dimension_numbers<[1], [0], [0], [1], [0, 0, 1, 1], [], []>} : vector<64x32xf32>, vector<32x64xf32>, vector<64x64xf32> -> vector<64x64xf32>
    %42 = arith.addf %38, %41 : vector<64x64xf32>
    %c0_25 = arith.constant 0 : index
    %c0_26 = arith.constant 0 : index
    %43 = vector.load %arg4[%c0_25, %c0_26] : memref<1x64xf32, #tpu.memory_space<vmem>>, vector<1x64xf32>
    %44 = vector.broadcast %43 : vector<1x64xf32> to vector<64x64xf32>
    %45 = arith.addf %42, %44 : vector<64x64xf32>
    %cst_27 = arith.constant 0.000000e+00 : f32
    %46 = vector.broadcast %cst_27 : f32 to vector<64x64xf32>
    %47 = arith.maximumf %45, %46 : vector<64x64xf32>
    %48 = vector.extract_strided_slice %47 {offsets = [0, 0], sizes = [16, 64], strides = [1, 1]} : vector<64x64xf32> to vector<16x64xf32>
    %c0_28 = arith.constant 0 : index
    %c0_29 = arith.constant 0 : index
    %49 = vector.load %arg5[%c0_28, %c0_29] : memref<256x18xf32, #tpu.memory_space<vmem>>, vector<64x18xf32>
    %cst_30 = arith.constant dense<0.000000e+00> : vector<16x18xf32>
    %50 = tpu.matmul %48, %49, %cst_30 {dimension_numbers = #tpu.dot_dimension_numbers<[1], [0], [0], [1], [0, 0, 1, 1], [], []>} : vector<16x64xf32>, vector<64x18xf32>, vector<16x18xf32> -> vector<16x18xf32>
    %51 = vector.extract_strided_slice %47 {offsets = [16, 0], sizes = [16, 64], strides = [1, 1]} : vector<64x64xf32> to vector<16x64xf32>
    %c64_31 = arith.constant 64 : index
    %c0_32 = arith.constant 0 : index
    %52 = vector.load %arg5[%c64_31, %c0_32] : memref<256x18xf32, #tpu.memory_space<vmem>>, vector<64x18xf32>
    %cst_33 = arith.constant dense<0.000000e+00> : vector<16x18xf32>
    %53 = tpu.matmul %51, %52, %cst_33 {dimension_numbers = #tpu.dot_dimension_numbers<[1], [0], [0], [1], [0, 0, 1, 1], [], []>} : vector<16x64xf32>, vector<64x18xf32>, vector<16x18xf32> -> vector<16x18xf32>
    %54 = arith.addf %50, %53 : vector<16x18xf32>
    %55 = vector.extract_strided_slice %47 {offsets = [32, 0], sizes = [16, 64], strides = [1, 1]} : vector<64x64xf32> to vector<16x64xf32>
    %c128_34 = arith.constant 128 : index
    %c0_35 = arith.constant 0 : index
    %56 = vector.load %arg5[%c128_34, %c0_35] : memref<256x18xf32, #tpu.memory_space<vmem>>, vector<64x18xf32>
    %cst_36 = arith.constant dense<0.000000e+00> : vector<16x18xf32>
    %57 = tpu.matmul %55, %56, %cst_36 {dimension_numbers = #tpu.dot_dimension_numbers<[1], [0], [0], [1], [0, 0, 1, 1], [], []>} : vector<16x64xf32>, vector<64x18xf32>, vector<16x18xf32> -> vector<16x18xf32>
    %58 = arith.addf %54, %57 : vector<16x18xf32>
    %59 = vector.extract_strided_slice %47 {offsets = [48, 0], sizes = [16, 64], strides = [1, 1]} : vector<64x64xf32> to vector<16x64xf32>
    %c192_37 = arith.constant 192 : index
    %c0_38 = arith.constant 0 : index
    %60 = vector.load %arg5[%c192_37, %c0_38] : memref<256x18xf32, #tpu.memory_space<vmem>>, vector<64x18xf32>
    %cst_39 = arith.constant dense<0.000000e+00> : vector<16x18xf32>
    %61 = tpu.matmul %59, %60, %cst_39 {dimension_numbers = #tpu.dot_dimension_numbers<[1], [0], [0], [1], [0, 0, 1, 1], [], []>} : vector<16x64xf32>, vector<64x18xf32>, vector<16x18xf32> -> vector<16x18xf32>
    %62 = arith.addf %58, %61 : vector<16x18xf32>
    %c0_40 = arith.constant 0 : index
    %c0_41 = arith.constant 0 : index
    %63 = vector.load %arg6[%c0_40, %c0_41] : memref<1x18xf32, #tpu.memory_space<vmem>>, vector<1x18xf32>
    %64 = vector.broadcast %63 : vector<1x18xf32> to vector<16x18xf32>
    %65 = arith.addf %62, %64 : vector<16x18xf32>
    %cst_42 = arith.constant 0.000000e+00 : f32
    %66 = vector.broadcast %cst_42 : f32 to vector<16x18xf32>
    %67 = arith.maximumf %65, %66 : vector<16x18xf32>
    %c0_43 = arith.constant 0 : index
    %c0_44 = arith.constant 0 : index
    %c0_45 = arith.constant 0 : index
    %68 = vector.load %arg7[%c0_43, %c0_44, %c0_45] : memref<4x18x50xf32, #tpu.memory_space<vmem>>, vector<1x18x50xf32>
    %69 = vector.shape_cast %68 : vector<1x18x50xf32> to vector<18x50xf32>
    %cst_46 = arith.constant dense<0.000000e+00> : vector<16x50xf32>
    %70 = tpu.matmul %67, %69, %cst_46 {dimension_numbers = #tpu.dot_dimension_numbers<[1], [0], [0], [1], [0, 0, 1, 1], [], []>} : vector<16x18xf32>, vector<18x50xf32>, vector<16x50xf32> -> vector<16x50xf32>
    %c0_47 = arith.constant 0 : index
    %c0_48 = arith.constant 0 : index
    %c0_49 = arith.constant 0 : index
    %71 = vector.load %arg9[%c0_47, %c0_48, %c0_49] : memref<4x1x50xf32, #tpu.memory_space<vmem>>, vector<1x1x50xf32>
    %72 = vector.shape_cast %71 : vector<1x1x50xf32> to vector<1x50xf32>
    %73 = vector.broadcast %72 : vector<1x50xf32> to vector<16x50xf32>
    %74 = arith.addf %70, %73 : vector<16x50xf32>
    %c1 = arith.constant 1 : index
    %c0_50 = arith.constant 0 : index
    %c0_51 = arith.constant 0 : index
    %75 = vector.load %arg7[%c1, %c0_50, %c0_51] : memref<4x18x50xf32, #tpu.memory_space<vmem>>, vector<1x18x50xf32>
    %76 = vector.shape_cast %75 : vector<1x18x50xf32> to vector<18x50xf32>
    %cst_52 = arith.constant dense<0.000000e+00> : vector<16x50xf32>
    %77 = tpu.matmul %67, %76, %cst_52 {dimension_numbers = #tpu.dot_dimension_numbers<[1], [0], [0], [1], [0, 0, 1, 1], [], []>} : vector<16x18xf32>, vector<18x50xf32>, vector<16x50xf32> -> vector<16x50xf32>
    %c1_53 = arith.constant 1 : index
    %c0_54 = arith.constant 0 : index
    %c0_55 = arith.constant 0 : index
    %78 = vector.load %arg9[%c1_53, %c0_54, %c0_55] : memref<4x1x50xf32, #tpu.memory_space<vmem>>, vector<1x1x50xf32>
    %79 = vector.shape_cast %78 : vector<1x1x50xf32> to vector<1x50xf32>
    %80 = vector.broadcast %79 : vector<1x50xf32> to vector<16x50xf32>
    %81 = arith.addf %77, %80 : vector<16x50xf32>
    %c2 = arith.constant 2 : index
    %c0_56 = arith.constant 0 : index
    %c0_57 = arith.constant 0 : index
    %82 = vector.load %arg7[%c2, %c0_56, %c0_57] : memref<4x18x50xf32, #tpu.memory_space<vmem>>, vector<1x18x50xf32>
    %83 = vector.shape_cast %82 : vector<1x18x50xf32> to vector<18x50xf32>
    %cst_58 = arith.constant dense<0.000000e+00> : vector<16x50xf32>
    %84 = tpu.matmul %67, %83, %cst_58 {dimension_numbers = #tpu.dot_dimension_numbers<[1], [0], [0], [1], [0, 0, 1, 1], [], []>} : vector<16x18xf32>, vector<18x50xf32>, vector<16x50xf32> -> vector<16x50xf32>
    %c2_59 = arith.constant 2 : index
    %c0_60 = arith.constant 0 : index
    %c0_61 = arith.constant 0 : index
    %85 = vector.load %arg9[%c2_59, %c0_60, %c0_61] : memref<4x1x50xf32, #tpu.memory_space<vmem>>, vector<1x1x50xf32>
    %86 = vector.shape_cast %85 : vector<1x1x50xf32> to vector<1x50xf32>
    %87 = vector.broadcast %86 : vector<1x50xf32> to vector<16x50xf32>
    %88 = arith.addf %84, %87 : vector<16x50xf32>
    %c3 = arith.constant 3 : index
    %c0_62 = arith.constant 0 : index
    %c0_63 = arith.constant 0 : index
    %89 = vector.load %arg7[%c3, %c0_62, %c0_63] : memref<4x18x50xf32, #tpu.memory_space<vmem>>, vector<1x18x50xf32>
    %90 = vector.shape_cast %89 : vector<1x18x50xf32> to vector<18x50xf32>
    %cst_64 = arith.constant dense<0.000000e+00> : vector<16x50xf32>
    %91 = tpu.matmul %67, %90, %cst_64 {dimension_numbers = #tpu.dot_dimension_numbers<[1], [0], [0], [1], [0, 0, 1, 1], [], []>} : vector<16x18xf32>, vector<18x50xf32>, vector<16x50xf32> -> vector<16x50xf32>
    %c3_65 = arith.constant 3 : index
    %c0_66 = arith.constant 0 : index
    %c0_67 = arith.constant 0 : index
    %92 = vector.load %arg9[%c3_65, %c0_66, %c0_67] : memref<4x1x50xf32, #tpu.memory_space<vmem>>, vector<1x1x50xf32>
    %93 = vector.shape_cast %92 : vector<1x1x50xf32> to vector<1x50xf32>
    %94 = vector.broadcast %93 : vector<1x50xf32> to vector<16x50xf32>
    %95 = arith.addf %91, %94 : vector<16x50xf32>
    %c0_68 = arith.constant 0 : index
    %c0_69 = arith.constant 0 : index
    %c0_70 = arith.constant 0 : index
    %96 = vector.load %arg8[%c0_68, %c0_69, %c0_70] : memref<4x50x50xf32, #tpu.memory_space<vmem>>, vector<1x50x50xf32>
    %97 = vector.shape_cast %96 : vector<1x50x50xf32> to vector<50x50xf32>
    %c1_71 = arith.constant 1 : index
    %c0_72 = arith.constant 0 : index
    %c0_73 = arith.constant 0 : index
    %98 = vector.load %arg8[%c1_71, %c0_72, %c0_73] : memref<4x50x50xf32, #tpu.memory_space<vmem>>, vector<1x50x50xf32>
    %99 = vector.shape_cast %98 : vector<1x50x50xf32> to vector<50x50xf32>
    %c2_74 = arith.constant 2 : index
    %c0_75 = arith.constant 0 : index
    %c0_76 = arith.constant 0 : index
    %100 = vector.load %arg8[%c2_74, %c0_75, %c0_76] : memref<4x50x50xf32, #tpu.memory_space<vmem>>, vector<1x50x50xf32>
    %101 = vector.shape_cast %100 : vector<1x50x50xf32> to vector<50x50xf32>
    %c3_77 = arith.constant 3 : index
    %c0_78 = arith.constant 0 : index
    %c0_79 = arith.constant 0 : index
    %102 = vector.load %arg8[%c3_77, %c0_78, %c0_79] : memref<4x50x50xf32, #tpu.memory_space<vmem>>, vector<1x50x50xf32>
    %103 = vector.shape_cast %102 : vector<1x50x50xf32> to vector<50x50xf32>
    %c0_80 = arith.constant 0 : index
    %c0_81 = arith.constant 0 : index
    %c0_82 = arith.constant 0 : index
    %104 = vector.load %arg10[%c0_80, %c0_81, %c0_82] : memref<4x100x50xf32, #tpu.memory_space<vmem>>, vector<1x100x50xf32>
    %105 = vector.shape_cast %104 : vector<1x100x50xf32> to vector<100x50xf32>
    %c1_83 = arith.constant 1 : index
    %c0_84 = arith.constant 0 : index
    %c0_85 = arith.constant 0 : index
    %106 = vector.load %arg10[%c1_83, %c0_84, %c0_85] : memref<4x100x50xf32, #tpu.memory_space<vmem>>, vector<1x100x50xf32>
    %107 = vector.shape_cast %106 : vector<1x100x50xf32> to vector<100x50xf32>
    %c2_86 = arith.constant 2 : index
    %c0_87 = arith.constant 0 : index
    %c0_88 = arith.constant 0 : index
    %108 = vector.load %arg10[%c2_86, %c0_87, %c0_88] : memref<4x100x50xf32, #tpu.memory_space<vmem>>, vector<1x100x50xf32>
    %109 = vector.shape_cast %108 : vector<1x100x50xf32> to vector<100x50xf32>
    %c3_89 = arith.constant 3 : index
    %c0_90 = arith.constant 0 : index
    %c0_91 = arith.constant 0 : index
    %110 = vector.load %arg10[%c3_89, %c0_90, %c0_91] : memref<4x100x50xf32, #tpu.memory_space<vmem>>, vector<1x100x50xf32>
    %111 = vector.shape_cast %110 : vector<1x100x50xf32> to vector<100x50xf32>
    %c0_92 = arith.constant 0 : index
    %c0_93 = arith.constant 0 : index
    %c0_94 = arith.constant 0 : index
    %112 = vector.load %arg11[%c0_92, %c0_93, %c0_94] : memref<4x2x50xf32, #tpu.memory_space<vmem>>, vector<1x2x50xf32>
    %113 = vector.shape_cast %112 : vector<1x2x50xf32> to vector<2x50xf32>
    %c1_95 = arith.constant 1 : index
    %c0_96 = arith.constant 0 : index
    %c0_97 = arith.constant 0 : index
    %114 = vector.load %arg11[%c1_95, %c0_96, %c0_97] : memref<4x2x50xf32, #tpu.memory_space<vmem>>, vector<1x2x50xf32>
    %115 = vector.shape_cast %114 : vector<1x2x50xf32> to vector<2x50xf32>
    %c2_98 = arith.constant 2 : index
    %c0_99 = arith.constant 0 : index
    %c0_100 = arith.constant 0 : index
    %116 = vector.load %arg11[%c2_98, %c0_99, %c0_100] : memref<4x2x50xf32, #tpu.memory_space<vmem>>, vector<1x2x50xf32>
    %117 = vector.shape_cast %116 : vector<1x2x50xf32> to vector<2x50xf32>
    %c3_101 = arith.constant 3 : index
    %c0_102 = arith.constant 0 : index
    %c0_103 = arith.constant 0 : index
    %118 = vector.load %arg11[%c3_101, %c0_102, %c0_103] : memref<4x2x50xf32, #tpu.memory_space<vmem>>, vector<1x2x50xf32>
    %119 = vector.shape_cast %118 : vector<1x2x50xf32> to vector<2x50xf32>
    %c0_104 = arith.constant 0 : index
    %c0_105 = arith.constant 0 : index
    %120 = vector.load %arg12[%c0_104, %c0_105] : memref<50x21xf32, #tpu.memory_space<vmem>>, vector<50x21xf32>
    %c0_106 = arith.constant 0 : index
    %c0_107 = arith.constant 0 : index
    %121 = vector.load %arg13[%c0_106, %c0_107] : memref<1x21xf32, #tpu.memory_space<vmem>>, vector<1x21xf32>
    %c0_108 = arith.constant 0 : index
    %c0_109 = arith.constant 0 : index
    %122 = vector.load %arg14[%c0_108, %c0_109] : memref<2x50xf32, #tpu.memory_space<vmem>>, vector<2x50xf32>
    %c0_110 = arith.constant 0 : index
    %c0_111 = arith.constant 0 : index
    %123 = vector.load %arg15[%c0_110, %c0_111] : memref<2x50xf32, #tpu.memory_space<vmem>>, vector<2x50xf32>
    %c0_112 = arith.constant 0 : index
    %c0_113 = arith.constant 0 : index
    %124 = vector.load %arg16[%c0_112, %c0_113] : memref<2x50xf32, #tpu.memory_space<vmem>>, vector<2x50xf32>
    %c0_114 = arith.constant 0 : index
    %c0_115 = arith.constant 0 : index
    %125 = vector.load %arg17[%c0_114, %c0_115] : memref<2x50xf32, #tpu.memory_space<vmem>>, vector<2x50xf32>
    %126 = vector.extract_strided_slice %74 {offsets = [0, 0], sizes = [2, 50], strides = [1, 1]} : vector<16x50xf32> to vector<2x50xf32>
    %cst_116 = arith.constant dense<0.000000e+00> : vector<2x50xf32>
    %127 = tpu.matmul %122, %97, %cst_116 {dimension_numbers = #tpu.dot_dimension_numbers<[1], [0], [0], [1], [0, 0, 1, 1], [], []>} : vector<2x50xf32>, vector<50x50xf32>, vector<2x50xf32> -> vector<2x50xf32>
    %128 = arith.addf %126, %127 : vector<2x50xf32>
    %129 = vector.extract_strided_slice %81 {offsets = [0, 0], sizes = [2, 50], strides = [1, 1]} : vector<16x50xf32> to vector<2x50xf32>
    %cst_117 = arith.constant dense<0.000000e+00> : vector<2x50xf32>
    %130 = tpu.matmul %122, %99, %cst_117 {dimension_numbers = #tpu.dot_dimension_numbers<[1], [0], [0], [1], [0, 0, 1, 1], [], []>} : vector<2x50xf32>, vector<50x50xf32>, vector<2x50xf32> -> vector<2x50xf32>
    %131 = arith.addf %129, %130 : vector<2x50xf32>
    %132 = vector.extract_strided_slice %88 {offsets = [0, 0], sizes = [2, 50], strides = [1, 1]} : vector<16x50xf32> to vector<2x50xf32>
    %cst_118 = arith.constant dense<0.000000e+00> : vector<2x50xf32>
    %133 = tpu.matmul %122, %101, %cst_118 {dimension_numbers = #tpu.dot_dimension_numbers<[1], [0], [0], [1], [0, 0, 1, 1], [], []>} : vector<2x50xf32>, vector<50x50xf32>, vector<2x50xf32> -> vector<2x50xf32>
    %134 = arith.addf %132, %133 : vector<2x50xf32>
    %135 = vector.extract_strided_slice %95 {offsets = [0, 0], sizes = [2, 50], strides = [1, 1]} : vector<16x50xf32> to vector<2x50xf32>
    %cst_119 = arith.constant dense<0.000000e+00> : vector<2x50xf32>
    %136 = tpu.matmul %122, %103, %cst_119 {dimension_numbers = #tpu.dot_dimension_numbers<[1], [0], [0], [1], [0, 0, 1, 1], [], []>} : vector<2x50xf32>, vector<50x50xf32>, vector<2x50xf32> -> vector<2x50xf32>
    %137 = arith.addf %135, %136 : vector<2x50xf32>
    %138 = arith.negf %131 : vector<2x50xf32>
    %139 = math.exp %138 : vector<2x50xf32>
    %cst_120 = arith.constant 1.000000e+00 : f32
    %140 = vector.broadcast %cst_120 : f32 to vector<2x50xf32>
    %141 = arith.addf %140, %139 : vector<2x50xf32>
    %142 = arith.divf %140, %141 : vector<2x50xf32>
    %143 = arith.mulf %142, %123 : vector<2x50xf32>
    %144 = arith.negf %128 : vector<2x50xf32>
    %145 = math.exp %144 : vector<2x50xf32>
    %cst_121 = arith.constant 1.000000e+00 : f32
    %146 = vector.broadcast %cst_121 : f32 to vector<2x50xf32>
    %147 = arith.addf %146, %145 : vector<2x50xf32>
    %148 = arith.divf %146, %147 : vector<2x50xf32>
    %149 = math.tanh %134 : vector<2x50xf32>
    %150 = arith.mulf %148, %149 : vector<2x50xf32>
    %151 = arith.addf %143, %150 : vector<2x50xf32>
    %152 = arith.negf %137 : vector<2x50xf32>
    %153 = math.exp %152 : vector<2x50xf32>
    %cst_122 = arith.constant 1.000000e+00 : f32
    %154 = vector.broadcast %cst_122 : f32 to vector<2x50xf32>
    %155 = arith.addf %154, %153 : vector<2x50xf32>
    %156 = arith.divf %154, %155 : vector<2x50xf32>
    %157 = math.tanh %151 : vector<2x50xf32>
    %158 = arith.mulf %156, %157 : vector<2x50xf32>
    %159 = tpu.concatenate %158, %124 in 1 : vector<2x50xf32>, vector<2x50xf32> -> vector<2x100xf32>
    %cst_123 = arith.constant dense<0.000000e+00> : vector<2x50xf32>
    %160 = tpu.matmul %159, %105, %cst_123 {dimension_numbers = #tpu.dot_dimension_numbers<[1], [0], [0], [1], [0, 0, 1, 1], [], []>} : vector<2x100xf32>, vector<100x50xf32>, vector<2x50xf32> -> vector<2x50xf32>
    %161 = arith.addf %160, %113 : vector<2x50xf32>
    %cst_124 = arith.constant dense<0.000000e+00> : vector<2x50xf32>
    %162 = tpu.matmul %159, %107, %cst_124 {dimension_numbers = #tpu.dot_dimension_numbers<[1], [0], [0], [1], [0, 0, 1, 1], [], []>} : vector<2x100xf32>, vector<100x50xf32>, vector<2x50xf32> -> vector<2x50xf32>
    %163 = arith.addf %162, %115 : vector<2x50xf32>
    %cst_125 = arith.constant dense<0.000000e+00> : vector<2x50xf32>
    %164 = tpu.matmul %159, %109, %cst_125 {dimension_numbers = #tpu.dot_dimension_numbers<[1], [0], [0], [1], [0, 0, 1, 1], [], []>} : vector<2x100xf32>, vector<100x50xf32>, vector<2x50xf32> -> vector<2x50xf32>
    %165 = arith.addf %164, %117 : vector<2x50xf32>
    %cst_126 = arith.constant dense<0.000000e+00> : vector<2x50xf32>
    %166 = tpu.matmul %159, %111, %cst_126 {dimension_numbers = #tpu.dot_dimension_numbers<[1], [0], [0], [1], [0, 0, 1, 1], [], []>} : vector<2x100xf32>, vector<100x50xf32>, vector<2x50xf32> -> vector<2x50xf32>
    %167 = arith.addf %166, %119 : vector<2x50xf32>
    %168 = arith.negf %163 : vector<2x50xf32>
    %169 = math.exp %168 : vector<2x50xf32>
    %cst_127 = arith.constant 1.000000e+00 : f32
    %170 = vector.broadcast %cst_127 : f32 to vector<2x50xf32>
    %171 = arith.addf %170, %169 : vector<2x50xf32>
    %172 = arith.divf %170, %171 : vector<2x50xf32>
    %173 = arith.mulf %172, %125 : vector<2x50xf32>
    %174 = arith.negf %161 : vector<2x50xf32>
    %175 = math.exp %174 : vector<2x50xf32>
    %cst_128 = arith.constant 1.000000e+00 : f32
    %176 = vector.broadcast %cst_128 : f32 to vector<2x50xf32>
    %177 = arith.addf %176, %175 : vector<2x50xf32>
    %178 = arith.divf %176, %177 : vector<2x50xf32>
    %179 = math.tanh %165 : vector<2x50xf32>
    %180 = arith.mulf %178, %179 : vector<2x50xf32>
    %181 = arith.addf %173, %180 : vector<2x50xf32>
    %182 = arith.negf %167 : vector<2x50xf32>
    %183 = math.exp %182 : vector<2x50xf32>
    %cst_129 = arith.constant 1.000000e+00 : f32
    %184 = vector.broadcast %cst_129 : f32 to vector<2x50xf32>
    %185 = arith.addf %184, %183 : vector<2x50xf32>
    %186 = arith.divf %184, %185 : vector<2x50xf32>
    %187 = math.tanh %181 : vector<2x50xf32>
    %188 = arith.mulf %186, %187 : vector<2x50xf32>
    %189 = vector.extract_strided_slice %74 {offsets = [2, 0], sizes = [2, 50], strides = [1, 1]} : vector<16x50xf32> to vector<2x50xf32>
    %cst_130 = arith.constant dense<0.000000e+00> : vector<2x50xf32>
    %190 = tpu.matmul %158, %97, %cst_130 {dimension_numbers = #tpu.dot_dimension_numbers<[1], [0], [0], [1], [0, 0, 1, 1], [], []>} : vector<2x50xf32>, vector<50x50xf32>, vector<2x50xf32> -> vector<2x50xf32>
    %191 = arith.addf %189, %190 : vector<2x50xf32>
    %192 = vector.extract_strided_slice %81 {offsets = [2, 0], sizes = [2, 50], strides = [1, 1]} : vector<16x50xf32> to vector<2x50xf32>
    %cst_131 = arith.constant dense<0.000000e+00> : vector<2x50xf32>
    %193 = tpu.matmul %158, %99, %cst_131 {dimension_numbers = #tpu.dot_dimension_numbers<[1], [0], [0], [1], [0, 0, 1, 1], [], []>} : vector<2x50xf32>, vector<50x50xf32>, vector<2x50xf32> -> vector<2x50xf32>
    %194 = arith.addf %192, %193 : vector<2x50xf32>
    %195 = vector.extract_strided_slice %88 {offsets = [2, 0], sizes = [2, 50], strides = [1, 1]} : vector<16x50xf32> to vector<2x50xf32>
    %cst_132 = arith.constant dense<0.000000e+00> : vector<2x50xf32>
    %196 = tpu.matmul %158, %101, %cst_132 {dimension_numbers = #tpu.dot_dimension_numbers<[1], [0], [0], [1], [0, 0, 1, 1], [], []>} : vector<2x50xf32>, vector<50x50xf32>, vector<2x50xf32> -> vector<2x50xf32>
    %197 = arith.addf %195, %196 : vector<2x50xf32>
    %198 = vector.extract_strided_slice %95 {offsets = [2, 0], sizes = [2, 50], strides = [1, 1]} : vector<16x50xf32> to vector<2x50xf32>
    %cst_133 = arith.constant dense<0.000000e+00> : vector<2x50xf32>
    %199 = tpu.matmul %158, %103, %cst_133 {dimension_numbers = #tpu.dot_dimension_numbers<[1], [0], [0], [1], [0, 0, 1, 1], [], []>} : vector<2x50xf32>, vector<50x50xf32>, vector<2x50xf32> -> vector<2x50xf32>
    %200 = arith.addf %198, %199 : vector<2x50xf32>
    %201 = arith.negf %194 : vector<2x50xf32>
    %202 = math.exp %201 : vector<2x50xf32>
    %cst_134 = arith.constant 1.000000e+00 : f32
    %203 = vector.broadcast %cst_134 : f32 to vector<2x50xf32>
    %204 = arith.addf %203, %202 : vector<2x50xf32>
    %205 = arith.divf %203, %204 : vector<2x50xf32>
    %206 = arith.mulf %205, %151 : vector<2x50xf32>
    %207 = arith.negf %191 : vector<2x50xf32>
    %208 = math.exp %207 : vector<2x50xf32>
    %cst_135 = arith.constant 1.000000e+00 : f32
    %209 = vector.broadcast %cst_135 : f32 to vector<2x50xf32>
    %210 = arith.addf %209, %208 : vector<2x50xf32>
    %211 = arith.divf %209, %210 : vector<2x50xf32>
    %212 = math.tanh %197 : vector<2x50xf32>
    %213 = arith.mulf %211, %212 : vector<2x50xf32>
    %214 = arith.addf %206, %213 : vector<2x50xf32>
    %215 = arith.negf %200 : vector<2x50xf32>
    %216 = math.exp %215 : vector<2x50xf32>
    %cst_136 = arith.constant 1.000000e+00 : f32
    %217 = vector.broadcast %cst_136 : f32 to vector<2x50xf32>
    %218 = arith.addf %217, %216 : vector<2x50xf32>
    %219 = arith.divf %217, %218 : vector<2x50xf32>
    %220 = math.tanh %214 : vector<2x50xf32>
    %221 = arith.mulf %219, %220 : vector<2x50xf32>
    %222 = tpu.concatenate %221, %188 in 1 : vector<2x50xf32>, vector<2x50xf32> -> vector<2x100xf32>
    %cst_137 = arith.constant dense<0.000000e+00> : vector<2x50xf32>
    %223 = tpu.matmul %222, %105, %cst_137 {dimension_numbers = #tpu.dot_dimension_numbers<[1], [0], [0], [1], [0, 0, 1, 1], [], []>} : vector<2x100xf32>, vector<100x50xf32>, vector<2x50xf32> -> vector<2x50xf32>
    %224 = arith.addf %223, %113 : vector<2x50xf32>
    %cst_138 = arith.constant dense<0.000000e+00> : vector<2x50xf32>
    %225 = tpu.matmul %222, %107, %cst_138 {dimension_numbers = #tpu.dot_dimension_numbers<[1], [0], [0], [1], [0, 0, 1, 1], [], []>} : vector<2x100xf32>, vector<100x50xf32>, vector<2x50xf32> -> vector<2x50xf32>
    %226 = arith.addf %225, %115 : vector<2x50xf32>
    %cst_139 = arith.constant dense<0.000000e+00> : vector<2x50xf32>
    %227 = tpu.matmul %222, %109, %cst_139 {dimension_numbers = #tpu.dot_dimension_numbers<[1], [0], [0], [1], [0, 0, 1, 1], [], []>} : vector<2x100xf32>, vector<100x50xf32>, vector<2x50xf32> -> vector<2x50xf32>
    %228 = arith.addf %227, %117 : vector<2x50xf32>
    %cst_140 = arith.constant dense<0.000000e+00> : vector<2x50xf32>
    %229 = tpu.matmul %222, %111, %cst_140 {dimension_numbers = #tpu.dot_dimension_numbers<[1], [0], [0], [1], [0, 0, 1, 1], [], []>} : vector<2x100xf32>, vector<100x50xf32>, vector<2x50xf32> -> vector<2x50xf32>
    %230 = arith.addf %229, %119 : vector<2x50xf32>
    %231 = arith.negf %226 : vector<2x50xf32>
    %232 = math.exp %231 : vector<2x50xf32>
    %cst_141 = arith.constant 1.000000e+00 : f32
    %233 = vector.broadcast %cst_141 : f32 to vector<2x50xf32>
    %234 = arith.addf %233, %232 : vector<2x50xf32>
    %235 = arith.divf %233, %234 : vector<2x50xf32>
    %236 = arith.mulf %235, %181 : vector<2x50xf32>
    %237 = arith.negf %224 : vector<2x50xf32>
    %238 = math.exp %237 : vector<2x50xf32>
    %cst_142 = arith.constant 1.000000e+00 : f32
    %239 = vector.broadcast %cst_142 : f32 to vector<2x50xf32>
    %240 = arith.addf %239, %238 : vector<2x50xf32>
    %241 = arith.divf %239, %240 : vector<2x50xf32>
    %242 = math.tanh %228 : vector<2x50xf32>
    %243 = arith.mulf %241, %242 : vector<2x50xf32>
    %244 = arith.addf %236, %243 : vector<2x50xf32>
    %245 = arith.negf %230 : vector<2x50xf32>
    %246 = math.exp %245 : vector<2x50xf32>
    %cst_143 = arith.constant 1.000000e+00 : f32
    %247 = vector.broadcast %cst_143 : f32 to vector<2x50xf32>
    %248 = arith.addf %247, %246 : vector<2x50xf32>
    %249 = arith.divf %247, %248 : vector<2x50xf32>
    %250 = math.tanh %244 : vector<2x50xf32>
    %251 = arith.mulf %249, %250 : vector<2x50xf32>
    %252 = vector.extract_strided_slice %74 {offsets = [4, 0], sizes = [2, 50], strides = [1, 1]} : vector<16x50xf32> to vector<2x50xf32>
    %cst_144 = arith.constant dense<0.000000e+00> : vector<2x50xf32>
    %253 = tpu.matmul %221, %97, %cst_144 {dimension_numbers = #tpu.dot_dimension_numbers<[1], [0], [0], [1], [0, 0, 1, 1], [], []>} : vector<2x50xf32>, vector<50x50xf32>, vector<2x50xf32> -> vector<2x50xf32>
    %254 = arith.addf %252, %253 : vector<2x50xf32>
    %255 = vector.extract_strided_slice %81 {offsets = [4, 0], sizes = [2, 50], strides = [1, 1]} : vector<16x50xf32> to vector<2x50xf32>
    %cst_145 = arith.constant dense<0.000000e+00> : vector<2x50xf32>
    %256 = tpu.matmul %221, %99, %cst_145 {dimension_numbers = #tpu.dot_dimension_numbers<[1], [0], [0], [1], [0, 0, 1, 1], [], []>} : vector<2x50xf32>, vector<50x50xf32>, vector<2x50xf32> -> vector<2x50xf32>
    %257 = arith.addf %255, %256 : vector<2x50xf32>
    %258 = vector.extract_strided_slice %88 {offsets = [4, 0], sizes = [2, 50], strides = [1, 1]} : vector<16x50xf32> to vector<2x50xf32>
    %cst_146 = arith.constant dense<0.000000e+00> : vector<2x50xf32>
    %259 = tpu.matmul %221, %101, %cst_146 {dimension_numbers = #tpu.dot_dimension_numbers<[1], [0], [0], [1], [0, 0, 1, 1], [], []>} : vector<2x50xf32>, vector<50x50xf32>, vector<2x50xf32> -> vector<2x50xf32>
    %260 = arith.addf %258, %259 : vector<2x50xf32>
    %261 = vector.extract_strided_slice %95 {offsets = [4, 0], sizes = [2, 50], strides = [1, 1]} : vector<16x50xf32> to vector<2x50xf32>
    %cst_147 = arith.constant dense<0.000000e+00> : vector<2x50xf32>
    %262 = tpu.matmul %221, %103, %cst_147 {dimension_numbers = #tpu.dot_dimension_numbers<[1], [0], [0], [1], [0, 0, 1, 1], [], []>} : vector<2x50xf32>, vector<50x50xf32>, vector<2x50xf32> -> vector<2x50xf32>
    %263 = arith.addf %261, %262 : vector<2x50xf32>
    %264 = arith.negf %257 : vector<2x50xf32>
    %265 = math.exp %264 : vector<2x50xf32>
    %cst_148 = arith.constant 1.000000e+00 : f32
    %266 = vector.broadcast %cst_148 : f32 to vector<2x50xf32>
    %267 = arith.addf %266, %265 : vector<2x50xf32>
    %268 = arith.divf %266, %267 : vector<2x50xf32>
    %269 = arith.mulf %268, %214 : vector<2x50xf32>
    %270 = arith.negf %254 : vector<2x50xf32>
    %271 = math.exp %270 : vector<2x50xf32>
    %cst_149 = arith.constant 1.000000e+00 : f32
    %272 = vector.broadcast %cst_149 : f32 to vector<2x50xf32>
    %273 = arith.addf %272, %271 : vector<2x50xf32>
    %274 = arith.divf %272, %273 : vector<2x50xf32>
    %275 = math.tanh %260 : vector<2x50xf32>
    %276 = arith.mulf %274, %275 : vector<2x50xf32>
    %277 = arith.addf %269, %276 : vector<2x50xf32>
    %278 = arith.negf %263 : vector<2x50xf32>
    %279 = math.exp %278 : vector<2x50xf32>
    %cst_150 = arith.constant 1.000000e+00 : f32
    %280 = vector.broadcast %cst_150 : f32 to vector<2x50xf32>
    %281 = arith.addf %280, %279 : vector<2x50xf32>
    %282 = arith.divf %280, %281 : vector<2x50xf32>
    %283 = math.tanh %277 : vector<2x50xf32>
    %284 = arith.mulf %282, %283 : vector<2x50xf32>
    %285 = tpu.concatenate %284, %251 in 1 : vector<2x50xf32>, vector<2x50xf32> -> vector<2x100xf32>
    %cst_151 = arith.constant dense<0.000000e+00> : vector<2x50xf32>
    %286 = tpu.matmul %285, %105, %cst_151 {dimension_numbers = #tpu.dot_dimension_numbers<[1], [0], [0], [1], [0, 0, 1, 1], [], []>} : vector<2x100xf32>, vector<100x50xf32>, vector<2x50xf32> -> vector<2x50xf32>
    %287 = arith.addf %286, %113 : vector<2x50xf32>
    %cst_152 = arith.constant dense<0.000000e+00> : vector<2x50xf32>
    %288 = tpu.matmul %285, %107, %cst_152 {dimension_numbers = #tpu.dot_dimension_numbers<[1], [0], [0], [1], [0, 0, 1, 1], [], []>} : vector<2x100xf32>, vector<100x50xf32>, vector<2x50xf32> -> vector<2x50xf32>
    %289 = arith.addf %288, %115 : vector<2x50xf32>
    %cst_153 = arith.constant dense<0.000000e+00> : vector<2x50xf32>
    %290 = tpu.matmul %285, %109, %cst_153 {dimension_numbers = #tpu.dot_dimension_numbers<[1], [0], [0], [1], [0, 0, 1, 1], [], []>} : vector<2x100xf32>, vector<100x50xf32>, vector<2x50xf32> -> vector<2x50xf32>
    %291 = arith.addf %290, %117 : vector<2x50xf32>
    %cst_154 = arith.constant dense<0.000000e+00> : vector<2x50xf32>
    %292 = tpu.matmul %285, %111, %cst_154 {dimension_numbers = #tpu.dot_dimension_numbers<[1], [0], [0], [1], [0, 0, 1, 1], [], []>} : vector<2x100xf32>, vector<100x50xf32>, vector<2x50xf32> -> vector<2x50xf32>
    %293 = arith.addf %292, %119 : vector<2x50xf32>
    %294 = arith.negf %289 : vector<2x50xf32>
    %295 = math.exp %294 : vector<2x50xf32>
    %cst_155 = arith.constant 1.000000e+00 : f32
    %296 = vector.broadcast %cst_155 : f32 to vector<2x50xf32>
    %297 = arith.addf %296, %295 : vector<2x50xf32>
    %298 = arith.divf %296, %297 : vector<2x50xf32>
    %299 = arith.mulf %298, %244 : vector<2x50xf32>
    %300 = arith.negf %287 : vector<2x50xf32>
    %301 = math.exp %300 : vector<2x50xf32>
    %cst_156 = arith.constant 1.000000e+00 : f32
    %302 = vector.broadcast %cst_156 : f32 to vector<2x50xf32>
    %303 = arith.addf %302, %301 : vector<2x50xf32>
    %304 = arith.divf %302, %303 : vector<2x50xf32>
    %305 = math.tanh %291 : vector<2x50xf32>
    %306 = arith.mulf %304, %305 : vector<2x50xf32>
    %307 = arith.addf %299, %306 : vector<2x50xf32>
    %308 = arith.negf %293 : vector<2x50xf32>
    %309 = math.exp %308 : vector<2x50xf32>
    %cst_157 = arith.constant 1.000000e+00 : f32
    %310 = vector.broadcast %cst_157 : f32 to vector<2x50xf32>
    %311 = arith.addf %310, %309 : vector<2x50xf32>
    %312 = arith.divf %310, %311 : vector<2x50xf32>
    %313 = math.tanh %307 : vector<2x50xf32>
    %314 = arith.mulf %312, %313 : vector<2x50xf32>
    %315 = vector.extract_strided_slice %74 {offsets = [6, 0], sizes = [2, 50], strides = [1, 1]} : vector<16x50xf32> to vector<2x50xf32>
    %cst_158 = arith.constant dense<0.000000e+00> : vector<2x50xf32>
    %316 = tpu.matmul %284, %97, %cst_158 {dimension_numbers = #tpu.dot_dimension_numbers<[1], [0], [0], [1], [0, 0, 1, 1], [], []>} : vector<2x50xf32>, vector<50x50xf32>, vector<2x50xf32> -> vector<2x50xf32>
    %317 = arith.addf %315, %316 : vector<2x50xf32>
    %318 = vector.extract_strided_slice %81 {offsets = [6, 0], sizes = [2, 50], strides = [1, 1]} : vector<16x50xf32> to vector<2x50xf32>
    %cst_159 = arith.constant dense<0.000000e+00> : vector<2x50xf32>
    %319 = tpu.matmul %284, %99, %cst_159 {dimension_numbers = #tpu.dot_dimension_numbers<[1], [0], [0], [1], [0, 0, 1, 1], [], []>} : vector<2x50xf32>, vector<50x50xf32>, vector<2x50xf32> -> vector<2x50xf32>
    %320 = arith.addf %318, %319 : vector<2x50xf32>
    %321 = vector.extract_strided_slice %88 {offsets = [6, 0], sizes = [2, 50], strides = [1, 1]} : vector<16x50xf32> to vector<2x50xf32>
    %cst_160 = arith.constant dense<0.000000e+00> : vector<2x50xf32>
    %322 = tpu.matmul %284, %101, %cst_160 {dimension_numbers = #tpu.dot_dimension_numbers<[1], [0], [0], [1], [0, 0, 1, 1], [], []>} : vector<2x50xf32>, vector<50x50xf32>, vector<2x50xf32> -> vector<2x50xf32>
    %323 = arith.addf %321, %322 : vector<2x50xf32>
    %324 = vector.extract_strided_slice %95 {offsets = [6, 0], sizes = [2, 50], strides = [1, 1]} : vector<16x50xf32> to vector<2x50xf32>
    %cst_161 = arith.constant dense<0.000000e+00> : vector<2x50xf32>
    %325 = tpu.matmul %284, %103, %cst_161 {dimension_numbers = #tpu.dot_dimension_numbers<[1], [0], [0], [1], [0, 0, 1, 1], [], []>} : vector<2x50xf32>, vector<50x50xf32>, vector<2x50xf32> -> vector<2x50xf32>
    %326 = arith.addf %324, %325 : vector<2x50xf32>
    %327 = arith.negf %320 : vector<2x50xf32>
    %328 = math.exp %327 : vector<2x50xf32>
    %cst_162 = arith.constant 1.000000e+00 : f32
    %329 = vector.broadcast %cst_162 : f32 to vector<2x50xf32>
    %330 = arith.addf %329, %328 : vector<2x50xf32>
    %331 = arith.divf %329, %330 : vector<2x50xf32>
    %332 = arith.mulf %331, %277 : vector<2x50xf32>
    %333 = arith.negf %317 : vector<2x50xf32>
    %334 = math.exp %333 : vector<2x50xf32>
    %cst_163 = arith.constant 1.000000e+00 : f32
    %335 = vector.broadcast %cst_163 : f32 to vector<2x50xf32>
    %336 = arith.addf %335, %334 : vector<2x50xf32>
    %337 = arith.divf %335, %336 : vector<2x50xf32>
    %338 = math.tanh %323 : vector<2x50xf32>
    %339 = arith.mulf %337, %338 : vector<2x50xf32>
    %340 = arith.addf %332, %339 : vector<2x50xf32>
    %341 = arith.negf %326 : vector<2x50xf32>
    %342 = math.exp %341 : vector<2x50xf32>
    %cst_164 = arith.constant 1.000000e+00 : f32
    %343 = vector.broadcast %cst_164 : f32 to vector<2x50xf32>
    %344 = arith.addf %343, %342 : vector<2x50xf32>
    %345 = arith.divf %343, %344 : vector<2x50xf32>
    %346 = math.tanh %340 : vector<2x50xf32>
    %347 = arith.mulf %345, %346 : vector<2x50xf32>
    %348 = tpu.concatenate %347, %314 in 1 : vector<2x50xf32>, vector<2x50xf32> -> vector<2x100xf32>
    %cst_165 = arith.constant dense<0.000000e+00> : vector<2x50xf32>
    %349 = tpu.matmul %348, %105, %cst_165 {dimension_numbers = #tpu.dot_dimension_numbers<[1], [0], [0], [1], [0, 0, 1, 1], [], []>} : vector<2x100xf32>, vector<100x50xf32>, vector<2x50xf32> -> vector<2x50xf32>
    %350 = arith.addf %349, %113 : vector<2x50xf32>
    %cst_166 = arith.constant dense<0.000000e+00> : vector<2x50xf32>
    %351 = tpu.matmul %348, %107, %cst_166 {dimension_numbers = #tpu.dot_dimension_numbers<[1], [0], [0], [1], [0, 0, 1, 1], [], []>} : vector<2x100xf32>, vector<100x50xf32>, vector<2x50xf32> -> vector<2x50xf32>
    %352 = arith.addf %351, %115 : vector<2x50xf32>
    %cst_167 = arith.constant dense<0.000000e+00> : vector<2x50xf32>
    %353 = tpu.matmul %348, %109, %cst_167 {dimension_numbers = #tpu.dot_dimension_numbers<[1], [0], [0], [1], [0, 0, 1, 1], [], []>} : vector<2x100xf32>, vector<100x50xf32>, vector<2x50xf32> -> vector<2x50xf32>
    %354 = arith.addf %353, %117 : vector<2x50xf32>
    %cst_168 = arith.constant dense<0.000000e+00> : vector<2x50xf32>
    %355 = tpu.matmul %348, %111, %cst_168 {dimension_numbers = #tpu.dot_dimension_numbers<[1], [0], [0], [1], [0, 0, 1, 1], [], []>} : vector<2x100xf32>, vector<100x50xf32>, vector<2x50xf32> -> vector<2x50xf32>
    %356 = arith.addf %355, %119 : vector<2x50xf32>
    %357 = arith.negf %352 : vector<2x50xf32>
    %358 = math.exp %357 : vector<2x50xf32>
    %cst_169 = arith.constant 1.000000e+00 : f32
    %359 = vector.broadcast %cst_169 : f32 to vector<2x50xf32>
    %360 = arith.addf %359, %358 : vector<2x50xf32>
    %361 = arith.divf %359, %360 : vector<2x50xf32>
    %362 = arith.mulf %361, %307 : vector<2x50xf32>
    %363 = arith.negf %350 : vector<2x50xf32>
    %364 = math.exp %363 : vector<2x50xf32>
    %cst_170 = arith.constant 1.000000e+00 : f32
    %365 = vector.broadcast %cst_170 : f32 to vector<2x50xf32>
    %366 = arith.addf %365, %364 : vector<2x50xf32>
    %367 = arith.divf %365, %366 : vector<2x50xf32>
    %368 = math.tanh %354 : vector<2x50xf32>
    %369 = arith.mulf %367, %368 : vector<2x50xf32>
    %370 = arith.addf %362, %369 : vector<2x50xf32>
    %371 = arith.negf %356 : vector<2x50xf32>
    %372 = math.exp %371 : vector<2x50xf32>
    %cst_171 = arith.constant 1.000000e+00 : f32
    %373 = vector.broadcast %cst_171 : f32 to vector<2x50xf32>
    %374 = arith.addf %373, %372 : vector<2x50xf32>
    %375 = arith.divf %373, %374 : vector<2x50xf32>
    %376 = math.tanh %370 : vector<2x50xf32>
    %377 = arith.mulf %375, %376 : vector<2x50xf32>
    %378 = vector.extract_strided_slice %74 {offsets = [8, 0], sizes = [2, 50], strides = [1, 1]} : vector<16x50xf32> to vector<2x50xf32>
    %cst_172 = arith.constant dense<0.000000e+00> : vector<2x50xf32>
    %379 = tpu.matmul %347, %97, %cst_172 {dimension_numbers = #tpu.dot_dimension_numbers<[1], [0], [0], [1], [0, 0, 1, 1], [], []>} : vector<2x50xf32>, vector<50x50xf32>, vector<2x50xf32> -> vector<2x50xf32>
    %380 = arith.addf %378, %379 : vector<2x50xf32>
    %381 = vector.extract_strided_slice %81 {offsets = [8, 0], sizes = [2, 50], strides = [1, 1]} : vector<16x50xf32> to vector<2x50xf32>
    %cst_173 = arith.constant dense<0.000000e+00> : vector<2x50xf32>
    %382 = tpu.matmul %347, %99, %cst_173 {dimension_numbers = #tpu.dot_dimension_numbers<[1], [0], [0], [1], [0, 0, 1, 1], [], []>} : vector<2x50xf32>, vector<50x50xf32>, vector<2x50xf32> -> vector<2x50xf32>
    %383 = arith.addf %381, %382 : vector<2x50xf32>
    %384 = vector.extract_strided_slice %88 {offsets = [8, 0], sizes = [2, 50], strides = [1, 1]} : vector<16x50xf32> to vector<2x50xf32>
    %cst_174 = arith.constant dense<0.000000e+00> : vector<2x50xf32>
    %385 = tpu.matmul %347, %101, %cst_174 {dimension_numbers = #tpu.dot_dimension_numbers<[1], [0], [0], [1], [0, 0, 1, 1], [], []>} : vector<2x50xf32>, vector<50x50xf32>, vector<2x50xf32> -> vector<2x50xf32>
    %386 = arith.addf %384, %385 : vector<2x50xf32>
    %387 = vector.extract_strided_slice %95 {offsets = [8, 0], sizes = [2, 50], strides = [1, 1]} : vector<16x50xf32> to vector<2x50xf32>
    %cst_175 = arith.constant dense<0.000000e+00> : vector<2x50xf32>
    %388 = tpu.matmul %347, %103, %cst_175 {dimension_numbers = #tpu.dot_dimension_numbers<[1], [0], [0], [1], [0, 0, 1, 1], [], []>} : vector<2x50xf32>, vector<50x50xf32>, vector<2x50xf32> -> vector<2x50xf32>
    %389 = arith.addf %387, %388 : vector<2x50xf32>
    %390 = arith.negf %383 : vector<2x50xf32>
    %391 = math.exp %390 : vector<2x50xf32>
    %cst_176 = arith.constant 1.000000e+00 : f32
    %392 = vector.broadcast %cst_176 : f32 to vector<2x50xf32>
    %393 = arith.addf %392, %391 : vector<2x50xf32>
    %394 = arith.divf %392, %393 : vector<2x50xf32>
    %395 = arith.mulf %394, %340 : vector<2x50xf32>
    %396 = arith.negf %380 : vector<2x50xf32>
    %397 = math.exp %396 : vector<2x50xf32>
    %cst_177 = arith.constant 1.000000e+00 : f32
    %398 = vector.broadcast %cst_177 : f32 to vector<2x50xf32>
    %399 = arith.addf %398, %397 : vector<2x50xf32>
    %400 = arith.divf %398, %399 : vector<2x50xf32>
    %401 = math.tanh %386 : vector<2x50xf32>
    %402 = arith.mulf %400, %401 : vector<2x50xf32>
    %403 = arith.addf %395, %402 : vector<2x50xf32>
    %404 = arith.negf %389 : vector<2x50xf32>
    %405 = math.exp %404 : vector<2x50xf32>
    %cst_178 = arith.constant 1.000000e+00 : f32
    %406 = vector.broadcast %cst_178 : f32 to vector<2x50xf32>
    %407 = arith.addf %406, %405 : vector<2x50xf32>
    %408 = arith.divf %406, %407 : vector<2x50xf32>
    %409 = math.tanh %403 : vector<2x50xf32>
    %410 = arith.mulf %408, %409 : vector<2x50xf32>
    %411 = tpu.concatenate %410, %377 in 1 : vector<2x50xf32>, vector<2x50xf32> -> vector<2x100xf32>
    %cst_179 = arith.constant dense<0.000000e+00> : vector<2x50xf32>
    %412 = tpu.matmul %411, %105, %cst_179 {dimension_numbers = #tpu.dot_dimension_numbers<[1], [0], [0], [1], [0, 0, 1, 1], [], []>} : vector<2x100xf32>, vector<100x50xf32>, vector<2x50xf32> -> vector<2x50xf32>
    %413 = arith.addf %412, %113 : vector<2x50xf32>
    %cst_180 = arith.constant dense<0.000000e+00> : vector<2x50xf32>
    %414 = tpu.matmul %411, %107, %cst_180 {dimension_numbers = #tpu.dot_dimension_numbers<[1], [0], [0], [1], [0, 0, 1, 1], [], []>} : vector<2x100xf32>, vector<100x50xf32>, vector<2x50xf32> -> vector<2x50xf32>
    %415 = arith.addf %414, %115 : vector<2x50xf32>
    %cst_181 = arith.constant dense<0.000000e+00> : vector<2x50xf32>
    %416 = tpu.matmul %411, %109, %cst_181 {dimension_numbers = #tpu.dot_dimension_numbers<[1], [0], [0], [1], [0, 0, 1, 1], [], []>} : vector<2x100xf32>, vector<100x50xf32>, vector<2x50xf32> -> vector<2x50xf32>
    %417 = arith.addf %416, %117 : vector<2x50xf32>
    %cst_182 = arith.constant dense<0.000000e+00> : vector<2x50xf32>
    %418 = tpu.matmul %411, %111, %cst_182 {dimension_numbers = #tpu.dot_dimension_numbers<[1], [0], [0], [1], [0, 0, 1, 1], [], []>} : vector<2x100xf32>, vector<100x50xf32>, vector<2x50xf32> -> vector<2x50xf32>
    %419 = arith.addf %418, %119 : vector<2x50xf32>
    %420 = arith.negf %415 : vector<2x50xf32>
    %421 = math.exp %420 : vector<2x50xf32>
    %cst_183 = arith.constant 1.000000e+00 : f32
    %422 = vector.broadcast %cst_183 : f32 to vector<2x50xf32>
    %423 = arith.addf %422, %421 : vector<2x50xf32>
    %424 = arith.divf %422, %423 : vector<2x50xf32>
    %425 = arith.mulf %424, %370 : vector<2x50xf32>
    %426 = arith.negf %413 : vector<2x50xf32>
    %427 = math.exp %426 : vector<2x50xf32>
    %cst_184 = arith.constant 1.000000e+00 : f32
    %428 = vector.broadcast %cst_184 : f32 to vector<2x50xf32>
    %429 = arith.addf %428, %427 : vector<2x50xf32>
    %430 = arith.divf %428, %429 : vector<2x50xf32>
    %431 = math.tanh %417 : vector<2x50xf32>
    %432 = arith.mulf %430, %431 : vector<2x50xf32>
    %433 = arith.addf %425, %432 : vector<2x50xf32>
    %434 = arith.negf %419 : vector<2x50xf32>
    %435 = math.exp %434 : vector<2x50xf32>
    %cst_185 = arith.constant 1.000000e+00 : f32
    %436 = vector.broadcast %cst_185 : f32 to vector<2x50xf32>
    %437 = arith.addf %436, %435 : vector<2x50xf32>
    %438 = arith.divf %436, %437 : vector<2x50xf32>
    %439 = math.tanh %433 : vector<2x50xf32>
    %440 = arith.mulf %438, %439 : vector<2x50xf32>
    %441 = vector.extract_strided_slice %74 {offsets = [10, 0], sizes = [2, 50], strides = [1, 1]} : vector<16x50xf32> to vector<2x50xf32>
    %cst_186 = arith.constant dense<0.000000e+00> : vector<2x50xf32>
    %442 = tpu.matmul %410, %97, %cst_186 {dimension_numbers = #tpu.dot_dimension_numbers<[1], [0], [0], [1], [0, 0, 1, 1], [], []>} : vector<2x50xf32>, vector<50x50xf32>, vector<2x50xf32> -> vector<2x50xf32>
    %443 = arith.addf %441, %442 : vector<2x50xf32>
    %444 = vector.extract_strided_slice %81 {offsets = [10, 0], sizes = [2, 50], strides = [1, 1]} : vector<16x50xf32> to vector<2x50xf32>
    %cst_187 = arith.constant dense<0.000000e+00> : vector<2x50xf32>
    %445 = tpu.matmul %410, %99, %cst_187 {dimension_numbers = #tpu.dot_dimension_numbers<[1], [0], [0], [1], [0, 0, 1, 1], [], []>} : vector<2x50xf32>, vector<50x50xf32>, vector<2x50xf32> -> vector<2x50xf32>
    %446 = arith.addf %444, %445 : vector<2x50xf32>
    %447 = vector.extract_strided_slice %88 {offsets = [10, 0], sizes = [2, 50], strides = [1, 1]} : vector<16x50xf32> to vector<2x50xf32>
    %cst_188 = arith.constant dense<0.000000e+00> : vector<2x50xf32>
    %448 = tpu.matmul %410, %101, %cst_188 {dimension_numbers = #tpu.dot_dimension_numbers<[1], [0], [0], [1], [0, 0, 1, 1], [], []>} : vector<2x50xf32>, vector<50x50xf32>, vector<2x50xf32> -> vector<2x50xf32>
    %449 = arith.addf %447, %448 : vector<2x50xf32>
    %450 = vector.extract_strided_slice %95 {offsets = [10, 0], sizes = [2, 50], strides = [1, 1]} : vector<16x50xf32> to vector<2x50xf32>
    %cst_189 = arith.constant dense<0.000000e+00> : vector<2x50xf32>
    %451 = tpu.matmul %410, %103, %cst_189 {dimension_numbers = #tpu.dot_dimension_numbers<[1], [0], [0], [1], [0, 0, 1, 1], [], []>} : vector<2x50xf32>, vector<50x50xf32>, vector<2x50xf32> -> vector<2x50xf32>
    %452 = arith.addf %450, %451 : vector<2x50xf32>
    %453 = arith.negf %446 : vector<2x50xf32>
    %454 = math.exp %453 : vector<2x50xf32>
    %cst_190 = arith.constant 1.000000e+00 : f32
    %455 = vector.broadcast %cst_190 : f32 to vector<2x50xf32>
    %456 = arith.addf %455, %454 : vector<2x50xf32>
    %457 = arith.divf %455, %456 : vector<2x50xf32>
    %458 = arith.mulf %457, %403 : vector<2x50xf32>
    %459 = arith.negf %443 : vector<2x50xf32>
    %460 = math.exp %459 : vector<2x50xf32>
    %cst_191 = arith.constant 1.000000e+00 : f32
    %461 = vector.broadcast %cst_191 : f32 to vector<2x50xf32>
    %462 = arith.addf %461, %460 : vector<2x50xf32>
    %463 = arith.divf %461, %462 : vector<2x50xf32>
    %464 = math.tanh %449 : vector<2x50xf32>
    %465 = arith.mulf %463, %464 : vector<2x50xf32>
    %466 = arith.addf %458, %465 : vector<2x50xf32>
    %467 = arith.negf %452 : vector<2x50xf32>
    %468 = math.exp %467 : vector<2x50xf32>
    %cst_192 = arith.constant 1.000000e+00 : f32
    %469 = vector.broadcast %cst_192 : f32 to vector<2x50xf32>
    %470 = arith.addf %469, %468 : vector<2x50xf32>
    %471 = arith.divf %469, %470 : vector<2x50xf32>
    %472 = math.tanh %466 : vector<2x50xf32>
    %473 = arith.mulf %471, %472 : vector<2x50xf32>
    %474 = tpu.concatenate %473, %440 in 1 : vector<2x50xf32>, vector<2x50xf32> -> vector<2x100xf32>
    %cst_193 = arith.constant dense<0.000000e+00> : vector<2x50xf32>
    %475 = tpu.matmul %474, %105, %cst_193 {dimension_numbers = #tpu.dot_dimension_numbers<[1], [0], [0], [1], [0, 0, 1, 1], [], []>} : vector<2x100xf32>, vector<100x50xf32>, vector<2x50xf32> -> vector<2x50xf32>
    %476 = arith.addf %475, %113 : vector<2x50xf32>
    %cst_194 = arith.constant dense<0.000000e+00> : vector<2x50xf32>
    %477 = tpu.matmul %474, %107, %cst_194 {dimension_numbers = #tpu.dot_dimension_numbers<[1], [0], [0], [1], [0, 0, 1, 1], [], []>} : vector<2x100xf32>, vector<100x50xf32>, vector<2x50xf32> -> vector<2x50xf32>
    %478 = arith.addf %477, %115 : vector<2x50xf32>
    %cst_195 = arith.constant dense<0.000000e+00> : vector<2x50xf32>
    %479 = tpu.matmul %474, %109, %cst_195 {dimension_numbers = #tpu.dot_dimension_numbers<[1], [0], [0], [1], [0, 0, 1, 1], [], []>} : vector<2x100xf32>, vector<100x50xf32>, vector<2x50xf32> -> vector<2x50xf32>
    %480 = arith.addf %479, %117 : vector<2x50xf32>
    %cst_196 = arith.constant dense<0.000000e+00> : vector<2x50xf32>
    %481 = tpu.matmul %474, %111, %cst_196 {dimension_numbers = #tpu.dot_dimension_numbers<[1], [0], [0], [1], [0, 0, 1, 1], [], []>} : vector<2x100xf32>, vector<100x50xf32>, vector<2x50xf32> -> vector<2x50xf32>
    %482 = arith.addf %481, %119 : vector<2x50xf32>
    %483 = arith.negf %478 : vector<2x50xf32>
    %484 = math.exp %483 : vector<2x50xf32>
    %cst_197 = arith.constant 1.000000e+00 : f32
    %485 = vector.broadcast %cst_197 : f32 to vector<2x50xf32>
    %486 = arith.addf %485, %484 : vector<2x50xf32>
    %487 = arith.divf %485, %486 : vector<2x50xf32>
    %488 = arith.mulf %487, %433 : vector<2x50xf32>
    %489 = arith.negf %476 : vector<2x50xf32>
    %490 = math.exp %489 : vector<2x50xf32>
    %cst_198 = arith.constant 1.000000e+00 : f32
    %491 = vector.broadcast %cst_198 : f32 to vector<2x50xf32>
    %492 = arith.addf %491, %490 : vector<2x50xf32>
    %493 = arith.divf %491, %492 : vector<2x50xf32>
    %494 = math.tanh %480 : vector<2x50xf32>
    %495 = arith.mulf %493, %494 : vector<2x50xf32>
    %496 = arith.addf %488, %495 : vector<2x50xf32>
    %497 = arith.negf %482 : vector<2x50xf32>
    %498 = math.exp %497 : vector<2x50xf32>
    %cst_199 = arith.constant 1.000000e+00 : f32
    %499 = vector.broadcast %cst_199 : f32 to vector<2x50xf32>
    %500 = arith.addf %499, %498 : vector<2x50xf32>
    %501 = arith.divf %499, %500 : vector<2x50xf32>
    %502 = math.tanh %496 : vector<2x50xf32>
    %503 = arith.mulf %501, %502 : vector<2x50xf32>
    %504 = vector.extract_strided_slice %74 {offsets = [12, 0], sizes = [2, 50], strides = [1, 1]} : vector<16x50xf32> to vector<2x50xf32>
    %cst_200 = arith.constant dense<0.000000e+00> : vector<2x50xf32>
    %505 = tpu.matmul %473, %97, %cst_200 {dimension_numbers = #tpu.dot_dimension_numbers<[1], [0], [0], [1], [0, 0, 1, 1], [], []>} : vector<2x50xf32>, vector<50x50xf32>, vector<2x50xf32> -> vector<2x50xf32>
    %506 = arith.addf %504, %505 : vector<2x50xf32>
    %507 = vector.extract_strided_slice %81 {offsets = [12, 0], sizes = [2, 50], strides = [1, 1]} : vector<16x50xf32> to vector<2x50xf32>
    %cst_201 = arith.constant dense<0.000000e+00> : vector<2x50xf32>
    %508 = tpu.matmul %473, %99, %cst_201 {dimension_numbers = #tpu.dot_dimension_numbers<[1], [0], [0], [1], [0, 0, 1, 1], [], []>} : vector<2x50xf32>, vector<50x50xf32>, vector<2x50xf32> -> vector<2x50xf32>
    %509 = arith.addf %507, %508 : vector<2x50xf32>
    %510 = vector.extract_strided_slice %88 {offsets = [12, 0], sizes = [2, 50], strides = [1, 1]} : vector<16x50xf32> to vector<2x50xf32>
    %cst_202 = arith.constant dense<0.000000e+00> : vector<2x50xf32>
    %511 = tpu.matmul %473, %101, %cst_202 {dimension_numbers = #tpu.dot_dimension_numbers<[1], [0], [0], [1], [0, 0, 1, 1], [], []>} : vector<2x50xf32>, vector<50x50xf32>, vector<2x50xf32> -> vector<2x50xf32>
    %512 = arith.addf %510, %511 : vector<2x50xf32>
    %513 = vector.extract_strided_slice %95 {offsets = [12, 0], sizes = [2, 50], strides = [1, 1]} : vector<16x50xf32> to vector<2x50xf32>
    %cst_203 = arith.constant dense<0.000000e+00> : vector<2x50xf32>
    %514 = tpu.matmul %473, %103, %cst_203 {dimension_numbers = #tpu.dot_dimension_numbers<[1], [0], [0], [1], [0, 0, 1, 1], [], []>} : vector<2x50xf32>, vector<50x50xf32>, vector<2x50xf32> -> vector<2x50xf32>
    %515 = arith.addf %513, %514 : vector<2x50xf32>
    %516 = arith.negf %509 : vector<2x50xf32>
    %517 = math.exp %516 : vector<2x50xf32>
    %cst_204 = arith.constant 1.000000e+00 : f32
    %518 = vector.broadcast %cst_204 : f32 to vector<2x50xf32>
    %519 = arith.addf %518, %517 : vector<2x50xf32>
    %520 = arith.divf %518, %519 : vector<2x50xf32>
    %521 = arith.mulf %520, %466 : vector<2x50xf32>
    %522 = arith.negf %506 : vector<2x50xf32>
    %523 = math.exp %522 : vector<2x50xf32>
    %cst_205 = arith.constant 1.000000e+00 : f32
    %524 = vector.broadcast %cst_205 : f32 to vector<2x50xf32>
    %525 = arith.addf %524, %523 : vector<2x50xf32>
    %526 = arith.divf %524, %525 : vector<2x50xf32>
    %527 = math.tanh %512 : vector<2x50xf32>
    %528 = arith.mulf %526, %527 : vector<2x50xf32>
    %529 = arith.addf %521, %528 : vector<2x50xf32>
    %530 = arith.negf %515 : vector<2x50xf32>
    %531 = math.exp %530 : vector<2x50xf32>
    %cst_206 = arith.constant 1.000000e+00 : f32
    %532 = vector.broadcast %cst_206 : f32 to vector<2x50xf32>
    %533 = arith.addf %532, %531 : vector<2x50xf32>
    %534 = arith.divf %532, %533 : vector<2x50xf32>
    %535 = math.tanh %529 : vector<2x50xf32>
    %536 = arith.mulf %534, %535 : vector<2x50xf32>
    %537 = tpu.concatenate %536, %503 in 1 : vector<2x50xf32>, vector<2x50xf32> -> vector<2x100xf32>
    %cst_207 = arith.constant dense<0.000000e+00> : vector<2x50xf32>
    %538 = tpu.matmul %537, %105, %cst_207 {dimension_numbers = #tpu.dot_dimension_numbers<[1], [0], [0], [1], [0, 0, 1, 1], [], []>} : vector<2x100xf32>, vector<100x50xf32>, vector<2x50xf32> -> vector<2x50xf32>
    %539 = arith.addf %538, %113 : vector<2x50xf32>
    %cst_208 = arith.constant dense<0.000000e+00> : vector<2x50xf32>
    %540 = tpu.matmul %537, %107, %cst_208 {dimension_numbers = #tpu.dot_dimension_numbers<[1], [0], [0], [1], [0, 0, 1, 1], [], []>} : vector<2x100xf32>, vector<100x50xf32>, vector<2x50xf32> -> vector<2x50xf32>
    %541 = arith.addf %540, %115 : vector<2x50xf32>
    %cst_209 = arith.constant dense<0.000000e+00> : vector<2x50xf32>
    %542 = tpu.matmul %537, %109, %cst_209 {dimension_numbers = #tpu.dot_dimension_numbers<[1], [0], [0], [1], [0, 0, 1, 1], [], []>} : vector<2x100xf32>, vector<100x50xf32>, vector<2x50xf32> -> vector<2x50xf32>
    %543 = arith.addf %542, %117 : vector<2x50xf32>
    %cst_210 = arith.constant dense<0.000000e+00> : vector<2x50xf32>
    %544 = tpu.matmul %537, %111, %cst_210 {dimension_numbers = #tpu.dot_dimension_numbers<[1], [0], [0], [1], [0, 0, 1, 1], [], []>} : vector<2x100xf32>, vector<100x50xf32>, vector<2x50xf32> -> vector<2x50xf32>
    %545 = arith.addf %544, %119 : vector<2x50xf32>
    %546 = arith.negf %541 : vector<2x50xf32>
    %547 = math.exp %546 : vector<2x50xf32>
    %cst_211 = arith.constant 1.000000e+00 : f32
    %548 = vector.broadcast %cst_211 : f32 to vector<2x50xf32>
    %549 = arith.addf %548, %547 : vector<2x50xf32>
    %550 = arith.divf %548, %549 : vector<2x50xf32>
    %551 = arith.mulf %550, %496 : vector<2x50xf32>
    %552 = arith.negf %539 : vector<2x50xf32>
    %553 = math.exp %552 : vector<2x50xf32>
    %cst_212 = arith.constant 1.000000e+00 : f32
    %554 = vector.broadcast %cst_212 : f32 to vector<2x50xf32>
    %555 = arith.addf %554, %553 : vector<2x50xf32>
    %556 = arith.divf %554, %555 : vector<2x50xf32>
    %557 = math.tanh %543 : vector<2x50xf32>
    %558 = arith.mulf %556, %557 : vector<2x50xf32>
    %559 = arith.addf %551, %558 : vector<2x50xf32>
    %560 = arith.negf %545 : vector<2x50xf32>
    %561 = math.exp %560 : vector<2x50xf32>
    %cst_213 = arith.constant 1.000000e+00 : f32
    %562 = vector.broadcast %cst_213 : f32 to vector<2x50xf32>
    %563 = arith.addf %562, %561 : vector<2x50xf32>
    %564 = arith.divf %562, %563 : vector<2x50xf32>
    %565 = math.tanh %559 : vector<2x50xf32>
    %566 = arith.mulf %564, %565 : vector<2x50xf32>
    %567 = vector.extract_strided_slice %74 {offsets = [14, 0], sizes = [2, 50], strides = [1, 1]} : vector<16x50xf32> to vector<2x50xf32>
    %cst_214 = arith.constant dense<0.000000e+00> : vector<2x50xf32>
    %568 = tpu.matmul %536, %97, %cst_214 {dimension_numbers = #tpu.dot_dimension_numbers<[1], [0], [0], [1], [0, 0, 1, 1], [], []>} : vector<2x50xf32>, vector<50x50xf32>, vector<2x50xf32> -> vector<2x50xf32>
    %569 = arith.addf %567, %568 : vector<2x50xf32>
    %570 = vector.extract_strided_slice %81 {offsets = [14, 0], sizes = [2, 50], strides = [1, 1]} : vector<16x50xf32> to vector<2x50xf32>
    %cst_215 = arith.constant dense<0.000000e+00> : vector<2x50xf32>
    %571 = tpu.matmul %536, %99, %cst_215 {dimension_numbers = #tpu.dot_dimension_numbers<[1], [0], [0], [1], [0, 0, 1, 1], [], []>} : vector<2x50xf32>, vector<50x50xf32>, vector<2x50xf32> -> vector<2x50xf32>
    %572 = arith.addf %570, %571 : vector<2x50xf32>
    %573 = vector.extract_strided_slice %88 {offsets = [14, 0], sizes = [2, 50], strides = [1, 1]} : vector<16x50xf32> to vector<2x50xf32>
    %cst_216 = arith.constant dense<0.000000e+00> : vector<2x50xf32>
    %574 = tpu.matmul %536, %101, %cst_216 {dimension_numbers = #tpu.dot_dimension_numbers<[1], [0], [0], [1], [0, 0, 1, 1], [], []>} : vector<2x50xf32>, vector<50x50xf32>, vector<2x50xf32> -> vector<2x50xf32>
    %575 = arith.addf %573, %574 : vector<2x50xf32>
    %576 = vector.extract_strided_slice %95 {offsets = [14, 0], sizes = [2, 50], strides = [1, 1]} : vector<16x50xf32> to vector<2x50xf32>
    %cst_217 = arith.constant dense<0.000000e+00> : vector<2x50xf32>
    %577 = tpu.matmul %536, %103, %cst_217 {dimension_numbers = #tpu.dot_dimension_numbers<[1], [0], [0], [1], [0, 0, 1, 1], [], []>} : vector<2x50xf32>, vector<50x50xf32>, vector<2x50xf32> -> vector<2x50xf32>
    %578 = arith.addf %576, %577 : vector<2x50xf32>
    %579 = arith.negf %572 : vector<2x50xf32>
    %580 = math.exp %579 : vector<2x50xf32>
    %cst_218 = arith.constant 1.000000e+00 : f32
    %581 = vector.broadcast %cst_218 : f32 to vector<2x50xf32>
    %582 = arith.addf %581, %580 : vector<2x50xf32>
    %583 = arith.divf %581, %582 : vector<2x50xf32>
    %584 = arith.mulf %583, %529 : vector<2x50xf32>
    %585 = arith.negf %569 : vector<2x50xf32>
    %586 = math.exp %585 : vector<2x50xf32>
    %cst_219 = arith.constant 1.000000e+00 : f32
    %587 = vector.broadcast %cst_219 : f32 to vector<2x50xf32>
    %588 = arith.addf %587, %586 : vector<2x50xf32>
    %589 = arith.divf %587, %588 : vector<2x50xf32>
    %590 = math.tanh %575 : vector<2x50xf32>
    %591 = arith.mulf %589, %590 : vector<2x50xf32>
    %592 = arith.addf %584, %591 : vector<2x50xf32>
    %593 = arith.negf %578 : vector<2x50xf32>
    %594 = math.exp %593 : vector<2x50xf32>
    %cst_220 = arith.constant 1.000000e+00 : f32
    %595 = vector.broadcast %cst_220 : f32 to vector<2x50xf32>
    %596 = arith.addf %595, %594 : vector<2x50xf32>
    %597 = arith.divf %595, %596 : vector<2x50xf32>
    %598 = math.tanh %592 : vector<2x50xf32>
    %599 = arith.mulf %597, %598 : vector<2x50xf32>
    %600 = tpu.concatenate %599, %566 in 1 : vector<2x50xf32>, vector<2x50xf32> -> vector<2x100xf32>
    %cst_221 = arith.constant dense<0.000000e+00> : vector<2x50xf32>
    %601 = tpu.matmul %600, %105, %cst_221 {dimension_numbers = #tpu.dot_dimension_numbers<[1], [0], [0], [1], [0, 0, 1, 1], [], []>} : vector<2x100xf32>, vector<100x50xf32>, vector<2x50xf32> -> vector<2x50xf32>
    %602 = arith.addf %601, %113 : vector<2x50xf32>
    %cst_222 = arith.constant dense<0.000000e+00> : vector<2x50xf32>
    %603 = tpu.matmul %600, %107, %cst_222 {dimension_numbers = #tpu.dot_dimension_numbers<[1], [0], [0], [1], [0, 0, 1, 1], [], []>} : vector<2x100xf32>, vector<100x50xf32>, vector<2x50xf32> -> vector<2x50xf32>
    %604 = arith.addf %603, %115 : vector<2x50xf32>
    %cst_223 = arith.constant dense<0.000000e+00> : vector<2x50xf32>
    %605 = tpu.matmul %600, %109, %cst_223 {dimension_numbers = #tpu.dot_dimension_numbers<[1], [0], [0], [1], [0, 0, 1, 1], [], []>} : vector<2x100xf32>, vector<100x50xf32>, vector<2x50xf32> -> vector<2x50xf32>
    %606 = arith.addf %605, %117 : vector<2x50xf32>
    %cst_224 = arith.constant dense<0.000000e+00> : vector<2x50xf32>
    %607 = tpu.matmul %600, %111, %cst_224 {dimension_numbers = #tpu.dot_dimension_numbers<[1], [0], [0], [1], [0, 0, 1, 1], [], []>} : vector<2x100xf32>, vector<100x50xf32>, vector<2x50xf32> -> vector<2x50xf32>
    %608 = arith.addf %607, %119 : vector<2x50xf32>
    %609 = arith.negf %604 : vector<2x50xf32>
    %610 = math.exp %609 : vector<2x50xf32>
    %cst_225 = arith.constant 1.000000e+00 : f32
    %611 = vector.broadcast %cst_225 : f32 to vector<2x50xf32>
    %612 = arith.addf %611, %610 : vector<2x50xf32>
    %613 = arith.divf %611, %612 : vector<2x50xf32>
    %614 = arith.mulf %613, %559 : vector<2x50xf32>
    %615 = arith.negf %602 : vector<2x50xf32>
    %616 = math.exp %615 : vector<2x50xf32>
    %cst_226 = arith.constant 1.000000e+00 : f32
    %617 = vector.broadcast %cst_226 : f32 to vector<2x50xf32>
    %618 = arith.addf %617, %616 : vector<2x50xf32>
    %619 = arith.divf %617, %618 : vector<2x50xf32>
    %620 = math.tanh %606 : vector<2x50xf32>
    %621 = arith.mulf %619, %620 : vector<2x50xf32>
    %622 = arith.addf %614, %621 : vector<2x50xf32>
    %623 = arith.negf %608 : vector<2x50xf32>
    %624 = math.exp %623 : vector<2x50xf32>
    %cst_227 = arith.constant 1.000000e+00 : f32
    %625 = vector.broadcast %cst_227 : f32 to vector<2x50xf32>
    %626 = arith.addf %625, %624 : vector<2x50xf32>
    %627 = arith.divf %625, %626 : vector<2x50xf32>
    %628 = math.tanh %622 : vector<2x50xf32>
    %629 = arith.mulf %627, %628 : vector<2x50xf32>
    %cst_228 = arith.constant dense<0.000000e+00> : vector<2x21xf32>
    %630 = tpu.matmul %629, %120, %cst_228 {dimension_numbers = #tpu.dot_dimension_numbers<[1], [0], [0], [1], [0, 0, 1, 1], [], []>} : vector<2x50xf32>, vector<50x21xf32>, vector<2x21xf32> -> vector<2x21xf32>
    %631 = vector.broadcast %121 : vector<1x21xf32> to vector<2x21xf32>
    %632 = arith.addf %630, %631 : vector<2x21xf32>
    %cst_229 = arith.constant dense<0xFF800000> : vector<2xf32>
    %633 = vector.multi_reduction <maximumf>, %632, %cst_229 [1] : vector<2x21xf32> to vector<2xf32>
    %634 = vector.shape_cast %633 : vector<2xf32> to vector<2x1xf32>
    %635 = vector.broadcast %634 : vector<2x1xf32> to vector<2x21xf32>
    %636 = arith.subf %632, %635 : vector<2x21xf32>
    %637 = math.exp %636 : vector<2x21xf32>
    %cst_230 = arith.constant dense<0.000000e+00> : vector<2xf32>
    %638 = vector.multi_reduction <add>, %637, %cst_230 [1] : vector<2x21xf32> to vector<2xf32>
    %639 = vector.shape_cast %638 : vector<2xf32> to vector<2x1xf32>
    %640 = math.log %639 : vector<2x1xf32>
    %641 = arith.addf %640, %634 : vector<2x1xf32>
    %642 = vector.broadcast %641 : vector<2x1xf32> to vector<2x21xf32>
    %643 = arith.subf %632, %642 : vector<2x21xf32>
    %c0_231 = arith.constant 0 : index
    %c0_232 = arith.constant 0 : index
    %644 = vector.load %arg18[%c0_231, %c0_232] : memref<2x21xf32, #tpu.memory_space<vmem>>, vector<2x21xf32>
    tpu.vector_store %arg18[%c0_231, %c0_232], %643 {strides = array<i32>} : memref<2x21xf32, #tpu.memory_space<vmem>>, vector<2x21xf32>,
    return
  }
}

</mosaic_0001>

<llo_original>
// kernel: biocnn_lstm_forward.1
$region0: #{biocnn_lstm_forward.1}
  #allocation0 [shape = 'u32[]', space=smem, size = 0x4, offset = 0x4, fixed_abs, tag = 'smem constant byte address 0x4 - core index']
  #allocation1 [shape = 'u32[144,128]{1,0:T(1,128)}', space=vmem, size = 0x12000, scoped, tag = 'internal scratch']
  %s0 = inlined_call_operand.vmem [shape: f32[576,9], index: 0, kind: input, shape index: {}]
  %s1 = inlined_call_operand.vmem [shape: f32[9,32], index: 1, kind: input, shape index: {}]
  %s2 = inlined_call_operand.vmem [shape: f32[1,32], index: 2, kind: input, shape index: {}]
  %s3 = inlined_call_operand.vmem [shape: f32[288,64], index: 3, kind: input, shape index: {}]
  %s4 = inlined_call_operand.vmem [shape: f32[1,64], index: 4, kind: input, shape index: {}]
  %s5 = inlined_call_operand.vmem [shape: f32[256,18], index: 5, kind: input, shape index: {}]
  %s6 = inlined_call_operand.vmem [shape: f32[1,18], index: 6, kind: input, shape index: {}]
  %s7 = inlined_call_operand.vmem [shape: f32[4,18,50], index: 7, kind: input, shape index: {}]
  %s8 = inlined_call_operand.vmem [shape: f32[4,50,50], index: 8, kind: input, shape index: {}]
  %s9 = inlined_call_operand.vmem [shape: f32[4,1,50], index: 9, kind: input, shape index: {}]
  %s10 = inlined_call_operand.vmem [shape: f32[4,100,50], index: 10, kind: input, shape index: {}]
  %s11 = inlined_call_operand.vmem [shape: f32[4,2,50], index: 11, kind: input, shape index: {}]
  %s12 = inlined_call_operand.vmem [shape: f32[50,21], index: 12, kind: input, shape index: {}]
  %s13 = inlined_call_operand.vmem [shape: f32[1,21], index: 13, kind: input, shape index: {}]
  %s14 = inlined_call_operand.vmem [shape: f32[2,50], index: 14, kind: input, shape index: {}]
  %s15 = inlined_call_operand.vmem [shape: f32[2,50], index: 15, kind: input, shape index: {}]
  %s16 = inlined_call_operand.vmem [shape: f32[2,50], index: 16, kind: input, shape index: {}]
  %s17 = inlined_call_operand.vmem [shape: f32[2,50], index: 17, kind: input, shape index: {}]
  %s18 = inlined_call_operand.hbm [shape: f32[2,21], index: 18, kind: output, shape index: {}]
  %s19 = sld [smem:[#allocation0]]
  $region82: #{biocnn_lstm_forward.1} parent=0
    _
  %s21 = ssub.s32 1, %s19
  %s22 = scalar_select 0, %s21, %s19
  $region1: #{biocnn_lstm_forward.1} parent=0
    #allocation2 [shape = 'u8[1024]{0}', space=vmem, size = 0x400, scoped, tag = 'output window, operand 0, single buffered']
    #allocation3 [shape = 's32[1]{0}', space=sflag, size = 0x4, scoped, tag = 'scoped memory for biocnn_lstm_forward.1']
    %23 = vsyncpa [#allocation3], 0
    // Predicated region
    $region2: #{biocnn_lstm_forward.1} parent=1 // pred_check
      _
    $region3: #{biocnn_lstm_forward.1} parent=1 // pred_check_branch
      %25 = sbr.rel (0) target = $region5
    $region4: #{biocnn_lstm_forward.1} parent=1 // pred_region
      _
    $region5: #{biocnn_lstm_forward.1} parent=1 // pred_fallthru
      _
    // Predicated region
    $region6: #{biocnn_lstm_forward.1} parent=1 // pred_check
      _
    $region7: #{biocnn_lstm_forward.1} parent=1 // pred_check_branch
      %27 = sbr.rel (0) target = $region9
    $region8: #{biocnn_lstm_forward.1} parent=1 // pred_region
      _
    $region9: #{biocnn_lstm_forward.1} parent=1 // pred_fallthru
      _
    // Predicated region
    $region10: #{biocnn_lstm_forward.1} parent=1 // pred_check
      _
    $region11: #{biocnn_lstm_forward.1} parent=1 // pred_check_branch
      %29 = sbr.rel (0) target = $region13
    $region12: #{biocnn_lstm_forward.1} parent=1 // pred_region
      _
    $region13: #{biocnn_lstm_forward.1} parent=1 // pred_fallthru
      _
    // Predicated region
    $region14: #{biocnn_lstm_forward.1} parent=1 // pred_check
      _
    $region15: #{biocnn_lstm_forward.1} parent=1 // pred_check_branch
      %31 = sbr.rel (0) target = $region17
    $region16: #{biocnn_lstm_forward.1} parent=1 // pred_region
      _
    $region17: #{biocnn_lstm_forward.1} parent=1 // pred_fallthru
      _
    // Predicated region
    $region18: #{biocnn_lstm_forward.1} parent=1 // pred_check
      _
    $region19: #{biocnn_lstm_forward.1} parent=1 // pred_check_branch
      %33 = sbr.rel (0) target = $region21
    $region20: #{biocnn_lstm_forward.1} parent=1 // pred_region
      _
    $region21: #{biocnn_lstm_forward.1} parent=1 // pred_fallthru
      _
    // Predicated region
    $region22: #{biocnn_lstm_forward.1} parent=1 // pred_check
      _
    $region23: #{biocnn_lstm_forward.1} parent=1 // pred_check_branch
      %35 = sbr.rel (0) target = $region25
    $region24: #{biocnn_lstm_forward.1} parent=1 // pred_region
      _
    $region25: #{biocnn_lstm_forward.1} parent=1 // pred_fallthru
      _
    // Predicated region
    $region26: #{biocnn_lstm_forward.1} parent=1 // pred_check
      _
    $region27: #{biocnn_lstm_forward.1} parent=1 // pred_check_branch
      %37 = sbr.rel (0) target = $region29
    $region28: #{biocnn_lstm_forward.1} parent=1 // pred_region
      _
    $region29: #{biocnn_lstm_forward.1} parent=1 // pred_fallthru
      _
    // Predicated region
    $region30: #{biocnn_lstm_forward.1} parent=1 // pred_check
      _
    $region31: #{biocnn_lstm_forward.1} parent=1 // pred_check_branch
      %39 = sbr.rel (0) target = $region33
    $region32: #{biocnn_lstm_forward.1} parent=1 // pred_region
      _
    $region33: #{biocnn_lstm_forward.1} parent=1 // pred_fallthru
      _
    // Predicated region
    $region34: #{biocnn_lstm_forward.1} parent=1 // pred_check
      _
    $region35: #{biocnn_lstm_forward.1} parent=1 // pred_check_branch
      %41 = sbr.rel (0) target = $region37
    $region36: #{biocnn_lstm_forward.1} parent=1 // pred_region
      _
    $region37: #{biocnn_lstm_forward.1} parent=1 // pred_fallthru
      _
    // Predicated region
    $region38: #{biocnn_lstm_forward.1} parent=1 // pred_check
      _
    $region39: #{biocnn_lstm_forward.1} parent=1 // pred_check_branch
      %43 = sbr.rel (0) target = $region41
    $region40: #{biocnn_lstm_forward.1} parent=1 // pred_region
      _
    $region41: #{biocnn_lstm_forward.1} parent=1 // pred_fallthru
      _
    // Predicated region
    $region42: #{biocnn_lstm_forward.1} parent=1 // pred_check
      _
    $region43: #{biocnn_lstm_forward.1} parent=1 // pred_check_branch
      %45 = sbr.rel (0) target = $region45
    $region44: #{biocnn_lstm_forward.1} parent=1 // pred_region
      _
    $region45: #{biocnn_lstm_forward.1} parent=1 // pred_fallthru
      _
    // Predicated region
    $region46: #{biocnn_lstm_forward.1} parent=1 // pred_check
      _
    $region47: #{biocnn_lstm_forward.1} parent=1 // pred_check_branch
      %47 = sbr.rel (0) target = $region49
    $region48: #{biocnn_lstm_forward.1} parent=1 // pred_region
      _
    $region49: #{biocnn_lstm_forward.1} parent=1 // pred_fallthru
      _
    // Predicated region
    $region50: #{biocnn_lstm_forward.1} parent=1 // pred_check
      _
    $region51: #{biocnn_lstm_forward.1} parent=1 // pred_check_branch
      %49 = sbr.rel (0) target = $region53
    $region52: #{biocnn_lstm_forward.1} parent=1 // pred_region
      _
    $region53: #{biocnn_lstm_forward.1} parent=1 // pred_fallthru
      _
    // Predicated region
    $region54: #{biocnn_lstm_forward.1} parent=1 // pred_check
      _
    $region55: #{biocnn_lstm_forward.1} parent=1 // pred_check_branch
      %51 = sbr.rel (0) target = $region57
    $region56: #{biocnn_lstm_forward.1} parent=1 // pred_region
      _
    $region57: #{biocnn_lstm_forward.1} parent=1 // pred_fallthru
      _
    // Predicated region
    $region58: #{biocnn_lstm_forward.1} parent=1 // pred_check
      _
    $region59: #{biocnn_lstm_forward.1} parent=1 // pred_check_branch
      %53 = sbr.rel (0) target = $region61
    $region60: #{biocnn_lstm_forward.1} parent=1 // pred_region
      _
    $region61: #{biocnn_lstm_forward.1} parent=1 // pred_fallthru
      _
    // Predicated region
    $region62: #{biocnn_lstm_forward.1} parent=1 // pred_check
      _
    $region63: #{biocnn_lstm_forward.1} parent=1 // pred_check_branch
      %55 = sbr.rel (0) target = $region65
    $region64: #{biocnn_lstm_forward.1} parent=1 // pred_region
      _
    $region65: #{biocnn_lstm_forward.1} parent=1 // pred_fallthru
      _
    // Predicated region
    $region66: #{biocnn_lstm_forward.1} parent=1 // pred_check
      _
    $region67: #{biocnn_lstm_forward.1} parent=1 // pred_check_branch
      %57 = sbr.rel (0) target = $region69
    $region68: #{biocnn_lstm_forward.1} parent=1 // pred_region
      _
    $region69: #{biocnn_lstm_forward.1} parent=1 // pred_fallthru
      _
    // Predicated region
    $region70: #{biocnn_lstm_forward.1} parent=1 // pred_check
      _
    $region71: #{biocnn_lstm_forward.1} parent=1 // pred_check_branch
      %59 = sbr.rel (0) target = $region73
    $region72: #{biocnn_lstm_forward.1} parent=1 // pred_region
      _
    $region73: #{biocnn_lstm_forward.1} parent=1 // pred_fallthru
      _
    %v60 = vld [vmem:[%s0] sm:$0xff]
    %v61 = vld [vmem:[%s0 + $0x8] sm:$0xff]
    %v62 = vld [vmem:[%s0 + $0x10] sm:$0xff]
    %v63 = vld [vmem:[%s0 + $0x18] sm:$0xff]
    %v64 = vld [vmem:[%s0 + $0x20] sm:$0xff]
    %v65 = vld [vmem:[%s0 + $0x28] sm:$0xff]
    %v66 = vld [vmem:[%s0 + $0x30] sm:$0xff]
    %v67 = vld [vmem:[%s0 + $0x38] sm:$0xff]
    %v68 = vld [vmem:[%s0 + $0x40] sm:$0xff]
    %v69 = vld [vmem:[%s0 + $0x48] sm:$0xff]
    %v70 = vld [vmem:[%s0 + $0x50] sm:$0xff]
    %v71 = vld [vmem:[%s0 + $0x58] sm:$0xff]
    %v72 = vld [vmem:[%s0 + $0x60] sm:$0xff]
    %v73 = vld [vmem:[%s0 + $0x68] sm:$0xff]
    %v74 = vld [vmem:[%s0 + $0x70] sm:$0xff]
    %v75 = vld [vmem:[%s0 + $0x78] sm:$0xff]
    %v76 = vld [vmem:[%s0 + $0x80] sm:$0xff]
    %v77 = vld [vmem:[%s0 + $0x88] sm:$0xff]
    %v78 = vld [vmem:[%s0 + $0x90] sm:$0xff]
    %v79 = vld [vmem:[%s0 + $0x98] sm:$0xff]
    %v80 = vld [vmem:[%s0 + $0xa0] sm:$0xff]
    %v81 = vld [vmem:[%s0 + $0xa8] sm:$0xff]
    %v82 = vld [vmem:[%s0 + $0xb0] sm:$0xff]
    %v83 = vld [vmem:[%s0 + $0xb8] sm:$0xff]
    %v84 = vld [vmem:[%s0 + $0xc0] sm:$0xff]
    %v85 = vld [vmem:[%s0 + $0xc8] sm:$0xff]
    %v86 = vld [vmem:[%s0 + $0xd0] sm:$0xff]
    %v87 = vld [vmem:[%s0 + $0xd8] sm:$0xff]
    %v88 = vld [vmem:[%s0 + $0xe0] sm:$0xff]
    %v89 = vld [vmem:[%s0 + $0xe8] sm:$0xff]
    %v90 = vld [vmem:[%s0 + $0xf0] sm:$0xff]
    %v91 = vld [vmem:[%s0 + $0xf8] sm:$0xff]
    %v92 = vld [vmem:[%s0 + $0x100] sm:$0xff]
    %v93 = vld [vmem:[%s0 + $0x108] sm:$0xff]
    %v94 = vld [vmem:[%s0 + $0x110] sm:$0xff]
    %v95 = vld [vmem:[%s0 + $0x118] sm:$0xff]
    %v96 = vld [vmem:[%s0 + $0x120] sm:$0xff]
    %v97 = vld [vmem:[%s0 + $0x128] sm:$0xff]
    %v98 = vld [vmem:[%s0 + $0x130] sm:$0xff]
    %v99 = vld [vmem:[%s0 + $0x138] sm:$0xff]
    %v100 = vld [vmem:[%s0 + $0x140] sm:$0xff]
    %v101 = vld [vmem:[%s0 + $0x148] sm:$0xff]
    %v102 = vld [vmem:[%s0 + $0x150] sm:$0xff]
    %v103 = vld [vmem:[%s0 + $0x158] sm:$0xff]
    %v104 = vld [vmem:[%s0 + $0x160] sm:$0xff]
    %v105 = vld [vmem:[%s0 + $0x168] sm:$0xff]
    %v106 = vld [vmem:[%s0 + $0x170] sm:$0xff]
    %v107 = vld [vmem:[%s0 + $0x178] sm:$0xff]
    %v108 = vld [vmem:[%s0 + $0x180] sm:$0xff]
    %v109 = vld [vmem:[%s0 + $0x188] sm:$0xff]
    %v110 = vld [vmem:[%s0 + $0x190] sm:$0xff]
    %v111 = vld [vmem:[%s0 + $0x198] sm:$0xff]
    %v112 = vld [vmem:[%s0 + $0x1a0] sm:$0xff]
    %v113 = vld [vmem:[%s0 + $0x1a8] sm:$0xff]
    %v114 = vld [vmem:[%s0 + $0x1b0] sm:$0xff]
    %v115 = vld [vmem:[%s0 + $0x1b8] sm:$0xff]
    %v116 = vld [vmem:[%s0 + $0x1c0] sm:$0xff]
    %v117 = vld [vmem:[%s0 + $0x1c8] sm:$0xff]
    %v118 = vld [vmem:[%s0 + $0x1d0] sm:$0xff]
    %v119 = vld [vmem:[%s0 + $0x1d8] sm:$0xff]
    %v120 = vld [vmem:[%s0 + $0x1e0] sm:$0xff]
    %v121 = vld [vmem:[%s0 + $0x1e8] sm:$0xff]
    %v122 = vld [vmem:[%s0 + $0x1f0] sm:$0xff]
    %v123 = vld [vmem:[%s0 + $0x1f8] sm:$0xff]
    %v124 = vld [vmem:[%s0 + $0x200] sm:$0xff]
    %v125 = vld [vmem:[%s0 + $0x208] sm:$0xff]
    %v126 = vld [vmem:[%s0 + $0x210] sm:$0xff]
    %v127 = vld [vmem:[%s0 + $0x218] sm:$0xff]
    %v128 = vld [vmem:[%s0 + $0x220] sm:$0xff]
    %v129 = vld [vmem:[%s0 + $0x228] sm:$0xff]
    %v130 = vld [vmem:[%s0 + $0x230] sm:$0xff]
    %v131 = vld [vmem:[%s0 + $0x238] sm:$0xff]
    %v132 = vld [vmem:[%s1] sm:$0xff]
    %v133 = vld [vmem:[%s1 + $0x8] sm:$0x1]
    %v134 = vld [vmem:[%s2] sm:$0x1]
    %v136 = vlaneseq
    %v137 = vshrl.u32 %v136, 7
    %v138 = vsub.s32 0, %v137
    %v139 = vrot.slane %v134, %v138
    %vm141 = vcmask 72704
    %v143 = vsel %vm141, %v60, 0
    %v146 = vsel %vm141, %v61, 0
    %v149 = vsel %vm141, %v62, 0
    %v152 = vsel %vm141, %v63, 0
    %v155 = vsel %vm141, %v64, 0
    %v158 = vsel %vm141, %v65, 0
    %v161 = vsel %vm141, %v66, 0
    %v164 = vsel %vm141, %v67, 0
    %v167 = vsel %vm141, %v68, 0
    %v170 = vsel %vm141, %v69, 0
    %v173 = vsel %vm141, %v70, 0
    %v176 = vsel %vm141, %v71, 0
    %v179 = vsel %vm141, %v72, 0
    %v182 = vsel %vm141, %v73, 0
    %v185 = vsel %vm141, %v74, 0
    %v188 = vsel %vm141, %v75, 0
    %v191 = vsel %vm141, %v76, 0
    %v194 = vsel %vm141, %v77, 0
    %v197 = vsel %vm141, %v78, 0
    %v200 = vsel %vm141, %v79, 0
    %v203 = vsel %vm141, %v80, 0
    %v206 = vsel %vm141, %v81, 0
    %v209 = vsel %vm141, %v82, 0
    %v212 = vsel %vm141, %v83, 0
    %v215 = vsel %vm141, %v84, 0
    %v218 = vsel %vm141, %v85, 0
    %v221 = vsel %vm141, %v86, 0
    %v224 = vsel %vm141, %v87, 0
    %v227 = vsel %vm141, %v88, 0
    %v230 = vsel %vm141, %v89, 0
    %v233 = vsel %vm141, %v90, 0
    %v236 = vsel %vm141, %v91, 0
    %v239 = vsel %vm141, %v92, 0
    %v242 = vsel %vm141, %v93, 0
    %v245 = vsel %vm141, %v94, 0
    %v248 = vsel %vm141, %v95, 0
    %v251 = vsel %vm141, %v96, 0
    %v254 = vsel %vm141, %v97, 0
    %v257 = vsel %vm141, %v98, 0
    %v260 = vsel %vm141, %v99, 0
    %v263 = vsel %vm141, %v100, 0
    %v266 = vsel %vm141, %v101, 0
    %v269 = vsel %vm141, %v102, 0
    %v272 = vsel %vm141, %v103, 0
    %v275 = vsel %vm141, %v104, 0
    %v278 = vsel %vm141, %v105, 0
    %v281 = vsel %vm141, %v106, 0
    %v284 = vsel %vm141, %v107, 0
    %v287 = vsel %vm141, %v108, 0
    %v290 = vsel %vm141, %v109, 0
    %v293 = vsel %vm141, %v110, 0
    %v296 = vsel %vm141, %v111, 0
    %v299 = vsel %vm141, %v112, 0
    %v302 = vsel %vm141, %v113, 0
    %v305 = vsel %vm141, %v114, 0
    %v308 = vsel %vm141, %v115, 0
    %v311 = vsel %vm141, %v116, 0
    %v314 = vsel %vm141, %v117, 0
    %v317 = vsel %vm141, %v118, 0
    %v320 = vsel %vm141, %v119, 0
    %v323 = vsel %vm141, %v120, 0
    %v326 = vsel %vm141, %v121, 0
    %v329 = vsel %vm141, %v122, 0
    %v332 = vsel %vm141, %v123, 0
    %v335 = vsel %vm141, %v124, 0
    %v338 = vsel %vm141, %v125, 0
    %v341 = vsel %vm141, %v126, 0
    %v344 = vsel %vm141, %v127, 0
    %v347 = vsel %vm141, %v128, 0
    %v350 = vsel %vm141, %v129, 0
    %v353 = vsel %vm141, %v130, 0
    %v356 = vsel %vm141, %v131, 0
    %vm358 = vcmask 1040384
    %v360 = vsel %vm358, %v133, 0
    %362 = vmatprep.subr.mxu0 0.0
    %363 = vmatpush1.msra.mxu0 %v132
    %364 = vmatprep.subr.mxu0 0.0
    %365 = vmatpush1.msra.mxu0 %v360
    %366 = vmatprep.subr.mxu0 0.0
    %367 = vmatpush1.msra.mxu0 0.0
    %368 = vmatprep.subr.mxu0 0.0
    %369 = vmatpush1.msra.mxu0 0.0
    %370 = vmatprep.subr.mxu0 0.0
    %371 = vmatpush1.msra.mxu0 0.0
    %372 = vmatprep.subr.mxu0 0.0
    %373 = vmatpush1.msra.mxu0 0.0
    %374 = vmatprep.subr.mxu0 0.0
    %375 = vmatpush1.msra.mxu0 0.0
    %376 = vmatprep.subr.mxu0 0.0
    %377 = vmatpush1.msra.mxu0 0.0
    %378 = vmatprep.subr.mxu0 0.0
    %379 = vmatpush1.msra.mxu0 0.0
    %380 = vmatprep.subr.mxu0 0.0
    %381 = vmatpush1.msra.mxu0 0.0
    %382 = vmatprep.subr.mxu0 0.0
    %383 = vmatpush1.msra.mxu0 0.0
    %384 = vmatprep.subr.mxu0 0.0
    %385 = vmatpush1.msra.mxu0 0.0
    %386 = vmatprep.subr.mxu0 0.0
    %387 = vmatpush1.msra.mxu0 0.0
    %388 = vmatprep.subr.mxu0 0.0
    %389 = vmatpush1.msra.mxu0 0.0
    %390 = vmatprep.subr.mxu0 0.0
    %391 = vmatpush1.msra.mxu0 0.0
    %392 = vmatprep.subr.mxu0 0.0
    %393 = vmatpush1.msra.mxu0 0.0
    %394 = vmatprep.subr.mxu0 0.0
    %395 = vmatpush1.msra.mxu0 0.0
    %396 = vmatprep.subr.mxu0 0.0
    %397 = vmatpush1.msra.mxu0 0.0
    %398 = vmatprep.subr.mxu0 0.0
    %399 = vmatpush1.msra.mxu0 0.0
    %400 = vmatprep.subr.mxu0 0.0
    %401 = vmatpush1.msra.mxu0 0.0
    %402 = vmatprep.subr.mxu0 0.0
    %403 = vmatpush1.msra.mxu0 0.0
    %404 = vmatprep.subr.mxu0 0.0
    %405 = vmatpush1.msra.mxu0 0.0
    %406 = vmatprep.subr.mxu0 0.0
    %407 = vmatpush1.msra.mxu0 0.0
    %408 = vmatprep.subr.mxu0 0.0
    %409 = vmatpush1.msra.mxu0 0.0
    %410 = vmatprep.subr.mxu0 0.0
    %411 = vmatpush1.msra.mxu0 0.0
    %412 = vmatprep.subr.mxu0 0.0
    %413 = vmatpush1.msra.mxu0 0.0
    %414 = vmatprep.subr.mxu0 0.0
    %415 = vmatpush1.msra.mxu0 0.0
    %416 = vmatprep.subr.mxu0 0.0
    %417 = vmatpush1.msra.mxu0 0.0
    %418 = vmatprep.subr.mxu0 0.0
    %419 = vmatpush1.msra.mxu0 0.0
    %420 = vmatprep.subr.mxu0 0.0
    %421 = vmatpush1.msra.mxu0 0.0
    %422 = vmatprep.subr.mxu0 0.0
    %423 = vmatpush1.msra.mxu0 0.0
    %424 = vmatprep.subr.mxu0 0.0
    %425 = vmatpush1.msra.mxu0 0.0
    %426 = vmatprep.mubr.f32.mxu0 0.0
    %427 = vmatmul.mubr.f32.gmra.mrb[0].mxu0 %v143
    %v428 = vpop.f32.mrb[0].mxu0
    %v429 = vadd.f32 %v139, %v428
    %v430 = vpop.f32.mrb[0].mxu0
    %431 = vmatprep.mubr.f32.mxu0 0.0
    %432 = vmatmul.mubr.f32.gmra.mrb[0].mxu0 %v146
    %v433 = vpop.f32.mrb[0].mxu0
    %v434 = vadd.f32 %v139, %v433
    %v435 = vpop.f32.mrb[0].mxu0
    %436 = vmatprep.mubr.f32.mxu0 0.0
    %437 = vmatmul.mubr.f32.gmra.mrb[0].mxu0 %v149
    %v438 = vpop.f32.mrb[0].mxu0
    %v439 = vadd.f32 %v139, %v438
    %v440 = vpop.f32.mrb[0].mxu0
    %441 = vmatprep.mubr.f32.mxu0 0.0
    %442 = vmatmul.mubr.f32.gmra.mrb[0].mxu0 %v152
    %v443 = vpop.f32.mrb[0].mxu0
    %v444 = vadd.f32 %v139, %v443
    %v445 = vpop.f32.mrb[0].mxu0
    %446 = vmatprep.mubr.f32.mxu0 0.0
    %447 = vmatmul.mubr.f32.gmra.mrb[0].mxu0 %v155
    %v448 = vpop.f32.mrb[0].mxu0
    %v449 = vadd.f32 %v139, %v448
    %v450 = vpop.f32.mrb[0].mxu0
    %451 = vmatprep.mubr.f32.mxu0 0.0
    %452 = vmatmul.mubr.f32.gmra.mrb[0].mxu0 %v158
    %v453 = vpop.f32.mrb[0].mxu0
    %v454 = vadd.f32 %v139, %v453
    %v455 = vpop.f32.mrb[0].mxu0
    %456 = vmatprep.mubr.f32.mxu0 0.0
    %457 = vmatmul.mubr.f32.gmra.mrb[0].mxu0 %v161
    %v458 = vpop.f32.mrb[0].mxu0
    %v459 = vadd.f32 %v139, %v458
    %v460 = vpop.f32.mrb[0].mxu0
    %461 = vmatprep.mubr.f32.mxu0 0.0
    %462 = vmatmul.mubr.f32.gmra.mrb[0].mxu0 %v164
    %v463 = vpop.f32.mrb[0].mxu0
    %v464 = vadd.f32 %v139, %v463
    %v465 = vpop.f32.mrb[0].mxu0
    %466 = vmatprep.mubr.f32.mxu0 0.0
    %467 = vmatmul.mubr.f32.gmra.mrb[0].mxu0 %v167
    %v468 = vpop.f32.mrb[0].mxu0
    %v469 = vadd.f32 %v139, %v468
    %v470 = vpop.f32.mrb[0].mxu0
    %471 = vmatprep.mubr.f32.mxu0 0.0
    %472 = vmatmul.mubr.f32.gmra.mrb[0].mxu0 %v170
    %v473 = vpop.f32.mrb[0].mxu0
    %v474 = vadd.f32 %v139, %v473
    %v475 = vpop.f32.mrb[0].mxu0
    %476 = vmatprep.mubr.f32.mxu0 0.0
    %477 = vmatmul.mubr.f32.gmra.mrb[0].mxu0 %v173
    %v478 = vpop.f32.mrb[0].mxu0
    %v479 = vadd.f32 %v139, %v478
    %v480 = vpop.f32.mrb[0].mxu0
    %481 = vmatprep.mubr.f32.mxu0 0.0
    %482 = vmatmul.mubr.f32.gmra.mrb[0].mxu0 %v176
    %v483 = vpop.f32.mrb[0].mxu0
    %v484 = vadd.f32 %v139, %v483
    %v485 = vpop.f32.mrb[0].mxu0
    %486 = vmatprep.mubr.f32.mxu0 0.0
    %487 = vmatmul.mubr.f32.gmra.mrb[0].mxu0 %v179
    %v488 = vpop.f32.mrb[0].mxu0
    %v489 = vadd.f32 %v139, %v488
    %v490 = vpop.f32.mrb[0].mxu0
    %491 = vmatprep.mubr.f32.mxu0 0.0
    %492 = vmatmul.mubr.f32.gmra.mrb[0].mxu0 %v182
    %v493 = vpop.f32.mrb[0].mxu0
    %v494 = vadd.f32 %v139, %v493
    %v495 = vpop.f32.mrb[0].mxu0
    %496 = vmatprep.mubr.f32.mxu0 0.0
    %497 = vmatmul.mubr.f32.gmra.mrb[0].mxu0 %v185
    %v498 = vpop.f32.mrb[0].mxu0
    %v499 = vadd.f32 %v139, %v498
    %v500 = vpop.f32.mrb[0].mxu0
    %501 = vmatprep.mubr.f32.mxu0 0.0
    %502 = vmatmul.mubr.f32.gmra.mrb[0].mxu0 %v188
    %v503 = vpop.f32.mrb[0].mxu0
    %v504 = vadd.f32 %v139, %v503
    %v505 = vpop.f32.mrb[0].mxu0
    %506 = vmatprep.mubr.f32.mxu0 0.0
    %507 = vmatmul.mubr.f32.gmra.mrb[0].mxu0 %v191
    %v508 = vpop.f32.mrb[0].mxu0
    %v509 = vadd.f32 %v139, %v508
    %v510 = vpop.f32.mrb[0].mxu0
    %511 = vmatprep.mubr.f32.mxu0 0.0
    %512 = vmatmul.mubr.f32.gmra.mrb[0].mxu0 %v194
    %v513 = vpop.f32.mrb[0].mxu0
    %v514 = vadd.f32 %v139, %v513
    %v515 = vpop.f32.mrb[0].mxu0
    %516 = vmatprep.mubr.f32.mxu0 0.0
    %517 = vmatmul.mubr.f32.gmra.mrb[0].mxu0 %v197
    %v518 = vpop.f32.mrb[0].mxu0
    %v519 = vadd.f32 %v139, %v518
    %v520 = vpop.f32.mrb[0].mxu0
    %521 = vmatprep.mubr.f32.mxu0 0.0
    %522 = vmatmul.mubr.f32.gmra.mrb[0].mxu0 %v200
    %v523 = vpop.f32.mrb[0].mxu0
    %v524 = vadd.f32 %v139, %v523
    %v525 = vpop.f32.mrb[0].mxu0
    %526 = vmatprep.mubr.f32.mxu0 0.0
    %527 = vmatmul.mubr.f32.gmra.mrb[0].mxu0 %v203
    %v528 = vpop.f32.mrb[0].mxu0
    %v529 = vadd.f32 %v139, %v528
    %v530 = vpop.f32.mrb[0].mxu0
    %531 = vmatprep.mubr.f32.mxu0 0.0
    %532 = vmatmul.mubr.f32.gmra.mrb[0].mxu0 %v206
    %v533 = vpop.f32.mrb[0].mxu0
    %v534 = vadd.f32 %v139, %v533
    %v535 = vpop.f32.mrb[0].mxu0
    %536 = vmatprep.mubr.f32.mxu0 0.0
    %537 = vmatmul.mubr.f32.gmra.mrb[0].mxu0 %v209
    %v538 = vpop.f32.mrb[0].mxu0
    %v539 = vadd.f32 %v139, %v538
    %v540 = vpop.f32.mrb[0].mxu0
    %541 = vmatprep.mubr.f32.mxu0 0.0
    %542 = vmatmul.mubr.f32.gmra.mrb[0].mxu0 %v212
    %v543 = vpop.f32.mrb[0].mxu0
    %v544 = vadd.f32 %v139, %v543
    %v545 = vpop.f32.mrb[0].mxu0
    %546 = vmatprep.mubr.f32.mxu0 0.0
    %547 = vmatmul.mubr.f32.gmra.mrb[0].mxu0 %v215
    %v548 = vpop.f32.mrb[0].mxu0
    %v549 = vadd.f32 %v139, %v548
    %v550 = vpop.f32.mrb[0].mxu0
    %551 = vmatprep.mubr.f32.mxu0 0.0
    %552 = vmatmul.mubr.f32.gmra.mrb[0].mxu0 %v218
    %v553 = vpop.f32.mrb[0].mxu0
    %v554 = vadd.f32 %v139, %v553
    %v555 = vpop.f32.mrb[0].mxu0
    %556 = vmatprep.mubr.f32.mxu0 0.0
    %557 = vmatmul.mubr.f32.gmra.mrb[0].mxu0 %v221
    %v558 = vpop.f32.mrb[0].mxu0
    %v559 = vadd.f32 %v139, %v558
    %v560 = vpop.f32.mrb[0].mxu0
    %561 = vmatprep.mubr.f32.mxu0 0.0
    %562 = vmatmul.mubr.f32.gmra.mrb[0].mxu0 %v224
    %v563 = vpop.f32.mrb[0].mxu0
    %v564 = vadd.f32 %v139, %v563
    %v565 = vpop.f32.mrb[0].mxu0
    %566 = vmatprep.mubr.f32.mxu0 0.0
    %567 = vmatmul.mubr.f32.gmra.mrb[0].mxu0 %v227
    %v568 = vpop.f32.mrb[0].mxu0
    %v569 = vadd.f32 %v139, %v568
    %v570 = vpop.f32.mrb[0].mxu0
    %571 = vmatprep.mubr.f32.mxu0 0.0
    %572 = vmatmul.mubr.f32.gmra.mrb[0].mxu0 %v230
    %v573 = vpop.f32.mrb[0].mxu0
    %v574 = vadd.f32 %v139, %v573
    %v575 = vpop.f32.mrb[0].mxu0
    %576 = vmatprep.mubr.f32.mxu0 0.0
    %577 = vmatmul.mubr.f32.gmra.mrb[0].mxu0 %v233
    %v578 = vpop.f32.mrb[0].mxu0
    %v579 = vadd.f32 %v139, %v578
    %v580 = vpop.f32.mrb[0].mxu0
    %581 = vmatprep.mubr.f32.mxu0 0.0
    %582 = vmatmul.mubr.f32.gmra.mrb[0].mxu0 %v236
    %v583 = vpop.f32.mrb[0].mxu0
    %v584 = vadd.f32 %v139, %v583
    %v585 = vpop.f32.mrb[0].mxu0
    %586 = vmatprep.mubr.f32.mxu0 0.0
    %587 = vmatmul.mubr.f32.gmra.mrb[0].mxu0 %v239
    %v588 = vpop.f32.mrb[0].mxu0
    %v589 = vadd.f32 %v139, %v588
    %v590 = vpop.f32.mrb[0].mxu0
    %591 = vmatprep.mubr.f32.mxu0 0.0
    %592 = vmatmul.mubr.f32.gmra.mrb[0].mxu0 %v242
    %v593 = vpop.f32.mrb[0].mxu0
    %v594 = vadd.f32 %v139, %v593
    %v595 = vpop.f32.mrb[0].mxu0
    %596 = vmatprep.mubr.f32.mxu0 0.0
    %597 = vmatmul.mubr.f32.gmra.mrb[0].mxu0 %v245
    %v598 = vpop.f32.mrb[0].mxu0
    %v599 = vadd.f32 %v139, %v598
    %v600 = vpop.f32.mrb[0].mxu0
    %601 = vmatprep.mubr.f32.mxu0 0.0
    %602 = vmatmul.mubr.f32.gmra.mrb[0].mxu0 %v248
    %v603 = vpop.f32.mrb[0].mxu0
    %v604 = vadd.f32 %v139, %v603
    %v605 = vpop.f32.mrb[0].mxu0
    %606 = vmatprep.mubr.f32.mxu0 0.0
    %607 = vmatmul.mubr.f32.gmra.mrb[0].mxu0 %v251
    %v608 = vpop.f32.mrb[0].mxu0
    %v609 = vadd.f32 %v139, %v608
    %v610 = vpop.f32.mrb[0].mxu0
    %611 = vmatprep.mubr.f32.mxu0 0.0
    %612 = vmatmul.mubr.f32.gmra.mrb[0].mxu0 %v254
    %v613 = vpop.f32.mrb[0].mxu0
    %v614 = vadd.f32 %v139, %v613
    %v615 = vpop.f32.mrb[0].mxu0
    %616 = vmatprep.mubr.f32.mxu0 0.0
    %617 = vmatmul.mubr.f32.gmra.mrb[0].mxu0 %v257
    %v618 = vpop.f32.mrb[0].mxu0
    %v619 = vadd.f32 %v139, %v618
    %v620 = vpop.f32.mrb[0].mxu0
    %621 = vmatprep.mubr.f32.mxu0 0.0
    %622 = vmatmul.mubr.f32.gmra.mrb[0].mxu0 %v260
    %v623 = vpop.f32.mrb[0].mxu0
    %v624 = vadd.f32 %v139, %v623
    %v625 = vpop.f32.mrb[0].mxu0
    %626 = vmatprep.mubr.f32.mxu0 0.0
    %627 = vmatmul.mubr.f32.gmra.mrb[0].mxu0 %v263
    %v628 = vpop.f32.mrb[0].mxu0
    %v629 = vadd.f32 %v139, %v628
    %v630 = vpop.f32.mrb[0].mxu0
    %631 = vmatprep.mubr.f32.mxu0 0.0
    %632 = vmatmul.mubr.f32.gmra.mrb[0].mxu0 %v266
    %v633 = vpop.f32.mrb[0].mxu0
    %v634 = vadd.f32 %v139, %v633
    %v635 = vpop.f32.mrb[0].mxu0
    %636 = vmatprep.mubr.f32.mxu0 0.0
    %637 = vmatmul.mubr.f32.gmra.mrb[0].mxu0 %v269
    %v638 = vpop.f32.mrb[0].mxu0
    %v639 = vadd.f32 %v139, %v638
    %v640 = vpop.f32.mrb[0].mxu0
    %641 = vmatprep.mubr.f32.mxu0 0.0
    %642 = vmatmul.mubr.f32.gmra.mrb[0].mxu0 %v272
    %v643 = vpop.f32.mrb[0].mxu0
    %v644 = vadd.f32 %v139, %v643
    %v645 = vpop.f32.mrb[0].mxu0
    %646 = vmatprep.mubr.f32.mxu0 0.0
    %647 = vmatmul.mubr.f32.gmra.mrb[0].mxu0 %v275
    %v648 = vpop.f32.mrb[0].mxu0
    %v649 = vadd.f32 %v139, %v648
    %v650 = vpop.f32.mrb[0].mxu0
    %651 = vmatprep.mubr.f32.mxu0 0.0
    %652 = vmatmul.mubr.f32.gmra.mrb[0].mxu0 %v278
    %v653 = vpop.f32.mrb[0].mxu0
    %v654 = vadd.f32 %v139, %v653
    %v655 = vpop.f32.mrb[0].mxu0
    %656 = vmatprep.mubr.f32.mxu0 0.0
    %657 = vmatmul.mubr.f32.gmra.mrb[0].mxu0 %v281
    %v658 = vpop.f32.mrb[0].mxu0
    %v659 = vadd.f32 %v139, %v658
    %v660 = vpop.f32.mrb[0].mxu0
    %661 = vmatprep.mubr.f32.mxu0 0.0
    %662 = vmatmul.mubr.f32.gmra.mrb[0].mxu0 %v284
    %v663 = vpop.f32.mrb[0].mxu0
    %v664 = vadd.f32 %v139, %v663
    %v665 = vpop.f32.mrb[0].mxu0
    %666 = vmatprep.mubr.f32.mxu0 0.0
    %667 = vmatmul.mubr.f32.gmra.mrb[0].mxu0 %v287
    %v668 = vpop.f32.mrb[0].mxu0
    %v669 = vadd.f32 %v139, %v668
    %v670 = vpop.f32.mrb[0].mxu0
    %671 = vmatprep.mubr.f32.mxu0 0.0
    %672 = vmatmul.mubr.f32.gmra.mrb[0].mxu0 %v290
    %v673 = vpop.f32.mrb[0].mxu0
    %v674 = vadd.f32 %v139, %v673
    %v675 = vpop.f32.mrb[0].mxu0
    %676 = vmatprep.mubr.f32.mxu0 0.0
    %677 = vmatmul.mubr.f32.gmra.mrb[0].mxu0 %v293
    %v678 = vpop.f32.mrb[0].mxu0
    %v679 = vadd.f32 %v139, %v678
    %v680 = vpop.f32.mrb[0].mxu0
    %681 = vmatprep.mubr.f32.mxu0 0.0
    %682 = vmatmul.mubr.f32.gmra.mrb[0].mxu0 %v296
    %v683 = vpop.f32.mrb[0].mxu0
    %v684 = vadd.f32 %v139, %v683
    %v685 = vpop.f32.mrb[0].mxu0
    %686 = vmatprep.mubr.f32.mxu0 0.0
    %687 = vmatmul.mubr.f32.gmra.mrb[0].mxu0 %v299
    %v688 = vpop.f32.mrb[0].mxu0
    %v689 = vadd.f32 %v139, %v688
    %v690 = vpop.f32.mrb[0].mxu0
    %691 = vmatprep.mubr.f32.mxu0 0.0
    %692 = vmatmul.mubr.f32.gmra.mrb[0].mxu0 %v302
    %v693 = vpop.f32.mrb[0].mxu0
    %v694 = vadd.f32 %v139, %v693
    %v695 = vpop.f32.mrb[0].mxu0
    %696 = vmatprep.mubr.f32.mxu0 0.0
    %697 = vmatmul.mubr.f32.gmra.mrb[0].mxu0 %v305
    %v698 = vpop.f32.mrb[0].mxu0
    %v699 = vadd.f32 %v139, %v698
    %v700 = vpop.f32.mrb[0].mxu0
    %701 = vmatprep.mubr.f32.mxu0 0.0
    %702 = vmatmul.mubr.f32.gmra.mrb[0].mxu0 %v308
    %v703 = vpop.f32.mrb[0].mxu0
    %v704 = vadd.f32 %v139, %v703
    %v705 = vpop.f32.mrb[0].mxu0
    %706 = vmatprep.mubr.f32.mxu0 0.0
    %707 = vmatmul.mubr.f32.gmra.mrb[0].mxu0 %v311
    %v708 = vpop.f32.mrb[0].mxu0
    %v709 = vadd.f32 %v139, %v708
    %v710 = vpop.f32.mrb[0].mxu0
    %711 = vmatprep.mubr.f32.mxu0 0.0
    %712 = vmatmul.mubr.f32.gmra.mrb[0].mxu0 %v314
    %v713 = vpop.f32.mrb[0].mxu0
    %v714 = vadd.f32 %v139, %v713
    %v715 = vpop.f32.mrb[0].mxu0
    %716 = vmatprep.mubr.f32.mxu0 0.0
    %717 = vmatmul.mubr.f32.gmra.mrb[0].mxu0 %v317
    %v718 = vpop.f32.mrb[0].mxu0
    %v719 = vadd.f32 %v139, %v718
    %v720 = vpop.f32.mrb[0].mxu0
    %721 = vmatprep.mubr.f32.mxu0 0.0
    %722 = vmatmul.mubr.f32.gmra.mrb[0].mxu0 %v320
    %v723 = vpop.f32.mrb[0].mxu0
    %v724 = vadd.f32 %v139, %v723
    %v725 = vpop.f32.mrb[0].mxu0
    %726 = vmatprep.mubr.f32.mxu0 0.0
    %727 = vmatmul.mubr.f32.gmra.mrb[0].mxu0 %v323
    %v728 = vpop.f32.mrb[0].mxu0
    %v729 = vadd.f32 %v139, %v728
    %v730 = vpop.f32.mrb[0].mxu0
    %731 = vmatprep.mubr.f32.mxu0 0.0
    %732 = vmatmul.mubr.f32.gmra.mrb[0].mxu0 %v326
    %v733 = vpop.f32.mrb[0].mxu0
    %v734 = vadd.f32 %v139, %v733
    %v735 = vpop.f32.mrb[0].mxu0
    %736 = vmatprep.mubr.f32.mxu0 0.0
    %737 = vmatmul.mubr.f32.gmra.mrb[0].mxu0 %v329
    %v738 = vpop.f32.mrb[0].mxu0
    %v739 = vadd.f32 %v139, %v738
    %v740 = vpop.f32.mrb[0].mxu0
    %741 = vmatprep.mubr.f32.mxu0 0.0
    %742 = vmatmul.mubr.f32.gmra.mrb[0].mxu0 %v332
    %v743 = vpop.f32.mrb[0].mxu0
    %v744 = vadd.f32 %v139, %v743
    %v745 = vpop.f32.mrb[0].mxu0
    %746 = vmatprep.mubr.f32.mxu0 0.0
    %747 = vmatmul.mubr.f32.gmra.mrb[0].mxu0 %v335
    %v748 = vpop.f32.mrb[0].mxu0
    %v749 = vadd.f32 %v139, %v748
    %v750 = vpop.f32.mrb[0].mxu0
    %751 = vmatprep.mubr.f32.mxu0 0.0
    %752 = vmatmul.mubr.f32.gmra.mrb[0].mxu0 %v338
    %v753 = vpop.f32.mrb[0].mxu0
    %v754 = vadd.f32 %v139, %v753
    %v755 = vpop.f32.mrb[0].mxu0
    %756 = vmatprep.mubr.f32.mxu0 0.0
    %757 = vmatmul.mubr.f32.gmra.mrb[0].mxu0 %v341
    %v758 = vpop.f32.mrb[0].mxu0
    %v759 = vadd.f32 %v139, %v758
    %v760 = vpop.f32.mrb[0].mxu0
    %761 = vmatprep.mubr.f32.mxu0 0.0
    %762 = vmatmul.mubr.f32.gmra.mrb[0].mxu0 %v344
    %v763 = vpop.f32.mrb[0].mxu0
    %v764 = vadd.f32 %v139, %v763
    %v765 = vpop.f32.mrb[0].mxu0
    %766 = vmatprep.mubr.f32.mxu0 0.0
    %767 = vmatmul.mubr.f32.gmra.mrb[0].mxu0 %v347
    %v768 = vpop.f32.mrb[0].mxu0
    %v769 = vadd.f32 %v139, %v768
    %v770 = vpop.f32.mrb[0].mxu0
    %771 = vmatprep.mubr.f32.mxu0 0.0
    %772 = vmatmul.mubr.f32.gmra.mrb[0].mxu0 %v350
    %v773 = vpop.f32.mrb[0].mxu0
    %v774 = vadd.f32 %v139, %v773
    %v775 = vpop.f32.mrb[0].mxu0
    %776 = vmatprep.mubr.f32.mxu0 0.0
    %777 = vmatmul.mubr.f32.gmra.mrb[0].mxu0 %v353
    %v778 = vpop.f32.mrb[0].mxu0
    %v779 = vadd.f32 %v139, %v778
    %v780 = vpop.f32.mrb[0].mxu0
    %781 = vmatprep.mubr.f32.mxu0 0.0
    %782 = vmatmul.mubr.f32.gmra.mrb[0].mxu0 %v356
    %v783 = vpop.f32.mrb[0].mxu0
    %v784 = vadd.f32 %v139, %v783
    %v785 = vpop.f32.mrb[0].mxu0
    %786 = vdwg.mxu0
    %v787 = vmax.f32 %v429, 0.0
    %v788 = vmax.f32 %v434, 0.0
    %v789 = vmax.f32 %v439, 0.0
    %v790 = vmax.f32 %v444, 0.0
    %v791 = vmax.f32 %v449, 0.0
    %v792 = vmax.f32 %v454, 0.0
    %v793 = vmax.f32 %v459, 0.0
    %v794 = vmax.f32 %v464, 0.0
    %v795 = vmax.f32 %v469, 0.0
    %v796 = vmax.f32 %v474, 0.0
    %v797 = vmax.f32 %v479, 0.0
    %v798 = vmax.f32 %v484, 0.0
    %v799 = vmax.f32 %v489, 0.0
    %v800 = vmax.f32 %v494, 0.0
    %v801 = vmax.f32 %v499, 0.0
    %v802 = vmax.f32 %v504, 0.0
    %v803 = vmax.f32 %v509, 0.0
    %v804 = vmax.f32 %v514, 0.0
    %v805 = vmax.f32 %v519, 0.0
    %v806 = vmax.f32 %v524, 0.0
    %v807 = vmax.f32 %v529, 0.0
    %v808 = vmax.f32 %v534, 0.0
    %v809 = vmax.f32 %v539, 0.0
    %v810 = vmax.f32 %v544, 0.0
    %v811 = vmax.f32 %v549, 0.0
    %v812 = vmax.f32 %v554, 0.0
    %v813 = vmax.f32 %v559, 0.0
    %v814 = vmax.f32 %v564, 0.0
    %v815 = vmax.f32 %v569, 0.0
    %v816 = vmax.f32 %v574, 0.0
    %v817 = vmax.f32 %v579, 0.0
    %v818 = vmax.f32 %v584, 0.0
    %v819 = vmax.f32 %v589, 0.0
    %v820 = vmax.f32 %v594, 0.0
    %v821 = vmax.f32 %v599, 0.0
    %v822 = vmax.f32 %v604, 0.0
    %v823 = vmax.f32 %v609, 0.0
    %v824 = vmax.f32 %v614, 0.0
    %v825 = vmax.f32 %v619, 0.0
    %v826 = vmax.f32 %v624, 0.0
    %v827 = vmax.f32 %v629, 0.0
    %v828 = vmax.f32 %v634, 0.0
    %v829 = vmax.f32 %v639, 0.0
    %v830 = vmax.f32 %v644, 0.0
    %v831 = vmax.f32 %v649, 0.0
    %v832 = vmax.f32 %v654, 0.0
    %v833 = vmax.f32 %v659, 0.0
    %v834 = vmax.f32 %v664, 0.0
    %v835 = vmax.f32 %v669, 0.0
    %v836 = vmax.f32 %v674, 0.0
    %v837 = vmax.f32 %v679, 0.0
    %v838 = vmax.f32 %v684, 0.0
    %v839 = vmax.f32 %v689, 0.0
    %v840 = vmax.f32 %v694, 0.0
    %v841 = vmax.f32 %v699, 0.0
    %v842 = vmax.f32 %v704, 0.0
    %v843 = vmax.f32 %v709, 0.0
    %v844 = vmax.f32 %v714, 0.0
    %v845 = vmax.f32 %v719, 0.0
    %v846 = vmax.f32 %v724, 0.0
    %v847 = vmax.f32 %v729, 0.0
    %v848 = vmax.f32 %v734, 0.0
    %v849 = vmax.f32 %v739, 0.0
    %v850 = vmax.f32 %v744, 0.0
    %v851 = vmax.f32 %v749, 0.0
    %v852 = vmax.f32 %v754, 0.0
    %v853 = vmax.f32 %v759, 0.0
    %v854 = vmax.f32 %v764, 0.0
    %v855 = vmax.f32 %v769, 0.0
    %v856 = vmax.f32 %v774, 0.0
    %v857 = vmax.f32 %v779, 0.0
    %v858 = vmax.f32 %v784, 0.0
    %v859 = vld [vmem:[%s3] sm:$0xff]
    %v860 = vld [vmem:[%s3 + $0x8] sm:$0xff]
    %v861 = vld [vmem:[%s3 + $0x10] sm:$0xff]
    %v862 = vld [vmem:[%s3 + $0x18] sm:$0xff]
    %v863 = vld [vmem:[%s3 + $0x20] sm:$0xff]
    %v864 = vld [vmem:[%s3 + $0x28] sm:$0xff]
    %v865 = vld [vmem:[%s3 + $0x30] sm:$0xff]
    %v866 = vld [vmem:[%s3 + $0x38] sm:$0xff]
    %vm867 = vcmask 261120
    %v869 = vsel %vm867, %v795, 0
    %v872 = vsel %vm867, %v796, 0
    %v875 = vsel %vm867, %v797, 0
    %v878 = vsel %vm867, %v798, 0
    %v881 = vsel %vm867, %v799, 0
    %v884 = vsel %vm867, %v800, 0
    %v887 = vsel %vm867, %v801, 0
    %v890 = vsel %vm867, %v802, 0
    %892 = vmatprep.subr.mxu0 0.0
    %893 = vmatpush1.msra.mxu0 %v863
    %894 = vmatprep.subr.mxu0 0.0
    %895 = vmatpush1.msra.mxu0 %v864
    %896 = vmatprep.subr.mxu0 0.0
    %897 = vmatpush1.msra.mxu0 %v865
    %898 = vmatprep.subr.mxu0 0.0
    %899 = vmatpush1.msra.mxu0 %v866
    %900 = vmatprep.subr.mxu0 0.0
    %901 = vmatpush1.msra.mxu0 0.0
    %902 = vmatprep.subr.mxu0 0.0
    %903 = vmatpush1.msra.mxu0 0.0
    %904 = vmatprep.subr.mxu0 0.0
    %905 = vmatpush1.msra.mxu0 0.0
    %906 = vmatprep.subr.mxu0 0.0
    %907 = vmatpush1.msra.mxu0 0.0
    %908 = vmatprep.subr.mxu0 0.0
    %909 = vmatpush1.msra.mxu0 0.0
    %910 = vmatprep.subr.mxu0 0.0
    %911 = vmatpush1.msra.mxu0 0.0
    %912 = vmatprep.subr.mxu0 0.0
    %913 = vmatpush1.msra.mxu0 0.0
    %914 = vmatprep.subr.mxu0 0.0
    %915 = vmatpush1.msra.mxu0 0.0
    %916 = vmatprep.subr.mxu0 0.0
    %917 = vmatpush1.msra.mxu0 0.0
    %918 = vmatprep.subr.mxu0 0.0
    %919 = vmatpush1.msra.mxu0 0.0
    %920 = vmatprep.subr.mxu0 0.0
    %921 = vmatpush1.msra.mxu0 0.0
    %922 = vmatprep.subr.mxu0 0.0
    %923 = vmatpush1.msra.mxu0 0.0
    %924 = vmatprep.subr.mxu0 0.0
    %925 = vmatpush1.msra.mxu0 0.0
    %926 = vmatprep.subr.mxu0 0.0
    %927 = vmatpush1.msra.mxu0 0.0
    %928 = vmatprep.subr.mxu0 0.0
    %929 = vmatpush1.msra.mxu0 0.0
    %930 = vmatprep.subr.mxu0 0.0
    %931 = vmatpush1.msra.mxu0 0.0
    %932 = vmatprep.subr.mxu0 0.0
    %933 = vmatpush1.msra.mxu0 0.0
    %934 = vmatprep.subr.mxu0 0.0
    %935 = vmatpush1.msra.mxu0 0.0
    %936 = vmatprep.subr.mxu0 0.0
    %937 = vmatpush1.msra.mxu0 0.0
    %938 = vmatprep.subr.mxu0 0.0
    %939 = vmatpush1.msra.mxu0 0.0
    %940 = vmatprep.subr.mxu0 0.0
    %941 = vmatpush1.msra.mxu0 0.0
    %942 = vmatprep.subr.mxu0 0.0
    %943 = vmatpush1.msra.mxu0 0.0
    %944 = vmatprep.subr.mxu0 0.0
    %945 = vmatpush1.msra.mxu0 0.0
    %946 = vmatprep.subr.mxu0 0.0
    %947 = vmatpush1.msra.mxu0 0.0
    %948 = vmatprep.subr.mxu0 0.0
    %949 = vmatpush1.msra.mxu0 0.0
    %950 = vmatprep.subr.mxu0 0.0
    %951 = vmatpush1.msra.mxu0 0.0
    %952 = vmatprep.subr.mxu0 0.0
    %953 = vmatpush1.msra.mxu0 0.0
    %954 = vmatprep.subr.mxu0 0.0
    %955 = vmatpush1.msra.mxu0 0.0
    %956 = vmatprep.mubr.f32.mxu0 0.0
    %957 = vmatmul.mubr.f32.gmra.mrb[0].mxu0 %v869
    %v958 = vpop.f32.mrb[0].mxu0
    %v959 = vadd.f32 0.0, %v958
    %v960 = vpop.f32.mrb[0].mxu0
    %961 = vmatprep.mubr.f32.mxu0 0.0
    %962 = vmatmul.mubr.f32.gmra.mrb[0].mxu0 %v872
    %v963 = vpop.f32.mrb[0].mxu0
    %v964 = vadd.f32 0.0, %v963
    %v965 = vpop.f32.mrb[0].mxu0
    %966 = vmatprep.mubr.f32.mxu0 0.0
    %967 = vmatmul.mubr.f32.gmra.mrb[0].mxu0 %v875
    %v968 = vpop.f32.mrb[0].mxu0
    %v969 = vadd.f32 0.0, %v968
    %v970 = vpop.f32.mrb[0].mxu0
    %971 = vmatprep.mubr.f32.mxu0 0.0
    %972 = vmatmul.mubr.f32.gmra.mrb[0].mxu0 %v878
    %v973 = vpop.f32.mrb[0].mxu0
    %v974 = vadd.f32 0.0, %v973
    %v975 = vpop.f32.mrb[0].mxu0
    %976 = vmatprep.mubr.f32.mxu0 0.0
    %977 = vmatmul.mubr.f32.gmra.mrb[0].mxu0 %v881
    %v978 = vpop.f32.mrb[0].mxu0
    %v979 = vadd.f32 0.0, %v978
    %v980 = vpop.f32.mrb[0].mxu0
    %981 = vmatprep.mubr.f32.mxu0 0.0
    %982 = vmatmul.mubr.f32.gmra.mrb[0].mxu0 %v884
    %v983 = vpop.f32.mrb[0].mxu0
    %v984 = vadd.f32 0.0, %v983
    %v985 = vpop.f32.mrb[0].mxu0
    %986 = vmatprep.mubr.f32.mxu0 0.0
    %987 = vmatmul.mubr.f32.gmra.mrb[0].mxu0 %v887
    %v988 = vpop.f32.mrb[0].mxu0
    %v989 = vadd.f32 0.0, %v988
    %v990 = vpop.f32.mrb[0].mxu0
    %991 = vmatprep.mubr.f32.mxu0 0.0
    %992 = vmatmul.mubr.f32.gmra.mrb[0].mxu0 %v890
    %v993 = vpop.f32.mrb[0].mxu0
    %v994 = vadd.f32 0.0, %v993
    %v995 = vpop.f32.mrb[0].mxu0
    %996 = vdwg.mxu0
    %v998 = vsel %vm867, %v787, 0
    %v1001 = vsel %vm867, %v788, 0
    %v1004 = vsel %vm867, %v789, 0
    %v1007 = vsel %vm867, %v790, 0
    %v1010 = vsel %vm867, %v791, 0
    %v1013 = vsel %vm867, %v792, 0
    %v1016 = vsel %vm867, %v793, 0
    %v1019 = vsel %vm867, %v794, 0
    %1021 = vmatprep.subr.mxu0 0.0
    %1022 = vmatpush1.msra.mxu0 %v859
    %1023 = vmatprep.subr.mxu0 0.0
    %1024 = vmatpush1.msra.mxu0 %v860
    %1025 = vmatprep.subr.mxu0 0.0
    %1026 = vmatpush1.msra.mxu0 %v861
    %1027 = vmatprep.subr.mxu0 0.0
    %1028 = vmatpush1.msra.mxu0 %v862
    %1029 = vmatprep.subr.mxu0 0.0
    %1030 = vmatpush1.msra.mxu0 0.0
    %1031 = vmatprep.subr.mxu0 0.0
    %1032 = vmatpush1.msra.mxu0 0.0
    %1033 = vmatprep.subr.mxu0 0.0
    %1034 = vmatpush1.msra.mxu0 0.0
    %1035 = vmatprep.subr.mxu0 0.0
    %1036 = vmatpush1.msra.mxu0 0.0
    %1037 = vmatprep.subr.mxu0 0.0
    %1038 = vmatpush1.msra.mxu0 0.0
    %1039 = vmatprep.subr.mxu0 0.0
    %1040 = vmatpush1.msra.mxu0 0.0
    %1041 = vmatprep.subr.mxu0 0.0
    %1042 = vmatpush1.msra.mxu0 0.0
    %1043 = vmatprep.subr.mxu0 0.0
    %1044 = vmatpush1.msra.mxu0 0.0
    %1045 = vmatprep.subr.mxu0 0.0
    %1046 = vmatpush1.msra.mxu0 0.0
    %1047 = vmatprep.subr.mxu0 0.0
    %1048 = vmatpush1.msra.mxu0 0.0
    %1049 = vmatprep.subr.mxu0 0.0
    %1050 = vmatpush1.msra.mxu0 0.0
    %1051 = vmatprep.subr.mxu0 0.0
    %1052 = vmatpush1.msra.mxu0 0.0
    %1053 = vmatprep.subr.mxu0 0.0
    %1054 = vmatpush1.msra.mxu0 0.0
    %1055 = vmatprep.subr.mxu0 0.0
    %1056 = vmatpush1.msra.mxu0 0.0
    %1057 = vmatprep.subr.mxu0 0.0
    %1058 = vmatpush1.msra.mxu0 0.0
    %1059 = vmatprep.subr.mxu0 0.0
    %1060 = vmatpush1.msra.mxu0 0.0
    %1061 = vmatprep.subr.mxu0 0.0
    %1062 = vmatpush1.msra.mxu0 0.0
    %1063 = vmatprep.subr.mxu0 0.0
    %1064 = vmatpush1.msra.mxu0 0.0
    %1065 = vmatprep.subr.mxu0 0.0
    %1066 = vmatpush1.msra.mxu0 0.0
    %1067 = vmatprep.subr.mxu0 0.0
    %1068 = vmatpush1.msra.mxu0 0.0
    %1069 = vmatprep.subr.mxu0 0.0
    %1070 = vmatpush1.msra.mxu0 0.0
    %1071 = vmatprep.subr.mxu0 0.0
    %1072 = vmatpush1.msra.mxu0 0.0
    %1073 = vmatprep.subr.mxu0 0.0
    %1074 = vmatpush1.msra.mxu0 0.0
    %1075 = vmatprep.subr.mxu0 0.0
    %1076 = vmatpush1.msra.mxu0 0.0
    %1077 = vmatprep.subr.mxu0 0.0
    %1078 = vmatpush1.msra.mxu0 0.0
    %1079 = vmatprep.subr.mxu0 0.0
    %1080 = vmatpush1.msra.mxu0 0.0
    %1081 = vmatprep.subr.mxu0 0.0
    %1082 = vmatpush1.msra.mxu0 0.0
    %1083 = vmatprep.subr.mxu0 0.0
    %1084 = vmatpush1.msra.mxu0 0.0
    %1085 = vmatprep.mubr.f32.mxu0 0.0
    %1086 = vmatmul.mubr.f32.gmra.mrb[0].mxu0 %v998
    %v1087 = vpop.f32.mrb[0].mxu0
    %v1088 = vadd.f32 %v959, %v1087
    %v1089 = vpop.f32.mrb[0].mxu0
    %1090 = vmatprep.mubr.f32.mxu0 0.0
    %1091 = vmatmul.mubr.f32.gmra.mrb[0].mxu0 %v1001
    %v1092 = vpop.f32.mrb[0].mxu0
    %v1093 = vadd.f32 %v964, %v1092
    %v1094 = vpop.f32.mrb[0].mxu0
    %1095 = vmatprep.mubr.f32.mxu0 0.0
    %1096 = vmatmul.mubr.f32.gmra.mrb[0].mxu0 %v1004
    %v1097 = vpop.f32.mrb[0].mxu0
    %v1098 = vadd.f32 %v969, %v1097
    %v1099 = vpop.f32.mrb[0].mxu0
    %1100 = vmatprep.mubr.f32.mxu0 0.0
    %1101 = vmatmul.mubr.f32.gmra.mrb[0].mxu0 %v1007
    %v1102 = vpop.f32.mrb[0].mxu0
    %v1103 = vadd.f32 %v974, %v1102
    %v1104 = vpop.f32.mrb[0].mxu0
    %1105 = vmatprep.mubr.f32.mxu0 0.0
    %1106 = vmatmul.mubr.f32.gmra.mrb[0].mxu0 %v1010
    %v1107 = vpop.f32.mrb[0].mxu0
    %v1108 = vadd.f32 %v979, %v1107
    %v1109 = vpop.f32.mrb[0].mxu0
    %1110 = vmatprep.mubr.f32.mxu0 0.0
    %1111 = vmatmul.mubr.f32.gmra.mrb[0].mxu0 %v1013
    %v1112 = vpop.f32.mrb[0].mxu0
    %v1113 = vadd.f32 %v984, %v1112
    %v1114 = vpop.f32.mrb[0].mxu0
    %1115 = vmatprep.mubr.f32.mxu0 0.0
    %1116 = vmatmul.mubr.f32.gmra.mrb[0].mxu0 %v1016
    %v1117 = vpop.f32.mrb[0].mxu0
    %v1118 = vadd.f32 %v989, %v1117
    %v1119 = vpop.f32.mrb[0].mxu0
    %1120 = vmatprep.mubr.f32.mxu0 0.0
    %1121 = vmatmul.mubr.f32.gmra.mrb[0].mxu0 %v1019
    %v1122 = vpop.f32.mrb[0].mxu0
    %v1123 = vadd.f32 %v994, %v1122
    %v1124 = vpop.f32.mrb[0].mxu0
    %1125 = vdwg.mxu0
    %v1126 = vld [vmem:[%s3 + $0x40] sm:$0xff]
    %v1127 = vld [vmem:[%s3 + $0x48] sm:$0xff]
    %v1128 = vld [vmem:[%s3 + $0x50] sm:$0xff]
    %v1129 = vld [vmem:[%s3 + $0x58] sm:$0xff]
    %v1131 = vsel %vm867, %v803, 0
    %v1134 = vsel %vm867, %v804, 0
    %v1137 = vsel %vm867, %v805, 0
    %v1140 = vsel %vm867, %v806, 0
    %v1143 = vsel %vm867, %v807, 0
    %v1146 = vsel %vm867, %v808, 0
    %v1149 = vsel %vm867, %v809, 0
    %v1152 = vsel %vm867, %v810, 0
    %1154 = vmatprep.subr.mxu0 0.0
    %1155 = vmatpush1.msra.mxu0 %v1126
    %1156 = vmatprep.subr.mxu0 0.0
    %1157 = vmatpush1.msra.mxu0 %v1127
    %1158 = vmatprep.subr.mxu0 0.0
    %1159 = vmatpush1.msra.mxu0 %v1128
    %1160 = vmatprep.subr.mxu0 0.0
    %1161 = vmatpush1.msra.mxu0 %v1129
    %1162 = vmatprep.subr.mxu0 0.0
    %1163 = vmatpush1.msra.mxu0 0.0
    %1164 = vmatprep.subr.mxu0 0.0
    %1165 = vmatpush1.msra.mxu0 0.0
    %1166 = vmatprep.subr.mxu0 0.0
    %1167 = vmatpush1.msra.mxu0 0.0
    %1168 = vmatprep.subr.mxu0 0.0
    %1169 = vmatpush1.msra.mxu0 0.0
    %1170 = vmatprep.subr.mxu0 0.0
    %1171 = vmatpush1.msra.mxu0 0.0
    %1172 = vmatprep.subr.mxu0 0.0
    %1173 = vmatpush1.msra.mxu0 0.0
    %1174 = vmatprep.subr.mxu0 0.0
    %1175 = vmatpush1.msra.mxu0 0.0
    %1176 = vmatprep.subr.mxu0 0.0
    %1177 = vmatpush1.msra.mxu0 0.0
    %1178 = vmatprep.subr.mxu0 0.0
    %1179 = vmatpush1.msra.mxu0 0.0
    %1180 = vmatprep.subr.mxu0 0.0
    %1181 = vmatpush1.msra.mxu0 0.0
    %1182 = vmatprep.subr.mxu0 0.0
    %1183 = vmatpush1.msra.mxu0 0.0
    %1184 = vmatprep.subr.mxu0 0.0
    %1185 = vmatpush1.msra.mxu0 0.0
    %1186 = vmatprep.subr.mxu0 0.0
    %1187 = vmatpush1.msra.mxu0 0.0
    %1188 = vmatprep.subr.mxu0 0.0
    %1189 = vmatpush1.msra.mxu0 0.0
    %1190 = vmatprep.subr.mxu0 0.0
    %1191 = vmatpush1.msra.mxu0 0.0
    %1192 = vmatprep.subr.mxu0 0.0
    %1193 = vmatpush1.msra.mxu0 0.0
    %1194 = vmatprep.subr.mxu0 0.0
    %1195 = vmatpush1.msra.mxu0 0.0
    %1196 = vmatprep.subr.mxu0 0.0
    %1197 = vmatpush1.msra.mxu0 0.0
    %1198 = vmatprep.subr.mxu0 0.0
    %1199 = vmatpush1.msra.mxu0 0.0
    %1200 = vmatprep.subr.mxu0 0.0
    %1201 = vmatpush1.msra.mxu0 0.0
    %1202 = vmatprep.subr.mxu0 0.0
    %1203 = vmatpush1.msra.mxu0 0.0
    %1204 = vmatprep.subr.mxu0 0.0
    %1205 = vmatpush1.msra.mxu0 0.0
    %1206 = vmatprep.subr.mxu0 0.0
    %1207 = vmatpush1.msra.mxu0 0.0
    %1208 = vmatprep.subr.mxu0 0.0
    %1209 = vmatpush1.msra.mxu0 0.0
    %1210 = vmatprep.subr.mxu0 0.0
    %1211 = vmatpush1.msra.mxu0 0.0
    %1212 = vmatprep.subr.mxu0 0.0
    %1213 = vmatpush1.msra.mxu0 0.0
    %1214 = vmatprep.subr.mxu0 0.0
    %1215 = vmatpush1.msra.mxu0 0.0
    %1216 = vmatprep.subr.mxu0 0.0
    %1217 = vmatpush1.msra.mxu0 0.0
    %1218 = vmatprep.mubr.f32.mxu0 0.0
    %1219 = vmatmul.mubr.f32.gmra.mrb[0].mxu0 %v1131
    %v1220 = vpop.f32.mrb[0].mxu0
    %v1221 = vadd.f32 0.0, %v1220
    %v1222 = vpop.f32.mrb[0].mxu0
    %1223 = vmatprep.mubr.f32.mxu0 0.0
    %1224 = vmatmul.mubr.f32.gmra.mrb[0].mxu0 %v1134
    %v1225 = vpop.f32.mrb[0].mxu0
    %v1226 = vadd.f32 0.0, %v1225
    %v1227 = vpop.f32.mrb[0].mxu0
    %1228 = vmatprep.mubr.f32.mxu0 0.0
    %1229 = vmatmul.mubr.f32.gmra.mrb[0].mxu0 %v1137
    %v1230 = vpop.f32.mrb[0].mxu0
    %v1231 = vadd.f32 0.0, %v1230
    %v1232 = vpop.f32.mrb[0].mxu0
    %1233 = vmatprep.mubr.f32.mxu0 0.0
    %1234 = vmatmul.mubr.f32.gmra.mrb[0].mxu0 %v1140
    %v1235 = vpop.f32.mrb[0].mxu0
    %v1236 = vadd.f32 0.0, %v1235
    %v1237 = vpop.f32.mrb[0].mxu0
    %1238 = vmatprep.mubr.f32.mxu0 0.0
    %1239 = vmatmul.mubr.f32.gmra.mrb[0].mxu0 %v1143
    %v1240 = vpop.f32.mrb[0].mxu0
    %v1241 = vadd.f32 0.0, %v1240
    %v1242 = vpop.f32.mrb[0].mxu0
    %1243 = vmatprep.mubr.f32.mxu0 0.0
    %1244 = vmatmul.mubr.f32.gmra.mrb[0].mxu0 %v1146
    %v1245 = vpop.f32.mrb[0].mxu0
    %v1246 = vadd.f32 0.0, %v1245
    %v1247 = vpop.f32.mrb[0].mxu0
    %1248 = vmatprep.mubr.f32.mxu0 0.0
    %1249 = vmatmul.mubr.f32.gmra.mrb[0].mxu0 %v1149
    %v1250 = vpop.f32.mrb[0].mxu0
    %v1251 = vadd.f32 0.0, %v1250
    %v1252 = vpop.f32.mrb[0].mxu0
    %1253 = vmatprep.mubr.f32.mxu0 0.0
    %1254 = vmatmul.mubr.f32.gmra.mrb[0].mxu0 %v1152
    %v1255 = vpop.f32.mrb[0].mxu0
    %v1256 = vadd.f32 0.0, %v1255
    %v1257 = vpop.f32.mrb[0].mxu0
    %1258 = vdwg.mxu0
    %v1259 = vadd.f32 %v1088, %v1221
    %v1260 = vadd.f32 %v1093, %v1226
    %v1261 = vadd.f32 %v1098, %v1231
    %v1262 = vadd.f32 %v1103, %v1236
    %v1263 = vadd.f32 %v1108, %v1241
    %v1264 = vadd.f32 %v1113, %v1246
    %v1265 = vadd.f32 %v1118, %v1251
    %v1266 = vadd.f32 %v1123, %v1256
    %v1267 = vld [vmem:[%s3 + $0x60] sm:$0xff]
    %v1268 = vld [vmem:[%s3 + $0x68] sm:$0xff]
    %v1269 = vld [vmem:[%s3 + $0x70] sm:$0xff]
    %v1270 = vld [vmem:[%s3 + $0x78] sm:$0xff]
    %v1272 = vsel %vm867, %v811, 0
    %v1275 = vsel %vm867, %v812, 0
    %v1278 = vsel %vm867, %v813, 0
    %v1281 = vsel %vm867, %v814, 0
    %v1284 = vsel %vm867, %v815, 0
    %v1287 = vsel %vm867, %v816, 0
    %v1290 = vsel %vm867, %v817, 0
    %v1293 = vsel %vm867, %v818, 0
    %1295 = vmatprep.subr.mxu0 0.0
    %1296 = vmatpush1.msra.mxu0 %v1267
    %1297 = vmatprep.subr.mxu0 0.0
    %1298 = vmatpush1.msra.mxu0 %v1268
    %1299 = vmatprep.subr.mxu0 0.0
    %1300 = vmatpush1.msra.mxu0 %v1269
    %1301 = vmatprep.subr.mxu0 0.0
    %1302 = vmatpush1.msra.mxu0 %v1270
    %1303 = vmatprep.subr.mxu0 0.0
    %1304 = vmatpush1.msra.mxu0 0.0
    %1305 = vmatprep.subr.mxu0 0.0
    %1306 = vmatpush1.msra.mxu0 0.0
    %1307 = vmatprep.subr.mxu0 0.0
    %1308 = vmatpush1.msra.mxu0 0.0
    %1309 = vmatprep.subr.mxu0 0.0
    %1310 = vmatpush1.msra.mxu0 0.0
    %1311 = vmatprep.subr.mxu0 0.0
    %1312 = vmatpush1.msra.mxu0 0.0
    %1313 = vmatprep.subr.mxu0 0.0
    %1314 = vmatpush1.msra.mxu0 0.0
    %1315 = vmatprep.subr.mxu0 0.0
    %1316 = vmatpush1.msra.mxu0 0.0
    %1317 = vmatprep.subr.mxu0 0.0
    %1318 = vmatpush1.msra.mxu0 0.0
    %1319 = vmatprep.subr.mxu0 0.0
    %1320 = vmatpush1.msra.mxu0 0.0
    %1321 = vmatprep.subr.mxu0 0.0
    %1322 = vmatpush1.msra.mxu0 0.0
    %1323 = vmatprep.subr.mxu0 0.0
    %1324 = vmatpush1.msra.mxu0 0.0
    %1325 = vmatprep.subr.mxu0 0.0
    %1326 = vmatpush1.msra.mxu0 0.0
    %1327 = vmatprep.subr.mxu0 0.0
    %1328 = vmatpush1.msra.mxu0 0.0
    %1329 = vmatprep.subr.mxu0 0.0
    %1330 = vmatpush1.msra.mxu0 0.0
    %1331 = vmatprep.subr.mxu0 0.0
    %1332 = vmatpush1.msra.mxu0 0.0
    %1333 = vmatprep.subr.mxu0 0.0
    %1334 = vmatpush1.msra.mxu0 0.0
    %1335 = vmatprep.subr.mxu0 0.0
    %1336 = vmatpush1.msra.mxu0 0.0
    %1337 = vmatprep.subr.mxu0 0.0
    %1338 = vmatpush1.msra.mxu0 0.0
    %1339 = vmatprep.subr.mxu0 0.0
    %1340 = vmatpush1.msra.mxu0 0.0
    %1341 = vmatprep.subr.mxu0 0.0
    %1342 = vmatpush1.msra.mxu0 0.0
    %1343 = vmatprep.subr.mxu0 0.0
    %1344 = vmatpush1.msra.mxu0 0.0
    %1345 = vmatprep.subr.mxu0 0.0
    %1346 = vmatpush1.msra.mxu0 0.0
    %1347 = vmatprep.subr.mxu0 0.0
    %1348 = vmatpush1.msra.mxu0 0.0
    %1349 = vmatprep.subr.mxu0 0.0
    %1350 = vmatpush1.msra.mxu0 0.0
    %1351 = vmatprep.subr.mxu0 0.0
    %1352 = vmatpush1.msra.mxu0 0.0
    %1353 = vmatprep.subr.mxu0 0.0
    %1354 = vmatpush1.msra.mxu0 0.0
    %1355 = vmatprep.subr.mxu0 0.0
    %1356 = vmatpush1.msra.mxu0 0.0
    %1357 = vmatprep.subr.mxu0 0.0
    %1358 = vmatpush1.msra.mxu0 0.0
    %1359 = vmatprep.mubr.f32.mxu0 0.0
    %1360 = vmatmul.mubr.f32.gmra.mrb[0].mxu0 %v1272
    %v1361 = vpop.f32.mrb[0].mxu0
    %v1362 = vadd.f32 0.0, %v1361
    %v1363 = vpop.f32.mrb[0].mxu0
    %1364 = vmatprep.mubr.f32.mxu0 0.0
    %1365 = vmatmul.mubr.f32.gmra.mrb[0].mxu0 %v1275
    %v1366 = vpop.f32.mrb[0].mxu0
    %v1367 = vadd.f32 0.0, %v1366
    %v1368 = vpop.f32.mrb[0].mxu0
    %1369 = vmatprep.mubr.f32.mxu0 0.0
    %1370 = vmatmul.mubr.f32.gmra.mrb[0].mxu0 %v1278
    %v1371 = vpop.f32.mrb[0].mxu0
    %v1372 = vadd.f32 0.0, %v1371
    %v1373 = vpop.f32.mrb[0].mxu0
    %1374 = vmatprep.mubr.f32.mxu0 0.0
    %1375 = vmatmul.mubr.f32.gmra.mrb[0].mxu0 %v1281
    %v1376 = vpop.f32.mrb[0].mxu0
    %v1377 = vadd.f32 0.0, %v1376
    %v1378 = vpop.f32.mrb[0].mxu0
    %1379 = vmatprep.mubr.f32.mxu0 0.0
    %1380 = vmatmul.mubr.f32.gmra.mrb[0].mxu0 %v1284
    %v1381 = vpop.f32.mrb[0].mxu0
    %v1382 = vadd.f32 0.0, %v1381
    %v1383 = vpop.f32.mrb[0].mxu0
    %1384 = vmatprep.mubr.f32.mxu0 0.0
    %1385 = vmatmul.mubr.f32.gmra.mrb[0].mxu0 %v1287
    %v1386 = vpop.f32.mrb[0].mxu0
    %v1387 = vadd.f32 0.0, %v1386
    %v1388 = vpop.f32.mrb[0].mxu0
    %1389 = vmatprep.mubr.f32.mxu0 0.0
    %1390 = vmatmul.mubr.f32.gmra.mrb[0].mxu0 %v1290
    %v1391 = vpop.f32.mrb[0].mxu0
    %v1392 = vadd.f32 0.0, %v1391
    %v1393 = vpop.f32.mrb[0].mxu0
    %1394 = vmatprep.mubr.f32.mxu0 0.0
    %1395 = vmatmul.mubr.f32.gmra.mrb[0].mxu0 %v1293
    %v1396 = vpop.f32.mrb[0].mxu0
    %v1397 = vadd.f32 0.0, %v1396
    %v1398 = vpop.f32.mrb[0].mxu0
    %1399 = vdwg.mxu0
    %v1400 = vadd.f32 %v1259, %v1362
    %v1401 = vadd.f32 %v1260, %v1367
    %v1402 = vadd.f32 %v1261, %v1372
    %v1403 = vadd.f32 %v1262, %v1377
    %v1404 = vadd.f32 %v1263, %v1382
    %v1405 = vadd.f32 %v1264, %v1387
    %v1406 = vadd.f32 %v1265, %v1392
    %v1407 = vadd.f32 %v1266, %v1397
    %v1408 = vld [vmem:[%s3 + $0x80] sm:$0xff]
    %v1409 = vld [vmem:[%s3 + $0x88] sm:$0xff]
    %v1410 = vld [vmem:[%s3 + $0x90] sm:$0xff]
    %v1411 = vld [vmem:[%s3 + $0x98] sm:$0xff]
    %v1413 = vsel %vm867, %v819, 0
    %v1416 = vsel %vm867, %v820, 0
    %v1419 = vsel %vm867, %v821, 0
    %v1422 = vsel %vm867, %v822, 0
    %v1425 = vsel %vm867, %v823, 0
    %v1428 = vsel %vm867, %v824, 0
    %v1431 = vsel %vm867, %v825, 0
    %v1434 = vsel %vm867, %v826, 0
    %1436 = vmatprep.subr.mxu0 0.0
    %1437 = vmatpush1.msra.mxu0 %v1408
    %1438 = vmatprep.subr.mxu0 0.0
    %1439 = vmatpush1.msra.mxu0 %v1409
    %1440 = vmatprep.subr.mxu0 0.0
    %1441 = vmatpush1.msra.mxu0 %v1410
    %1442 = vmatprep.subr.mxu0 0.0
    %1443 = vmatpush1.msra.mxu0 %v1411
    %1444 = vmatprep.subr.mxu0 0.0
    %1445 = vmatpush1.msra.mxu0 0.0
    %1446 = vmatprep.subr.mxu0 0.0
    %1447 = vmatpush1.msra.mxu0 0.0
    %1448 = vmatprep.subr.mxu0 0.0
    %1449 = vmatpush1.msra.mxu0 0.0
    %1450 = vmatprep.subr.mxu0 0.0
    %1451 = vmatpush1.msra.mxu0 0.0
    %1452 = vmatprep.subr.mxu0 0.0
    %1453 = vmatpush1.msra.mxu0 0.0
    %1454 = vmatprep.subr.mxu0 0.0
    %1455 = vmatpush1.msra.mxu0 0.0
    %1456 = vmatprep.subr.mxu0 0.0
    %1457 = vmatpush1.msra.mxu0 0.0
    %1458 = vmatprep.subr.mxu0 0.0
    %1459 = vmatpush1.msra.mxu0 0.0
    %1460 = vmatprep.subr.mxu0 0.0
    %1461 = vmatpush1.msra.mxu0 0.0
    %1462 = vmatprep.subr.mxu0 0.0
    %1463 = vmatpush1.msra.mxu0 0.0
    %1464 = vmatprep.subr.mxu0 0.0
    %1465 = vmatpush1.msra.mxu0 0.0
    %1466 = vmatprep.subr.mxu0 0.0
    %1467 = vmatpush1.msra.mxu0 0.0
    %1468 = vmatprep.subr.mxu0 0.0
    %1469 = vmatpush1.msra.mxu0 0.0
    %1470 = vmatprep.subr.mxu0 0.0
    %1471 = vmatpush1.msra.mxu0 0.0
    %1472 = vmatprep.subr.mxu0 0.0
    %1473 = vmatpush1.msra.mxu0 0.0
    %1474 = vmatprep.subr.mxu0 0.0
    %1475 = vmatpush1.msra.mxu0 0.0
    %1476 = vmatprep.subr.mxu0 0.0
    %1477 = vmatpush1.msra.mxu0 0.0
    %1478 = vmatprep.subr.mxu0 0.0
    %1479 = vmatpush1.msra.mxu0 0.0
    %1480 = vmatprep.subr.mxu0 0.0
    %1481 = vmatpush1.msra.mxu0 0.0
    %1482 = vmatprep.subr.mxu0 0.0
    %1483 = vmatpush1.msra.mxu0 0.0
    %1484 = vmatprep.subr.mxu0 0.0
    %1485 = vmatpush1.msra.mxu0 0.0
    %1486 = vmatprep.subr.mxu0 0.0
    %1487 = vmatpush1.msra.mxu0 0.0
    %1488 = vmatprep.subr.mxu0 0.0
    %1489 = vmatpush1.msra.mxu0 0.0
    %1490 = vmatprep.subr.mxu0 0.0
    %1491 = vmatpush1.msra.mxu0 0.0
    %1492 = vmatprep.subr.mxu0 0.0
    %1493 = vmatpush1.msra.mxu0 0.0
    %1494 = vmatprep.subr.mxu0 0.0
    %1495 = vmatpush1.msra.mxu0 0.0
    %1496 = vmatprep.subr.mxu0 0.0
    %1497 = vmatpush1.msra.mxu0 0.0
    %1498 = vmatprep.subr.mxu0 0.0
    %1499 = vmatpush1.msra.mxu0 0.0
    %1500 = vmatprep.mubr.f32.mxu0 0.0
    %1501 = vmatmul.mubr.f32.gmra.mrb[0].mxu0 %v1413
    %v1502 = vpop.f32.mrb[0].mxu0
    %v1503 = vadd.f32 0.0, %v1502
    %v1504 = vpop.f32.mrb[0].mxu0
    %1505 = vmatprep.mubr.f32.mxu0 0.0
    %1506 = vmatmul.mubr.f32.gmra.mrb[0].mxu0 %v1416
    %v1507 = vpop.f32.mrb[0].mxu0
    %v1508 = vadd.f32 0.0, %v1507
    %v1509 = vpop.f32.mrb[0].mxu0
    %1510 = vmatprep.mubr.f32.mxu0 0.0
    %1511 = vmatmul.mubr.f32.gmra.mrb[0].mxu0 %v1419
    %v1512 = vpop.f32.mrb[0].mxu0
    %v1513 = vadd.f32 0.0, %v1512
    %v1514 = vpop.f32.mrb[0].mxu0
    %1515 = vmatprep.mubr.f32.mxu0 0.0
    %1516 = vmatmul.mubr.f32.gmra.mrb[0].mxu0 %v1422
    %v1517 = vpop.f32.mrb[0].mxu0
    %v1518 = vadd.f32 0.0, %v1517
    %v1519 = vpop.f32.mrb[0].mxu0
    %1520 = vmatprep.mubr.f32.mxu0 0.0
    %1521 = vmatmul.mubr.f32.gmra.mrb[0].mxu0 %v1425
    %v1522 = vpop.f32.mrb[0].mxu0
    %v1523 = vadd.f32 0.0, %v1522
    %v1524 = vpop.f32.mrb[0].mxu0
    %1525 = vmatprep.mubr.f32.mxu0 0.0
    %1526 = vmatmul.mubr.f32.gmra.mrb[0].mxu0 %v1428
    %v1527 = vpop.f32.mrb[0].mxu0
    %v1528 = vadd.f32 0.0, %v1527
    %v1529 = vpop.f32.mrb[0].mxu0
    %1530 = vmatprep.mubr.f32.mxu0 0.0
    %1531 = vmatmul.mubr.f32.gmra.mrb[0].mxu0 %v1431
    %v1532 = vpop.f32.mrb[0].mxu0
    %v1533 = vadd.f32 0.0, %v1532
    %v1534 = vpop.f32.mrb[0].mxu0
    %1535 = vmatprep.mubr.f32.mxu0 0.0
    %1536 = vmatmul.mubr.f32.gmra.mrb[0].mxu0 %v1434
    %v1537 = vpop.f32.mrb[0].mxu0
    %v1538 = vadd.f32 0.0, %v1537
    %v1539 = vpop.f32.mrb[0].mxu0
    %1540 = vdwg.mxu0
    %v1541 = vadd.f32 %v1400, %v1503
    %v1542 = vadd.f32 %v1401, %v1508
    %v1543 = vadd.f32 %v1402, %v1513
    %v1544 = vadd.f32 %v1403, %v1518
    %v1545 = vadd.f32 %v1404, %v1523
    %v1546 = vadd.f32 %v1405, %v1528
    %v1547 = vadd.f32 %v1406, %v1533
    %v1548 = vadd.f32 %v1407, %v1538
    %v1549 = vld [vmem:[%s3 + $0xa0] sm:$0xff]
    %v1550 = vld [vmem:[%s3 + $0xa8] sm:$0xff]
    %v1551 = vld [vmem:[%s3 + $0xb0] sm:$0xff]
    %v1552 = vld [vmem:[%s3 + $0xb8] sm:$0xff]
    %v1554 = vsel %vm867, %v827, 0
    %v1557 = vsel %vm867, %v828, 0
    %v1560 = vsel %vm867, %v829, 0
    %v1563 = vsel %vm867, %v830, 0
    %v1566 = vsel %vm867, %v831, 0
    %v1569 = vsel %vm867, %v832, 0
    %v1572 = vsel %vm867, %v833, 0
    %v1575 = vsel %vm867, %v834, 0
    %1577 = vmatprep.subr.mxu0 0.0
    %1578 = vmatpush1.msra.mxu0 %v1549
    %1579 = vmatprep.subr.mxu0 0.0
    %1580 = vmatpush1.msra.mxu0 %v1550
    %1581 = vmatprep.subr.mxu0 0.0
    %1582 = vmatpush1.msra.mxu0 %v1551
    %1583 = vmatprep.subr.mxu0 0.0
    %1584 = vmatpush1.msra.mxu0 %v1552
    %1585 = vmatprep.subr.mxu0 0.0
    %1586 = vmatpush1.msra.mxu0 0.0
    %1587 = vmatprep.subr.mxu0 0.0
    %1588 = vmatpush1.msra.mxu0 0.0
    %1589 = vmatprep.subr.mxu0 0.0
    %1590 = vmatpush1.msra.mxu0 0.0
    %1591 = vmatprep.subr.mxu0 0.0
    %1592 = vmatpush1.msra.mxu0 0.0
    %1593 = vmatprep.subr.mxu0 0.0
    %1594 = vmatpush1.msra.mxu0 0.0
    %1595 = vmatprep.subr.mxu0 0.0
    %1596 = vmatpush1.msra.mxu0 0.0
    %1597 = vmatprep.subr.mxu0 0.0
    %1598 = vmatpush1.msra.mxu0 0.0
    %1599 = vmatprep.subr.mxu0 0.0
    %1600 = vmatpush1.msra.mxu0 0.0
    %1601 = vmatprep.subr.mxu0 0.0
    %1602 = vmatpush1.msra.mxu0 0.0
    %1603 = vmatprep.subr.mxu0 0.0
    %1604 = vmatpush1.msra.mxu0 0.0
    %1605 = vmatprep.subr.mxu0 0.0
    %1606 = vmatpush1.msra.mxu0 0.0
    %1607 = vmatprep.subr.mxu0 0.0
    %1608 = vmatpush1.msra.mxu0 0.0
    %1609 = vmatprep.subr.mxu0 0.0
    %1610 = vmatpush1.msra.mxu0 0.0
    %1611 = vmatprep.subr.mxu0 0.0
    %1612 = vmatpush1.msra.mxu0 0.0
    %1613 = vmatprep.subr.mxu0 0.0
    %1614 = vmatpush1.msra.mxu0 0.0
    %1615 = vmatprep.subr.mxu0 0.0
    %1616 = vmatpush1.msra.mxu0 0.0
    %1617 = vmatprep.subr.mxu0 0.0
    %1618 = vmatpush1.msra.mxu0 0.0
    %1619 = vmatprep.subr.mxu0 0.0
    %1620 = vmatpush1.msra.mxu0 0.0
    %1621 = vmatprep.subr.mxu0 0.0
    %1622 = vmatpush1.msra.mxu0 0.0
    %1623 = vmatprep.subr.mxu0 0.0
    %1624 = vmatpush1.msra.mxu0 0.0
    %1625 = vmatprep.subr.mxu0 0.0
    %1626 = vmatpush1.msra.mxu0 0.0
    %1627 = vmatprep.subr.mxu0 0.0
    %1628 = vmatpush1.msra.mxu0 0.0
    %1629 = vmatprep.subr.mxu0 0.0
    %1630 = vmatpush1.msra.mxu0 0.0
    %1631 = vmatprep.subr.mxu0 0.0
    %1632 = vmatpush1.msra.mxu0 0.0
    %1633 = vmatprep.subr.mxu0 0.0
    %1634 = vmatpush1.msra.mxu0 0.0
    %1635 = vmatprep.subr.mxu0 0.0
    %1636 = vmatpush1.msra.mxu0 0.0
    %1637 = vmatprep.subr.mxu0 0.0
    %1638 = vmatpush1.msra.mxu0 0.0
    %1639 = vmatprep.subr.mxu0 0.0
    %1640 = vmatpush1.msra.mxu0 0.0
    %1641 = vmatprep.mubr.f32.mxu0 0.0
    %1642 = vmatmul.mubr.f32.gmra.mrb[0].mxu0 %v1554
    %v1643 = vpop.f32.mrb[0].mxu0
    %v1644 = vadd.f32 0.0, %v1643
    %v1645 = vpop.f32.mrb[0].mxu0
    %1646 = vmatprep.mubr.f32.mxu0 0.0
    %1647 = vmatmul.mubr.f32.gmra.mrb[0].mxu0 %v1557
    %v1648 = vpop.f32.mrb[0].mxu0
    %v1649 = vadd.f32 0.0, %v1648
    %v1650 = vpop.f32.mrb[0].mxu0
    %1651 = vmatprep.mubr.f32.mxu0 0.0
    %1652 = vmatmul.mubr.f32.gmra.mrb[0].mxu0 %v1560
    %v1653 = vpop.f32.mrb[0].mxu0
    %v1654 = vadd.f32 0.0, %v1653
    %v1655 = vpop.f32.mrb[0].mxu0
    %1656 = vmatprep.mubr.f32.mxu0 0.0
    %1657 = vmatmul.mubr.f32.gmra.mrb[0].mxu0 %v1563
    %v1658 = vpop.f32.mrb[0].mxu0
    %v1659 = vadd.f32 0.0, %v1658
    %v1660 = vpop.f32.mrb[0].mxu0
    %1661 = vmatprep.mubr.f32.mxu0 0.0
    %1662 = vmatmul.mubr.f32.gmra.mrb[0].mxu0 %v1566
    %v1663 = vpop.f32.mrb[0].mxu0
    %v1664 = vadd.f32 0.0, %v1663
    %v1665 = vpop.f32.mrb[0].mxu0
    %1666 = vmatprep.mubr.f32.mxu0 0.0
    %1667 = vmatmul.mubr.f32.gmra.mrb[0].mxu0 %v1569
    %v1668 = vpop.f32.mrb[0].mxu0
    %v1669 = vadd.f32 0.0, %v1668
    %v1670 = vpop.f32.mrb[0].mxu0
    %1671 = vmatprep.mubr.f32.mxu0 0.0
    %1672 = vmatmul.mubr.f32.gmra.mrb[0].mxu0 %v1572
    %v1673 = vpop.f32.mrb[0].mxu0
    %v1674 = vadd.f32 0.0, %v1673
    %v1675 = vpop.f32.mrb[0].mxu0
    %1676 = vmatprep.mubr.f32.mxu0 0.0
    %1677 = vmatmul.mubr.f32.gmra.mrb[0].mxu0 %v1575
    %v1678 = vpop.f32.mrb[0].mxu0
    %v1679 = vadd.f32 0.0, %v1678
    %v1680 = vpop.f32.mrb[0].mxu0
    %1681 = vdwg.mxu0
    %v1682 = vadd.f32 %v1541, %v1644
    %v1683 = vadd.f32 %v1542, %v1649
    %v1684 = vadd.f32 %v1543, %v1654
    %v1685 = vadd.f32 %v1544, %v1659
    %v1686 = vadd.f32 %v1545, %v1664
    %v1687 = vadd.f32 %v1546, %v1669
    %v1688 = vadd.f32 %v1547, %v1674
    %v1689 = vadd.f32 %v1548, %v1679
    %v1690 = vld [vmem:[%s3 + $0xc0] sm:$0xff]
    %v1691 = vld [vmem:[%s3 + $0xc8] sm:$0xff]
    %v1692 = vld [vmem:[%s3 + $0xd0] sm:$0xff]
    %v1693 = vld [vmem:[%s3 + $0xd8] sm:$0xff]
    %v1695 = vsel %vm867, %v835, 0
    %v1698 = vsel %vm867, %v836, 0
    %v1701 = vsel %vm867, %v837, 0
    %v1704 = vsel %vm867, %v838, 0
    %v1707 = vsel %vm867, %v839, 0
    %v1710 = vsel %vm867, %v840, 0
    %v1713 = vsel %vm867, %v841, 0
    %v1716 = vsel %vm867, %v842, 0
    %1718 = vmatprep.subr.mxu0 0.0
    %1719 = vmatpush1.msra.mxu0 %v1690
    %1720 = vmatprep.subr.mxu0 0.0
    %1721 = vmatpush1.msra.mxu0 %v1691
    %1722 = vmatprep.subr.mxu0 0.0
    %1723 = vmatpush1.msra.mxu0 %v1692
    %1724 = vmatprep.subr.mxu0 0.0
    %1725 = vmatpush1.msra.mxu0 %v1693
    %1726 = vmatprep.subr.mxu0 0.0
    %1727 = vmatpush1.msra.mxu0 0.0
    %1728 = vmatprep.subr.mxu0 0.0
    %1729 = vmatpush1.msra.mxu0 0.0
    %1730 = vmatprep.subr.mxu0 0.0
    %1731 = vmatpush1.msra.mxu0 0.0
    %1732 = vmatprep.subr.mxu0 0.0
    %1733 = vmatpush1.msra.mxu0 0.0
    %1734 = vmatprep.subr.mxu0 0.0
    %1735 = vmatpush1.msra.mxu0 0.0
    %1736 = vmatprep.subr.mxu0 0.0
    %1737 = vmatpush1.msra.mxu0 0.0
    %1738 = vmatprep.subr.mxu0 0.0
    %1739 = vmatpush1.msra.mxu0 0.0
    %1740 = vmatprep.subr.mxu0 0.0
    %1741 = vmatpush1.msra.mxu0 0.0
    %1742 = vmatprep.subr.mxu0 0.0
    %1743 = vmatpush1.msra.mxu0 0.0
    %1744 = vmatprep.subr.mxu0 0.0
    %1745 = vmatpush1.msra.mxu0 0.0
    %1746 = vmatprep.subr.mxu0 0.0
    %1747 = vmatpush1.msra.mxu0 0.0
    %1748 = vmatprep.subr.mxu0 0.0
    %1749 = vmatpush1.msra.mxu0 0.0
    %1750 = vmatprep.subr.mxu0 0.0
    %1751 = vmatpush1.msra.mxu0 0.0
    %1752 = vmatprep.subr.mxu0 0.0
    %1753 = vmatpush1.msra.mxu0 0.0
    %1754 = vmatprep.subr.mxu0 0.0
    %1755 = vmatpush1.msra.mxu0 0.0
    %1756 = vmatprep.subr.mxu0 0.0
    %1757 = vmatpush1.msra.mxu0 0.0
    %1758 = vmatprep.subr.mxu0 0.0
    %1759 = vmatpush1.msra.mxu0 0.0
    %1760 = vmatprep.subr.mxu0 0.0
    %1761 = vmatpush1.msra.mxu0 0.0
    %1762 = vmatprep.subr.mxu0 0.0
    %1763 = vmatpush1.msra.mxu0 0.0
    %1764 = vmatprep.subr.mxu0 0.0
    %1765 = vmatpush1.msra.mxu0 0.0
    %1766 = vmatprep.subr.mxu0 0.0
    %1767 = vmatpush1.msra.mxu0 0.0
    %1768 = vmatprep.subr.mxu0 0.0
    %1769 = vmatpush1.msra.mxu0 0.0
    %1770 = vmatprep.subr.mxu0 0.0
    %1771 = vmatpush1.msra.mxu0 0.0
    %1772 = vmatprep.subr.mxu0 0.0
    %1773 = vmatpush1.msra.mxu0 0.0
    %1774 = vmatprep.subr.mxu0 0.0
    %1775 = vmatpush1.msra.mxu0 0.0
    %1776 = vmatprep.subr.mxu0 0.0
    %1777 = vmatpush1.msra.mxu0 0.0
    %1778 = vmatprep.subr.mxu0 0.0
    %1779 = vmatpush1.msra.mxu0 0.0
    %1780 = vmatprep.subr.mxu0 0.0
    %1781 = vmatpush1.msra.mxu0 0.0
    %1782 = vmatprep.mubr.f32.mxu0 0.0
    %1783 = vmatmul.mubr.f32.gmra.mrb[0].mxu0 %v1695
    %v1784 = vpop.f32.mrb[0].mxu0
    %v1785 = vadd.f32 0.0, %v1784
    %v1786 = vpop.f32.mrb[0].mxu0
    %1787 = vmatprep.mubr.f32.mxu0 0.0
    %1788 = vmatmul.mubr.f32.gmra.mrb[0].mxu0 %v1698
    %v1789 = vpop.f32.mrb[0].mxu0
    %v1790 = vadd.f32 0.0, %v1789
    %v1791 = vpop.f32.mrb[0].mxu0
    %1792 = vmatprep.mubr.f32.mxu0 0.0
    %1793 = vmatmul.mubr.f32.gmra.mrb[0].mxu0 %v1701
    %v1794 = vpop.f32.mrb[0].mxu0
    %v1795 = vadd.f32 0.0, %v1794
    %v1796 = vpop.f32.mrb[0].mxu0
    %1797 = vmatprep.mubr.f32.mxu0 0.0
    %1798 = vmatmul.mubr.f32.gmra.mrb[0].mxu0 %v1704
    %v1799 = vpop.f32.mrb[0].mxu0
    %v1800 = vadd.f32 0.0, %v1799
    %v1801 = vpop.f32.mrb[0].mxu0
    %1802 = vmatprep.mubr.f32.mxu0 0.0
    %1803 = vmatmul.mubr.f32.gmra.mrb[0].mxu0 %v1707
    %v1804 = vpop.f32.mrb[0].mxu0
    %v1805 = vadd.f32 0.0, %v1804
    %v1806 = vpop.f32.mrb[0].mxu0
    %1807 = vmatprep.mubr.f32.mxu0 0.0
    %1808 = vmatmul.mubr.f32.gmra.mrb[0].mxu0 %v1710
    %v1809 = vpop.f32.mrb[0].mxu0
    %v1810 = vadd.f32 0.0, %v1809
    %v1811 = vpop.f32.mrb[0].mxu0
    %1812 = vmatprep.mubr.f32.mxu0 0.0
    %1813 = vmatmul.mubr.f32.gmra.mrb[0].mxu0 %v1713
    %v1814 = vpop.f32.mrb[0].mxu0
    %v1815 = vadd.f32 0.0, %v1814
    %v1816 = vpop.f32.mrb[0].mxu0
    %1817 = vmatprep.mubr.f32.mxu0 0.0
    %1818 = vmatmul.mubr.f32.gmra.mrb[0].mxu0 %v1716
    %v1819 = vpop.f32.mrb[0].mxu0
    %v1820 = vadd.f32 0.0, %v1819
    %v1821 = vpop.f32.mrb[0].mxu0
    %1822 = vdwg.mxu0
    %v1823 = vadd.f32 %v1682, %v1785
    %v1824 = vadd.f32 %v1683, %v1790
    %v1825 = vadd.f32 %v1684, %v1795
    %v1826 = vadd.f32 %v1685, %v1800
    %v1827 = vadd.f32 %v1686, %v1805
    %v1828 = vadd.f32 %v1687, %v1810
    %v1829 = vadd.f32 %v1688, %v1815
    %v1830 = vadd.f32 %v1689, %v1820
    %v1831 = vld [vmem:[%s3 + $0xe0] sm:$0xff]
    %v1832 = vld [vmem:[%s3 + $0xe8] sm:$0xff]
    %v1833 = vld [vmem:[%s3 + $0xf0] sm:$0xff]
    %v1834 = vld [vmem:[%s3 + $0xf8] sm:$0xff]
    %v1836 = vsel %vm867, %v843, 0
    %v1839 = vsel %vm867, %v844, 0
    %v1842 = vsel %vm867, %v845, 0
    %v1845 = vsel %vm867, %v846, 0
    %v1848 = vsel %vm867, %v847, 0
    %v1851 = vsel %vm867, %v848, 0
    %v1854 = vsel %vm867, %v849, 0
    %v1857 = vsel %vm867, %v850, 0
    %1859 = vmatprep.subr.mxu0 0.0
    %1860 = vmatpush1.msra.mxu0 %v1831
    %1861 = vmatprep.subr.mxu0 0.0
    %1862 = vmatpush1.msra.mxu0 %v1832
    %1863 = vmatprep.subr.mxu0 0.0
    %1864 = vmatpush1.msra.mxu0 %v1833
    %1865 = vmatprep.subr.mxu0 0.0
    %1866 = vmatpush1.msra.mxu0 %v1834
    %1867 = vmatprep.subr.mxu0 0.0
    %1868 = vmatpush1.msra.mxu0 0.0
    %1869 = vmatprep.subr.mxu0 0.0
    %1870 = vmatpush1.msra.mxu0 0.0
    %1871 = vmatprep.subr.mxu0 0.0
    %1872 = vmatpush1.msra.mxu0 0.0
    %1873 = vmatprep.subr.mxu0 0.0
    %1874 = vmatpush1.msra.mxu0 0.0
    %1875 = vmatprep.subr.mxu0 0.0
    %1876 = vmatpush1.msra.mxu0 0.0
    %1877 = vmatprep.subr.mxu0 0.0
    %1878 = vmatpush1.msra.mxu0 0.0
    %1879 = vmatprep.subr.mxu0 0.0
    %1880 = vmatpush1.msra.mxu0 0.0
    %1881 = vmatprep.subr.mxu0 0.0
    %1882 = vmatpush1.msra.mxu0 0.0
    %1883 = vmatprep.subr.mxu0 0.0
    %1884 = vmatpush1.msra.mxu0 0.0
    %1885 = vmatprep.subr.mxu0 0.0
    %1886 = vmatpush1.msra.mxu0 0.0
    %1887 = vmatprep.subr.mxu0 0.0
    %1888 = vmatpush1.msra.mxu0 0.0
    %1889 = vmatprep.subr.mxu0 0.0
    %1890 = vmatpush1.msra.mxu0 0.0
    %1891 = vmatprep.subr.mxu0 0.0
    %1892 = vmatpush1.msra.mxu0 0.0
    %1893 = vmatprep.subr.mxu0 0.0
    %1894 = vmatpush1.msra.mxu0 0.0
    %1895 = vmatprep.subr.mxu0 0.0
    %1896 = vmatpush1.msra.mxu0 0.0
    %1897 = vmatprep.subr.mxu0 0.0
    %1898 = vmatpush1.msra.mxu0 0.0
    %1899 = vmatprep.subr.mxu0 0.0
    %1900 = vmatpush1.msra.mxu0 0.0
    %1901 = vmatprep.subr.mxu0 0.0
    %1902 = vmatpush1.msra.mxu0 0.0
    %1903 = vmatprep.subr.mxu0 0.0
    %1904 = vmatpush1.msra.mxu0 0.0
    %1905 = vmatprep.subr.mxu0 0.0
    %1906 = vmatpush1.msra.mxu0 0.0
    %1907 = vmatprep.subr.mxu0 0.0
    %1908 = vmatpush1.msra.mxu0 0.0
    %1909 = vmatprep.subr.mxu0 0.0
    %1910 = vmatpush1.msra.mxu0 0.0
    %1911 = vmatprep.subr.mxu0 0.0
    %1912 = vmatpush1.msra.mxu0 0.0
    %1913 = vmatprep.subr.mxu0 0.0
    %1914 = vmatpush1.msra.mxu0 0.0
    %1915 = vmatprep.subr.mxu0 0.0
    %1916 = vmatpush1.msra.mxu0 0.0
    %1917 = vmatprep.subr.mxu0 0.0
    %1918 = vmatpush1.msra.mxu0 0.0
    %1919 = vmatprep.subr.mxu0 0.0
    %1920 = vmatpush1.msra.mxu0 0.0
    %1921 = vmatprep.subr.mxu0 0.0
    %1922 = vmatpush1.msra.mxu0 0.0
    %1923 = vmatprep.mubr.f32.mxu0 0.0
    %1924 = vmatmul.mubr.f32.gmra.mrb[0].mxu0 %v1836
    %v1925 = vpop.f32.mrb[0].mxu0
    %v1926 = vadd.f32 0.0, %v1925
    %v1927 = vpop.f32.mrb[0].mxu0
    %1928 = vmatprep.mubr.f32.mxu0 0.0
    %1929 = vmatmul.mubr.f32.gmra.mrb[0].mxu0 %v1839
    %v1930 = vpop.f32.mrb[0].mxu0
    %v1931 = vadd.f32 0.0, %v1930
    %v1932 = vpop.f32.mrb[0].mxu0
    %1933 = vmatprep.mubr.f32.mxu0 0.0
    %1934 = vmatmul.mubr.f32.gmra.mrb[0].mxu0 %v1842
    %v1935 = vpop.f32.mrb[0].mxu0
    %v1936 = vadd.f32 0.0, %v1935
    %v1937 = vpop.f32.mrb[0].mxu0
    %1938 = vmatprep.mubr.f32.mxu0 0.0
    %1939 = vmatmul.mubr.f32.gmra.mrb[0].mxu0 %v1845
    %v1940 = vpop.f32.mrb[0].mxu0
    %v1941 = vadd.f32 0.0, %v1940
    %v1942 = vpop.f32.mrb[0].mxu0
    %1943 = vmatprep.mubr.f32.mxu0 0.0
    %1944 = vmatmul.mubr.f32.gmra.mrb[0].mxu0 %v1848
    %v1945 = vpop.f32.mrb[0].mxu0
    %v1946 = vadd.f32 0.0, %v1945
    %v1947 = vpop.f32.mrb[0].mxu0
    %1948 = vmatprep.mubr.f32.mxu0 0.0
    %1949 = vmatmul.mubr.f32.gmra.mrb[0].mxu0 %v1851
    %v1950 = vpop.f32.mrb[0].mxu0
    %v1951 = vadd.f32 0.0, %v1950
    %v1952 = vpop.f32.mrb[0].mxu0
    %1953 = vmatprep.mubr.f32.mxu0 0.0
    %1954 = vmatmul.mubr.f32.gmra.mrb[0].mxu0 %v1854
    %v1955 = vpop.f32.mrb[0].mxu0
    %v1956 = vadd.f32 0.0, %v1955
    %v1957 = vpop.f32.mrb[0].mxu0
    %1958 = vmatprep.mubr.f32.mxu0 0.0
    %1959 = vmatmul.mubr.f32.gmra.mrb[0].mxu0 %v1857
    %v1960 = vpop.f32.mrb[0].mxu0
    %v1961 = vadd.f32 0.0, %v1960
    %v1962 = vpop.f32.mrb[0].mxu0
    %1963 = vdwg.mxu0
    %v1964 = vadd.f32 %v1823, %v1926
    %v1965 = vadd.f32 %v1824, %v1931
    %v1966 = vadd.f32 %v1825, %v1936
    %v1967 = vadd.f32 %v1826, %v1941
    %v1968 = vadd.f32 %v1827, %v1946
    %v1969 = vadd.f32 %v1828, %v1951
    %v1970 = vadd.f32 %v1829, %v1956
    %v1971 = vadd.f32 %v1830, %v1961
    %v1972 = vld [vmem:[%s3 + $0x100] sm:$0xff]
    %v1973 = vld [vmem:[%s3 + $0x108] sm:$0xff]
    %v1974 = vld [vmem:[%s3 + $0x110] sm:$0xff]
    %v1975 = vld [vmem:[%s3 + $0x118] sm:$0xff]
    %v1977 = vsel %vm867, %v851, 0
    %v1980 = vsel %vm867, %v852, 0
    %v1983 = vsel %vm867, %v853, 0
    %v1986 = vsel %vm867, %v854, 0
    %v1989 = vsel %vm867, %v855, 0
    %v1992 = vsel %vm867, %v856, 0
    %v1995 = vsel %vm867, %v857, 0
    %v1998 = vsel %vm867, %v858, 0
    %2000 = vmatprep.subr.mxu0 0.0
    %2001 = vmatpush1.msra.mxu0 %v1972
    %2002 = vmatprep.subr.mxu0 0.0
    %2003 = vmatpush1.msra.mxu0 %v1973
    %2004 = vmatprep.subr.mxu0 0.0
    %2005 = vmatpush1.msra.mxu0 %v1974
    %2006 = vmatprep.subr.mxu0 0.0
    %2007 = vmatpush1.msra.mxu0 %v1975
    %2008 = vmatprep.subr.mxu0 0.0
    %2009 = vmatpush1.msra.mxu0 0.0
    %2010 = vmatprep.subr.mxu0 0.0
    %2011 = vmatpush1.msra.mxu0 0.0
    %2012 = vmatprep.subr.mxu0 0.0
    %2013 = vmatpush1.msra.mxu0 0.0
    %2014 = vmatprep.subr.mxu0 0.0
    %2015 = vmatpush1.msra.mxu0 0.0
    %2016 = vmatprep.subr.mxu0 0.0
    %2017 = vmatpush1.msra.mxu0 0.0
    %2018 = vmatprep.subr.mxu0 0.0
    %2019 = vmatpush1.msra.mxu0 0.0
    %2020 = vmatprep.subr.mxu0 0.0
    %2021 = vmatpush1.msra.mxu0 0.0
    %2022 = vmatprep.subr.mxu0 0.0
    %2023 = vmatpush1.msra.mxu0 0.0
    %2024 = vmatprep.subr.mxu0 0.0
    %2025 = vmatpush1.msra.mxu0 0.0
    %2026 = vmatprep.subr.mxu0 0.0
    %2027 = vmatpush1.msra.mxu0 0.0
    %2028 = vmatprep.subr.mxu0 0.0
    %2029 = vmatpush1.msra.mxu0 0.0
    %2030 = vmatprep.subr.mxu0 0.0
    %2031 = vmatpush1.msra.mxu0 0.0
    %2032 = vmatprep.subr.mxu0 0.0
    %2033 = vmatpush1.msra.mxu0 0.0
    %2034 = vmatprep.subr.mxu0 0.0
    %2035 = vmatpush1.msra.mxu0 0.0
    %2036 = vmatprep.subr.mxu0 0.0
    %2037 = vmatpush1.msra.mxu0 0.0
    %2038 = vmatprep.subr.mxu0 0.0
    %2039 = vmatpush1.msra.mxu0 0.0
    %2040 = vmatprep.subr.mxu0 0.0
    %2041 = vmatpush1.msra.mxu0 0.0
    %2042 = vmatprep.subr.mxu0 0.0
    %2043 = vmatpush1.msra.mxu0 0.0
    %2044 = vmatprep.subr.mxu0 0.0
    %2045 = vmatpush1.msra.mxu0 0.0
    %2046 = vmatprep.subr.mxu0 0.0
    %2047 = vmatpush1.msra.mxu0 0.0
    %2048 = vmatprep.subr.mxu0 0.0
    %2049 = vmatpush1.msra.mxu0 0.0
    %2050 = vmatprep.subr.mxu0 0.0
    %2051 = vmatpush1.msra.mxu0 0.0
    %2052 = vmatprep.subr.mxu0 0.0
    %2053 = vmatpush1.msra.mxu0 0.0
    %2054 = vmatprep.subr.mxu0 0.0
    %2055 = vmatpush1.msra.mxu0 0.0
    %2056 = vmatprep.subr.mxu0 0.0
    %2057 = vmatpush1.msra.mxu0 0.0
    %2058 = vmatprep.subr.mxu0 0.0
    %2059 = vmatpush1.msra.mxu0 0.0
    %2060 = vmatprep.subr.mxu0 0.0
    %2061 = vmatpush1.msra.mxu0 0.0
    %2062 = vmatprep.subr.mxu0 0.0
    %2063 = vmatpush1.msra.mxu0 0.0
    %2064 = vmatprep.mubr.f32.mxu0 0.0
    %2065 = vmatmul.mubr.f32.gmra.mrb[0].mxu0 %v1977
    %v2066 = vpop.f32.mrb[0].mxu0
    %v2067 = vadd.f32 0.0, %v2066
    %v2068 = vpop.f32.mrb[0].mxu0
    %2069 = vmatprep.mubr.f32.mxu0 0.0
    %2070 = vmatmul.mubr.f32.gmra.mrb[0].mxu0 %v1980
    %v2071 = vpop.f32.mrb[0].mxu0
    %v2072 = vadd.f32 0.0, %v2071
    %v2073 = vpop.f32.mrb[0].mxu0
    %2074 = vmatprep.mubr.f32.mxu0 0.0
    %2075 = vmatmul.mubr.f32.gmra.mrb[0].mxu0 %v1983
    %v2076 = vpop.f32.mrb[0].mxu0
    %v2077 = vadd.f32 0.0, %v2076
    %v2078 = vpop.f32.mrb[0].mxu0
    %2079 = vmatprep.mubr.f32.mxu0 0.0
    %2080 = vmatmul.mubr.f32.gmra.mrb[0].mxu0 %v1986
    %v2081 = vpop.f32.mrb[0].mxu0
    %v2082 = vadd.f32 0.0, %v2081
    %v2083 = vpop.f32.mrb[0].mxu0
    %2084 = vmatprep.mubr.f32.mxu0 0.0
    %2085 = vmatmul.mubr.f32.gmra.mrb[0].mxu0 %v1989
    %v2086 = vpop.f32.mrb[0].mxu0
    %v2087 = vadd.f32 0.0, %v2086
    %v2088 = vpop.f32.mrb[0].mxu0
    %2089 = vmatprep.mubr.f32.mxu0 0.0
    %2090 = vmatmul.mubr.f32.gmra.mrb[0].mxu0 %v1992
    %v2091 = vpop.f32.mrb[0].mxu0
    %v2092 = vadd.f32 0.0, %v2091
    %v2093 = vpop.f32.mrb[0].mxu0
    %2094 = vmatprep.mubr.f32.mxu0 0.0
    %2095 = vmatmul.mubr.f32.gmra.mrb[0].mxu0 %v1995
    %v2096 = vpop.f32.mrb[0].mxu0
    %v2097 = vadd.f32 0.0, %v2096
    %v2098 = vpop.f32.mrb[0].mxu0
    %2099 = vmatprep.mubr.f32.mxu0 0.0
    %2100 = vmatmul.mubr.f32.gmra.mrb[0].mxu0 %v1998
    %v2101 = vpop.f32.mrb[0].mxu0
    %v2102 = vadd.f32 0.0, %v2101
    %v2103 = vpop.f32.mrb[0].mxu0
    %2104 = vdwg.mxu0
    %v2105 = vadd.f32 %v1964, %v2067
    %v2106 = vadd.f32 %v1965, %v2072
    %v2107 = vadd.f32 %v1966, %v2077
    %v2108 = vadd.f32 %v1967, %v2082
    %v2109 = vadd.f32 %v1968, %v2087
    %v2110 = vadd.f32 %v1969, %v2092
    %v2111 = vadd.f32 %v1970, %v2097
    %v2112 = vadd.f32 %v1971, %v2102
    %v2113 = vld [vmem:[%s4] sm:$0x1]
    %v2115 = vlaneseq
    %v2116 = vshrl.u32 %v2115, 7
    %v2117 = vsub.s32 0, %v2116
    %v2118 = vrot.slane %v2113, %v2117
    %v2120 = vadd.f32 %v2105, %v2118
    %v2121 = vadd.f32 %v2106, %v2118
    %v2122 = vadd.f32 %v2107, %v2118
    %v2123 = vadd.f32 %v2108, %v2118
    %v2124 = vadd.f32 %v2109, %v2118
    %v2125 = vadd.f32 %v2110, %v2118
    %v2126 = vadd.f32 %v2111, %v2118
    %v2127 = vadd.f32 %v2112, %v2118
    %v2128 = vmax.f32 %v2120, 0.0
    %v2129 = vmax.f32 %v2121, 0.0
    %v2130 = vmax.f32 %v2122, 0.0
    %v2131 = vmax.f32 %v2123, 0.0
    %v2132 = vmax.f32 %v2124, 0.0
    %v2133 = vmax.f32 %v2125, 0.0
    %v2134 = vmax.f32 %v2126, 0.0
    %v2135 = vmax.f32 %v2127, 0.0
    %v2136 = vld [vmem:[%s5] sm:$0xff]
    %v2137 = vld [vmem:[%s5 + $0x8] sm:$0xff]
    %v2138 = vld [vmem:[%s5 + $0x10] sm:$0xff]
    %v2139 = vld [vmem:[%s5 + $0x18] sm:$0xff]
    %v2140 = vld [vmem:[%s5 + $0x20] sm:$0xff]
    %v2141 = vld [vmem:[%s5 + $0x28] sm:$0xff]
    %v2142 = vld [vmem:[%s5 + $0x30] sm:$0xff]
    %v2143 = vld [vmem:[%s5 + $0x38] sm:$0xff]
    %v2144 = vld [vmem:[%s5 + $0x40] sm:$0xff]
    %v2145 = vld [vmem:[%s5 + $0x48] sm:$0xff]
    %v2146 = vld [vmem:[%s5 + $0x50] sm:$0xff]
    %v2147 = vld [vmem:[%s5 + $0x58] sm:$0xff]
    %v2148 = vld [vmem:[%s5 + $0x60] sm:$0xff]
    %v2149 = vld [vmem:[%s5 + $0x68] sm:$0xff]
    %v2150 = vld [vmem:[%s5 + $0x70] sm:$0xff]
    %v2151 = vld [vmem:[%s5 + $0x78] sm:$0xff]
    %vm2152 = vcmask 523264
    %v2154 = vsel %vm2152, %v2130, 0
    %v2157 = vsel %vm2152, %v2131, 0
    %2159 = vmatprep.subr.mxu0 0.0
    %2160 = vmatpush1.msra.mxu0 %v2144
    %2161 = vmatprep.subr.mxu0 0.0
    %2162 = vmatpush1.msra.mxu0 %v2145
    %2163 = vmatprep.subr.mxu0 0.0
    %2164 = vmatpush1.msra.mxu0 %v2146
    %2165 = vmatprep.subr.mxu0 0.0
    %2166 = vmatpush1.msra.mxu0 %v2147
    %2167 = vmatprep.subr.mxu0 0.0
    %2168 = vmatpush1.msra.mxu0 %v2148
    %2169 = vmatprep.subr.mxu0 0.0
    %2170 = vmatpush1.msra.mxu0 %v2149
    %2171 = vmatprep.subr.mxu0 0.0
    %2172 = vmatpush1.msra.mxu0 %v2150
    %2173 = vmatprep.subr.mxu0 0.0
    %2174 = vmatpush1.msra.mxu0 %v2151
    %2175 = vmatprep.subr.mxu0 0.0
    %2176 = vmatpush1.msra.mxu0 0.0
    %2177 = vmatprep.subr.mxu0 0.0
    %2178 = vmatpush1.msra.mxu0 0.0
    %2179 = vmatprep.subr.mxu0 0.0
    %2180 = vmatpush1.msra.mxu0 0.0
    %2181 = vmatprep.subr.mxu0 0.0
    %2182 = vmatpush1.msra.mxu0 0.0
    %2183 = vmatprep.subr.mxu0 0.0
    %2184 = vmatpush1.msra.mxu0 0.0
    %2185 = vmatprep.subr.mxu0 0.0
    %2186 = vmatpush1.msra.mxu0 0.0
    %2187 = vmatprep.subr.mxu0 0.0
    %2188 = vmatpush1.msra.mxu0 0.0
    %2189 = vmatprep.subr.mxu0 0.0
    %2190 = vmatpush1.msra.mxu0 0.0
    %2191 = vmatprep.subr.mxu0 0.0
    %2192 = vmatpush1.msra.mxu0 0.0
    %2193 = vmatprep.subr.mxu0 0.0
    %2194 = vmatpush1.msra.mxu0 0.0
    %2195 = vmatprep.subr.mxu0 0.0
    %2196 = vmatpush1.msra.mxu0 0.0
    %2197 = vmatprep.subr.mxu0 0.0
    %2198 = vmatpush1.msra.mxu0 0.0
    %2199 = vmatprep.subr.mxu0 0.0
    %2200 = vmatpush1.msra.mxu0 0.0
    %2201 = vmatprep.subr.mxu0 0.0
    %2202 = vmatpush1.msra.mxu0 0.0
    %2203 = vmatprep.subr.mxu0 0.0
    %2204 = vmatpush1.msra.mxu0 0.0
    %2205 = vmatprep.subr.mxu0 0.0
    %2206 = vmatpush1.msra.mxu0 0.0
    %2207 = vmatprep.subr.mxu0 0.0
    %2208 = vmatpush1.msra.mxu0 0.0
    %2209 = vmatprep.subr.mxu0 0.0
    %2210 = vmatpush1.msra.mxu0 0.0
    %2211 = vmatprep.subr.mxu0 0.0
    %2212 = vmatpush1.msra.mxu0 0.0
    %2213 = vmatprep.subr.mxu0 0.0
    %2214 = vmatpush1.msra.mxu0 0.0
    %2215 = vmatprep.subr.mxu0 0.0
    %2216 = vmatpush1.msra.mxu0 0.0
    %2217 = vmatprep.subr.mxu0 0.0
    %2218 = vmatpush1.msra.mxu0 0.0
    %2219 = vmatprep.subr.mxu0 0.0
    %2220 = vmatpush1.msra.mxu0 0.0
    %2221 = vmatprep.subr.mxu0 0.0
    %2222 = vmatpush1.msra.mxu0 0.0
    %2223 = vmatprep.mubr.f32.mxu0 0.0
    %2224 = vmatmul.mubr.f32.gmra.mrb[0].mxu0 %v2154
    %v2225 = vpop.f32.mrb[0].mxu0
    %v2226 = vadd.f32 0.0, %v2225
    %v2227 = vpop.f32.mrb[0].mxu0
    %2228 = vmatprep.mubr.f32.mxu0 0.0
    %2229 = vmatmul.mubr.f32.gmra.mrb[0].mxu0 %v2157
    %v2230 = vpop.f32.mrb[0].mxu0
    %v2231 = vadd.f32 0.0, %v2230
    %v2232 = vpop.f32.mrb[0].mxu0
    %2233 = vdwg.mxu0
    %v2235 = vsel %vm2152, %v2128, 0
    %v2238 = vsel %vm2152, %v2129, 0
    %2240 = vmatprep.subr.mxu0 0.0
    %2241 = vmatpush1.msra.mxu0 %v2136
    %2242 = vmatprep.subr.mxu0 0.0
    %2243 = vmatpush1.msra.mxu0 %v2137
    %2244 = vmatprep.subr.mxu0 0.0
    %2245 = vmatpush1.msra.mxu0 %v2138
    %2246 = vmatprep.subr.mxu0 0.0
    %2247 = vmatpush1.msra.mxu0 %v2139
    %2248 = vmatprep.subr.mxu0 0.0
    %2249 = vmatpush1.msra.mxu0 %v2140
    %2250 = vmatprep.subr.mxu0 0.0
    %2251 = vmatpush1.msra.mxu0 %v2141
    %2252 = vmatprep.subr.mxu0 0.0
    %2253 = vmatpush1.msra.mxu0 %v2142
    %2254 = vmatprep.subr.mxu0 0.0
    %2255 = vmatpush1.msra.mxu0 %v2143
    %2256 = vmatprep.subr.mxu0 0.0
    %2257 = vmatpush1.msra.mxu0 0.0
    %2258 = vmatprep.subr.mxu0 0.0
    %2259 = vmatpush1.msra.mxu0 0.0
    %2260 = vmatprep.subr.mxu0 0.0
    %2261 = vmatpush1.msra.mxu0 0.0
    %2262 = vmatprep.subr.mxu0 0.0
    %2263 = vmatpush1.msra.mxu0 0.0
    %2264 = vmatprep.subr.mxu0 0.0
    %2265 = vmatpush1.msra.mxu0 0.0
    %2266 = vmatprep.subr.mxu0 0.0
    %2267 = vmatpush1.msra.mxu0 0.0
    %2268 = vmatprep.subr.mxu0 0.0
    %2269 = vmatpush1.msra.mxu0 0.0
    %2270 = vmatprep.subr.mxu0 0.0
    %2271 = vmatpush1.msra.mxu0 0.0
    %2272 = vmatprep.subr.mxu0 0.0
    %2273 = vmatpush1.msra.mxu0 0.0
    %2274 = vmatprep.subr.mxu0 0.0
    %2275 = vmatpush1.msra.mxu0 0.0
    %2276 = vmatprep.subr.mxu0 0.0
    %2277 = vmatpush1.msra.mxu0 0.0
    %2278 = vmatprep.subr.mxu0 0.0
    %2279 = vmatpush1.msra.mxu0 0.0
    %2280 = vmatprep.subr.mxu0 0.0
    %2281 = vmatpush1.msra.mxu0 0.0
    %2282 = vmatprep.subr.mxu0 0.0
    %2283 = vmatpush1.msra.mxu0 0.0
    %2284 = vmatprep.subr.mxu0 0.0
    %2285 = vmatpush1.msra.mxu0 0.0
    %2286 = vmatprep.subr.mxu0 0.0
    %2287 = vmatpush1.msra.mxu0 0.0
    %2288 = vmatprep.subr.mxu0 0.0
    %2289 = vmatpush1.msra.mxu0 0.0
    %2290 = vmatprep.subr.mxu0 0.0
    %2291 = vmatpush1.msra.mxu0 0.0
    %2292 = vmatprep.subr.mxu0 0.0
    %2293 = vmatpush1.msra.mxu0 0.0
    %2294 = vmatprep.subr.mxu0 0.0
    %2295 = vmatpush1.msra.mxu0 0.0
    %2296 = vmatprep.subr.mxu0 0.0
    %2297 = vmatpush1.msra.mxu0 0.0
    %2298 = vmatprep.subr.mxu0 0.0
    %2299 = vmatpush1.msra.mxu0 0.0
    %2300 = vmatprep.subr.mxu0 0.0
    %2301 = vmatpush1.msra.mxu0 0.0
    %2302 = vmatprep.subr.mxu0 0.0
    %2303 = vmatpush1.msra.mxu0 0.0
    %2304 = vmatprep.mubr.f32.mxu0 0.0
    %2305 = vmatmul.mubr.f32.gmra.mrb[0].mxu0 %v2235
    %v2306 = vpop.f32.mrb[0].mxu0
    %v2307 = vadd.f32 %v2226, %v2306
    %v2308 = vpop.f32.mrb[0].mxu0
    %2309 = vmatprep.mubr.f32.mxu0 0.0
    %2310 = vmatmul.mubr.f32.gmra.mrb[0].mxu0 %v2238
    %v2311 = vpop.f32.mrb[0].mxu0
    %v2312 = vadd.f32 %v2231, %v2311
    %v2313 = vpop.f32.mrb[0].mxu0
    %2314 = vdwg.mxu0
    %v2315 = vld [vmem:[%s5 + $0x80] sm:$0xff]
    %v2316 = vld [vmem:[%s5 + $0x88] sm:$0xff]
    %v2317 = vld [vmem:[%s5 + $0x90] sm:$0xff]
    %v2318 = vld [vmem:[%s5 + $0x98] sm:$0xff]
    %v2319 = vld [vmem:[%s5 + $0xa0] sm:$0xff]
    %v2320 = vld [vmem:[%s5 + $0xa8] sm:$0xff]
    %v2321 = vld [vmem:[%s5 + $0xb0] sm:$0xff]
    %v2322 = vld [vmem:[%s5 + $0xb8] sm:$0xff]
    %v2324 = vsel %vm2152, %v2132, 0
    %v2327 = vsel %vm2152, %v2133, 0
    %2329 = vmatprep.subr.mxu0 0.0
    %2330 = vmatpush1.msra.mxu0 %v2315
    %2331 = vmatprep.subr.mxu0 0.0
    %2332 = vmatpush1.msra.mxu0 %v2316
    %2333 = vmatprep.subr.mxu0 0.0
    %2334 = vmatpush1.msra.mxu0 %v2317
    %2335 = vmatprep.subr.mxu0 0.0
    %2336 = vmatpush1.msra.mxu0 %v2318
    %2337 = vmatprep.subr.mxu0 0.0
    %2338 = vmatpush1.msra.mxu0 %v2319
    %2339 = vmatprep.subr.mxu0 0.0
    %2340 = vmatpush1.msra.mxu0 %v2320
    %2341 = vmatprep.subr.mxu0 0.0
    %2342 = vmatpush1.msra.mxu0 %v2321
    %2343 = vmatprep.subr.mxu0 0.0
    %2344 = vmatpush1.msra.mxu0 %v2322
    %2345 = vmatprep.subr.mxu0 0.0
    %2346 = vmatpush1.msra.mxu0 0.0
    %2347 = vmatprep.subr.mxu0 0.0
    %2348 = vmatpush1.msra.mxu0 0.0
    %2349 = vmatprep.subr.mxu0 0.0
    %2350 = vmatpush1.msra.mxu0 0.0
    %2351 = vmatprep.subr.mxu0 0.0
    %2352 = vmatpush1.msra.mxu0 0.0
    %2353 = vmatprep.subr.mxu0 0.0
    %2354 = vmatpush1.msra.mxu0 0.0
    %2355 = vmatprep.subr.mxu0 0.0
    %2356 = vmatpush1.msra.mxu0 0.0
    %2357 = vmatprep.subr.mxu0 0.0
    %2358 = vmatpush1.msra.mxu0 0.0
    %2359 = vmatprep.subr.mxu0 0.0
    %2360 = vmatpush1.msra.mxu0 0.0
    %2361 = vmatprep.subr.mxu0 0.0
    %2362 = vmatpush1.msra.mxu0 0.0
    %2363 = vmatprep.subr.mxu0 0.0
    %2364 = vmatpush1.msra.mxu0 0.0
    %2365 = vmatprep.subr.mxu0 0.0
    %2366 = vmatpush1.msra.mxu0 0.0
    %2367 = vmatprep.subr.mxu0 0.0
    %2368 = vmatpush1.msra.mxu0 0.0
    %2369 = vmatprep.subr.mxu0 0.0
    %2370 = vmatpush1.msra.mxu0 0.0
    %2371 = vmatprep.subr.mxu0 0.0
    %2372 = vmatpush1.msra.mxu0 0.0
    %2373 = vmatprep.subr.mxu0 0.0
    %2374 = vmatpush1.msra.mxu0 0.0
    %2375 = vmatprep.subr.mxu0 0.0
    %2376 = vmatpush1.msra.mxu0 0.0
    %2377 = vmatprep.subr.mxu0 0.0
    %2378 = vmatpush1.msra.mxu0 0.0
    %2379 = vmatprep.subr.mxu0 0.0
    %2380 = vmatpush1.msra.mxu0 0.0
    %2381 = vmatprep.subr.mxu0 0.0
    %2382 = vmatpush1.msra.mxu0 0.0
    %2383 = vmatprep.subr.mxu0 0.0
    %2384 = vmatpush1.msra.mxu0 0.0
    %2385 = vmatprep.subr.mxu0 0.0
    %2386 = vmatpush1.msra.mxu0 0.0
    %2387 = vmatprep.subr.mxu0 0.0
    %2388 = vmatpush1.msra.mxu0 0.0
    %2389 = vmatprep.subr.mxu0 0.0
    %2390 = vmatpush1.msra.mxu0 0.0
    %2391 = vmatprep.subr.mxu0 0.0
    %2392 = vmatpush1.msra.mxu0 0.0
    %2393 = vmatprep.mubr.f32.mxu0 0.0
    %2394 = vmatmul.mubr.f32.gmra.mrb[0].mxu0 %v2324
    %v2395 = vpop.f32.mrb[0].mxu0
    %v2396 = vadd.f32 0.0, %v2395
    %v2397 = vpop.f32.mrb[0].mxu0
    %2398 = vmatprep.mubr.f32.mxu0 0.0
    %2399 = vmatmul.mubr.f32.gmra.mrb[0].mxu0 %v2327
    %v2400 = vpop.f32.mrb[0].mxu0
    %v2401 = vadd.f32 0.0, %v2400
    %v2402 = vpop.f32.mrb[0].mxu0
    %2403 = vdwg.mxu0
    %v2404 = vadd.f32 %v2307, %v2396
    %v2405 = vadd.f32 %v2312, %v2401
    %v2406 = vld [vmem:[%s5 + $0xc0] sm:$0xff]
    %v2407 = vld [vmem:[%s5 + $0xc8] sm:$0xff]
    %v2408 = vld [vmem:[%s5 + $0xd0] sm:$0xff]
    %v2409 = vld [vmem:[%s5 + $0xd8] sm:$0xff]
    %v2410 = vld [vmem:[%s5 + $0xe0] sm:$0xff]
    %v2411 = vld [vmem:[%s5 + $0xe8] sm:$0xff]
    %v2412 = vld [vmem:[%s5 + $0xf0] sm:$0xff]
    %v2413 = vld [vmem:[%s5 + $0xf8] sm:$0xff]
    %v2415 = vsel %vm2152, %v2134, 0
    %v2418 = vsel %vm2152, %v2135, 0
    %2420 = vmatprep.subr.mxu0 0.0
    %2421 = vmatpush1.msra.mxu0 %v2406
    %2422 = vmatprep.subr.mxu0 0.0
    %2423 = vmatpush1.msra.mxu0 %v2407
    %2424 = vmatprep.subr.mxu0 0.0
    %2425 = vmatpush1.msra.mxu0 %v2408
    %2426 = vmatprep.subr.mxu0 0.0
    %2427 = vmatpush1.msra.mxu0 %v2409
    %2428 = vmatprep.subr.mxu0 0.0
    %2429 = vmatpush1.msra.mxu0 %v2410
    %2430 = vmatprep.subr.mxu0 0.0
    %2431 = vmatpush1.msra.mxu0 %v2411
    %2432 = vmatprep.subr.mxu0 0.0
    %2433 = vmatpush1.msra.mxu0 %v2412
    %2434 = vmatprep.subr.mxu0 0.0
    %2435 = vmatpush1.msra.mxu0 %v2413
    %2436 = vmatprep.subr.mxu0 0.0
    %2437 = vmatpush1.msra.mxu0 0.0
    %2438 = vmatprep.subr.mxu0 0.0
    %2439 = vmatpush1.msra.mxu0 0.0
    %2440 = vmatprep.subr.mxu0 0.0
    %2441 = vmatpush1.msra.mxu0 0.0
    %2442 = vmatprep.subr.mxu0 0.0
    %2443 = vmatpush1.msra.mxu0 0.0
    %2444 = vmatprep.subr.mxu0 0.0
    %2445 = vmatpush1.msra.mxu0 0.0
    %2446 = vmatprep.subr.mxu0 0.0
    %2447 = vmatpush1.msra.mxu0 0.0
    %2448 = vmatprep.subr.mxu0 0.0
    %2449 = vmatpush1.msra.mxu0 0.0
    %2450 = vmatprep.subr.mxu0 0.0
    %2451 = vmatpush1.msra.mxu0 0.0
    %2452 = vmatprep.subr.mxu0 0.0
    %2453 = vmatpush1.msra.mxu0 0.0
    %2454 = vmatprep.subr.mxu0 0.0
    %2455 = vmatpush1.msra.mxu0 0.0
    %2456 = vmatprep.subr.mxu0 0.0
    %2457 = vmatpush1.msra.mxu0 0.0
    %2458 = vmatprep.subr.mxu0 0.0
    %2459 = vmatpush1.msra.mxu0 0.0
    %2460 = vmatprep.subr.mxu0 0.0
    %2461 = vmatpush1.msra.mxu0 0.0
    %2462 = vmatprep.subr.mxu0 0.0
    %2463 = vmatpush1.msra.mxu0 0.0
    %2464 = vmatprep.subr.mxu0 0.0
    %2465 = vmatpush1.msra.mxu0 0.0
    %2466 = vmatprep.subr.mxu0 0.0
    %2467 = vmatpush1.msra.mxu0 0.0
    %2468 = vmatprep.subr.mxu0 0.0
    %2469 = vmatpush1.msra.mxu0 0.0
    %2470 = vmatprep.subr.mxu0 0.0
    %2471 = vmatpush1.msra.mxu0 0.0
    %2472 = vmatprep.subr.mxu0 0.0
    %2473 = vmatpush1.msra.mxu0 0.0
    %2474 = vmatprep.subr.mxu0 0.0
    %2475 = vmatpush1.msra.mxu0 0.0
    %2476 = vmatprep.subr.mxu0 0.0
    %2477 = vmatpush1.msra.mxu0 0.0
    %2478 = vmatprep.subr.mxu0 0.0
    %2479 = vmatpush1.msra.mxu0 0.0
    %2480 = vmatprep.subr.mxu0 0.0
    %2481 = vmatpush1.msra.mxu0 0.0
    %2482 = vmatprep.subr.mxu0 0.0
    %2483 = vmatpush1.msra.mxu0 0.0
    %2484 = vmatprep.mubr.f32.mxu0 0.0
    %2485 = vmatmul.mubr.f32.gmra.mrb[0].mxu0 %v2415
    %v2486 = vpop.f32.mrb[0].mxu0
    %v2487 = vadd.f32 0.0, %v2486
    %v2488 = vpop.f32.mrb[0].mxu0
    %2489 = vmatprep.mubr.f32.mxu0 0.0
    %2490 = vmatmul.mubr.f32.gmra.mrb[0].mxu0 %v2418
    %v2491 = vpop.f32.mrb[0].mxu0
    %v2492 = vadd.f32 0.0, %v2491
    %v2493 = vpop.f32.mrb[0].mxu0
    %2494 = vdwg.mxu0
    %v2495 = vadd.f32 %v2404, %v2487
    %v2496 = vadd.f32 %v2405, %v2492
    %v2497 = vld [vmem:[%s6] sm:$0x1]
    %v2499 = vlaneseq
    %v2500 = vshrl.u32 %v2499, 7
    %v2501 = vsub.s32 0, %v2500
    %v2502 = vrot.slane %v2497, %v2501
    %v2504 = vadd.f32 %v2495, %v2502
    %v2505 = vadd.f32 %v2496, %v2502
    %v2506 = vmax.f32 %v2504, 0.0
    %v2507 = vmax.f32 %v2505, 0.0
    %v2508 = vld [vmem:[%s7] sm:$0xff]
    %v2509 = vld [vmem:[%s7 + $0x8] sm:$0xff]
    %v2510 = vld [vmem:[%s7 + $0x10] sm:$0x3]
    %v2511 = vld [vmem:[%s9] sm:$0x1]
    %v2513 = vlaneseq
    %v2514 = vshrl.u32 %v2513, 7
    %v2515 = vsub.s32 0, %v2514
    %v2516 = vrot.slane %v2511, %v2515
    %vm2518 = vcmask 146432
    %v2520 = vsel %vm2518, %v2506, 0
    %v2523 = vsel %vm2518, %v2507, 0
    %vm2525 = vcmask 1041408
    %v2527 = vsel %vm2525, %v2510, 0
    %2529 = vmatprep.subr.mxu0 0.0
    %2530 = vmatpush1.msra.mxu0 %v2508
    %2531 = vmatprep.subr.mxu0 0.0
    %2532 = vmatpush1.msra.mxu0 %v2509
    %2533 = vmatprep.subr.mxu0 0.0
    %2534 = vmatpush1.msra.mxu0 %v2527
    %2535 = vmatprep.subr.mxu0 0.0
    %2536 = vmatpush1.msra.mxu0 0.0
    %2537 = vmatprep.subr.mxu0 0.0
    %2538 = vmatpush1.msra.mxu0 0.0
    %2539 = vmatprep.subr.mxu0 0.0
    %2540 = vmatpush1.msra.mxu0 0.0
    %2541 = vmatprep.subr.mxu0 0.0
    %2542 = vmatpush1.msra.mxu0 0.0
    %2543 = vmatprep.subr.mxu0 0.0
    %2544 = vmatpush1.msra.mxu0 0.0
    %2545 = vmatprep.subr.mxu0 0.0
    %2546 = vmatpush1.msra.mxu0 0.0
    %2547 = vmatprep.subr.mxu0 0.0
    %2548 = vmatpush1.msra.mxu0 0.0
    %2549 = vmatprep.subr.mxu0 0.0
    %2550 = vmatpush1.msra.mxu0 0.0
    %2551 = vmatprep.subr.mxu0 0.0
    %2552 = vmatpush1.msra.mxu0 0.0
    %2553 = vmatprep.subr.mxu0 0.0
    %2554 = vmatpush1.msra.mxu0 0.0
    %2555 = vmatprep.subr.mxu0 0.0
    %2556 = vmatpush1.msra.mxu0 0.0
    %2557 = vmatprep.subr.mxu0 0.0
    %2558 = vmatpush1.msra.mxu0 0.0
    %2559 = vmatprep.subr.mxu0 0.0
    %2560 = vmatpush1.msra.mxu0 0.0
    %2561 = vmatprep.subr.mxu0 0.0
    %2562 = vmatpush1.msra.mxu0 0.0
    %2563 = vmatprep.subr.mxu0 0.0
    %2564 = vmatpush1.msra.mxu0 0.0
    %2565 = vmatprep.subr.mxu0 0.0
    %2566 = vmatpush1.msra.mxu0 0.0
    %2567 = vmatprep.subr.mxu0 0.0
    %2568 = vmatpush1.msra.mxu0 0.0
    %2569 = vmatprep.subr.mxu0 0.0
    %2570 = vmatpush1.msra.mxu0 0.0
    %2571 = vmatprep.subr.mxu0 0.0
    %2572 = vmatpush1.msra.mxu0 0.0
    %2573 = vmatprep.subr.mxu0 0.0
    %2574 = vmatpush1.msra.mxu0 0.0
    %2575 = vmatprep.subr.mxu0 0.0
    %2576 = vmatpush1.msra.mxu0 0.0
    %2577 = vmatprep.subr.mxu0 0.0
    %2578 = vmatpush1.msra.mxu0 0.0
    %2579 = vmatprep.subr.mxu0 0.0
    %2580 = vmatpush1.msra.mxu0 0.0
    %2581 = vmatprep.subr.mxu0 0.0
    %2582 = vmatpush1.msra.mxu0 0.0
    %2583 = vmatprep.subr.mxu0 0.0
    %2584 = vmatpush1.msra.mxu0 0.0
    %2585 = vmatprep.subr.mxu0 0.0
    %2586 = vmatpush1.msra.mxu0 0.0
    %2587 = vmatprep.subr.mxu0 0.0
    %2588 = vmatpush1.msra.mxu0 0.0
    %2589 = vmatprep.subr.mxu0 0.0
    %2590 = vmatpush1.msra.mxu0 0.0
    %2591 = vmatprep.subr.mxu0 0.0
    %2592 = vmatpush1.msra.mxu0 0.0
    %2593 = vmatprep.mubr.f32.mxu0 0.0
    %2594 = vmatmul.mubr.f32.gmra.mrb[0].mxu0 %v2520
    %v2595 = vpop.f32.mrb[0].mxu0
    %v2596 = vadd.f32 %v2516, %v2595
    %v2597 = vpop.f32.mrb[0].mxu0
    %2598 = vmatprep.mubr.f32.mxu0 0.0
    %2599 = vmatmul.mubr.f32.gmra.mrb[0].mxu0 %v2523
    %v2600 = vpop.f32.mrb[0].mxu0
    %v2601 = vadd.f32 %v2516, %v2600
    %v2602 = vpop.f32.mrb[0].mxu0
    %2603 = vdwg.mxu0
    %s2604 = scalar_lea.vmem %s7, 24
    %v2605 = vld [vmem:[%s2604] sm:$0xff]
    %v2606 = vld [vmem:[%s2604 + $0x8] sm:$0xff]
    %v2607 = vld [vmem:[%s2604 + $0x10] sm:$0x3]
    %s2608 = scalar_lea.vmem %s9, 1
    %v2609 = vld [vmem:[%s2608] sm:$0x1]
    %v2611 = vlaneseq
    %v2612 = vshrl.u32 %v2611, 7
    %v2613 = vsub.s32 0, %v2612
    %v2614 = vrot.slane %v2609, %v2613
    %v2617 = vsel %vm2525, %v2607, 0
    %2619 = vmatprep.subr.mxu0 0.0
    %2620 = vmatpush1.msra.mxu0 %v2605
    %2621 = vmatprep.subr.mxu0 0.0
    %2622 = vmatpush1.msra.mxu0 %v2606
    %2623 = vmatprep.subr.mxu0 0.0
    %2624 = vmatpush1.msra.mxu0 %v2617
    %2625 = vmatprep.subr.mxu0 0.0
    %2626 = vmatpush1.msra.mxu0 0.0
    %2627 = vmatprep.subr.mxu0 0.0
    %2628 = vmatpush1.msra.mxu0 0.0
    %2629 = vmatprep.subr.mxu0 0.0
    %2630 = vmatpush1.msra.mxu0 0.0
    %2631 = vmatprep.subr.mxu0 0.0
    %2632 = vmatpush1.msra.mxu0 0.0
    %2633 = vmatprep.subr.mxu0 0.0
    %2634 = vmatpush1.msra.mxu0 0.0
    %2635 = vmatprep.subr.mxu0 0.0
    %2636 = vmatpush1.msra.mxu0 0.0
    %2637 = vmatprep.subr.mxu0 0.0
    %2638 = vmatpush1.msra.mxu0 0.0
    %2639 = vmatprep.subr.mxu0 0.0
    %2640 = vmatpush1.msra.mxu0 0.0
    %2641 = vmatprep.subr.mxu0 0.0
    %2642 = vmatpush1.msra.mxu0 0.0
    %2643 = vmatprep.subr.mxu0 0.0
    %2644 = vmatpush1.msra.mxu0 0.0
    %2645 = vmatprep.subr.mxu0 0.0
    %2646 = vmatpush1.msra.mxu0 0.0
    %2647 = vmatprep.subr.mxu0 0.0
    %2648 = vmatpush1.msra.mxu0 0.0
    %2649 = vmatprep.subr.mxu0 0.0
    %2650 = vmatpush1.msra.mxu0 0.0
    %2651 = vmatprep.subr.mxu0 0.0
    %2652 = vmatpush1.msra.mxu0 0.0
    %2653 = vmatprep.subr.mxu0 0.0
    %2654 = vmatpush1.msra.mxu0 0.0
    %2655 = vmatprep.subr.mxu0 0.0
    %2656 = vmatpush1.msra.mxu0 0.0
    %2657 = vmatprep.subr.mxu0 0.0
    %2658 = vmatpush1.msra.mxu0 0.0
    %2659 = vmatprep.subr.mxu0 0.0
    %2660 = vmatpush1.msra.mxu0 0.0
    %2661 = vmatprep.subr.mxu0 0.0
    %2662 = vmatpush1.msra.mxu0 0.0
    %2663 = vmatprep.subr.mxu0 0.0
    %2664 = vmatpush1.msra.mxu0 0.0
    %2665 = vmatprep.subr.mxu0 0.0
    %2666 = vmatpush1.msra.mxu0 0.0
    %2667 = vmatprep.subr.mxu0 0.0
    %2668 = vmatpush1.msra.mxu0 0.0
    %2669 = vmatprep.subr.mxu0 0.0
    %2670 = vmatpush1.msra.mxu0 0.0
    %2671 = vmatprep.subr.mxu0 0.0
    %2672 = vmatpush1.msra.mxu0 0.0
    %2673 = vmatprep.subr.mxu0 0.0
    %2674 = vmatpush1.msra.mxu0 0.0
    %2675 = vmatprep.subr.mxu0 0.0
    %2676 = vmatpush1.msra.mxu0 0.0
    %2677 = vmatprep.subr.mxu0 0.0
    %2678 = vmatpush1.msra.mxu0 0.0
    %2679 = vmatprep.subr.mxu0 0.0
    %2680 = vmatpush1.msra.mxu0 0.0
    %2681 = vmatprep.subr.mxu0 0.0
    %2682 = vmatpush1.msra.mxu0 0.0
    %2683 = vmatprep.mubr.f32.mxu0 0.0
    %2684 = vmatmul.mubr.f32.gmra.mrb[0].mxu0 %v2520
    %v2685 = vpop.f32.mrb[0].mxu0
    %v2686 = vadd.f32 %v2614, %v2685
    %v2687 = vpop.f32.mrb[0].mxu0
    %2688 = vmatprep.mubr.f32.mxu0 0.0
    %2689 = vmatmul.mubr.f32.gmra.mrb[0].mxu0 %v2523
    %v2690 = vpop.f32.mrb[0].mxu0
    %v2691 = vadd.f32 %v2614, %v2690
    %v2692 = vpop.f32.mrb[0].mxu0
    %2693 = vdwg.mxu0
    %s2694 = scalar_lea.vmem %s7, 48
    %v2695 = vld [vmem:[%s2694] sm:$0xff]
    %v2696 = vld [vmem:[%s2694 + $0x8] sm:$0xff]
    %v2697 = vld [vmem:[%s2694 + $0x10] sm:$0x3]
    %s2698 = scalar_lea.vmem %s9, 2
    %v2699 = vld [vmem:[%s2698] sm:$0x1]
    %v2701 = vlaneseq
    %v2702 = vshrl.u32 %v2701, 7
    %v2703 = vsub.s32 0, %v2702
    %v2704 = vrot.slane %v2699, %v2703
    %v2707 = vsel %vm2525, %v2697, 0
    %2709 = vmatprep.subr.mxu0 0.0
    %2710 = vmatpush1.msra.mxu0 %v2695
    %2711 = vmatprep.subr.mxu0 0.0
    %2712 = vmatpush1.msra.mxu0 %v2696
    %2713 = vmatprep.subr.mxu0 0.0
    %2714 = vmatpush1.msra.mxu0 %v2707
    %2715 = vmatprep.subr.mxu0 0.0
    %2716 = vmatpush1.msra.mxu0 0.0
    %2717 = vmatprep.subr.mxu0 0.0
    %2718 = vmatpush1.msra.mxu0 0.0
    %2719 = vmatprep.subr.mxu0 0.0
    %2720 = vmatpush1.msra.mxu0 0.0
    %2721 = vmatprep.subr.mxu0 0.0
    %2722 = vmatpush1.msra.mxu0 0.0
    %2723 = vmatprep.subr.mxu0 0.0
    %2724 = vmatpush1.msra.mxu0 0.0
    %2725 = vmatprep.subr.mxu0 0.0
    %2726 = vmatpush1.msra.mxu0 0.0
    %2727 = vmatprep.subr.mxu0 0.0
    %2728 = vmatpush1.msra.mxu0 0.0
    %2729 = vmatprep.subr.mxu0 0.0
    %2730 = vmatpush1.msra.mxu0 0.0
    %2731 = vmatprep.subr.mxu0 0.0
    %2732 = vmatpush1.msra.mxu0 0.0
    %2733 = vmatprep.subr.mxu0 0.0
    %2734 = vmatpush1.msra.mxu0 0.0
    %2735 = vmatprep.subr.mxu0 0.0
    %2736 = vmatpush1.msra.mxu0 0.0
    %2737 = vmatprep.subr.mxu0 0.0
    %2738 = vmatpush1.msra.mxu0 0.0
    %2739 = vmatprep.subr.mxu0 0.0
    %2740 = vmatpush1.msra.mxu0 0.0
    %2741 = vmatprep.subr.mxu0 0.0
    %2742 = vmatpush1.msra.mxu0 0.0
    %2743 = vmatprep.subr.mxu0 0.0
    %2744 = vmatpush1.msra.mxu0 0.0
    %2745 = vmatprep.subr.mxu0 0.0
    %2746 = vmatpush1.msra.mxu0 0.0
    %2747 = vmatprep.subr.mxu0 0.0
    %2748 = vmatpush1.msra.mxu0 0.0
    %2749 = vmatprep.subr.mxu0 0.0
    %2750 = vmatpush1.msra.mxu0 0.0
    %2751 = vmatprep.subr.mxu0 0.0
    %2752 = vmatpush1.msra.mxu0 0.0
    %2753 = vmatprep.subr.mxu0 0.0
    %2754 = vmatpush1.msra.mxu0 0.0
    %2755 = vmatprep.subr.mxu0 0.0
    %2756 = vmatpush1.msra.mxu0 0.0
    %2757 = vmatprep.subr.mxu0 0.0
    %2758 = vmatpush1.msra.mxu0 0.0
    %2759 = vmatprep.subr.mxu0 0.0
    %2760 = vmatpush1.msra.mxu0 0.0
    %2761 = vmatprep.subr.mxu0 0.0
    %2762 = vmatpush1.msra.mxu0 0.0
    %2763 = vmatprep.subr.mxu0 0.0
    %2764 = vmatpush1.msra.mxu0 0.0
    %2765 = vmatprep.subr.mxu0 0.0
    %2766 = vmatpush1.msra.mxu0 0.0
    %2767 = vmatprep.subr.mxu0 0.0
    %2768 = vmatpush1.msra.mxu0 0.0
    %2769 = vmatprep.subr.mxu0 0.0
    %2770 = vmatpush1.msra.mxu0 0.0
    %2771 = vmatprep.subr.mxu0 0.0
    %2772 = vmatpush1.msra.mxu0 0.0
    %2773 = vmatprep.mubr.f32.mxu0 0.0
    %2774 = vmatmul.mubr.f32.gmra.mrb[0].mxu0 %v2520
    %v2775 = vpop.f32.mrb[0].mxu0
    %v2776 = vadd.f32 %v2704, %v2775
    %v2777 = vpop.f32.mrb[0].mxu0
    %2778 = vmatprep.mubr.f32.mxu0 0.0
    %2779 = vmatmul.mubr.f32.gmra.mrb[0].mxu0 %v2523
    %v2780 = vpop.f32.mrb[0].mxu0
    %v2781 = vadd.f32 %v2704, %v2780
    %v2782 = vpop.f32.mrb[0].mxu0
    %2783 = vdwg.mxu0
    %s2784 = scalar_lea.vmem %s7, 72
    %v2785 = vld [vmem:[%s2784] sm:$0xff]
    %v2786 = vld [vmem:[%s2784 + $0x8] sm:$0xff]
    %v2787 = vld [vmem:[%s2784 + $0x10] sm:$0x3]
    %s2788 = scalar_lea.vmem %s9, 3
    %v2789 = vld [vmem:[%s2788] sm:$0x1]
    %v2791 = vlaneseq
    %v2792 = vshrl.u32 %v2791, 7
    %v2793 = vsub.s32 0, %v2792
    %v2794 = vrot.slane %v2789, %v2793
    %v2797 = vsel %vm2525, %v2787, 0
    %2799 = vmatprep.subr.mxu0 0.0
    %2800 = vmatpush1.msra.mxu0 %v2785
    %2801 = vmatprep.subr.mxu0 0.0
    %2802 = vmatpush1.msra.mxu0 %v2786
    %2803 = vmatprep.subr.mxu0 0.0
    %2804 = vmatpush1.msra.mxu0 %v2797
    %2805 = vmatprep.subr.mxu0 0.0
    %2806 = vmatpush1.msra.mxu0 0.0
    %2807 = vmatprep.subr.mxu0 0.0
    %2808 = vmatpush1.msra.mxu0 0.0
    %2809 = vmatprep.subr.mxu0 0.0
    %2810 = vmatpush1.msra.mxu0 0.0
    %2811 = vmatprep.subr.mxu0 0.0
    %2812 = vmatpush1.msra.mxu0 0.0
    %2813 = vmatprep.subr.mxu0 0.0
    %2814 = vmatpush1.msra.mxu0 0.0
    %2815 = vmatprep.subr.mxu0 0.0
    %2816 = vmatpush1.msra.mxu0 0.0
    %2817 = vmatprep.subr.mxu0 0.0
    %2818 = vmatpush1.msra.mxu0 0.0
    %2819 = vmatprep.subr.mxu0 0.0
    %2820 = vmatpush1.msra.mxu0 0.0
    %2821 = vmatprep.subr.mxu0 0.0
    %2822 = vmatpush1.msra.mxu0 0.0
    %2823 = vmatprep.subr.mxu0 0.0
    %2824 = vmatpush1.msra.mxu0 0.0
    %2825 = vmatprep.subr.mxu0 0.0
    %2826 = vmatpush1.msra.mxu0 0.0
    %2827 = vmatprep.subr.mxu0 0.0
    %2828 = vmatpush1.msra.mxu0 0.0
    %2829 = vmatprep.subr.mxu0 0.0
    %2830 = vmatpush1.msra.mxu0 0.0
    %2831 = vmatprep.subr.mxu0 0.0
    %2832 = vmatpush1.msra.mxu0 0.0
    %2833 = vmatprep.subr.mxu0 0.0
    %2834 = vmatpush1.msra.mxu0 0.0
    %2835 = vmatprep.subr.mxu0 0.0
    %2836 = vmatpush1.msra.mxu0 0.0
    %2837 = vmatprep.subr.mxu0 0.0
    %2838 = vmatpush1.msra.mxu0 0.0
    %2839 = vmatprep.subr.mxu0 0.0
    %2840 = vmatpush1.msra.mxu0 0.0
    %2841 = vmatprep.subr.mxu0 0.0
    %2842 = vmatpush1.msra.mxu0 0.0
    %2843 = vmatprep.subr.mxu0 0.0
    %2844 = vmatpush1.msra.mxu0 0.0
    %2845 = vmatprep.subr.mxu0 0.0
    %2846 = vmatpush1.msra.mxu0 0.0
    %2847 = vmatprep.subr.mxu0 0.0
    %2848 = vmatpush1.msra.mxu0 0.0
    %2849 = vmatprep.subr.mxu0 0.0
    %2850 = vmatpush1.msra.mxu0 0.0
    %2851 = vmatprep.subr.mxu0 0.0
    %2852 = vmatpush1.msra.mxu0 0.0
    %2853 = vmatprep.subr.mxu0 0.0
    %2854 = vmatpush1.msra.mxu0 0.0
    %2855 = vmatprep.subr.mxu0 0.0
    %2856 = vmatpush1.msra.mxu0 0.0
    %2857 = vmatprep.subr.mxu0 0.0
    %2858 = vmatpush1.msra.mxu0 0.0
    %2859 = vmatprep.subr.mxu0 0.0
    %2860 = vmatpush1.msra.mxu0 0.0
    %2861 = vmatprep.subr.mxu0 0.0
    %2862 = vmatpush1.msra.mxu0 0.0
    %2863 = vmatprep.mubr.f32.mxu0 0.0
    %2864 = vmatmul.mubr.f32.gmra.mrb[0].mxu0 %v2520
    %v2865 = vpop.f32.mrb[0].mxu0
    %v2866 = vadd.f32 %v2794, %v2865
    %v2867 = vpop.f32.mrb[0].mxu0
    %2868 = vmatprep.mubr.f32.mxu0 0.0
    %2869 = vmatmul.mubr.f32.gmra.mrb[0].mxu0 %v2523
    %v2870 = vpop.f32.mrb[0].mxu0
    %v2871 = vadd.f32 %v2794, %v2870
    %v2872 = vpop.f32.mrb[0].mxu0
    %2873 = vdwg.mxu0
    %v2874 = vld [vmem:[%s8] sm:$0xff]
    %v2875 = vld [vmem:[%s8 + $0x8] sm:$0xff]
    %v2876 = vld [vmem:[%s8 + $0x10] sm:$0xff]
    %v2877 = vld [vmem:[%s8 + $0x18] sm:$0xff]
    %v2878 = vld [vmem:[%s8 + $0x20] sm:$0xff]
    %v2879 = vld [vmem:[%s8 + $0x28] sm:$0xff]
    %v2880 = vld [vmem:[%s8 + $0x30] sm:$0x3]
    %s2881 = scalar_lea.vmem %s8, 56
    %v2882 = vld [vmem:[%s2881] sm:$0xff]
    %v2883 = vld [vmem:[%s2881 + $0x8] sm:$0xff]
    %v2884 = vld [vmem:[%s2881 + $0x10] sm:$0xff]
    %v2885 = vld [vmem:[%s2881 + $0x18] sm:$0xff]
    %v2886 = vld [vmem:[%s2881 + $0x20] sm:$0xff]
    %v2887 = vld [vmem:[%s2881 + $0x28] sm:$0xff]
    %v2888 = vld [vmem:[%s2881 + $0x30] sm:$0x3]
    %s2889 = scalar_lea.vmem %s8, 112
    %v2890 = vld [vmem:[%s2889] sm:$0xff]
    %v2891 = vld [vmem:[%s2889 + $0x8] sm:$0xff]
    %v2892 = vld [vmem:[%s2889 + $0x10] sm:$0xff]
    %v2893 = vld [vmem:[%s2889 + $0x18] sm:$0xff]
    %v2894 = vld [vmem:[%s2889 + $0x20] sm:$0xff]
    %v2895 = vld [vmem:[%s2889 + $0x28] sm:$0xff]
    %v2896 = vld [vmem:[%s2889 + $0x30] sm:$0x3]
    %s2897 = scalar_lea.vmem %s8, 168
    %v2898 = vld [vmem:[%s2897] sm:$0xff]
    %v2899 = vld [vmem:[%s2897 + $0x8] sm:$0xff]
    %v2900 = vld [vmem:[%s2897 + $0x10] sm:$0xff]
    %v2901 = vld [vmem:[%s2897 + $0x18] sm:$0xff]
    %v2902 = vld [vmem:[%s2897 + $0x20] sm:$0xff]
    %v2903 = vld [vmem:[%s2897 + $0x28] sm:$0xff]
    %v2904 = vld [vmem:[%s2897 + $0x30] sm:$0x3]
    %v2905 = vld [vmem:[%s10] sm:$0xff]
    %v2906 = vld [vmem:[%s10 + $0x8] sm:$0xff]
    %v2907 = vld [vmem:[%s10 + $0x10] sm:$0xff]
    %v2908 = vld [vmem:[%s10 + $0x18] sm:$0xff]
    %v2909 = vld [vmem:[%s10 + $0x20] sm:$0xff]
    %v2910 = vld [vmem:[%s10 + $0x28] sm:$0xff]
    %v2911 = vld [vmem:[%s10 + $0x30] sm:$0xff]
    %v2912 = vld [vmem:[%s10 + $0x38] sm:$0xff]
    %v2913 = vld [vmem:[%s10 + $0x40] sm:$0xff]
    %v2914 = vld [vmem:[%s10 + $0x48] sm:$0xff]
    %v2915 = vld [vmem:[%s10 + $0x50] sm:$0xff]
    %v2916 = vld [vmem:[%s10 + $0x58] sm:$0xff]
    %v2917 = vld [vmem:[%s10 + $0x60] sm:$0xf]
    %s2918 = scalar_lea.vmem %s10, 104
    %v2919 = vld [vmem:[%s2918] sm:$0xff]
    %v2920 = vld [vmem:[%s2918 + $0x8] sm:$0xff]
    %v2921 = vld [vmem:[%s2918 + $0x10] sm:$0xff]
    %v2922 = vld [vmem:[%s2918 + $0x18] sm:$0xff]
    %v2923 = vld [vmem:[%s2918 + $0x20] sm:$0xff]
    %v2924 = vld [vmem:[%s2918 + $0x28] sm:$0xff]
    %v2925 = vld [vmem:[%s2918 + $0x30] sm:$0xff]
    %v2926 = vld [vmem:[%s2918 + $0x38] sm:$0xff]
    %v2927 = vld [vmem:[%s2918 + $0x40] sm:$0xff]
    %v2928 = vld [vmem:[%s2918 + $0x48] sm:$0xff]
    %v2929 = vld [vmem:[%s2918 + $0x50] sm:$0xff]
    %v2930 = vld [vmem:[%s2918 + $0x58] sm:$0xff]
    %v2931 = vld [vmem:[%s2918 + $0x60] sm:$0xf]
    %s2932 = scalar_lea.vmem %s10, 208
    %v2933 = vld [vmem:[%s2932] sm:$0xff]
    %v2934 = vld [vmem:[%s2932 + $0x8] sm:$0xff]
    %v2935 = vld [vmem:[%s2932 + $0x10] sm:$0xff]
    %v2936 = vld [vmem:[%s2932 + $0x18] sm:$0xff]
    %v2937 = vld [vmem:[%s2932 + $0x20] sm:$0xff]
    %v2938 = vld [vmem:[%s2932 + $0x28] sm:$0xff]
    %v2939 = vld [vmem:[%s2932 + $0x30] sm:$0xff]
    %v2940 = vld [vmem:[%s2932 + $0x38] sm:$0xff]
    %v2941 = vld [vmem:[%s2932 + $0x40] sm:$0xff]
    %v2942 = vld [vmem:[%s2932 + $0x48] sm:$0xff]
    %v2943 = vld [vmem:[%s2932 + $0x50] sm:$0xff]
    %v2944 = vld [vmem:[%s2932 + $0x58] sm:$0xff]
    %v2945 = vld [vmem:[%s2932 + $0x60] sm:$0xf]
    %s2946 = scalar_lea.vmem %s10, 312
    %v2947 = vld [vmem:[%s2946] sm:$0xff]
    %v2948 = vld [vmem:[%s2946 + $0x8] sm:$0xff]
    %v2949 = vld [vmem:[%s2946 + $0x10] sm:$0xff]
    %v2950 = vld [vmem:[%s2946 + $0x18] sm:$0xff]
    %v2951 = vld [vmem:[%s2946 + $0x20] sm:$0xff]
    %v2952 = vld [vmem:[%s2946 + $0x28] sm:$0xff]
    %v2953 = vld [vmem:[%s2946 + $0x30] sm:$0xff]
    %v2954 = vld [vmem:[%s2946 + $0x38] sm:$0xff]
    %v2955 = vld [vmem:[%s2946 + $0x40] sm:$0xff]
    %v2956 = vld [vmem:[%s2946 + $0x48] sm:$0xff]
    %v2957 = vld [vmem:[%s2946 + $0x50] sm:$0xff]
    %v2958 = vld [vmem:[%s2946 + $0x58] sm:$0xff]
    %v2959 = vld [vmem:[%s2946 + $0x60] sm:$0xf]
    %v2960 = vld [vmem:[%s11] sm:$0x3]
    %s2961 = scalar_lea.vmem %s11, 2
    %v2962 = vld [vmem:[%s2961] sm:$0x3]
    %s2963 = scalar_lea.vmem %s11, 4
    %v2964 = vld [vmem:[%s2963] sm:$0x3]
    %s2965 = scalar_lea.vmem %s11, 6
    %v2966 = vld [vmem:[%s2965] sm:$0x3]
    %v2967 = vld [vmem:[%s12] sm:$0xff]
    %v2968 = vld [vmem:[%s12 + $0x8] sm:$0xff]
    %v2969 = vld [vmem:[%s12 + $0x10] sm:$0xff]
    %v2970 = vld [vmem:[%s12 + $0x18] sm:$0xff]
    %v2971 = vld [vmem:[%s12 + $0x20] sm:$0xff]
    %v2972 = vld [vmem:[%s12 + $0x28] sm:$0xff]
    %v2973 = vld [vmem:[%s12 + $0x30] sm:$0x3]
    %v2974 = vld [vmem:[%s13] sm:$0x1]
    %v2975 = vld [vmem:[%s14] sm:$0x3]
    %v2976 = vld [vmem:[%s15] sm:$0x3]
    %v2977 = vld [vmem:[%s16] sm:$0x3]
    %v2978 = vld [vmem:[%s17] sm:$0x3]
    %vm2979 = vcmask 408576
    %v2981 = vsel %vm2979, %v2975, 0
    %v2984 = vsel %vm2525, %v2880, 0
    %2986 = vmatprep.subr.mxu0 0.0
    %2987 = vmatpush1.msra.mxu0 %v2874
    %2988 = vmatprep.subr.mxu0 0.0
    %2989 = vmatpush1.msra.mxu0 %v2875
    %2990 = vmatprep.subr.mxu0 0.0
    %2991 = vmatpush1.msra.mxu0 %v2876
    %2992 = vmatprep.subr.mxu0 0.0
    %2993 = vmatpush1.msra.mxu0 %v2877
    %2994 = vmatprep.subr.mxu0 0.0
    %2995 = vmatpush1.msra.mxu0 %v2878
    %2996 = vmatprep.subr.mxu0 0.0
    %2997 = vmatpush1.msra.mxu0 %v2879
    %2998 = vmatprep.subr.mxu0 0.0
    %2999 = vmatpush1.msra.mxu0 %v2984
    %3000 = vmatprep.subr.mxu0 0.0
    %3001 = vmatpush1.msra.mxu0 0.0
    %3002 = vmatprep.subr.mxu0 0.0
    %3003 = vmatpush1.msra.mxu0 0.0
    %3004 = vmatprep.subr.mxu0 0.0
    %3005 = vmatpush1.msra.mxu0 0.0
    %3006 = vmatprep.subr.mxu0 0.0
    %3007 = vmatpush1.msra.mxu0 0.0
    %3008 = vmatprep.subr.mxu0 0.0
    %3009 = vmatpush1.msra.mxu0 0.0
    %3010 = vmatprep.subr.mxu0 0.0
    %3011 = vmatpush1.msra.mxu0 0.0
    %3012 = vmatprep.subr.mxu0 0.0
    %3013 = vmatpush1.msra.mxu0 0.0
    %3014 = vmatprep.subr.mxu0 0.0
    %3015 = vmatpush1.msra.mxu0 0.0
    %3016 = vmatprep.subr.mxu0 0.0
    %3017 = vmatpush1.msra.mxu0 0.0
    %3018 = vmatprep.subr.mxu0 0.0
    %3019 = vmatpush1.msra.mxu0 0.0
    %3020 = vmatprep.subr.mxu0 0.0
    %3021 = vmatpush1.msra.mxu0 0.0
    %3022 = vmatprep.subr.mxu0 0.0
    %3023 = vmatpush1.msra.mxu0 0.0
    %3024 = vmatprep.subr.mxu0 0.0
    %3025 = vmatpush1.msra.mxu0 0.0
    %3026 = vmatprep.subr.mxu0 0.0
    %3027 = vmatpush1.msra.mxu0 0.0
    %3028 = vmatprep.subr.mxu0 0.0
    %3029 = vmatpush1.msra.mxu0 0.0
    %3030 = vmatprep.subr.mxu0 0.0
    %3031 = vmatpush1.msra.mxu0 0.0
    %3032 = vmatprep.subr.mxu0 0.0
    %3033 = vmatpush1.msra.mxu0 0.0
    %3034 = vmatprep.subr.mxu0 0.0
    %3035 = vmatpush1.msra.mxu0 0.0
    %3036 = vmatprep.subr.mxu0 0.0
    %3037 = vmatpush1.msra.mxu0 0.0
    %3038 = vmatprep.subr.mxu0 0.0
    %3039 = vmatpush1.msra.mxu0 0.0
    %3040 = vmatprep.subr.mxu0 0.0
    %3041 = vmatpush1.msra.mxu0 0.0
    %3042 = vmatprep.subr.mxu0 0.0
    %3043 = vmatpush1.msra.mxu0 0.0
    %3044 = vmatprep.subr.mxu0 0.0
    %3045 = vmatpush1.msra.mxu0 0.0
    %3046 = vmatprep.subr.mxu0 0.0
    %3047 = vmatpush1.msra.mxu0 0.0
    %3048 = vmatprep.subr.mxu0 0.0
    %3049 = vmatpush1.msra.mxu0 0.0
    %3050 = vmatprep.mubr.f32.mxu0 0.0
    %3051 = vmatmul.mubr.f32.gmra.mrb[0].mxu0 %v2981
    %v3052 = vpop.f32.mrb[0].mxu0
    %v3053 = vadd.f32 0.0, %v3052
    %v3054 = vpop.f32.mrb[0].mxu0
    %3055 = vdwg.mxu0
    %v3056 = vadd.f32 %v2596, %v3053
    %v3058 = vsel %vm2525, %v2888, 0
    %3060 = vmatprep.subr.mxu0 0.0
    %3061 = vmatpush1.msra.mxu0 %v2882
    %3062 = vmatprep.subr.mxu0 0.0
    %3063 = vmatpush1.msra.mxu0 %v2883
    %3064 = vmatprep.subr.mxu0 0.0
    %3065 = vmatpush1.msra.mxu0 %v2884
    %3066 = vmatprep.subr.mxu0 0.0
    %3067 = vmatpush1.msra.mxu0 %v2885
    %3068 = vmatprep.subr.mxu0 0.0
    %3069 = vmatpush1.msra.mxu0 %v2886
    %3070 = vmatprep.subr.mxu0 0.0
    %3071 = vmatpush1.msra.mxu0 %v2887
    %3072 = vmatprep.subr.mxu0 0.0
    %3073 = vmatpush1.msra.mxu0 %v3058
    %3074 = vmatprep.subr.mxu0 0.0
    %3075 = vmatpush1.msra.mxu0 0.0
    %3076 = vmatprep.subr.mxu0 0.0
    %3077 = vmatpush1.msra.mxu0 0.0
    %3078 = vmatprep.subr.mxu0 0.0
    %3079 = vmatpush1.msra.mxu0 0.0
    %3080 = vmatprep.subr.mxu0 0.0
    %3081 = vmatpush1.msra.mxu0 0.0
    %3082 = vmatprep.subr.mxu0 0.0
    %3083 = vmatpush1.msra.mxu0 0.0
    %3084 = vmatprep.subr.mxu0 0.0
    %3085 = vmatpush1.msra.mxu0 0.0
    %3086 = vmatprep.subr.mxu0 0.0
    %3087 = vmatpush1.msra.mxu0 0.0
    %3088 = vmatprep.subr.mxu0 0.0
    %3089 = vmatpush1.msra.mxu0 0.0
    %3090 = vmatprep.subr.mxu0 0.0
    %3091 = vmatpush1.msra.mxu0 0.0
    %3092 = vmatprep.subr.mxu0 0.0
    %3093 = vmatpush1.msra.mxu0 0.0
    %3094 = vmatprep.subr.mxu0 0.0
    %3095 = vmatpush1.msra.mxu0 0.0
    %3096 = vmatprep.subr.mxu0 0.0
    %3097 = vmatpush1.msra.mxu0 0.0
    %3098 = vmatprep.subr.mxu0 0.0
    %3099 = vmatpush1.msra.mxu0 0.0
    %3100 = vmatprep.subr.mxu0 0.0
    %3101 = vmatpush1.msra.mxu0 0.0
    %3102 = vmatprep.subr.mxu0 0.0
    %3103 = vmatpush1.msra.mxu0 0.0
    %3104 = vmatprep.subr.mxu0 0.0
    %3105 = vmatpush1.msra.mxu0 0.0
    %3106 = vmatprep.subr.mxu0 0.0
    %3107 = vmatpush1.msra.mxu0 0.0
    %3108 = vmatprep.subr.mxu0 0.0
    %3109 = vmatpush1.msra.mxu0 0.0
    %3110 = vmatprep.subr.mxu0 0.0
    %3111 = vmatpush1.msra.mxu0 0.0
    %3112 = vmatprep.subr.mxu0 0.0
    %3113 = vmatpush1.msra.mxu0 0.0
    %3114 = vmatprep.subr.mxu0 0.0
    %3115 = vmatpush1.msra.mxu0 0.0
    %3116 = vmatprep.subr.mxu0 0.0
    %3117 = vmatpush1.msra.mxu0 0.0
    %3118 = vmatprep.subr.mxu0 0.0
    %3119 = vmatpush1.msra.mxu0 0.0
    %3120 = vmatprep.subr.mxu0 0.0
    %3121 = vmatpush1.msra.mxu0 0.0
    %3122 = vmatprep.subr.mxu0 0.0
    %3123 = vmatpush1.msra.mxu0 0.0
    %3124 = vmatprep.mubr.f32.mxu0 0.0
    %3125 = vmatmul.mubr.f32.gmra.mrb[0].mxu0 %v2981
    %v3126 = vpop.f32.mrb[0].mxu0
    %v3127 = vadd.f32 0.0, %v3126
    %v3128 = vpop.f32.mrb[0].mxu0
    %3129 = vdwg.mxu0
    %v3130 = vadd.f32 %v2686, %v3127
    %v3132 = vsel %vm2525, %v2896, 0
    %3134 = vmatprep.subr.mxu0 0.0
    %3135 = vmatpush1.msra.mxu0 %v2890
    %3136 = vmatprep.subr.mxu0 0.0
    %3137 = vmatpush1.msra.mxu0 %v2891
    %3138 = vmatprep.subr.mxu0 0.0
    %3139 = vmatpush1.msra.mxu0 %v2892
    %3140 = vmatprep.subr.mxu0 0.0
    %3141 = vmatpush1.msra.mxu0 %v2893
    %3142 = vmatprep.subr.mxu0 0.0
    %3143 = vmatpush1.msra.mxu0 %v2894
    %3144 = vmatprep.subr.mxu0 0.0
    %3145 = vmatpush1.msra.mxu0 %v2895
    %3146 = vmatprep.subr.mxu0 0.0
    %3147 = vmatpush1.msra.mxu0 %v3132
    %3148 = vmatprep.subr.mxu0 0.0
    %3149 = vmatpush1.msra.mxu0 0.0
    %3150 = vmatprep.subr.mxu0 0.0
    %3151 = vmatpush1.msra.mxu0 0.0
    %3152 = vmatprep.subr.mxu0 0.0
    %3153 = vmatpush1.msra.mxu0 0.0
    %3154 = vmatprep.subr.mxu0 0.0
    %3155 = vmatpush1.msra.mxu0 0.0
    %3156 = vmatprep.subr.mxu0 0.0
    %3157 = vmatpush1.msra.mxu0 0.0
    %3158 = vmatprep.subr.mxu0 0.0
    %3159 = vmatpush1.msra.mxu0 0.0
    %3160 = vmatprep.subr.mxu0 0.0
    %3161 = vmatpush1.msra.mxu0 0.0
    %3162 = vmatprep.subr.mxu0 0.0
    %3163 = vmatpush1.msra.mxu0 0.0
    %3164 = vmatprep.subr.mxu0 0.0
    %3165 = vmatpush1.msra.mxu0 0.0
    %3166 = vmatprep.subr.mxu0 0.0
    %3167 = vmatpush1.msra.mxu0 0.0
    %3168 = vmatprep.subr.mxu0 0.0
    %3169 = vmatpush1.msra.mxu0 0.0
    %3170 = vmatprep.subr.mxu0 0.0
    %3171 = vmatpush1.msra.mxu0 0.0
    %3172 = vmatprep.subr.mxu0 0.0
    %3173 = vmatpush1.msra.mxu0 0.0
    %3174 = vmatprep.subr.mxu0 0.0
    %3175 = vmatpush1.msra.mxu0 0.0
    %3176 = vmatprep.subr.mxu0 0.0
    %3177 = vmatpush1.msra.mxu0 0.0
    %3178 = vmatprep.subr.mxu0 0.0
    %3179 = vmatpush1.msra.mxu0 0.0
    %3180 = vmatprep.subr.mxu0 0.0
    %3181 = vmatpush1.msra.mxu0 0.0
    %3182 = vmatprep.subr.mxu0 0.0
    %3183 = vmatpush1.msra.mxu0 0.0
    %3184 = vmatprep.subr.mxu0 0.0
    %3185 = vmatpush1.msra.mxu0 0.0
    %3186 = vmatprep.subr.mxu0 0.0
    %3187 = vmatpush1.msra.mxu0 0.0
    %3188 = vmatprep.subr.mxu0 0.0
    %3189 = vmatpush1.msra.mxu0 0.0
    %3190 = vmatprep.subr.mxu0 0.0
    %3191 = vmatpush1.msra.mxu0 0.0
    %3192 = vmatprep.subr.mxu0 0.0
    %3193 = vmatpush1.msra.mxu0 0.0
    %3194 = vmatprep.subr.mxu0 0.0
    %3195 = vmatpush1.msra.mxu0 0.0
    %3196 = vmatprep.subr.mxu0 0.0
    %3197 = vmatpush1.msra.mxu0 0.0
    %3198 = vmatprep.mubr.f32.mxu0 0.0
    %3199 = vmatmul.mubr.f32.gmra.mrb[0].mxu0 %v2981
    %v3200 = vpop.f32.mrb[0].mxu0
    %v3201 = vadd.f32 0.0, %v3200
    %v3202 = vpop.f32.mrb[0].mxu0
    %3203 = vdwg.mxu0
    %v3204 = vadd.f32 %v2776, %v3201
    %v3206 = vsel %vm2525, %v2904, 0
    %3208 = vmatprep.subr.mxu0 0.0
    %3209 = vmatpush1.msra.mxu0 %v2898
    %3210 = vmatprep.subr.mxu0 0.0
    %3211 = vmatpush1.msra.mxu0 %v2899
    %3212 = vmatprep.subr.mxu0 0.0
    %3213 = vmatpush1.msra.mxu0 %v2900
    %3214 = vmatprep.subr.mxu0 0.0
    %3215 = vmatpush1.msra.mxu0 %v2901
    %3216 = vmatprep.subr.mxu0 0.0
    %3217 = vmatpush1.msra.mxu0 %v2902
    %3218 = vmatprep.subr.mxu0 0.0
    %3219 = vmatpush1.msra.mxu0 %v2903
    %3220 = vmatprep.subr.mxu0 0.0
    %3221 = vmatpush1.msra.mxu0 %v3206
    %3222 = vmatprep.subr.mxu0 0.0
    %3223 = vmatpush1.msra.mxu0 0.0
    %3224 = vmatprep.subr.mxu0 0.0
    %3225 = vmatpush1.msra.mxu0 0.0
    %3226 = vmatprep.subr.mxu0 0.0
    %3227 = vmatpush1.msra.mxu0 0.0
    %3228 = vmatprep.subr.mxu0 0.0
    %3229 = vmatpush1.msra.mxu0 0.0
    %3230 = vmatprep.subr.mxu0 0.0
    %3231 = vmatpush1.msra.mxu0 0.0
    %3232 = vmatprep.subr.mxu0 0.0
    %3233 = vmatpush1.msra.mxu0 0.0
    %3234 = vmatprep.subr.mxu0 0.0
    %3235 = vmatpush1.msra.mxu0 0.0
    %3236 = vmatprep.subr.mxu0 0.0
    %3237 = vmatpush1.msra.mxu0 0.0
    %3238 = vmatprep.subr.mxu0 0.0
    %3239 = vmatpush1.msra.mxu0 0.0
    %3240 = vmatprep.subr.mxu0 0.0
    %3241 = vmatpush1.msra.mxu0 0.0
    %3242 = vmatprep.subr.mxu0 0.0
    %3243 = vmatpush1.msra.mxu0 0.0
    %3244 = vmatprep.subr.mxu0 0.0
    %3245 = vmatpush1.msra.mxu0 0.0
    %3246 = vmatprep.subr.mxu0 0.0
    %3247 = vmatpush1.msra.mxu0 0.0
    %3248 = vmatprep.subr.mxu0 0.0
    %3249 = vmatpush1.msra.mxu0 0.0
    %3250 = vmatprep.subr.mxu0 0.0
    %3251 = vmatpush1.msra.mxu0 0.0
    %3252 = vmatprep.subr.mxu0 0.0
    %3253 = vmatpush1.msra.mxu0 0.0
    %3254 = vmatprep.subr.mxu0 0.0
    %3255 = vmatpush1.msra.mxu0 0.0
    %3256 = vmatprep.subr.mxu0 0.0
    %3257 = vmatpush1.msra.mxu0 0.0
    %3258 = vmatprep.subr.mxu0 0.0
    %3259 = vmatpush1.msra.mxu0 0.0
    %3260 = vmatprep.subr.mxu0 0.0
    %3261 = vmatpush1.msra.mxu0 0.0
    %3262 = vmatprep.subr.mxu0 0.0
    %3263 = vmatpush1.msra.mxu0 0.0
    %3264 = vmatprep.subr.mxu0 0.0
    %3265 = vmatpush1.msra.mxu0 0.0
    %3266 = vmatprep.subr.mxu0 0.0
    %3267 = vmatpush1.msra.mxu0 0.0
    %3268 = vmatprep.subr.mxu0 0.0
    %3269 = vmatpush1.msra.mxu0 0.0
    %3270 = vmatprep.subr.mxu0 0.0
    %3271 = vmatpush1.msra.mxu0 0.0
    %3272 = vmatprep.mubr.f32.mxu0 0.0
    %3273 = vmatmul.mubr.f32.gmra.mrb[0].mxu0 %v2981
    %v3274 = vpop.f32.mrb[0].mxu0
    %v3275 = vadd.f32 0.0, %v3274
    %v3276 = vpop.f32.mrb[0].mxu0
    %3277 = vdwg.mxu0
    %v3278 = vadd.f32 %v2866, %v3275
    %v3279 = vxor.u32 %v3130, 2147483648
    %v3280 = vmul.f32 %v3279, 1.442695
    %v3281 = vpow.pop %v3280
    %v3282 = vadd.f32 %v3281, 1.0
    %v3283 = vrcp.pop %v3282
    %v3284 = vmul.f32 1.0, %v3283
    %v3285 = vmul.f32 %v3284, %v2976
    %v3286 = vxor.u32 %v3056, 2147483648
    %v3287 = vmul.f32 %v3286, 1.442695
    %v3288 = vpow.pop %v3287
    %v3289 = vadd.f32 %v3288, 1.0
    %v3290 = vrcp.pop %v3289
    %v3291 = vmul.f32 1.0, %v3290
    %v3292 = vtanh.pop %v3204
    %v3293 = vmul.f32 %v3291, %v3292
    %v3294 = vadd.f32 %v3285, %v3293
    %v3295 = vxor.u32 %v3278, 2147483648
    %v3296 = vmul.f32 %v3295, 1.442695
    %v3297 = vpow.pop %v3296
    %v3298 = vadd.f32 %v3297, 1.0
    %v3299 = vrcp.pop %v3298
    %v3300 = vmul.f32 1.0, %v3299
    %v3301 = vtanh.pop %v3294
    %v3302 = vmul.f32 %v3300, %v3301
    %3304 = vrot.lane.b32.xlu0 %v2977, 50
    %v3305 = vpop.permute.xlu0 %3304
    %v3307 = vsel %vm2979, %v3302, %v3305
    %vm3308 = vcmask 818176
    %v3310 = vsel %vm3308, %v3307, 0
    %vm3312 = vcmask 1043456
    %v3314 = vsel %vm3312, %v2917, 0
    %3316 = vmatprep.subr.mxu0 0.0
    %3317 = vmatpush1.msra.mxu0 %v2905
    %3318 = vmatprep.subr.mxu0 0.0
    %3319 = vmatpush1.msra.mxu0 %v2906
    %3320 = vmatprep.subr.mxu0 0.0
    %3321 = vmatpush1.msra.mxu0 %v2907
    %3322 = vmatprep.subr.mxu0 0.0
    %3323 = vmatpush1.msra.mxu0 %v2908
    %3324 = vmatprep.subr.mxu0 0.0
    %3325 = vmatpush1.msra.mxu0 %v2909
    %3326 = vmatprep.subr.mxu0 0.0
    %3327 = vmatpush1.msra.mxu0 %v2910
    %3328 = vmatprep.subr.mxu0 0.0
    %3329 = vmatpush1.msra.mxu0 %v2911
    %3330 = vmatprep.subr.mxu0 0.0
    %3331 = vmatpush1.msra.mxu0 %v2912
    %3332 = vmatprep.subr.mxu0 0.0
    %3333 = vmatpush1.msra.mxu0 %v2913
    %3334 = vmatprep.subr.mxu0 0.0
    %3335 = vmatpush1.msra.mxu0 %v2914
    %3336 = vmatprep.subr.mxu0 0.0
    %3337 = vmatpush1.msra.mxu0 %v2915
    %3338 = vmatprep.subr.mxu0 0.0
    %3339 = vmatpush1.msra.mxu0 %v2916
    %3340 = vmatprep.subr.mxu0 0.0
    %3341 = vmatpush1.msra.mxu0 %v3314
    %3342 = vmatprep.subr.mxu0 0.0
    %3343 = vmatpush1.msra.mxu0 0.0
    %3344 = vmatprep.subr.mxu0 0.0
    %3345 = vmatpush1.msra.mxu0 0.0
    %3346 = vmatprep.subr.mxu0 0.0
    %3347 = vmatpush1.msra.mxu0 0.0
    %3348 = vmatprep.subr.mxu0 0.0
    %3349 = vmatpush1.msra.mxu0 0.0
    %3350 = vmatprep.subr.mxu0 0.0
    %3351 = vmatpush1.msra.mxu0 0.0
    %3352 = vmatprep.subr.mxu0 0.0
    %3353 = vmatpush1.msra.mxu0 0.0
    %3354 = vmatprep.subr.mxu0 0.0
    %3355 = vmatpush1.msra.mxu0 0.0
    %3356 = vmatprep.subr.mxu0 0.0
    %3357 = vmatpush1.msra.mxu0 0.0
    %3358 = vmatprep.subr.mxu0 0.0
    %3359 = vmatpush1.msra.mxu0 0.0
    %3360 = vmatprep.subr.mxu0 0.0
    %3361 = vmatpush1.msra.mxu0 0.0
    %3362 = vmatprep.subr.mxu0 0.0
    %3363 = vmatpush1.msra.mxu0 0.0
    %3364 = vmatprep.subr.mxu0 0.0
    %3365 = vmatpush1.msra.mxu0 0.0
    %3366 = vmatprep.subr.mxu0 0.0
    %3367 = vmatpush1.msra.mxu0 0.0
    %3368 = vmatprep.subr.mxu0 0.0
    %3369 = vmatpush1.msra.mxu0 0.0
    %3370 = vmatprep.subr.mxu0 0.0
    %3371 = vmatpush1.msra.mxu0 0.0
    %3372 = vmatprep.subr.mxu0 0.0
    %3373 = vmatpush1.msra.mxu0 0.0
    %3374 = vmatprep.subr.mxu0 0.0
    %3375 = vmatpush1.msra.mxu0 0.0
    %3376 = vmatprep.subr.mxu0 0.0
    %3377 = vmatpush1.msra.mxu0 0.0
    %3378 = vmatprep.subr.mxu0 0.0
    %3379 = vmatpush1.msra.mxu0 0.0
    %3380 = vmatprep.mubr.f32.mxu0 0.0
    %3381 = vmatmul.mubr.f32.gmra.mrb[0].mxu0 %v3310
    %v3382 = vpop.f32.mrb[0].mxu0
    %v3383 = vadd.f32 %v2960, %v3382
    %v3384 = vpop.f32.mrb[0].mxu0
    %3385 = vdwg.mxu0
    %v3387 = vsel %vm3312, %v2931, 0
    %3389 = vmatprep.subr.mxu0 0.0
    %3390 = vmatpush1.msra.mxu0 %v2919
    %3391 = vmatprep.subr.mxu0 0.0
    %3392 = vmatpush1.msra.mxu0 %v2920
    %3393 = vmatprep.subr.mxu0 0.0
    %3394 = vmatpush1.msra.mxu0 %v2921
    %3395 = vmatprep.subr.mxu0 0.0
    %3396 = vmatpush1.msra.mxu0 %v2922
    %3397 = vmatprep.subr.mxu0 0.0
    %3398 = vmatpush1.msra.mxu0 %v2923
    %3399 = vmatprep.subr.mxu0 0.0
    %3400 = vmatpush1.msra.mxu0 %v2924
    %3401 = vmatprep.subr.mxu0 0.0
    %3402 = vmatpush1.msra.mxu0 %v2925
    %3403 = vmatprep.subr.mxu0 0.0
    %3404 = vmatpush1.msra.mxu0 %v2926
    %3405 = vmatprep.subr.mxu0 0.0
    %3406 = vmatpush1.msra.mxu0 %v2927
    %3407 = vmatprep.subr.mxu0 0.0
    %3408 = vmatpush1.msra.mxu0 %v2928
    %3409 = vmatprep.subr.mxu0 0.0
    %3410 = vmatpush1.msra.mxu0 %v2929
    %3411 = vmatprep.subr.mxu0 0.0
    %3412 = vmatpush1.msra.mxu0 %v2930
    %3413 = vmatprep.subr.mxu0 0.0
    %3414 = vmatpush1.msra.mxu0 %v3387
    %3415 = vmatprep.subr.mxu0 0.0
    %3416 = vmatpush1.msra.mxu0 0.0
    %3417 = vmatprep.subr.mxu0 0.0
    %3418 = vmatpush1.msra.mxu0 0.0
    %3419 = vmatprep.subr.mxu0 0.0
    %3420 = vmatpush1.msra.mxu0 0.0
    %3421 = vmatprep.subr.mxu0 0.0
    %3422 = vmatpush1.msra.mxu0 0.0
    %3423 = vmatprep.subr.mxu0 0.0
    %3424 = vmatpush1.msra.mxu0 0.0
    %3425 = vmatprep.subr.mxu0 0.0
    %3426 = vmatpush1.msra.mxu0 0.0
    %3427 = vmatprep.subr.mxu0 0.0
    %3428 = vmatpush1.msra.mxu0 0.0
    %3429 = vmatprep.subr.mxu0 0.0
    %3430 = vmatpush1.msra.mxu0 0.0
    %3431 = vmatprep.subr.mxu0 0.0
    %3432 = vmatpush1.msra.mxu0 0.0
    %3433 = vmatprep.subr.mxu0 0.0
    %3434 = vmatpush1.msra.mxu0 0.0
    %3435 = vmatprep.subr.mxu0 0.0
    %3436 = vmatpush1.msra.mxu0 0.0
    %3437 = vmatprep.subr.mxu0 0.0
    %3438 = vmatpush1.msra.mxu0 0.0
    %3439 = vmatprep.subr.mxu0 0.0
    %3440 = vmatpush1.msra.mxu0 0.0
    %3441 = vmatprep.subr.mxu0 0.0
    %3442 = vmatpush1.msra.mxu0 0.0
    %3443 = vmatprep.subr.mxu0 0.0
    %3444 = vmatpush1.msra.mxu0 0.0
    %3445 = vmatprep.subr.mxu0 0.0
    %3446 = vmatpush1.msra.mxu0 0.0
    %3447 = vmatprep.subr.mxu0 0.0
    %3448 = vmatpush1.msra.mxu0 0.0
    %3449 = vmatprep.subr.mxu0 0.0
    %3450 = vmatpush1.msra.mxu0 0.0
    %3451 = vmatprep.subr.mxu0 0.0
    %3452 = vmatpush1.msra.mxu0 0.0
    %3453 = vmatprep.mubr.f32.mxu0 0.0
    %3454 = vmatmul.mubr.f32.gmra.mrb[0].mxu0 %v3310
    %v3455 = vpop.f32.mrb[0].mxu0
    %v3456 = vadd.f32 %v2962, %v3455
    %v3457 = vpop.f32.mrb[0].mxu0
    %3458 = vdwg.mxu0
    %v3460 = vsel %vm3312, %v2945, 0
    %3462 = vmatprep.subr.mxu0 0.0
    %3463 = vmatpush1.msra.mxu0 %v2933
    %3464 = vmatprep.subr.mxu0 0.0
    %3465 = vmatpush1.msra.mxu0 %v2934
    %3466 = vmatprep.subr.mxu0 0.0
    %3467 = vmatpush1.msra.mxu0 %v2935
    %3468 = vmatprep.subr.mxu0 0.0
    %3469 = vmatpush1.msra.mxu0 %v2936
    %3470 = vmatprep.subr.mxu0 0.0
    %3471 = vmatpush1.msra.mxu0 %v2937
    %3472 = vmatprep.subr.mxu0 0.0
    %3473 = vmatpush1.msra.mxu0 %v2938
    %3474 = vmatprep.subr.mxu0 0.0
    %3475 = vmatpush1.msra.mxu0 %v2939
    %3476 = vmatprep.subr.mxu0 0.0
    %3477 = vmatpush1.msra.mxu0 %v2940
    %3478 = vmatprep.subr.mxu0 0.0
    %3479 = vmatpush1.msra.mxu0 %v2941
    %3480 = vmatprep.subr.mxu0 0.0
    %3481 = vmatpush1.msra.mxu0 %v2942
    %3482 = vmatprep.subr.mxu0 0.0
    %3483 = vmatpush1.msra.mxu0 %v2943
    %3484 = vmatprep.subr.mxu0 0.0
    %3485 = vmatpush1.msra.mxu0 %v2944
    %3486 = vmatprep.subr.mxu0 0.0
    %3487 = vmatpush1.msra.mxu0 %v3460
    %3488 = vmatprep.subr.mxu0 0.0
    %3489 = vmatpush1.msra.mxu0 0.0
    %3490 = vmatprep.subr.mxu0 0.0
    %3491 = vmatpush1.msra.mxu0 0.0
    %3492 = vmatprep.subr.mxu0 0.0
    %3493 = vmatpush1.msra.mxu0 0.0
    %3494 = vmatprep.subr.mxu0 0.0
    %3495 = vmatpush1.msra.mxu0 0.0
    %3496 = vmatprep.subr.mxu0 0.0
    %3497 = vmatpush1.msra.mxu0 0.0
    %3498 = vmatprep.subr.mxu0 0.0
    %3499 = vmatpush1.msra.mxu0 0.0
    %3500 = vmatprep.subr.mxu0 0.0
    %3501 = vmatpush1.msra.mxu0 0.0
    %3502 = vmatprep.subr.mxu0 0.0
    %3503 = vmatpush1.msra.mxu0 0.0
    %3504 = vmatprep.subr.mxu0 0.0
    %3505 = vmatpush1.msra.mxu0 0.0
    %3506 = vmatprep.subr.mxu0 0.0
    %3507 = vmatpush1.msra.mxu0 0.0
    %3508 = vmatprep.subr.mxu0 0.0
    %3509 = vmatpush1.msra.mxu0 0.0
    %3510 = vmatprep.subr.mxu0 0.0
    %3511 = vmatpush1.msra.mxu0 0.0
    %3512 = vmatprep.subr.mxu0 0.0
    %3513 = vmatpush1.msra.mxu0 0.0
    %3514 = vmatprep.subr.mxu0 0.0
    %3515 = vmatpush1.msra.mxu0 0.0
    %3516 = vmatprep.subr.mxu0 0.0
    %3517 = vmatpush1.msra.mxu0 0.0
    %3518 = vmatprep.subr.mxu0 0.0
    %3519 = vmatpush1.msra.mxu0 0.0
    %3520 = vmatprep.subr.mxu0 0.0
    %3521 = vmatpush1.msra.mxu0 0.0
    %3522 = vmatprep.subr.mxu0 0.0
    %3523 = vmatpush1.msra.mxu0 0.0
    %3524 = vmatprep.subr.mxu0 0.0
    %3525 = vmatpush1.msra.mxu0 0.0
    %3526 = vmatprep.mubr.f32.mxu0 0.0
    %3527 = vmatmul.mubr.f32.gmra.mrb[0].mxu0 %v3310
    %v3528 = vpop.f32.mrb[0].mxu0
    %v3529 = vadd.f32 %v2964, %v3528
    %v3530 = vpop.f32.mrb[0].mxu0
    %3531 = vdwg.mxu0
    %v3533 = vsel %vm3312, %v2959, 0
    %3535 = vmatprep.subr.mxu0 0.0
    %3536 = vmatpush1.msra.mxu0 %v2947
    %3537 = vmatprep.subr.mxu0 0.0
    %3538 = vmatpush1.msra.mxu0 %v2948
    %3539 = vmatprep.subr.mxu0 0.0
    %3540 = vmatpush1.msra.mxu0 %v2949
    %3541 = vmatprep.subr.mxu0 0.0
    %3542 = vmatpush1.msra.mxu0 %v2950
    %3543 = vmatprep.subr.mxu0 0.0
    %3544 = vmatpush1.msra.mxu0 %v2951
    %3545 = vmatprep.subr.mxu0 0.0
    %3546 = vmatpush1.msra.mxu0 %v2952
    %3547 = vmatprep.subr.mxu0 0.0
    %3548 = vmatpush1.msra.mxu0 %v2953
    %3549 = vmatprep.subr.mxu0 0.0
    %3550 = vmatpush1.msra.mxu0 %v2954
    %3551 = vmatprep.subr.mxu0 0.0
    %3552 = vmatpush1.msra.mxu0 %v2955
    %3553 = vmatprep.subr.mxu0 0.0
    %3554 = vmatpush1.msra.mxu0 %v2956
    %3555 = vmatprep.subr.mxu0 0.0
    %3556 = vmatpush1.msra.mxu0 %v2957
    %3557 = vmatprep.subr.mxu0 0.0
    %3558 = vmatpush1.msra.mxu0 %v2958
    %3559 = vmatprep.subr.mxu0 0.0
    %3560 = vmatpush1.msra.mxu0 %v3533
    %3561 = vmatprep.subr.mxu0 0.0
    %3562 = vmatpush1.msra.mxu0 0.0
    %3563 = vmatprep.subr.mxu0 0.0
    %3564 = vmatpush1.msra.mxu0 0.0
    %3565 = vmatprep.subr.mxu0 0.0
    %3566 = vmatpush1.msra.mxu0 0.0
    %3567 = vmatprep.subr.mxu0 0.0
    %3568 = vmatpush1.msra.mxu0 0.0
    %3569 = vmatprep.subr.mxu0 0.0
    %3570 = vmatpush1.msra.mxu0 0.0
    %3571 = vmatprep.subr.mxu0 0.0
    %3572 = vmatpush1.msra.mxu0 0.0
    %3573 = vmatprep.subr.mxu0 0.0
    %3574 = vmatpush1.msra.mxu0 0.0
    %3575 = vmatprep.subr.mxu0 0.0
    %3576 = vmatpush1.msra.mxu0 0.0
    %3577 = vmatprep.subr.mxu0 0.0
    %3578 = vmatpush1.msra.mxu0 0.0
    %3579 = vmatprep.subr.mxu0 0.0
    %3580 = vmatpush1.msra.mxu0 0.0
    %3581 = vmatprep.subr.mxu0 0.0
    %3582 = vmatpush1.msra.mxu0 0.0
    %3583 = vmatprep.subr.mxu0 0.0
    %3584 = vmatpush1.msra.mxu0 0.0
    %3585 = vmatprep.subr.mxu0 0.0
    %3586 = vmatpush1.msra.mxu0 0.0
    %3587 = vmatprep.subr.mxu0 0.0
    %3588 = vmatpush1.msra.mxu0 0.0
    %3589 = vmatprep.subr.mxu0 0.0
    %3590 = vmatpush1.msra.mxu0 0.0
    %3591 = vmatprep.subr.mxu0 0.0
    %3592 = vmatpush1.msra.mxu0 0.0
    %3593 = vmatprep.subr.mxu0 0.0
    %3594 = vmatpush1.msra.mxu0 0.0
    %3595 = vmatprep.subr.mxu0 0.0
    %3596 = vmatpush1.msra.mxu0 0.0
    %3597 = vmatprep.subr.mxu0 0.0
    %3598 = vmatpush1.msra.mxu0 0.0
    %3599 = vmatprep.mubr.f32.mxu0 0.0
    %3600 = vmatmul.mubr.f32.gmra.mrb[0].mxu0 %v3310
    %v3601 = vpop.f32.mrb[0].mxu0
    %v3602 = vadd.f32 %v2966, %v3601
    %v3603 = vpop.f32.mrb[0].mxu0
    %3604 = vdwg.mxu0
    %v3605 = vxor.u32 %v3456, 2147483648
    %v3606 = vmul.f32 %v3605, 1.442695
    %v3607 = vpow.pop %v3606
    %v3608 = vadd.f32 %v3607, 1.0
    %v3609 = vrcp.pop %v3608
    %v3610 = vmul.f32 1.0, %v3609
    %v3611 = vmul.f32 %v3610, %v2978
    %v3612 = vxor.u32 %v3383, 2147483648
    %v3613 = vmul.f32 %v3612, 1.442695
    %v3614 = vpow.pop %v3613
    %v3615 = vadd.f32 %v3614, 1.0
    %v3616 = vrcp.pop %v3615
    %v3617 = vmul.f32 1.0, %v3616
    %v3618 = vtanh.pop %v3529
    %v3619 = vmul.f32 %v3617, %v3618
    %v3620 = vadd.f32 %v3611, %v3619
    %v3621 = vxor.u32 %v3602, 2147483648
    %v3622 = vmul.f32 %v3621, 1.442695
    %v3623 = vpow.pop %v3622
    %v3624 = vadd.f32 %v3623, 1.0
    %v3625 = vrcp.pop %v3624
    %v3626 = vmul.f32 1.0, %v3625
    %v3627 = vtanh.pop %v3620
    %v3628 = vmul.f32 %v3626, %v3627
    %v3630 = vsel %vm2979, %v3302, 0
    %3632 = vmatprep.subr.mxu0 0.0
    %3633 = vmatpush1.msra.mxu0 %v2874
    %3634 = vmatprep.subr.mxu0 0.0
    %3635 = vmatpush1.msra.mxu0 %v2875
    %3636 = vmatprep.subr.mxu0 0.0
    %3637 = vmatpush1.msra.mxu0 %v2876
    %3638 = vmatprep.subr.mxu0 0.0
    %3639 = vmatpush1.msra.mxu0 %v2877
    %3640 = vmatprep.subr.mxu0 0.0
    %3641 = vmatpush1.msra.mxu0 %v2878
    %3642 = vmatprep.subr.mxu0 0.0
    %3643 = vmatpush1.msra.mxu0 %v2879
    %3644 = vmatprep.subr.mxu0 0.0
    %3645 = vmatpush1.msra.mxu0 %v2984
    %3646 = vmatprep.subr.mxu0 0.0
    %3647 = vmatpush1.msra.mxu0 0.0
    %3648 = vmatprep.subr.mxu0 0.0
    %3649 = vmatpush1.msra.mxu0 0.0
    %3650 = vmatprep.subr.mxu0 0.0
    %3651 = vmatpush1.msra.mxu0 0.0
    %3652 = vmatprep.subr.mxu0 0.0
    %3653 = vmatpush1.msra.mxu0 0.0
    %3654 = vmatprep.subr.mxu0 0.0
    %3655 = vmatpush1.msra.mxu0 0.0
    %3656 = vmatprep.subr.mxu0 0.0
    %3657 = vmatpush1.msra.mxu0 0.0
    %3658 = vmatprep.subr.mxu0 0.0
    %3659 = vmatpush1.msra.mxu0 0.0
    %3660 = vmatprep.subr.mxu0 0.0
    %3661 = vmatpush1.msra.mxu0 0.0
    %3662 = vmatprep.subr.mxu0 0.0
    %3663 = vmatpush1.msra.mxu0 0.0
    %3664 = vmatprep.subr.mxu0 0.0
    %3665 = vmatpush1.msra.mxu0 0.0
    %3666 = vmatprep.subr.mxu0 0.0
    %3667 = vmatpush1.msra.mxu0 0.0
    %3668 = vmatprep.subr.mxu0 0.0
    %3669 = vmatpush1.msra.mxu0 0.0
    %3670 = vmatprep.subr.mxu0 0.0
    %3671 = vmatpush1.msra.mxu0 0.0
    %3672 = vmatprep.subr.mxu0 0.0
    %3673 = vmatpush1.msra.mxu0 0.0
    %3674 = vmatprep.subr.mxu0 0.0
    %3675 = vmatpush1.msra.mxu0 0.0
    %3676 = vmatprep.subr.mxu0 0.0
    %3677 = vmatpush1.msra.mxu0 0.0
    %3678 = vmatprep.subr.mxu0 0.0
    %3679 = vmatpush1.msra.mxu0 0.0
    %3680 = vmatprep.subr.mxu0 0.0
    %3681 = vmatpush1.msra.mxu0 0.0
    %3682 = vmatprep.subr.mxu0 0.0
    %3683 = vmatpush1.msra.mxu0 0.0
    %3684 = vmatprep.subr.mxu0 0.0
    %3685 = vmatpush1.msra.mxu0 0.0
    %3686 = vmatprep.subr.mxu0 0.0
    %3687 = vmatpush1.msra.mxu0 0.0
    %3688 = vmatprep.subr.mxu0 0.0
    %3689 = vmatpush1.msra.mxu0 0.0
    %3690 = vmatprep.subr.mxu0 0.0
    %3691 = vmatpush1.msra.mxu0 0.0
    %3692 = vmatprep.subr.mxu0 0.0
    %3693 = vmatpush1.msra.mxu0 0.0
    %3694 = vmatprep.subr.mxu0 0.0
    %3695 = vmatpush1.msra.mxu0 0.0
    %3696 = vmatprep.mubr.f32.mxu0 0.0
    %3697 = vmatmul.mubr.f32.gmra.mrb[0].mxu0 %v3630
    %v3698 = vpop.f32.mrb[0].mxu0
    %v3699 = vadd.f32 0.0, %v3698
    %v3700 = vpop.f32.mrb[0].mxu0
    %3701 = vdwg.mxu0
    %v3703 = vrot.slane %v3699, 6
    %v3705 = vadd.f32 %v2596, %v3703
    %3706 = vmatprep.subr.mxu0 0.0
    %3707 = vmatpush1.msra.mxu0 %v2882
    %3708 = vmatprep.subr.mxu0 0.0
    %3709 = vmatpush1.msra.mxu0 %v2883
    %3710 = vmatprep.subr.mxu0 0.0
    %3711 = vmatpush1.msra.mxu0 %v2884
    %3712 = vmatprep.subr.mxu0 0.0
    %3713 = vmatpush1.msra.mxu0 %v2885
    %3714 = vmatprep.subr.mxu0 0.0
    %3715 = vmatpush1.msra.mxu0 %v2886
    %3716 = vmatprep.subr.mxu0 0.0
    %3717 = vmatpush1.msra.mxu0 %v2887
    %3718 = vmatprep.subr.mxu0 0.0
    %3719 = vmatpush1.msra.mxu0 %v3058
    %3720 = vmatprep.subr.mxu0 0.0
    %3721 = vmatpush1.msra.mxu0 0.0
    %3722 = vmatprep.subr.mxu0 0.0
    %3723 = vmatpush1.msra.mxu0 0.0
    %3724 = vmatprep.subr.mxu0 0.0
    %3725 = vmatpush1.msra.mxu0 0.0
    %3726 = vmatprep.subr.mxu0 0.0
    %3727 = vmatpush1.msra.mxu0 0.0
    %3728 = vmatprep.subr.mxu0 0.0
    %3729 = vmatpush1.msra.mxu0 0.0
    %3730 = vmatprep.subr.mxu0 0.0
    %3731 = vmatpush1.msra.mxu0 0.0
    %3732 = vmatprep.subr.mxu0 0.0
    %3733 = vmatpush1.msra.mxu0 0.0
    %3734 = vmatprep.subr.mxu0 0.0
    %3735 = vmatpush1.msra.mxu0 0.0
    %3736 = vmatprep.subr.mxu0 0.0
    %3737 = vmatpush1.msra.mxu0 0.0
    %3738 = vmatprep.subr.mxu0 0.0
    %3739 = vmatpush1.msra.mxu0 0.0
    %3740 = vmatprep.subr.mxu0 0.0
    %3741 = vmatpush1.msra.mxu0 0.0
    %3742 = vmatprep.subr.mxu0 0.0
    %3743 = vmatpush1.msra.mxu0 0.0
    %3744 = vmatprep.subr.mxu0 0.0
    %3745 = vmatpush1.msra.mxu0 0.0
    %3746 = vmatprep.subr.mxu0 0.0
    %3747 = vmatpush1.msra.mxu0 0.0
    %3748 = vmatprep.subr.mxu0 0.0
    %3749 = vmatpush1.msra.mxu0 0.0
    %3750 = vmatprep.subr.mxu0 0.0
    %3751 = vmatpush1.msra.mxu0 0.0
    %3752 = vmatprep.subr.mxu0 0.0
    %3753 = vmatpush1.msra.mxu0 0.0
    %3754 = vmatprep.subr.mxu0 0.0
    %3755 = vmatpush1.msra.mxu0 0.0
    %3756 = vmatprep.subr.mxu0 0.0
    %3757 = vmatpush1.msra.mxu0 0.0
    %3758 = vmatprep.subr.mxu0 0.0
    %3759 = vmatpush1.msra.mxu0 0.0
    %3760 = vmatprep.subr.mxu0 0.0
    %3761 = vmatpush1.msra.mxu0 0.0
    %3762 = vmatprep.subr.mxu0 0.0
    %3763 = vmatpush1.msra.mxu0 0.0
    %3764 = vmatprep.subr.mxu0 0.0
    %3765 = vmatpush1.msra.mxu0 0.0
    %3766 = vmatprep.subr.mxu0 0.0
    %3767 = vmatpush1.msra.mxu0 0.0
    %3768 = vmatprep.subr.mxu0 0.0
    %3769 = vmatpush1.msra.mxu0 0.0
    %3770 = vmatprep.mubr.f32.mxu0 0.0
    %3771 = vmatmul.mubr.f32.gmra.mrb[0].mxu0 %v3630
    %v3772 = vpop.f32.mrb[0].mxu0
    %v3773 = vadd.f32 0.0, %v3772
    %v3774 = vpop.f32.mrb[0].mxu0
    %3775 = vdwg.mxu0
    %v3777 = vrot.slane %v3773, 6
    %v3779 = vadd.f32 %v2686, %v3777
    %3780 = vmatprep.subr.mxu0 0.0
    %3781 = vmatpush1.msra.mxu0 %v2890
    %3782 = vmatprep.subr.mxu0 0.0
    %3783 = vmatpush1.msra.mxu0 %v2891
    %3784 = vmatprep.subr.mxu0 0.0
    %3785 = vmatpush1.msra.mxu0 %v2892
    %3786 = vmatprep.subr.mxu0 0.0
    %3787 = vmatpush1.msra.mxu0 %v2893
    %3788 = vmatprep.subr.mxu0 0.0
    %3789 = vmatpush1.msra.mxu0 %v2894
    %3790 = vmatprep.subr.mxu0 0.0
    %3791 = vmatpush1.msra.mxu0 %v2895
    %3792 = vmatprep.subr.mxu0 0.0
    %3793 = vmatpush1.msra.mxu0 %v3132
    %3794 = vmatprep.subr.mxu0 0.0
    %3795 = vmatpush1.msra.mxu0 0.0
    %3796 = vmatprep.subr.mxu0 0.0
    %3797 = vmatpush1.msra.mxu0 0.0
    %3798 = vmatprep.subr.mxu0 0.0
    %3799 = vmatpush1.msra.mxu0 0.0
    %3800 = vmatprep.subr.mxu0 0.0
    %3801 = vmatpush1.msra.mxu0 0.0
    %3802 = vmatprep.subr.mxu0 0.0
    %3803 = vmatpush1.msra.mxu0 0.0
    %3804 = vmatprep.subr.mxu0 0.0
    %3805 = vmatpush1.msra.mxu0 0.0
    %3806 = vmatprep.subr.mxu0 0.0
    %3807 = vmatpush1.msra.mxu0 0.0
    %3808 = vmatprep.subr.mxu0 0.0
    %3809 = vmatpush1.msra.mxu0 0.0
    %3810 = vmatprep.subr.mxu0 0.0
    %3811 = vmatpush1.msra.mxu0 0.0
    %3812 = vmatprep.subr.mxu0 0.0
    %3813 = vmatpush1.msra.mxu0 0.0
    %3814 = vmatprep.subr.mxu0 0.0
    %3815 = vmatpush1.msra.mxu0 0.0
    %3816 = vmatprep.subr.mxu0 0.0
    %3817 = vmatpush1.msra.mxu0 0.0
    %3818 = vmatprep.subr.mxu0 0.0
    %3819 = vmatpush1.msra.mxu0 0.0
    %3820 = vmatprep.subr.mxu0 0.0
    %3821 = vmatpush1.msra.mxu0 0.0
    %3822 = vmatprep.subr.mxu0 0.0
    %3823 = vmatpush1.msra.mxu0 0.0
    %3824 = vmatprep.subr.mxu0 0.0
    %3825 = vmatpush1.msra.mxu0 0.0
    %3826 = vmatprep.subr.mxu0 0.0
    %3827 = vmatpush1.msra.mxu0 0.0
    %3828 = vmatprep.subr.mxu0 0.0
    %3829 = vmatpush1.msra.mxu0 0.0
    %3830 = vmatprep.subr.mxu0 0.0
    %3831 = vmatpush1.msra.mxu0 0.0
    %3832 = vmatprep.subr.mxu0 0.0
    %3833 = vmatpush1.msra.mxu0 0.0
    %3834 = vmatprep.subr.mxu0 0.0
    %3835 = vmatpush1.msra.mxu0 0.0
    %3836 = vmatprep.subr.mxu0 0.0
    %3837 = vmatpush1.msra.mxu0 0.0
    %3838 = vmatprep.subr.mxu0 0.0
    %3839 = vmatpush1.msra.mxu0 0.0
    %3840 = vmatprep.subr.mxu0 0.0
    %3841 = vmatpush1.msra.mxu0 0.0
    %3842 = vmatprep.subr.mxu0 0.0
    %3843 = vmatpush1.msra.mxu0 0.0
    %3844 = vmatprep.mubr.f32.mxu0 0.0
    %3845 = vmatmul.mubr.f32.gmra.mrb[0].mxu0 %v3630
    %v3846 = vpop.f32.mrb[0].mxu0
    %v3847 = vadd.f32 0.0, %v3846
    %v3848 = vpop.f32.mrb[0].mxu0
    %3849 = vdwg.mxu0
    %v3851 = vrot.slane %v3847, 6
    %v3853 = vadd.f32 %v2776, %v3851
    %3854 = vmatprep.subr.mxu0 0.0
    %3855 = vmatpush1.msra.mxu0 %v2898
    %3856 = vmatprep.subr.mxu0 0.0
    %3857 = vmatpush1.msra.mxu0 %v2899
    %3858 = vmatprep.subr.mxu0 0.0
    %3859 = vmatpush1.msra.mxu0 %v2900
    %3860 = vmatprep.subr.mxu0 0.0
    %3861 = vmatpush1.msra.mxu0 %v2901
    %3862 = vmatprep.subr.mxu0 0.0
    %3863 = vmatpush1.msra.mxu0 %v2902
    %3864 = vmatprep.subr.mxu0 0.0
    %3865 = vmatpush1.msra.mxu0 %v2903
    %3866 = vmatprep.subr.mxu0 0.0
    %3867 = vmatpush1.msra.mxu0 %v3206
    %3868 = vmatprep.subr.mxu0 0.0
    %3869 = vmatpush1.msra.mxu0 0.0
    %3870 = vmatprep.subr.mxu0 0.0
    %3871 = vmatpush1.msra.mxu0 0.0
    %3872 = vmatprep.subr.mxu0 0.0
    %3873 = vmatpush1.msra.mxu0 0.0
    %3874 = vmatprep.subr.mxu0 0.0
    %3875 = vmatpush1.msra.mxu0 0.0
    %3876 = vmatprep.subr.mxu0 0.0
    %3877 = vmatpush1.msra.mxu0 0.0
    %3878 = vmatprep.subr.mxu0 0.0
    %3879 = vmatpush1.msra.mxu0 0.0
    %3880 = vmatprep.subr.mxu0 0.0
    %3881 = vmatpush1.msra.mxu0 0.0
    %3882 = vmatprep.subr.mxu0 0.0
    %3883 = vmatpush1.msra.mxu0 0.0
    %3884 = vmatprep.subr.mxu0 0.0
    %3885 = vmatpush1.msra.mxu0 0.0
    %3886 = vmatprep.subr.mxu0 0.0
    %3887 = vmatpush1.msra.mxu0 0.0
    %3888 = vmatprep.subr.mxu0 0.0
    %3889 = vmatpush1.msra.mxu0 0.0
    %3890 = vmatprep.subr.mxu0 0.0
    %3891 = vmatpush1.msra.mxu0 0.0
    %3892 = vmatprep.subr.mxu0 0.0
    %3893 = vmatpush1.msra.mxu0 0.0
    %3894 = vmatprep.subr.mxu0 0.0
    %3895 = vmatpush1.msra.mxu0 0.0
    %3896 = vmatprep.subr.mxu0 0.0
    %3897 = vmatpush1.msra.mxu0 0.0
    %3898 = vmatprep.subr.mxu0 0.0
    %3899 = vmatpush1.msra.mxu0 0.0
    %3900 = vmatprep.subr.mxu0 0.0
    %3901 = vmatpush1.msra.mxu0 0.0
    %3902 = vmatprep.subr.mxu0 0.0
    %3903 = vmatpush1.msra.mxu0 0.0
    %3904 = vmatprep.subr.mxu0 0.0
    %3905 = vmatpush1.msra.mxu0 0.0
    %3906 = vmatprep.subr.mxu0 0.0
    %3907 = vmatpush1.msra.mxu0 0.0
    %3908 = vmatprep.subr.mxu0 0.0
    %3909 = vmatpush1.msra.mxu0 0.0
    %3910 = vmatprep.subr.mxu0 0.0
    %3911 = vmatpush1.msra.mxu0 0.0
    %3912 = vmatprep.subr.mxu0 0.0
    %3913 = vmatpush1.msra.mxu0 0.0
    %3914 = vmatprep.subr.mxu0 0.0
    %3915 = vmatpush1.msra.mxu0 0.0
    %3916 = vmatprep.subr.mxu0 0.0
    %3917 = vmatpush1.msra.mxu0 0.0
    %3918 = vmatprep.mubr.f32.mxu0 0.0
    %3919 = vmatmul.mubr.f32.gmra.mrb[0].mxu0 %v3630
    %v3920 = vpop.f32.mrb[0].mxu0
    %v3921 = vadd.f32 0.0, %v3920
    %v3922 = vpop.f32.mrb[0].mxu0
    %3923 = vdwg.mxu0
    %v3925 = vrot.slane %v3921, 6
    %v3927 = vadd.f32 %v2866, %v3925
    %v3928 = vxor.u32 %v3779, 2147483648
    %v3929 = vmul.f32 %v3928, 1.442695
    %v3930 = vpow.pop %v3929
    %v3931 = vadd.f32 %v3930, 1.0
    %v3932 = vrcp.pop %v3931
    %v3933 = vmul.f32 1.0, %v3932
    %v3935 = vrot.slane %v3294, 6
    %v3937 = vmul.f32 %v3933, %v3935
    %v3938 = vxor.u32 %v3705, 2147483648
    %v3939 = vmul.f32 %v3938, 1.442695
    %v3940 = vpow.pop %v3939
    %v3941 = vadd.f32 %v3940, 1.0
    %v3942 = vrcp.pop %v3941
    %v3943 = vmul.f32 1.0, %v3942
    %v3944 = vtanh.pop %v3853
    %v3945 = vmul.f32 %v3943, %v3944
    %v3946 = vadd.f32 %v3937, %v3945
    %v3947 = vxor.u32 %v3927, 2147483648
    %v3948 = vmul.f32 %v3947, 1.442695
    %v3949 = vpow.pop %v3948
    %v3950 = vadd.f32 %v3949, 1.0
    %v3951 = vrcp.pop %v3950
    %v3952 = vmul.f32 1.0, %v3951
    %v3953 = vtanh.pop %v3946
    %v3954 = vmul.f32 %v3952, %v3953
    %v3956 = vrot.slane %v3628, 6
    %3957 = vrot.lane.b32.xlu0 %v3956, 50
    %v3958 = vpop.permute.xlu0 %3957
    %v3960 = vsel %vm2979, %v3954, %v3958
    %v3962 = vrot.slane %v3960, 2
    %v3963 = vsel %vm3308, %v3962, 0
    %3965 = vmatprep.subr.mxu0 0.0
    %3966 = vmatpush1.msra.mxu0 %v2905
    %3967 = vmatprep.subr.mxu0 0.0
    %3968 = vmatpush1.msra.mxu0 %v2906
    %3969 = vmatprep.subr.mxu0 0.0
    %3970 = vmatpush1.msra.mxu0 %v2907
    %3971 = vmatprep.subr.mxu0 0.0
    %3972 = vmatpush1.msra.mxu0 %v2908
    %3973 = vmatprep.subr.mxu0 0.0
    %3974 = vmatpush1.msra.mxu0 %v2909
    %3975 = vmatprep.subr.mxu0 0.0
    %3976 = vmatpush1.msra.mxu0 %v2910
    %3977 = vmatprep.subr.mxu0 0.0
    %3978 = vmatpush1.msra.mxu0 %v2911
    %3979 = vmatprep.subr.mxu0 0.0
    %3980 = vmatpush1.msra.mxu0 %v2912
    %3981 = vmatprep.subr.mxu0 0.0
    %3982 = vmatpush1.msra.mxu0 %v2913
    %3983 = vmatprep.subr.mxu0 0.0
    %3984 = vmatpush1.msra.mxu0 %v2914
    %3985 = vmatprep.subr.mxu0 0.0
    %3986 = vmatpush1.msra.mxu0 %v2915
    %3987 = vmatprep.subr.mxu0 0.0
    %3988 = vmatpush1.msra.mxu0 %v2916
    %3989 = vmatprep.subr.mxu0 0.0
    %3990 = vmatpush1.msra.mxu0 %v3314
    %3991 = vmatprep.subr.mxu0 0.0
    %3992 = vmatpush1.msra.mxu0 0.0
    %3993 = vmatprep.subr.mxu0 0.0
    %3994 = vmatpush1.msra.mxu0 0.0
    %3995 = vmatprep.subr.mxu0 0.0
    %3996 = vmatpush1.msra.mxu0 0.0
    %3997 = vmatprep.subr.mxu0 0.0
    %3998 = vmatpush1.msra.mxu0 0.0
    %3999 = vmatprep.subr.mxu0 0.0
    %4000 = vmatpush1.msra.mxu0 0.0
    %4001 = vmatprep.subr.mxu0 0.0
    %4002 = vmatpush1.msra.mxu0 0.0
    %4003 = vmatprep.subr.mxu0 0.0
    %4004 = vmatpush1.msra.mxu0 0.0
    %4005 = vmatprep.subr.mxu0 0.0
    %4006 = vmatpush1.msra.mxu0 0.0
    %4007 = vmatprep.subr.mxu0 0.0
    %4008 = vmatpush1.msra.mxu0 0.0
    %4009 = vmatprep.subr.mxu0 0.0
    %4010 = vmatpush1.msra.mxu0 0.0
    %4011 = vmatprep.subr.mxu0 0.0
    %4012 = vmatpush1.msra.mxu0 0.0
    %4013 = vmatprep.subr.mxu0 0.0
    %4014 = vmatpush1.msra.mxu0 0.0
    %4015 = vmatprep.subr.mxu0 0.0
    %4016 = vmatpush1.msra.mxu0 0.0
    %4017 = vmatprep.subr.mxu0 0.0
    %4018 = vmatpush1.msra.mxu0 0.0
    %4019 = vmatprep.subr.mxu0 0.0
    %4020 = vmatpush1.msra.mxu0 0.0
    %4021 = vmatprep.subr.mxu0 0.0
    %4022 = vmatpush1.msra.mxu0 0.0
    %4023 = vmatprep.subr.mxu0 0.0
    %4024 = vmatpush1.msra.mxu0 0.0
    %4025 = vmatprep.subr.mxu0 0.0
    %4026 = vmatpush1.msra.mxu0 0.0
    %4027 = vmatprep.subr.mxu0 0.0
    %4028 = vmatpush1.msra.mxu0 0.0
    %4029 = vmatprep.mubr.f32.mxu0 0.0
    %4030 = vmatmul.mubr.f32.gmra.mrb[0].mxu0 %v3963
    %v4031 = vpop.f32.mrb[0].mxu0
    %v4032 = vadd.f32 %v2960, %v4031
    %v4033 = vpop.f32.mrb[0].mxu0
    %4034 = vdwg.mxu0
    %4035 = vmatprep.subr.mxu0 0.0
    %4036 = vmatpush1.msra.mxu0 %v2919
    %4037 = vmatprep.subr.mxu0 0.0
    %4038 = vmatpush1.msra.mxu0 %v2920
    %4039 = vmatprep.subr.mxu0 0.0
    %4040 = vmatpush1.msra.mxu0 %v2921
    %4041 = vmatprep.subr.mxu0 0.0
    %4042 = vmatpush1.msra.mxu0 %v2922
    %4043 = vmatprep.subr.mxu0 0.0
    %4044 = vmatpush1.msra.mxu0 %v2923
    %4045 = vmatprep.subr.mxu0 0.0
    %4046 = vmatpush1.msra.mxu0 %v2924
    %4047 = vmatprep.subr.mxu0 0.0
    %4048 = vmatpush1.msra.mxu0 %v2925
    %4049 = vmatprep.subr.mxu0 0.0
    %4050 = vmatpush1.msra.mxu0 %v2926
    %4051 = vmatprep.subr.mxu0 0.0
    %4052 = vmatpush1.msra.mxu0 %v2927
    %4053 = vmatprep.subr.mxu0 0.0
    %4054 = vmatpush1.msra.mxu0 %v2928
    %4055 = vmatprep.subr.mxu0 0.0
    %4056 = vmatpush1.msra.mxu0 %v2929
    %4057 = vmatprep.subr.mxu0 0.0
    %4058 = vmatpush1.msra.mxu0 %v2930
    %4059 = vmatprep.subr.mxu0 0.0
    %4060 = vmatpush1.msra.mxu0 %v3387
    %4061 = vmatprep.subr.mxu0 0.0
    %4062 = vmatpush1.msra.mxu0 0.0
    %4063 = vmatprep.subr.mxu0 0.0
    %4064 = vmatpush1.msra.mxu0 0.0
    %4065 = vmatprep.subr.mxu0 0.0
    %4066 = vmatpush1.msra.mxu0 0.0
    %4067 = vmatprep.subr.mxu0 0.0
    %4068 = vmatpush1.msra.mxu0 0.0
    %4069 = vmatprep.subr.mxu0 0.0
    %4070 = vmatpush1.msra.mxu0 0.0
    %4071 = vmatprep.subr.mxu0 0.0
    %4072 = vmatpush1.msra.mxu0 0.0
    %4073 = vmatprep.subr.mxu0 0.0
    %4074 = vmatpush1.msra.mxu0 0.0
    %4075 = vmatprep.subr.mxu0 0.0
    %4076 = vmatpush1.msra.mxu0 0.0
    %4077 = vmatprep.subr.mxu0 0.0
    %4078 = vmatpush1.msra.mxu0 0.0
    %4079 = vmatprep.subr.mxu0 0.0
    %4080 = vmatpush1.msra.mxu0 0.0
    %4081 = vmatprep.subr.mxu0 0.0
    %4082 = vmatpush1.msra.mxu0 0.0
    %4083 = vmatprep.subr.mxu0 0.0
    %4084 = vmatpush1.msra.mxu0 0.0
    %4085 = vmatprep.subr.mxu0 0.0
    %4086 = vmatpush1.msra.mxu0 0.0
    %4087 = vmatprep.subr.mxu0 0.0
    %4088 = vmatpush1.msra.mxu0 0.0
    %4089 = vmatprep.subr.mxu0 0.0
    %4090 = vmatpush1.msra.mxu0 0.0
    %4091 = vmatprep.subr.mxu0 0.0
    %4092 = vmatpush1.msra.mxu0 0.0
    %4093 = vmatprep.subr.mxu0 0.0
    %4094 = vmatpush1.msra.mxu0 0.0
    %4095 = vmatprep.subr.mxu0 0.0
    %4096 = vmatpush1.msra.mxu0 0.0
    %4097 = vmatprep.subr.mxu0 0.0
    %4098 = vmatpush1.msra.mxu0 0.0
    %4099 = vmatprep.mubr.f32.mxu0 0.0
    %4100 = vmatmul.mubr.f32.gmra.mrb[0].mxu0 %v3963
    %v4101 = vpop.f32.mrb[0].mxu0
    %v4102 = vadd.f32 %v2962, %v4101
    %v4103 = vpop.f32.mrb[0].mxu0
    %4104 = vdwg.mxu0
    %4105 = vmatprep.subr.mxu0 0.0
    %4106 = vmatpush1.msra.mxu0 %v2933
    %4107 = vmatprep.subr.mxu0 0.0
    %4108 = vmatpush1.msra.mxu0 %v2934
    %4109 = vmatprep.subr.mxu0 0.0
    %4110 = vmatpush1.msra.mxu0 %v2935
    %4111 = vmatprep.subr.mxu0 0.0
    %4112 = vmatpush1.msra.mxu0 %v2936
    %4113 = vmatprep.subr.mxu0 0.0
    %4114 = vmatpush1.msra.mxu0 %v2937
    %4115 = vmatprep.subr.mxu0 0.0
    %4116 = vmatpush1.msra.mxu0 %v2938
    %4117 = vmatprep.subr.mxu0 0.0
    %4118 = vmatpush1.msra.mxu0 %v2939
    %4119 = vmatprep.subr.mxu0 0.0
    %4120 = vmatpush1.msra.mxu0 %v2940
    %4121 = vmatprep.subr.mxu0 0.0
    %4122 = vmatpush1.msra.mxu0 %v2941
    %4123 = vmatprep.subr.mxu0 0.0
    %4124 = vmatpush1.msra.mxu0 %v2942
    %4125 = vmatprep.subr.mxu0 0.0
    %4126 = vmatpush1.msra.mxu0 %v2943
    %4127 = vmatprep.subr.mxu0 0.0
    %4128 = vmatpush1.msra.mxu0 %v2944
    %4129 = vmatprep.subr.mxu0 0.0
    %4130 = vmatpush1.msra.mxu0 %v3460
    %4131 = vmatprep.subr.mxu0 0.0
    %4132 = vmatpush1.msra.mxu0 0.0
    %4133 = vmatprep.subr.mxu0 0.0
    %4134 = vmatpush1.msra.mxu0 0.0
    %4135 = vmatprep.subr.mxu0 0.0
    %4136 = vmatpush1.msra.mxu0 0.0
    %4137 = vmatprep.subr.mxu0 0.0
    %4138 = vmatpush1.msra.mxu0 0.0
    %4139 = vmatprep.subr.mxu0 0.0
    %4140 = vmatpush1.msra.mxu0 0.0
    %4141 = vmatprep.subr.mxu0 0.0
    %4142 = vmatpush1.msra.mxu0 0.0
    %4143 = vmatprep.subr.mxu0 0.0
    %4144 = vmatpush1.msra.mxu0 0.0
    %4145 = vmatprep.subr.mxu0 0.0
    %4146 = vmatpush1.msra.mxu0 0.0
    %4147 = vmatprep.subr.mxu0 0.0
    %4148 = vmatpush1.msra.mxu0 0.0
    %4149 = vmatprep.subr.mxu0 0.0
    %4150 = vmatpush1.msra.mxu0 0.0
    %4151 = vmatprep.subr.mxu0 0.0
    %4152 = vmatpush1.msra.mxu0 0.0
    %4153 = vmatprep.subr.mxu0 0.0
    %4154 = vmatpush1.msra.mxu0 0.0
    %4155 = vmatprep.subr.mxu0 0.0
    %4156 = vmatpush1.msra.mxu0 0.0
    %4157 = vmatprep.subr.mxu0 0.0
    %4158 = vmatpush1.msra.mxu0 0.0
    %4159 = vmatprep.subr.mxu0 0.0
    %4160 = vmatpush1.msra.mxu0 0.0
    %4161 = vmatprep.subr.mxu0 0.0
    %4162 = vmatpush1.msra.mxu0 0.0
    %4163 = vmatprep.subr.mxu0 0.0
    %4164 = vmatpush1.msra.mxu0 0.0
    %4165 = vmatprep.subr.mxu0 0.0
    %4166 = vmatpush1.msra.mxu0 0.0
    %4167 = vmatprep.subr.mxu0 0.0
    %4168 = vmatpush1.msra.mxu0 0.0
    %4169 = vmatprep.mubr.f32.mxu0 0.0
    %4170 = vmatmul.mubr.f32.gmra.mrb[0].mxu0 %v3963
    %v4171 = vpop.f32.mrb[0].mxu0
    %v4172 = vadd.f32 %v2964, %v4171
    %v4173 = vpop.f32.mrb[0].mxu0
    %4174 = vdwg.mxu0
    %4175 = vmatprep.subr.mxu0 0.0
    %4176 = vmatpush1.msra.mxu0 %v2947
    %4177 = vmatprep.subr.mxu0 0.0
    %4178 = vmatpush1.msra.mxu0 %v2948
    %4179 = vmatprep.subr.mxu0 0.0
    %4180 = vmatpush1.msra.mxu0 %v2949
    %4181 = vmatprep.subr.mxu0 0.0
    %4182 = vmatpush1.msra.mxu0 %v2950
    %4183 = vmatprep.subr.mxu0 0.0
    %4184 = vmatpush1.msra.mxu0 %v2951
    %4185 = vmatprep.subr.mxu0 0.0
    %4186 = vmatpush1.msra.mxu0 %v2952
    %4187 = vmatprep.subr.mxu0 0.0
    %4188 = vmatpush1.msra.mxu0 %v2953
    %4189 = vmatprep.subr.mxu0 0.0
    %4190 = vmatpush1.msra.mxu0 %v2954
    %4191 = vmatprep.subr.mxu0 0.0
    %4192 = vmatpush1.msra.mxu0 %v2955
    %4193 = vmatprep.subr.mxu0 0.0
    %4194 = vmatpush1.msra.mxu0 %v2956
    %4195 = vmatprep.subr.mxu0 0.0
    %4196 = vmatpush1.msra.mxu0 %v2957
    %4197 = vmatprep.subr.mxu0 0.0
    %4198 = vmatpush1.msra.mxu0 %v2958
    %4199 = vmatprep.subr.mxu0 0.0
    %4200 = vmatpush1.msra.mxu0 %v3533
    %4201 = vmatprep.subr.mxu0 0.0
    %4202 = vmatpush1.msra.mxu0 0.0
    %4203 = vmatprep.subr.mxu0 0.0
    %4204 = vmatpush1.msra.mxu0 0.0
    %4205 = vmatprep.subr.mxu0 0.0
    %4206 = vmatpush1.msra.mxu0 0.0
    %4207 = vmatprep.subr.mxu0 0.0
    %4208 = vmatpush1.msra.mxu0 0.0
    %4209 = vmatprep.subr.mxu0 0.0
    %4210 = vmatpush1.msra.mxu0 0.0
    %4211 = vmatprep.subr.mxu0 0.0
    %4212 = vmatpush1.msra.mxu0 0.0
    %4213 = vmatprep.subr.mxu0 0.0
    %4214 = vmatpush1.msra.mxu0 0.0
    %4215 = vmatprep.subr.mxu0 0.0
    %4216 = vmatpush1.msra.mxu0 0.0
    %4217 = vmatprep.subr.mxu0 0.0
    %4218 = vmatpush1.msra.mxu0 0.0
    %4219 = vmatprep.subr.mxu0 0.0
    %4220 = vmatpush1.msra.mxu0 0.0
    %4221 = vmatprep.subr.mxu0 0.0
    %4222 = vmatpush1.msra.mxu0 0.0
    %4223 = vmatprep.subr.mxu0 0.0
    %4224 = vmatpush1.msra.mxu0 0.0
    %4225 = vmatprep.subr.mxu0 0.0
    %4226 = vmatpush1.msra.mxu0 0.0
    %4227 = vmatprep.subr.mxu0 0.0
    %4228 = vmatpush1.msra.mxu0 0.0
    %4229 = vmatprep.subr.mxu0 0.0
    %4230 = vmatpush1.msra.mxu0 0.0
    %4231 = vmatprep.subr.mxu0 0.0
    %4232 = vmatpush1.msra.mxu0 0.0
    %4233 = vmatprep.subr.mxu0 0.0
    %4234 = vmatpush1.msra.mxu0 0.0
    %4235 = vmatprep.subr.mxu0 0.0
    %4236 = vmatpush1.msra.mxu0 0.0
    %4237 = vmatprep.subr.mxu0 0.0
    %4238 = vmatpush1.msra.mxu0 0.0
    %4239 = vmatprep.mubr.f32.mxu0 0.0
    %4240 = vmatmul.mubr.f32.gmra.mrb[0].mxu0 %v3963
    %v4241 = vpop.f32.mrb[0].mxu0
    %v4242 = vadd.f32 %v2966, %v4241
    %v4243 = vpop.f32.mrb[0].mxu0
    %4244 = vdwg.mxu0
    %v4245 = vxor.u32 %v4102, 2147483648
    %v4246 = vmul.f32 %v4245, 1.442695
    %v4247 = vpow.pop %v4246
    %v4248 = vadd.f32 %v4247, 1.0
    %v4249 = vrcp.pop %v4248
    %v4250 = vmul.f32 1.0, %v4249
    %v4251 = vmul.f32 %v4250, %v3620
    %v4252 = vxor.u32 %v4032, 2147483648
    %v4253 = vmul.f32 %v4252, 1.442695
    %v4254 = vpow.pop %v4253
    %v4255 = vadd.f32 %v4254, 1.0
    %v4256 = vrcp.pop %v4255
    %v4257 = vmul.f32 1.0, %v4256
    %v4258 = vtanh.pop %v4172
    %v4259 = vmul.f32 %v4257, %v4258
    %v4260 = vadd.f32 %v4251, %v4259
    %v4261 = vxor.u32 %v4242, 2147483648
    %v4262 = vmul.f32 %v4261, 1.442695
    %v4263 = vpow.pop %v4262
    %v4264 = vadd.f32 %v4263, 1.0
    %v4265 = vrcp.pop %v4264
    %v4266 = vmul.f32 1.0, %v4265
    %v4267 = vtanh.pop %v4260
    %v4268 = vmul.f32 %v4266, %v4267
    %v4270 = vrot.slane %v3954, 2
    %v4271 = vsel %vm2979, %v4270, 0
    %4273 = vmatprep.subr.mxu0 0.0
    %4274 = vmatpush1.msra.mxu0 %v2874
    %4275 = vmatprep.subr.mxu0 0.0
    %4276 = vmatpush1.msra.mxu0 %v2875
    %4277 = vmatprep.subr.mxu0 0.0
    %4278 = vmatpush1.msra.mxu0 %v2876
    %4279 = vmatprep.subr.mxu0 0.0
    %4280 = vmatpush1.msra.mxu0 %v2877
    %4281 = vmatprep.subr.mxu0 0.0
    %4282 = vmatpush1.msra.mxu0 %v2878
    %4283 = vmatprep.subr.mxu0 0.0
    %4284 = vmatpush1.msra.mxu0 %v2879
    %4285 = vmatprep.subr.mxu0 0.0
    %4286 = vmatpush1.msra.mxu0 %v2984
    %4287 = vmatprep.subr.mxu0 0.0
    %4288 = vmatpush1.msra.mxu0 0.0
    %4289 = vmatprep.subr.mxu0 0.0
    %4290 = vmatpush1.msra.mxu0 0.0
    %4291 = vmatprep.subr.mxu0 0.0
    %4292 = vmatpush1.msra.mxu0 0.0
    %4293 = vmatprep.subr.mxu0 0.0
    %4294 = vmatpush1.msra.mxu0 0.0
    %4295 = vmatprep.subr.mxu0 0.0
    %4296 = vmatpush1.msra.mxu0 0.0
    %4297 = vmatprep.subr.mxu0 0.0
    %4298 = vmatpush1.msra.mxu0 0.0
    %4299 = vmatprep.subr.mxu0 0.0
    %4300 = vmatpush1.msra.mxu0 0.0
    %4301 = vmatprep.subr.mxu0 0.0
    %4302 = vmatpush1.msra.mxu0 0.0
    %4303 = vmatprep.subr.mxu0 0.0
    %4304 = vmatpush1.msra.mxu0 0.0
    %4305 = vmatprep.subr.mxu0 0.0
    %4306 = vmatpush1.msra.mxu0 0.0
    %4307 = vmatprep.subr.mxu0 0.0
    %4308 = vmatpush1.msra.mxu0 0.0
    %4309 = vmatprep.subr.mxu0 0.0
    %4310 = vmatpush1.msra.mxu0 0.0
    %4311 = vmatprep.subr.mxu0 0.0
    %4312 = vmatpush1.msra.mxu0 0.0
    %4313 = vmatprep.subr.mxu0 0.0
    %4314 = vmatpush1.msra.mxu0 0.0
    %4315 = vmatprep.subr.mxu0 0.0
    %4316 = vmatpush1.msra.mxu0 0.0
    %4317 = vmatprep.subr.mxu0 0.0
    %4318 = vmatpush1.msra.mxu0 0.0
    %4319 = vmatprep.subr.mxu0 0.0
    %4320 = vmatpush1.msra.mxu0 0.0
    %4321 = vmatprep.subr.mxu0 0.0
    %4322 = vmatpush1.msra.mxu0 0.0
    %4323 = vmatprep.subr.mxu0 0.0
    %4324 = vmatpush1.msra.mxu0 0.0
    %4325 = vmatprep.subr.mxu0 0.0
    %4326 = vmatpush1.msra.mxu0 0.0
    %4327 = vmatprep.subr.mxu0 0.0
    %4328 = vmatpush1.msra.mxu0 0.0
    %4329 = vmatprep.subr.mxu0 0.0
    %4330 = vmatpush1.msra.mxu0 0.0
    %4331 = vmatprep.subr.mxu0 0.0
    %4332 = vmatpush1.msra.mxu0 0.0
    %4333 = vmatprep.subr.mxu0 0.0
    %4334 = vmatpush1.msra.mxu0 0.0
    %4335 = vmatprep.subr.mxu0 0.0
    %4336 = vmatpush1.msra.mxu0 0.0
    %4337 = vmatprep.mubr.f32.mxu0 0.0
    %4338 = vmatmul.mubr.f32.gmra.mrb[0].mxu0 %v4271
    %v4339 = vpop.f32.mrb[0].mxu0
    %v4340 = vadd.f32 0.0, %v4339
    %v4341 = vpop.f32.mrb[0].mxu0
    %4342 = vdwg.mxu0
    %v4344 = vrot.slane %v4340, 4
    %v4346 = vadd.f32 %v2596, %v4344
    %4347 = vmatprep.subr.mxu0 0.0
    %4348 = vmatpush1.msra.mxu0 %v2882
    %4349 = vmatprep.subr.mxu0 0.0
    %4350 = vmatpush1.msra.mxu0 %v2883
    %4351 = vmatprep.subr.mxu0 0.0
    %4352 = vmatpush1.msra.mxu0 %v2884
    %4353 = vmatprep.subr.mxu0 0.0
    %4354 = vmatpush1.msra.mxu0 %v2885
    %4355 = vmatprep.subr.mxu0 0.0
    %4356 = vmatpush1.msra.mxu0 %v2886
    %4357 = vmatprep.subr.mxu0 0.0
    %4358 = vmatpush1.msra.mxu0 %v2887
    %4359 = vmatprep.subr.mxu0 0.0
    %4360 = vmatpush1.msra.mxu0 %v3058
    %4361 = vmatprep.subr.mxu0 0.0
    %4362 = vmatpush1.msra.mxu0 0.0
    %4363 = vmatprep.subr.mxu0 0.0
    %4364 = vmatpush1.msra.mxu0 0.0
    %4365 = vmatprep.subr.mxu0 0.0
    %4366 = vmatpush1.msra.mxu0 0.0
    %4367 = vmatprep.subr.mxu0 0.0
    %4368 = vmatpush1.msra.mxu0 0.0
    %4369 = vmatprep.subr.mxu0 0.0
    %4370 = vmatpush1.msra.mxu0 0.0
    %4371 = vmatprep.subr.mxu0 0.0
    %4372 = vmatpush1.msra.mxu0 0.0
    %4373 = vmatprep.subr.mxu0 0.0
    %4374 = vmatpush1.msra.mxu0 0.0
    %4375 = vmatprep.subr.mxu0 0.0
    %4376 = vmatpush1.msra.mxu0 0.0
    %4377 = vmatprep.subr.mxu0 0.0
    %4378 = vmatpush1.msra.mxu0 0.0
    %4379 = vmatprep.subr.mxu0 0.0
    %4380 = vmatpush1.msra.mxu0 0.0
    %4381 = vmatprep.subr.mxu0 0.0
    %4382 = vmatpush1.msra.mxu0 0.0
    %4383 = vmatprep.subr.mxu0 0.0
    %4384 = vmatpush1.msra.mxu0 0.0
    %4385 = vmatprep.subr.mxu0 0.0
    %4386 = vmatpush1.msra.mxu0 0.0
    %4387 = vmatprep.subr.mxu0 0.0
    %4388 = vmatpush1.msra.mxu0 0.0
    %4389 = vmatprep.subr.mxu0 0.0
    %4390 = vmatpush1.msra.mxu0 0.0
    %4391 = vmatprep.subr.mxu0 0.0
    %4392 = vmatpush1.msra.mxu0 0.0
    %4393 = vmatprep.subr.mxu0 0.0
    %4394 = vmatpush1.msra.mxu0 0.0
    %4395 = vmatprep.subr.mxu0 0.0
    %4396 = vmatpush1.msra.mxu0 0.0
    %4397 = vmatprep.subr.mxu0 0.0
    %4398 = vmatpush1.msra.mxu0 0.0
    %4399 = vmatprep.subr.mxu0 0.0
    %4400 = vmatpush1.msra.mxu0 0.0
    %4401 = vmatprep.subr.mxu0 0.0
    %4402 = vmatpush1.msra.mxu0 0.0
    %4403 = vmatprep.subr.mxu0 0.0
    %4404 = vmatpush1.msra.mxu0 0.0
    %4405 = vmatprep.subr.mxu0 0.0
    %4406 = vmatpush1.msra.mxu0 0.0
    %4407 = vmatprep.subr.mxu0 0.0
    %4408 = vmatpush1.msra.mxu0 0.0
    %4409 = vmatprep.subr.mxu0 0.0
    %4410 = vmatpush1.msra.mxu0 0.0
    %4411 = vmatprep.mubr.f32.mxu0 0.0
    %4412 = vmatmul.mubr.f32.gmra.mrb[0].mxu0 %v4271
    %v4413 = vpop.f32.mrb[0].mxu0
    %v4414 = vadd.f32 0.0, %v4413
    %v4415 = vpop.f32.mrb[0].mxu0
    %4416 = vdwg.mxu0
    %v4418 = vrot.slane %v4414, 4
    %v4420 = vadd.f32 %v2686, %v4418
    %4421 = vmatprep.subr.mxu0 0.0
    %4422 = vmatpush1.msra.mxu0 %v2890
    %4423 = vmatprep.subr.mxu0 0.0
    %4424 = vmatpush1.msra.mxu0 %v2891
    %4425 = vmatprep.subr.mxu0 0.0
    %4426 = vmatpush1.msra.mxu0 %v2892
    %4427 = vmatprep.subr.mxu0 0.0
    %4428 = vmatpush1.msra.mxu0 %v2893
    %4429 = vmatprep.subr.mxu0 0.0
    %4430 = vmatpush1.msra.mxu0 %v2894
    %4431 = vmatprep.subr.mxu0 0.0
    %4432 = vmatpush1.msra.mxu0 %v2895
    %4433 = vmatprep.subr.mxu0 0.0
    %4434 = vmatpush1.msra.mxu0 %v3132
    %4435 = vmatprep.subr.mxu0 0.0
    %4436 = vmatpush1.msra.mxu0 0.0
    %4437 = vmatprep.subr.mxu0 0.0
    %4438 = vmatpush1.msra.mxu0 0.0
    %4439 = vmatprep.subr.mxu0 0.0
    %4440 = vmatpush1.msra.mxu0 0.0
    %4441 = vmatprep.subr.mxu0 0.0
    %4442 = vmatpush1.msra.mxu0 0.0
    %4443 = vmatprep.subr.mxu0 0.0
    %4444 = vmatpush1.msra.mxu0 0.0
    %4445 = vmatprep.subr.mxu0 0.0
    %4446 = vmatpush1.msra.mxu0 0.0
    %4447 = vmatprep.subr.mxu0 0.0
    %4448 = vmatpush1.msra.mxu0 0.0
    %4449 = vmatprep.subr.mxu0 0.0
    %4450 = vmatpush1.msra.mxu0 0.0
    %4451 = vmatprep.subr.mxu0 0.0
    %4452 = vmatpush1.msra.mxu0 0.0
    %4453 = vmatprep.subr.mxu0 0.0
    %4454 = vmatpush1.msra.mxu0 0.0
    %4455 = vmatprep.subr.mxu0 0.0
    %4456 = vmatpush1.msra.mxu0 0.0
    %4457 = vmatprep.subr.mxu0 0.0
    %4458 = vmatpush1.msra.mxu0 0.0
    %4459 = vmatprep.subr.mxu0 0.0
    %4460 = vmatpush1.msra.mxu0 0.0
    %4461 = vmatprep.subr.mxu0 0.0
    %4462 = vmatpush1.msra.mxu0 0.0
    %4463 = vmatprep.subr.mxu0 0.0
    %4464 = vmatpush1.msra.mxu0 0.0
    %4465 = vmatprep.subr.mxu0 0.0
    %4466 = vmatpush1.msra.mxu0 0.0
    %4467 = vmatprep.subr.mxu0 0.0
    %4468 = vmatpush1.msra.mxu0 0.0
    %4469 = vmatprep.subr.mxu0 0.0
    %4470 = vmatpush1.msra.mxu0 0.0
    %4471 = vmatprep.subr.mxu0 0.0
    %4472 = vmatpush1.msra.mxu0 0.0
    %4473 = vmatprep.subr.mxu0 0.0
    %4474 = vmatpush1.msra.mxu0 0.0
    %4475 = vmatprep.subr.mxu0 0.0
    %4476 = vmatpush1.msra.mxu0 0.0
    %4477 = vmatprep.subr.mxu0 0.0
    %4478 = vmatpush1.msra.mxu0 0.0
    %4479 = vmatprep.subr.mxu0 0.0
    %4480 = vmatpush1.msra.mxu0 0.0
    %4481 = vmatprep.subr.mxu0 0.0
    %4482 = vmatpush1.msra.mxu0 0.0
    %4483 = vmatprep.subr.mxu0 0.0
    %4484 = vmatpush1.msra.mxu0 0.0
    %4485 = vmatprep.mubr.f32.mxu0 0.0
    %4486 = vmatmul.mubr.f32.gmra.mrb[0].mxu0 %v4271
    %v4487 = vpop.f32.mrb[0].mxu0
    %v4488 = vadd.f32 0.0, %v4487
    %v4489 = vpop.f32.mrb[0].mxu0
    %4490 = vdwg.mxu0
    %v4492 = vrot.slane %v4488, 4
    %v4494 = vadd.f32 %v2776, %v4492
    %4495 = vmatprep.subr.mxu0 0.0
    %4496 = vmatpush1.msra.mxu0 %v2898
    %4497 = vmatprep.subr.mxu0 0.0
    %4498 = vmatpush1.msra.mxu0 %v2899
    %4499 = vmatprep.subr.mxu0 0.0
    %4500 = vmatpush1.msra.mxu0 %v2900
    %4501 = vmatprep.subr.mxu0 0.0
    %4502 = vmatpush1.msra.mxu0 %v2901
    %4503 = vmatprep.subr.mxu0 0.0
    %4504 = vmatpush1.msra.mxu0 %v2902
    %4505 = vmatprep.subr.mxu0 0.0
    %4506 = vmatpush1.msra.mxu0 %v2903
    %4507 = vmatprep.subr.mxu0 0.0
    %4508 = vmatpush1.msra.mxu0 %v3206
    %4509 = vmatprep.subr.mxu0 0.0
    %4510 = vmatpush1.msra.mxu0 0.0
    %4511 = vmatprep.subr.mxu0 0.0
    %4512 = vmatpush1.msra.mxu0 0.0
    %4513 = vmatprep.subr.mxu0 0.0
    %4514 = vmatpush1.msra.mxu0 0.0
    %4515 = vmatprep.subr.mxu0 0.0
    %4516 = vmatpush1.msra.mxu0 0.0
    %4517 = vmatprep.subr.mxu0 0.0
    %4518 = vmatpush1.msra.mxu0 0.0
    %4519 = vmatprep.subr.mxu0 0.0
    %4520 = vmatpush1.msra.mxu0 0.0
    %4521 = vmatprep.subr.mxu0 0.0
    %4522 = vmatpush1.msra.mxu0 0.0
    %4523 = vmatprep.subr.mxu0 0.0
    %4524 = vmatpush1.msra.mxu0 0.0
    %4525 = vmatprep.subr.mxu0 0.0
    %4526 = vmatpush1.msra.mxu0 0.0
    %4527 = vmatprep.subr.mxu0 0.0
    %4528 = vmatpush1.msra.mxu0 0.0
    %4529 = vmatprep.subr.mxu0 0.0
    %4530 = vmatpush1.msra.mxu0 0.0
    %4531 = vmatprep.subr.mxu0 0.0
    %4532 = vmatpush1.msra.mxu0 0.0
    %4533 = vmatprep.subr.mxu0 0.0
    %4534 = vmatpush1.msra.mxu0 0.0
    %4535 = vmatprep.subr.mxu0 0.0
    %4536 = vmatpush1.msra.mxu0 0.0
    %4537 = vmatprep.subr.mxu0 0.0
    %4538 = vmatpush1.msra.mxu0 0.0
    %4539 = vmatprep.subr.mxu0 0.0
    %4540 = vmatpush1.msra.mxu0 0.0
    %4541 = vmatprep.subr.mxu0 0.0
    %4542 = vmatpush1.msra.mxu0 0.0
    %4543 = vmatprep.subr.mxu0 0.0
    %4544 = vmatpush1.msra.mxu0 0.0
    %4545 = vmatprep.subr.mxu0 0.0
    %4546 = vmatpush1.msra.mxu0 0.0
    %4547 = vmatprep.subr.mxu0 0.0
    %4548 = vmatpush1.msra.mxu0 0.0
    %4549 = vmatprep.subr.mxu0 0.0
    %4550 = vmatpush1.msra.mxu0 0.0
    %4551 = vmatprep.subr.mxu0 0.0
    %4552 = vmatpush1.msra.mxu0 0.0
    %4553 = vmatprep.subr.mxu0 0.0
    %4554 = vmatpush1.msra.mxu0 0.0
    %4555 = vmatprep.subr.mxu0 0.0
    %4556 = vmatpush1.msra.mxu0 0.0
    %4557 = vmatprep.subr.mxu0 0.0
    %4558 = vmatpush1.msra.mxu0 0.0
    %4559 = vmatprep.mubr.f32.mxu0 0.0
    %4560 = vmatmul.mubr.f32.gmra.mrb[0].mxu0 %v4271
    %v4561 = vpop.f32.mrb[0].mxu0
    %v4562 = vadd.f32 0.0, %v4561
    %v4563 = vpop.f32.mrb[0].mxu0
    %4564 = vdwg.mxu0
    %v4566 = vrot.slane %v4562, 4
    %v4568 = vadd.f32 %v2866, %v4566
    %v4569 = vxor.u32 %v4420, 2147483648
    %v4570 = vmul.f32 %v4569, 1.442695
    %v4571 = vpow.pop %v4570
    %v4572 = vadd.f32 %v4571, 1.0
    %v4573 = vrcp.pop %v4572
    %v4574 = vmul.f32 1.0, %v4573
    %v4576 = vrot.slane %v3946, 6
    %v4578 = vmul.f32 %v4574, %v4576
    %v4579 = vxor.u32 %v4346, 2147483648
    %v4580 = vmul.f32 %v4579, 1.442695
    %v4581 = vpow.pop %v4580
    %v4582 = vadd.f32 %v4581, 1.0
    %v4583 = vrcp.pop %v4582
    %v4584 = vmul.f32 1.0, %v4583
    %v4585 = vtanh.pop %v4494
    %v4586 = vmul.f32 %v4584, %v4585
    %v4587 = vadd.f32 %v4578, %v4586
    %v4588 = vxor.u32 %v4568, 2147483648
    %v4589 = vmul.f32 %v4588, 1.442695
    %v4590 = vpow.pop %v4589
    %v4591 = vadd.f32 %v4590, 1.0
    %v4592 = vrcp.pop %v4591
    %v4593 = vmul.f32 1.0, %v4592
    %v4594 = vtanh.pop %v4587
    %v4595 = vmul.f32 %v4593, %v4594
    %v4597 = vrot.slane %v4268, 4
    %4598 = vrot.lane.b32.xlu0 %v4597, 50
    %v4599 = vpop.permute.xlu0 %4598
    %v4601 = vsel %vm2979, %v4595, %v4599
    %v4603 = vrot.slane %v4601, 4
    %v4604 = vsel %vm3308, %v4603, 0
    %4606 = vmatprep.subr.mxu0 0.0
    %4607 = vmatpush1.msra.mxu0 %v2905
    %4608 = vmatprep.subr.mxu0 0.0
    %4609 = vmatpush1.msra.mxu0 %v2906
    %4610 = vmatprep.subr.mxu0 0.0
    %4611 = vmatpush1.msra.mxu0 %v2907
    %4612 = vmatprep.subr.mxu0 0.0
    %4613 = vmatpush1.msra.mxu0 %v2908
    %4614 = vmatprep.subr.mxu0 0.0
    %4615 = vmatpush1.msra.mxu0 %v2909
    %4616 = vmatprep.subr.mxu0 0.0
    %4617 = vmatpush1.msra.mxu0 %v2910
    %4618 = vmatprep.subr.mxu0 0.0
    %4619 = vmatpush1.msra.mxu0 %v2911
    %4620 = vmatprep.subr.mxu0 0.0
    %4621 = vmatpush1.msra.mxu0 %v2912
    %4622 = vmatprep.subr.mxu0 0.0
    %4623 = vmatpush1.msra.mxu0 %v2913
    %4624 = vmatprep.subr.mxu0 0.0
    %4625 = vmatpush1.msra.mxu0 %v2914
    %4626 = vmatprep.subr.mxu0 0.0
    %4627 = vmatpush1.msra.mxu0 %v2915
    %4628 = vmatprep.subr.mxu0 0.0
    %4629 = vmatpush1.msra.mxu0 %v2916
    %4630 = vmatprep.subr.mxu0 0.0
    %4631 = vmatpush1.msra.mxu0 %v3314
    %4632 = vmatprep.subr.mxu0 0.0
    %4633 = vmatpush1.msra.mxu0 0.0
    %4634 = vmatprep.subr.mxu0 0.0
    %4635 = vmatpush1.msra.mxu0 0.0
    %4636 = vmatprep.subr.mxu0 0.0
    %4637 = vmatpush1.msra.mxu0 0.0
    %4638 = vmatprep.subr.mxu0 0.0
    %4639 = vmatpush1.msra.mxu0 0.0
    %4640 = vmatprep.subr.mxu0 0.0
    %4641 = vmatpush1.msra.mxu0 0.0
    %4642 = vmatprep.subr.mxu0 0.0
    %4643 = vmatpush1.msra.mxu0 0.0
    %4644 = vmatprep.subr.mxu0 0.0
    %4645 = vmatpush1.msra.mxu0 0.0
    %4646 = vmatprep.subr.mxu0 0.0
    %4647 = vmatpush1.msra.mxu0 0.0
    %4648 = vmatprep.subr.mxu0 0.0
    %4649 = vmatpush1.msra.mxu0 0.0
    %4650 = vmatprep.subr.mxu0 0.0
    %4651 = vmatpush1.msra.mxu0 0.0
    %4652 = vmatprep.subr.mxu0 0.0
    %4653 = vmatpush1.msra.mxu0 0.0
    %4654 = vmatprep.subr.mxu0 0.0
    %4655 = vmatpush1.msra.mxu0 0.0
    %4656 = vmatprep.subr.mxu0 0.0
    %4657 = vmatpush1.msra.mxu0 0.0
    %4658 = vmatprep.subr.mxu0 0.0
    %4659 = vmatpush1.msra.mxu0 0.0
    %4660 = vmatprep.subr.mxu0 0.0
    %4661 = vmatpush1.msra.mxu0 0.0
    %4662 = vmatprep.subr.mxu0 0.0
    %4663 = vmatpush1.msra.mxu0 0.0
    %4664 = vmatprep.subr.mxu0 0.0
    %4665 = vmatpush1.msra.mxu0 0.0
    %4666 = vmatprep.subr.mxu0 0.0
    %4667 = vmatpush1.msra.mxu0 0.0
    %4668 = vmatprep.subr.mxu0 0.0
    %4669 = vmatpush1.msra.mxu0 0.0
    %4670 = vmatprep.mubr.f32.mxu0 0.0
    %4671 = vmatmul.mubr.f32.gmra.mrb[0].mxu0 %v4604
    %v4672 = vpop.f32.mrb[0].mxu0
    %v4673 = vadd.f32 %v2960, %v4672
    %v4674 = vpop.f32.mrb[0].mxu0
    %4675 = vdwg.mxu0
    %4676 = vmatprep.subr.mxu0 0.0
    %4677 = vmatpush1.msra.mxu0 %v2919
    %4678 = vmatprep.subr.mxu0 0.0
    %4679 = vmatpush1.msra.mxu0 %v2920
    %4680 = vmatprep.subr.mxu0 0.0
    %4681 = vmatpush1.msra.mxu0 %v2921
    %4682 = vmatprep.subr.mxu0 0.0
    %4683 = vmatpush1.msra.mxu0 %v2922
    %4684 = vmatprep.subr.mxu0 0.0
    %4685 = vmatpush1.msra.mxu0 %v2923
    %4686 = vmatprep.subr.mxu0 0.0
    %4687 = vmatpush1.msra.mxu0 %v2924
    %4688 = vmatprep.subr.mxu0 0.0
    %4689 = vmatpush1.msra.mxu0 %v2925
    %4690 = vmatprep.subr.mxu0 0.0
    %4691 = vmatpush1.msra.mxu0 %v2926
    %4692 = vmatprep.subr.mxu0 0.0
    %4693 = vmatpush1.msra.mxu0 %v2927
    %4694 = vmatprep.subr.mxu0 0.0
    %4695 = vmatpush1.msra.mxu0 %v2928
    %4696 = vmatprep.subr.mxu0 0.0
    %4697 = vmatpush1.msra.mxu0 %v2929
    %4698 = vmatprep.subr.mxu0 0.0
    %4699 = vmatpush1.msra.mxu0 %v2930
    %4700 = vmatprep.subr.mxu0 0.0
    %4701 = vmatpush1.msra.mxu0 %v3387
    %4702 = vmatprep.subr.mxu0 0.0
    %4703 = vmatpush1.msra.mxu0 0.0
    %4704 = vmatprep.subr.mxu0 0.0
    %4705 = vmatpush1.msra.mxu0 0.0
    %4706 = vmatprep.subr.mxu0 0.0
    %4707 = vmatpush1.msra.mxu0 0.0
    %4708 = vmatprep.subr.mxu0 0.0
    %4709 = vmatpush1.msra.mxu0 0.0
    %4710 = vmatprep.subr.mxu0 0.0
    %4711 = vmatpush1.msra.mxu0 0.0
    %4712 = vmatprep.subr.mxu0 0.0
    %4713 = vmatpush1.msra.mxu0 0.0
    %4714 = vmatprep.subr.mxu0 0.0
    %4715 = vmatpush1.msra.mxu0 0.0
    %4716 = vmatprep.subr.mxu0 0.0
    %4717 = vmatpush1.msra.mxu0 0.0
    %4718 = vmatprep.subr.mxu0 0.0
    %4719 = vmatpush1.msra.mxu0 0.0
    %4720 = vmatprep.subr.mxu0 0.0
    %4721 = vmatpush1.msra.mxu0 0.0
    %4722 = vmatprep.subr.mxu0 0.0
    %4723 = vmatpush1.msra.mxu0 0.0
    %4724 = vmatprep.subr.mxu0 0.0
    %4725 = vmatpush1.msra.mxu0 0.0
    %4726 = vmatprep.subr.mxu0 0.0
    %4727 = vmatpush1.msra.mxu0 0.0
    %4728 = vmatprep.subr.mxu0 0.0
    %4729 = vmatpush1.msra.mxu0 0.0
    %4730 = vmatprep.subr.mxu0 0.0
    %4731 = vmatpush1.msra.mxu0 0.0
    %4732 = vmatprep.subr.mxu0 0.0
    %4733 = vmatpush1.msra.mxu0 0.0
    %4734 = vmatprep.subr.mxu0 0.0
    %4735 = vmatpush1.msra.mxu0 0.0
    %4736 = vmatprep.subr.mxu0 0.0
    %4737 = vmatpush1.msra.mxu0 0.0
    %4738 = vmatprep.subr.mxu0 0.0
    %4739 = vmatpush1.msra.mxu0 0.0
    %4740 = vmatprep.mubr.f32.mxu0 0.0
    %4741 = vmatmul.mubr.f32.gmra.mrb[0].mxu0 %v4604
    %v4742 = vpop.f32.mrb[0].mxu0
    %v4743 = vadd.f32 %v2962, %v4742
    %v4744 = vpop.f32.mrb[0].mxu0
    %4745 = vdwg.mxu0
    %4746 = vmatprep.subr.mxu0 0.0
    %4747 = vmatpush1.msra.mxu0 %v2933
    %4748 = vmatprep.subr.mxu0 0.0
    %4749 = vmatpush1.msra.mxu0 %v2934
    %4750 = vmatprep.subr.mxu0 0.0
    %4751 = vmatpush1.msra.mxu0 %v2935
    %4752 = vmatprep.subr.mxu0 0.0
    %4753 = vmatpush1.msra.mxu0 %v2936
    %4754 = vmatprep.subr.mxu0 0.0
    %4755 = vmatpush1.msra.mxu0 %v2937
    %4756 = vmatprep.subr.mxu0 0.0
    %4757 = vmatpush1.msra.mxu0 %v2938
    %4758 = vmatprep.subr.mxu0 0.0
    %4759 = vmatpush1.msra.mxu0 %v2939
    %4760 = vmatprep.subr.mxu0 0.0
    %4761 = vmatpush1.msra.mxu0 %v2940
    %4762 = vmatprep.subr.mxu0 0.0
    %4763 = vmatpush1.msra.mxu0 %v2941
    %4764 = vmatprep.subr.mxu0 0.0
    %4765 = vmatpush1.msra.mxu0 %v2942
    %4766 = vmatprep.subr.mxu0 0.0
    %4767 = vmatpush1.msra.mxu0 %v2943
    %4768 = vmatprep.subr.mxu0 0.0
    %4769 = vmatpush1.msra.mxu0 %v2944
    %4770 = vmatprep.subr.mxu0 0.0
    %4771 = vmatpush1.msra.mxu0 %v3460
    %4772 = vmatprep.subr.mxu0 0.0
    %4773 = vmatpush1.msra.mxu0 0.0
    %4774 = vmatprep.subr.mxu0 0.0
    %4775 = vmatpush1.msra.mxu0 0.0
    %4776 = vmatprep.subr.mxu0 0.0
    %4777 = vmatpush1.msra.mxu0 0.0
    %4778 = vmatprep.subr.mxu0 0.0
    %4779 = vmatpush1.msra.mxu0 0.0
    %4780 = vmatprep.subr.mxu0 0.0
    %4781 = vmatpush1.msra.mxu0 0.0
    %4782 = vmatprep.subr.mxu0 0.0
    %4783 = vmatpush1.msra.mxu0 0.0
    %4784 = vmatprep.subr.mxu0 0.0
    %4785 = vmatpush1.msra.mxu0 0.0
    %4786 = vmatprep.subr.mxu0 0.0
    %4787 = vmatpush1.msra.mxu0 0.0
    %4788 = vmatprep.subr.mxu0 0.0
    %4789 = vmatpush1.msra.mxu0 0.0
    %4790 = vmatprep.subr.mxu0 0.0
    %4791 = vmatpush1.msra.mxu0 0.0
    %4792 = vmatprep.subr.mxu0 0.0
    %4793 = vmatpush1.msra.mxu0 0.0
    %4794 = vmatprep.subr.mxu0 0.0
    %4795 = vmatpush1.msra.mxu0 0.0
    %4796 = vmatprep.subr.mxu0 0.0
    %4797 = vmatpush1.msra.mxu0 0.0
    %4798 = vmatprep.subr.mxu0 0.0
    %4799 = vmatpush1.msra.mxu0 0.0
    %4800 = vmatprep.subr.mxu0 0.0
    %4801 = vmatpush1.msra.mxu0 0.0
    %4802 = vmatprep.subr.mxu0 0.0
    %4803 = vmatpush1.msra.mxu0 0.0
    %4804 = vmatprep.subr.mxu0 0.0
    %4805 = vmatpush1.msra.mxu0 0.0
    %4806 = vmatprep.subr.mxu0 0.0
    %4807 = vmatpush1.msra.mxu0 0.0
    %4808 = vmatprep.subr.mxu0 0.0
    %4809 = vmatpush1.msra.mxu0 0.0
    %4810 = vmatprep.mubr.f32.mxu0 0.0
    %4811 = vmatmul.mubr.f32.gmra.mrb[0].mxu0 %v4604
    %v4812 = vpop.f32.mrb[0].mxu0
    %v4813 = vadd.f32 %v2964, %v4812
    %v4814 = vpop.f32.mrb[0].mxu0
    %4815 = vdwg.mxu0
    %4816 = vmatprep.subr.mxu0 0.0
    %4817 = vmatpush1.msra.mxu0 %v2947
    %4818 = vmatprep.subr.mxu0 0.0
    %4819 = vmatpush1.msra.mxu0 %v2948
    %4820 = vmatprep.subr.mxu0 0.0
    %4821 = vmatpush1.msra.mxu0 %v2949
    %4822 = vmatprep.subr.mxu0 0.0
    %4823 = vmatpush1.msra.mxu0 %v2950
    %4824 = vmatprep.subr.mxu0 0.0
    %4825 = vmatpush1.msra.mxu0 %v2951
    %4826 = vmatprep.subr.mxu0 0.0
    %4827 = vmatpush1.msra.mxu0 %v2952
    %4828 = vmatprep.subr.mxu0 0.0
    %4829 = vmatpush1.msra.mxu0 %v2953
    %4830 = vmatprep.subr.mxu0 0.0
    %4831 = vmatpush1.msra.mxu0 %v2954
    %4832 = vmatprep.subr.mxu0 0.0
    %4833 = vmatpush1.msra.mxu0 %v2955
    %4834 = vmatprep.subr.mxu0 0.0
    %4835 = vmatpush1.msra.mxu0 %v2956
    %4836 = vmatprep.subr.mxu0 0.0
    %4837 = vmatpush1.msra.mxu0 %v2957
    %4838 = vmatprep.subr.mxu0 0.0
    %4839 = vmatpush1.msra.mxu0 %v2958
    %4840 = vmatprep.subr.mxu0 0.0
    %4841 = vmatpush1.msra.mxu0 %v3533
    %4842 = vmatprep.subr.mxu0 0.0
    %4843 = vmatpush1.msra.mxu0 0.0
    %4844 = vmatprep.subr.mxu0 0.0
    %4845 = vmatpush1.msra.mxu0 0.0
    %4846 = vmatprep.subr.mxu0 0.0
    %4847 = vmatpush1.msra.mxu0 0.0
    %4848 = vmatprep.subr.mxu0 0.0
    %4849 = vmatpush1.msra.mxu0 0.0
    %4850 = vmatprep.subr.mxu0 0.0
    %4851 = vmatpush1.msra.mxu0 0.0
    %4852 = vmatprep.subr.mxu0 0.0
    %4853 = vmatpush1.msra.mxu0 0.0
    %4854 = vmatprep.subr.mxu0 0.0
    %4855 = vmatpush1.msra.mxu0 0.0
    %4856 = vmatprep.subr.mxu0 0.0
    %4857 = vmatpush1.msra.mxu0 0.0
    %4858 = vmatprep.subr.mxu0 0.0
    %4859 = vmatpush1.msra.mxu0 0.0
    %4860 = vmatprep.subr.mxu0 0.0
    %4861 = vmatpush1.msra.mxu0 0.0
    %4862 = vmatprep.subr.mxu0 0.0
    %4863 = vmatpush1.msra.mxu0 0.0
    %4864 = vmatprep.subr.mxu0 0.0
    %4865 = vmatpush1.msra.mxu0 0.0
    %4866 = vmatprep.subr.mxu0 0.0
    %4867 = vmatpush1.msra.mxu0 0.0
    %4868 = vmatprep.subr.mxu0 0.0
    %4869 = vmatpush1.msra.mxu0 0.0
    %4870 = vmatprep.subr.mxu0 0.0
    %4871 = vmatpush1.msra.mxu0 0.0
    %4872 = vmatprep.subr.mxu0 0.0
    %4873 = vmatpush1.msra.mxu0 0.0
    %4874 = vmatprep.subr.mxu0 0.0
    %4875 = vmatpush1.msra.mxu0 0.0
    %4876 = vmatprep.subr.mxu0 0.0
    %4877 = vmatpush1.msra.mxu0 0.0
    %4878 = vmatprep.subr.mxu0 0.0
    %4879 = vmatpush1.msra.mxu0 0.0
    %4880 = vmatprep.mubr.f32.mxu0 0.0
    %4881 = vmatmul.mubr.f32.gmra.mrb[0].mxu0 %v4604
    %v4882 = vpop.f32.mrb[0].mxu0
    %v4883 = vadd.f32 %v2966, %v4882
    %v4884 = vpop.f32.mrb[0].mxu0
    %4885 = vdwg.mxu0
    %v4886 = vxor.u32 %v4743, 2147483648
    %v4887 = vmul.f32 %v4886, 1.442695
    %v4888 = vpow.pop %v4887
    %v4889 = vadd.f32 %v4888, 1.0
    %v4890 = vrcp.pop %v4889
    %v4891 = vmul.f32 1.0, %v4890
    %v4892 = vmul.f32 %v4891, %v4260
    %v4893 = vxor.u32 %v4673, 2147483648
    %v4894 = vmul.f32 %v4893, 1.442695
    %v4895 = vpow.pop %v4894
    %v4896 = vadd.f32 %v4895, 1.0
    %v4897 = vrcp.pop %v4896
    %v4898 = vmul.f32 1.0, %v4897
    %v4899 = vtanh.pop %v4813
    %v4900 = vmul.f32 %v4898, %v4899
    %v4901 = vadd.f32 %v4892, %v4900
    %v4902 = vxor.u32 %v4883, 2147483648
    %v4903 = vmul.f32 %v4902, 1.442695
    %v4904 = vpow.pop %v4903
    %v4905 = vadd.f32 %v4904, 1.0
    %v4906 = vrcp.pop %v4905
    %v4907 = vmul.f32 1.0, %v4906
    %v4908 = vtanh.pop %v4901
    %v4909 = vmul.f32 %v4907, %v4908
    %v4911 = vrot.slane %v4595, 4
    %v4912 = vsel %vm2979, %v4911, 0
    %4914 = vmatprep.subr.mxu0 0.0
    %4915 = vmatpush1.msra.mxu0 %v2874
    %4916 = vmatprep.subr.mxu0 0.0
    %4917 = vmatpush1.msra.mxu0 %v2875
    %4918 = vmatprep.subr.mxu0 0.0
    %4919 = vmatpush1.msra.mxu0 %v2876
    %4920 = vmatprep.subr.mxu0 0.0
    %4921 = vmatpush1.msra.mxu0 %v2877
    %4922 = vmatprep.subr.mxu0 0.0
    %4923 = vmatpush1.msra.mxu0 %v2878
    %4924 = vmatprep.subr.mxu0 0.0
    %4925 = vmatpush1.msra.mxu0 %v2879
    %4926 = vmatprep.subr.mxu0 0.0
    %4927 = vmatpush1.msra.mxu0 %v2984
    %4928 = vmatprep.subr.mxu0 0.0
    %4929 = vmatpush1.msra.mxu0 0.0
    %4930 = vmatprep.subr.mxu0 0.0
    %4931 = vmatpush1.msra.mxu0 0.0
    %4932 = vmatprep.subr.mxu0 0.0
    %4933 = vmatpush1.msra.mxu0 0.0
    %4934 = vmatprep.subr.mxu0 0.0
    %4935 = vmatpush1.msra.mxu0 0.0
    %4936 = vmatprep.subr.mxu0 0.0
    %4937 = vmatpush1.msra.mxu0 0.0
    %4938 = vmatprep.subr.mxu0 0.0
    %4939 = vmatpush1.msra.mxu0 0.0
    %4940 = vmatprep.subr.mxu0 0.0
    %4941 = vmatpush1.msra.mxu0 0.0
    %4942 = vmatprep.subr.mxu0 0.0
    %4943 = vmatpush1.msra.mxu0 0.0
    %4944 = vmatprep.subr.mxu0 0.0
    %4945 = vmatpush1.msra.mxu0 0.0
    %4946 = vmatprep.subr.mxu0 0.0
    %4947 = vmatpush1.msra.mxu0 0.0
    %4948 = vmatprep.subr.mxu0 0.0
    %4949 = vmatpush1.msra.mxu0 0.0
    %4950 = vmatprep.subr.mxu0 0.0
    %4951 = vmatpush1.msra.mxu0 0.0
    %4952 = vmatprep.subr.mxu0 0.0
    %4953 = vmatpush1.msra.mxu0 0.0
    %4954 = vmatprep.subr.mxu0 0.0
    %4955 = vmatpush1.msra.mxu0 0.0
    %4956 = vmatprep.subr.mxu0 0.0
    %4957 = vmatpush1.msra.mxu0 0.0
    %4958 = vmatprep.subr.mxu0 0.0
    %4959 = vmatpush1.msra.mxu0 0.0
    %4960 = vmatprep.subr.mxu0 0.0
    %4961 = vmatpush1.msra.mxu0 0.0
    %4962 = vmatprep.subr.mxu0 0.0
    %4963 = vmatpush1.msra.mxu0 0.0
    %4964 = vmatprep.subr.mxu0 0.0
    %4965 = vmatpush1.msra.mxu0 0.0
    %4966 = vmatprep.subr.mxu0 0.0
    %4967 = vmatpush1.msra.mxu0 0.0
    %4968 = vmatprep.subr.mxu0 0.0
    %4969 = vmatpush1.msra.mxu0 0.0
    %4970 = vmatprep.subr.mxu0 0.0
    %4971 = vmatpush1.msra.mxu0 0.0
    %4972 = vmatprep.subr.mxu0 0.0
    %4973 = vmatpush1.msra.mxu0 0.0
    %4974 = vmatprep.subr.mxu0 0.0
    %4975 = vmatpush1.msra.mxu0 0.0
    %4976 = vmatprep.subr.mxu0 0.0
    %4977 = vmatpush1.msra.mxu0 0.0
    %4978 = vmatprep.mubr.f32.mxu0 0.0
    %4979 = vmatmul.mubr.f32.gmra.mrb[0].mxu0 %v4912
    %v4980 = vpop.f32.mrb[0].mxu0
    %v4981 = vadd.f32 0.0, %v4980
    %v4982 = vpop.f32.mrb[0].mxu0
    %4983 = vdwg.mxu0
    %v4985 = vrot.slane %v4981, 2
    %v4987 = vadd.f32 %v2596, %v4985
    %4988 = vmatprep.subr.mxu0 0.0
    %4989 = vmatpush1.msra.mxu0 %v2882
    %4990 = vmatprep.subr.mxu0 0.0
    %4991 = vmatpush1.msra.mxu0 %v2883
    %4992 = vmatprep.subr.mxu0 0.0
    %4993 = vmatpush1.msra.mxu0 %v2884
    %4994 = vmatprep.subr.mxu0 0.0
    %4995 = vmatpush1.msra.mxu0 %v2885
    %4996 = vmatprep.subr.mxu0 0.0
    %4997 = vmatpush1.msra.mxu0 %v2886
    %4998 = vmatprep.subr.mxu0 0.0
    %4999 = vmatpush1.msra.mxu0 %v2887
    %5000 = vmatprep.subr.mxu0 0.0
    %5001 = vmatpush1.msra.mxu0 %v3058
    %5002 = vmatprep.subr.mxu0 0.0
    %5003 = vmatpush1.msra.mxu0 0.0
    %5004 = vmatprep.subr.mxu0 0.0
    %5005 = vmatpush1.msra.mxu0 0.0
    %5006 = vmatprep.subr.mxu0 0.0
    %5007 = vmatpush1.msra.mxu0 0.0
    %5008 = vmatprep.subr.mxu0 0.0
    %5009 = vmatpush1.msra.mxu0 0.0
    %5010 = vmatprep.subr.mxu0 0.0
    %5011 = vmatpush1.msra.mxu0 0.0
    %5012 = vmatprep.subr.mxu0 0.0
    %5013 = vmatpush1.msra.mxu0 0.0
    %5014 = vmatprep.subr.mxu0 0.0
    %5015 = vmatpush1.msra.mxu0 0.0
    %5016 = vmatprep.subr.mxu0 0.0
    %5017 = vmatpush1.msra.mxu0 0.0
    %5018 = vmatprep.subr.mxu0 0.0
    %5019 = vmatpush1.msra.mxu0 0.0
    %5020 = vmatprep.subr.mxu0 0.0
    %5021 = vmatpush1.msra.mxu0 0.0
    %5022 = vmatprep.subr.mxu0 0.0
    %5023 = vmatpush1.msra.mxu0 0.0
    %5024 = vmatprep.subr.mxu0 0.0
    %5025 = vmatpush1.msra.mxu0 0.0
    %5026 = vmatprep.subr.mxu0 0.0
    %5027 = vmatpush1.msra.mxu0 0.0
    %5028 = vmatprep.subr.mxu0 0.0
    %5029 = vmatpush1.msra.mxu0 0.0
    %5030 = vmatprep.subr.mxu0 0.0
    %5031 = vmatpush1.msra.mxu0 0.0
    %5032 = vmatprep.subr.mxu0 0.0
    %5033 = vmatpush1.msra.mxu0 0.0
    %5034 = vmatprep.subr.mxu0 0.0
    %5035 = vmatpush1.msra.mxu0 0.0
    %5036 = vmatprep.subr.mxu0 0.0
    %5037 = vmatpush1.msra.mxu0 0.0
    %5038 = vmatprep.subr.mxu0 0.0
    %5039 = vmatpush1.msra.mxu0 0.0
    %5040 = vmatprep.subr.mxu0 0.0
    %5041 = vmatpush1.msra.mxu0 0.0
    %5042 = vmatprep.subr.mxu0 0.0
    %5043 = vmatpush1.msra.mxu0 0.0
    %5044 = vmatprep.subr.mxu0 0.0
    %5045 = vmatpush1.msra.mxu0 0.0
    %5046 = vmatprep.subr.mxu0 0.0
    %5047 = vmatpush1.msra.mxu0 0.0
    %5048 = vmatprep.subr.mxu0 0.0
    %5049 = vmatpush1.msra.mxu0 0.0
    %5050 = vmatprep.subr.mxu0 0.0
    %5051 = vmatpush1.msra.mxu0 0.0
    %5052 = vmatprep.mubr.f32.mxu0 0.0
    %5053 = vmatmul.mubr.f32.gmra.mrb[0].mxu0 %v4912
    %v5054 = vpop.f32.mrb[0].mxu0
    %v5055 = vadd.f32 0.0, %v5054
    %v5056 = vpop.f32.mrb[0].mxu0
    %5057 = vdwg.mxu0
    %v5059 = vrot.slane %v5055, 2
    %v5061 = vadd.f32 %v2686, %v5059
    %5062 = vmatprep.subr.mxu0 0.0
    %5063 = vmatpush1.msra.mxu0 %v2890
    %5064 = vmatprep.subr.mxu0 0.0
    %5065 = vmatpush1.msra.mxu0 %v2891
    %5066 = vmatprep.subr.mxu0 0.0
    %5067 = vmatpush1.msra.mxu0 %v2892
    %5068 = vmatprep.subr.mxu0 0.0
    %5069 = vmatpush1.msra.mxu0 %v2893
    %5070 = vmatprep.subr.mxu0 0.0
    %5071 = vmatpush1.msra.mxu0 %v2894
    %5072 = vmatprep.subr.mxu0 0.0
    %5073 = vmatpush1.msra.mxu0 %v2895
    %5074 = vmatprep.subr.mxu0 0.0
    %5075 = vmatpush1.msra.mxu0 %v3132
    %5076 = vmatprep.subr.mxu0 0.0
    %5077 = vmatpush1.msra.mxu0 0.0
    %5078 = vmatprep.subr.mxu0 0.0
    %5079 = vmatpush1.msra.mxu0 0.0
    %5080 = vmatprep.subr.mxu0 0.0
    %5081 = vmatpush1.msra.mxu0 0.0
    %5082 = vmatprep.subr.mxu0 0.0
    %5083 = vmatpush1.msra.mxu0 0.0
    %5084 = vmatprep.subr.mxu0 0.0
    %5085 = vmatpush1.msra.mxu0 0.0
    %5086 = vmatprep.subr.mxu0 0.0
    %5087 = vmatpush1.msra.mxu0 0.0
    %5088 = vmatprep.subr.mxu0 0.0
    %5089 = vmatpush1.msra.mxu0 0.0
    %5090 = vmatprep.subr.mxu0 0.0
    %5091 = vmatpush1.msra.mxu0 0.0
    %5092 = vmatprep.subr.mxu0 0.0
    %5093 = vmatpush1.msra.mxu0 0.0
    %5094 = vmatprep.subr.mxu0 0.0
    %5095 = vmatpush1.msra.mxu0 0.0
    %5096 = vmatprep.subr.mxu0 0.0
    %5097 = vmatpush1.msra.mxu0 0.0
    %5098 = vmatprep.subr.mxu0 0.0
    %5099 = vmatpush1.msra.mxu0 0.0
    %5100 = vmatprep.subr.mxu0 0.0
    %5101 = vmatpush1.msra.mxu0 0.0
    %5102 = vmatprep.subr.mxu0 0.0
    %5103 = vmatpush1.msra.mxu0 0.0
    %5104 = vmatprep.subr.mxu0 0.0
    %5105 = vmatpush1.msra.mxu0 0.0
    %5106 = vmatprep.subr.mxu0 0.0
    %5107 = vmatpush1.msra.mxu0 0.0
    %5108 = vmatprep.subr.mxu0 0.0
    %5109 = vmatpush1.msra.mxu0 0.0
    %5110 = vmatprep.subr.mxu0 0.0
    %5111 = vmatpush1.msra.mxu0 0.0
    %5112 = vmatprep.subr.mxu0 0.0
    %5113 = vmatpush1.msra.mxu0 0.0
    %5114 = vmatprep.subr.mxu0 0.0
    %5115 = vmatpush1.msra.mxu0 0.0
    %5116 = vmatprep.subr.mxu0 0.0
    %5117 = vmatpush1.msra.mxu0 0.0
    %5118 = vmatprep.subr.mxu0 0.0
    %5119 = vmatpush1.msra.mxu0 0.0
    %5120 = vmatprep.subr.mxu0 0.0
    %5121 = vmatpush1.msra.mxu0 0.0
    %5122 = vmatprep.subr.mxu0 0.0
    %5123 = vmatpush1.msra.mxu0 0.0
    %5124 = vmatprep.subr.mxu0 0.0
    %5125 = vmatpush1.msra.mxu0 0.0
    %5126 = vmatprep.mubr.f32.mxu0 0.0
    %5127 = vmatmul.mubr.f32.gmra.mrb[0].mxu0 %v4912
    %v5128 = vpop.f32.mrb[0].mxu0
    %v5129 = vadd.f32 0.0, %v5128
    %v5130 = vpop.f32.mrb[0].mxu0
    %5131 = vdwg.mxu0
    %v5133 = vrot.slane %v5129, 2
    %v5135 = vadd.f32 %v2776, %v5133
    %5136 = vmatprep.subr.mxu0 0.0
    %5137 = vmatpush1.msra.mxu0 %v2898
    %5138 = vmatprep.subr.mxu0 0.0
    %5139 = vmatpush1.msra.mxu0 %v2899
    %5140 = vmatprep.subr.mxu0 0.0
    %5141 = vmatpush1.msra.mxu0 %v2900
    %5142 = vmatprep.subr.mxu0 0.0
    %5143 = vmatpush1.msra.mxu0 %v2901
    %5144 = vmatprep.subr.mxu0 0.0
    %5145 = vmatpush1.msra.mxu0 %v2902
    %5146 = vmatprep.subr.mxu0 0.0
    %5147 = vmatpush1.msra.mxu0 %v2903
    %5148 = vmatprep.subr.mxu0 0.0
    %5149 = vmatpush1.msra.mxu0 %v3206
    %5150 = vmatprep.subr.mxu0 0.0
    %5151 = vmatpush1.msra.mxu0 0.0
    %5152 = vmatprep.subr.mxu0 0.0
    %5153 = vmatpush1.msra.mxu0 0.0
    %5154 = vmatprep.subr.mxu0 0.0
    %5155 = vmatpush1.msra.mxu0 0.0
    %5156 = vmatprep.subr.mxu0 0.0
    %5157 = vmatpush1.msra.mxu0 0.0
    %5158 = vmatprep.subr.mxu0 0.0
    %5159 = vmatpush1.msra.mxu0 0.0
    %5160 = vmatprep.subr.mxu0 0.0
    %5161 = vmatpush1.msra.mxu0 0.0
    %5162 = vmatprep.subr.mxu0 0.0
    %5163 = vmatpush1.msra.mxu0 0.0
    %5164 = vmatprep.subr.mxu0 0.0
    %5165 = vmatpush1.msra.mxu0 0.0
    %5166 = vmatprep.subr.mxu0 0.0
    %5167 = vmatpush1.msra.mxu0 0.0
    %5168 = vmatprep.subr.mxu0 0.0
    %5169 = vmatpush1.msra.mxu0 0.0
    %5170 = vmatprep.subr.mxu0 0.0
    %5171 = vmatpush1.msra.mxu0 0.0
    %5172 = vmatprep.subr.mxu0 0.0
    %5173 = vmatpush1.msra.mxu0 0.0
    %5174 = vmatprep.subr.mxu0 0.0
    %5175 = vmatpush1.msra.mxu0 0.0
    %5176 = vmatprep.subr.mxu0 0.0
    %5177 = vmatpush1.msra.mxu0 0.0
    %5178 = vmatprep.subr.mxu0 0.0
    %5179 = vmatpush1.msra.mxu0 0.0
    %5180 = vmatprep.subr.mxu0 0.0
    %5181 = vmatpush1.msra.mxu0 0.0
    %5182 = vmatprep.subr.mxu0 0.0
    %5183 = vmatpush1.msra.mxu0 0.0
    %5184 = vmatprep.subr.mxu0 0.0
    %5185 = vmatpush1.msra.mxu0 0.0
    %5186 = vmatprep.subr.mxu0 0.0
    %5187 = vmatpush1.msra.mxu0 0.0
    %5188 = vmatprep.subr.mxu0 0.0
    %5189 = vmatpush1.msra.mxu0 0.0
    %5190 = vmatprep.subr.mxu0 0.0
    %5191 = vmatpush1.msra.mxu0 0.0
    %5192 = vmatprep.subr.mxu0 0.0
    %5193 = vmatpush1.msra.mxu0 0.0
    %5194 = vmatprep.subr.mxu0 0.0
    %5195 = vmatpush1.msra.mxu0 0.0
    %5196 = vmatprep.subr.mxu0 0.0
    %5197 = vmatpush1.msra.mxu0 0.0
    %5198 = vmatprep.subr.mxu0 0.0
    %5199 = vmatpush1.msra.mxu0 0.0
    %5200 = vmatprep.mubr.f32.mxu0 0.0
    %5201 = vmatmul.mubr.f32.gmra.mrb[0].mxu0 %v4912
    %v5202 = vpop.f32.mrb[0].mxu0
    %v5203 = vadd.f32 0.0, %v5202
    %v5204 = vpop.f32.mrb[0].mxu0
    %5205 = vdwg.mxu0
    %v5207 = vrot.slane %v5203, 2
    %v5209 = vadd.f32 %v2866, %v5207
    %v5210 = vxor.u32 %v5061, 2147483648
    %v5211 = vmul.f32 %v5210, 1.442695
    %v5212 = vpow.pop %v5211
    %v5213 = vadd.f32 %v5212, 1.0
    %v5214 = vrcp.pop %v5213
    %v5215 = vmul.f32 1.0, %v5214
    %v5217 = vrot.slane %v4587, 6
    %v5219 = vmul.f32 %v5215, %v5217
    %v5220 = vxor.u32 %v4987, 2147483648
    %v5221 = vmul.f32 %v5220, 1.442695
    %v5222 = vpow.pop %v5221
    %v5223 = vadd.f32 %v5222, 1.0
    %v5224 = vrcp.pop %v5223
    %v5225 = vmul.f32 1.0, %v5224
    %v5226 = vtanh.pop %v5135
    %v5227 = vmul.f32 %v5225, %v5226
    %v5228 = vadd.f32 %v5219, %v5227
    %v5229 = vxor.u32 %v5209, 2147483648
    %v5230 = vmul.f32 %v5229, 1.442695
    %v5231 = vpow.pop %v5230
    %v5232 = vadd.f32 %v5231, 1.0
    %v5233 = vrcp.pop %v5232
    %v5234 = vmul.f32 1.0, %v5233
    %v5235 = vtanh.pop %v5228
    %v5236 = vmul.f32 %v5234, %v5235
    %v5238 = vrot.slane %v4909, 2
    %5239 = vrot.lane.b32.xlu0 %v5238, 50
    %v5240 = vpop.permute.xlu0 %5239
    %v5242 = vsel %vm2979, %v5236, %v5240
    %v5244 = vrot.slane %v5242, 6
    %v5245 = vsel %vm3308, %v5244, 0
    %5247 = vmatprep.subr.mxu0 0.0
    %5248 = vmatpush1.msra.mxu0 %v2905
    %5249 = vmatprep.subr.mxu0 0.0
    %5250 = vmatpush1.msra.mxu0 %v2906
    %5251 = vmatprep.subr.mxu0 0.0
    %5252 = vmatpush1.msra.mxu0 %v2907
    %5253 = vmatprep.subr.mxu0 0.0
    %5254 = vmatpush1.msra.mxu0 %v2908
    %5255 = vmatprep.subr.mxu0 0.0
    %5256 = vmatpush1.msra.mxu0 %v2909
    %5257 = vmatprep.subr.mxu0 0.0
    %5258 = vmatpush1.msra.mxu0 %v2910
    %5259 = vmatprep.subr.mxu0 0.0
    %5260 = vmatpush1.msra.mxu0 %v2911
    %5261 = vmatprep.subr.mxu0 0.0
    %5262 = vmatpush1.msra.mxu0 %v2912
    %5263 = vmatprep.subr.mxu0 0.0
    %5264 = vmatpush1.msra.mxu0 %v2913
    %5265 = vmatprep.subr.mxu0 0.0
    %5266 = vmatpush1.msra.mxu0 %v2914
    %5267 = vmatprep.subr.mxu0 0.0
    %5268 = vmatpush1.msra.mxu0 %v2915
    %5269 = vmatprep.subr.mxu0 0.0
    %5270 = vmatpush1.msra.mxu0 %v2916
    %5271 = vmatprep.subr.mxu0 0.0
    %5272 = vmatpush1.msra.mxu0 %v3314
    %5273 = vmatprep.subr.mxu0 0.0
    %5274 = vmatpush1.msra.mxu0 0.0
    %5275 = vmatprep.subr.mxu0 0.0
    %5276 = vmatpush1.msra.mxu0 0.0
    %5277 = vmatprep.subr.mxu0 0.0
    %5278 = vmatpush1.msra.mxu0 0.0
    %5279 = vmatprep.subr.mxu0 0.0
    %5280 = vmatpush1.msra.mxu0 0.0
    %5281 = vmatprep.subr.mxu0 0.0
    %5282 = vmatpush1.msra.mxu0 0.0
    %5283 = vmatprep.subr.mxu0 0.0
    %5284 = vmatpush1.msra.mxu0 0.0
    %5285 = vmatprep.subr.mxu0 0.0
    %5286 = vmatpush1.msra.mxu0 0.0
    %5287 = vmatprep.subr.mxu0 0.0
    %5288 = vmatpush1.msra.mxu0 0.0
    %5289 = vmatprep.subr.mxu0 0.0
    %5290 = vmatpush1.msra.mxu0 0.0
    %5291 = vmatprep.subr.mxu0 0.0
    %5292 = vmatpush1.msra.mxu0 0.0
    %5293 = vmatprep.subr.mxu0 0.0
    %5294 = vmatpush1.msra.mxu0 0.0
    %5295 = vmatprep.subr.mxu0 0.0
    %5296 = vmatpush1.msra.mxu0 0.0
    %5297 = vmatprep.subr.mxu0 0.0
    %5298 = vmatpush1.msra.mxu0 0.0
    %5299 = vmatprep.subr.mxu0 0.0
    %5300 = vmatpush1.msra.mxu0 0.0
    %5301 = vmatprep.subr.mxu0 0.0
    %5302 = vmatpush1.msra.mxu0 0.0
    %5303 = vmatprep.subr.mxu0 0.0
    %5304 = vmatpush1.msra.mxu0 0.0
    %5305 = vmatprep.subr.mxu0 0.0
    %5306 = vmatpush1.msra.mxu0 0.0
    %5307 = vmatprep.subr.mxu0 0.0
    %5308 = vmatpush1.msra.mxu0 0.0
    %5309 = vmatprep.subr.mxu0 0.0
    %5310 = vmatpush1.msra.mxu0 0.0
    %5311 = vmatprep.mubr.f32.mxu0 0.0
    %5312 = vmatmul.mubr.f32.gmra.mrb[0].mxu0 %v5245
    %v5313 = vpop.f32.mrb[0].mxu0
    %v5314 = vadd.f32 %v2960, %v5313
    %v5315 = vpop.f32.mrb[0].mxu0
    %5316 = vdwg.mxu0
    %5317 = vmatprep.subr.mxu0 0.0
    %5318 = vmatpush1.msra.mxu0 %v2919
    %5319 = vmatprep.subr.mxu0 0.0
    %5320 = vmatpush1.msra.mxu0 %v2920
    %5321 = vmatprep.subr.mxu0 0.0
    %5322 = vmatpush1.msra.mxu0 %v2921
    %5323 = vmatprep.subr.mxu0 0.0
    %5324 = vmatpush1.msra.mxu0 %v2922
    %5325 = vmatprep.subr.mxu0 0.0
    %5326 = vmatpush1.msra.mxu0 %v2923
    %5327 = vmatprep.subr.mxu0 0.0
    %5328 = vmatpush1.msra.mxu0 %v2924
    %5329 = vmatprep.subr.mxu0 0.0
    %5330 = vmatpush1.msra.mxu0 %v2925
    %5331 = vmatprep.subr.mxu0 0.0
    %5332 = vmatpush1.msra.mxu0 %v2926
    %5333 = vmatprep.subr.mxu0 0.0
    %5334 = vmatpush1.msra.mxu0 %v2927
    %5335 = vmatprep.subr.mxu0 0.0
    %5336 = vmatpush1.msra.mxu0 %v2928
    %5337 = vmatprep.subr.mxu0 0.0
    %5338 = vmatpush1.msra.mxu0 %v2929
    %5339 = vmatprep.subr.mxu0 0.0
    %5340 = vmatpush1.msra.mxu0 %v2930
    %5341 = vmatprep.subr.mxu0 0.0
    %5342 = vmatpush1.msra.mxu0 %v3387
    %5343 = vmatprep.subr.mxu0 0.0
    %5344 = vmatpush1.msra.mxu0 0.0
    %5345 = vmatprep.subr.mxu0 0.0
    %5346 = vmatpush1.msra.mxu0 0.0
    %5347 = vmatprep.subr.mxu0 0.0
    %5348 = vmatpush1.msra.mxu0 0.0
    %5349 = vmatprep.subr.mxu0 0.0
    %5350 = vmatpush1.msra.mxu0 0.0
    %5351 = vmatprep.subr.mxu0 0.0
    %5352 = vmatpush1.msra.mxu0 0.0
    %5353 = vmatprep.subr.mxu0 0.0
    %5354 = vmatpush1.msra.mxu0 0.0
    %5355 = vmatprep.subr.mxu0 0.0
    %5356 = vmatpush1.msra.mxu0 0.0
    %5357 = vmatprep.subr.mxu0 0.0
    %5358 = vmatpush1.msra.mxu0 0.0
    %5359 = vmatprep.subr.mxu0 0.0
    %5360 = vmatpush1.msra.mxu0 0.0
    %5361 = vmatprep.subr.mxu0 0.0
    %5362 = vmatpush1.msra.mxu0 0.0
    %5363 = vmatprep.subr.mxu0 0.0
    %5364 = vmatpush1.msra.mxu0 0.0
    %5365 = vmatprep.subr.mxu0 0.0
    %5366 = vmatpush1.msra.mxu0 0.0
    %5367 = vmatprep.subr.mxu0 0.0
    %5368 = vmatpush1.msra.mxu0 0.0
    %5369 = vmatprep.subr.mxu0 0.0
    %5370 = vmatpush1.msra.mxu0 0.0
    %5371 = vmatprep.subr.mxu0 0.0
    %5372 = vmatpush1.msra.mxu0 0.0
    %5373 = vmatprep.subr.mxu0 0.0
    %5374 = vmatpush1.msra.mxu0 0.0
    %5375 = vmatprep.subr.mxu0 0.0
    %5376 = vmatpush1.msra.mxu0 0.0
    %5377 = vmatprep.subr.mxu0 0.0
    %5378 = vmatpush1.msra.mxu0 0.0
    %5379 = vmatprep.subr.mxu0 0.0
    %5380 = vmatpush1.msra.mxu0 0.0
    %5381 = vmatprep.mubr.f32.mxu0 0.0
    %5382 = vmatmul.mubr.f32.gmra.mrb[0].mxu0 %v5245
    %v5383 = vpop.f32.mrb[0].mxu0
    %v5384 = vadd.f32 %v2962, %v5383
    %v5385 = vpop.f32.mrb[0].mxu0
    %5386 = vdwg.mxu0
    %5387 = vmatprep.subr.mxu0 0.0
    %5388 = vmatpush1.msra.mxu0 %v2933
    %5389 = vmatprep.subr.mxu0 0.0
    %5390 = vmatpush1.msra.mxu0 %v2934
    %5391 = vmatprep.subr.mxu0 0.0
    %5392 = vmatpush1.msra.mxu0 %v2935
    %5393 = vmatprep.subr.mxu0 0.0
    %5394 = vmatpush1.msra.mxu0 %v2936
    %5395 = vmatprep.subr.mxu0 0.0
    %5396 = vmatpush1.msra.mxu0 %v2937
    %5397 = vmatprep.subr.mxu0 0.0
    %5398 = vmatpush1.msra.mxu0 %v2938
    %5399 = vmatprep.subr.mxu0 0.0
    %5400 = vmatpush1.msra.mxu0 %v2939
    %5401 = vmatprep.subr.mxu0 0.0
    %5402 = vmatpush1.msra.mxu0 %v2940
    %5403 = vmatprep.subr.mxu0 0.0
    %5404 = vmatpush1.msra.mxu0 %v2941
    %5405 = vmatprep.subr.mxu0 0.0
    %5406 = vmatpush1.msra.mxu0 %v2942
    %5407 = vmatprep.subr.mxu0 0.0
    %5408 = vmatpush1.msra.mxu0 %v2943
    %5409 = vmatprep.subr.mxu0 0.0
    %5410 = vmatpush1.msra.mxu0 %v2944
    %5411 = vmatprep.subr.mxu0 0.0
    %5412 = vmatpush1.msra.mxu0 %v3460
    %5413 = vmatprep.subr.mxu0 0.0
    %5414 = vmatpush1.msra.mxu0 0.0
    %5415 = vmatprep.subr.mxu0 0.0
    %5416 = vmatpush1.msra.mxu0 0.0
    %5417 = vmatprep.subr.mxu0 0.0
    %5418 = vmatpush1.msra.mxu0 0.0
    %5419 = vmatprep.subr.mxu0 0.0
    %5420 = vmatpush1.msra.mxu0 0.0
    %5421 = vmatprep.subr.mxu0 0.0
    %5422 = vmatpush1.msra.mxu0 0.0
    %5423 = vmatprep.subr.mxu0 0.0
    %5424 = vmatpush1.msra.mxu0 0.0
    %5425 = vmatprep.subr.mxu0 0.0
    %5426 = vmatpush1.msra.mxu0 0.0
    %5427 = vmatprep.subr.mxu0 0.0
    %5428 = vmatpush1.msra.mxu0 0.0
    %5429 = vmatprep.subr.mxu0 0.0
    %5430 = vmatpush1.msra.mxu0 0.0
    %5431 = vmatprep.subr.mxu0 0.0
    %5432 = vmatpush1.msra.mxu0 0.0
    %5433 = vmatprep.subr.mxu0 0.0
    %5434 = vmatpush1.msra.mxu0 0.0
    %5435 = vmatprep.subr.mxu0 0.0
    %5436 = vmatpush1.msra.mxu0 0.0
    %5437 = vmatprep.subr.mxu0 0.0
    %5438 = vmatpush1.msra.mxu0 0.0
    %5439 = vmatprep.subr.mxu0 0.0
    %5440 = vmatpush1.msra.mxu0 0.0
    %5441 = vmatprep.subr.mxu0 0.0
    %5442 = vmatpush1.msra.mxu0 0.0
    %5443 = vmatprep.subr.mxu0 0.0
    %5444 = vmatpush1.msra.mxu0 0.0
    %5445 = vmatprep.subr.mxu0 0.0
    %5446 = vmatpush1.msra.mxu0 0.0
    %5447 = vmatprep.subr.mxu0 0.0
    %5448 = vmatpush1.msra.mxu0 0.0
    %5449 = vmatprep.subr.mxu0 0.0
    %5450 = vmatpush1.msra.mxu0 0.0
    %5451 = vmatprep.mubr.f32.mxu0 0.0
    %5452 = vmatmul.mubr.f32.gmra.mrb[0].mxu0 %v5245
    %v5453 = vpop.f32.mrb[0].mxu0
    %v5454 = vadd.f32 %v2964, %v5453
    %v5455 = vpop.f32.mrb[0].mxu0
    %5456 = vdwg.mxu0
    %5457 = vmatprep.subr.mxu0 0.0
    %5458 = vmatpush1.msra.mxu0 %v2947
    %5459 = vmatprep.subr.mxu0 0.0
    %5460 = vmatpush1.msra.mxu0 %v2948
    %5461 = vmatprep.subr.mxu0 0.0
    %5462 = vmatpush1.msra.mxu0 %v2949
    %5463 = vmatprep.subr.mxu0 0.0
    %5464 = vmatpush1.msra.mxu0 %v2950
    %5465 = vmatprep.subr.mxu0 0.0
    %5466 = vmatpush1.msra.mxu0 %v2951
    %5467 = vmatprep.subr.mxu0 0.0
    %5468 = vmatpush1.msra.mxu0 %v2952
    %5469 = vmatprep.subr.mxu0 0.0
    %5470 = vmatpush1.msra.mxu0 %v2953
    %5471 = vmatprep.subr.mxu0 0.0
    %5472 = vmatpush1.msra.mxu0 %v2954
    %5473 = vmatprep.subr.mxu0 0.0
    %5474 = vmatpush1.msra.mxu0 %v2955
    %5475 = vmatprep.subr.mxu0 0.0
    %5476 = vmatpush1.msra.mxu0 %v2956
    %5477 = vmatprep.subr.mxu0 0.0
    %5478 = vmatpush1.msra.mxu0 %v2957
    %5479 = vmatprep.subr.mxu0 0.0
    %5480 = vmatpush1.msra.mxu0 %v2958
    %5481 = vmatprep.subr.mxu0 0.0
    %5482 = vmatpush1.msra.mxu0 %v3533
    %5483 = vmatprep.subr.mxu0 0.0
    %5484 = vmatpush1.msra.mxu0 0.0
    %5485 = vmatprep.subr.mxu0 0.0
    %5486 = vmatpush1.msra.mxu0 0.0
    %5487 = vmatprep.subr.mxu0 0.0
    %5488 = vmatpush1.msra.mxu0 0.0
    %5489 = vmatprep.subr.mxu0 0.0
    %5490 = vmatpush1.msra.mxu0 0.0
    %5491 = vmatprep.subr.mxu0 0.0
    %5492 = vmatpush1.msra.mxu0 0.0
    %5493 = vmatprep.subr.mxu0 0.0
    %5494 = vmatpush1.msra.mxu0 0.0
    %5495 = vmatprep.subr.mxu0 0.0
    %5496 = vmatpush1.msra.mxu0 0.0
    %5497 = vmatprep.subr.mxu0 0.0
    %5498 = vmatpush1.msra.mxu0 0.0
    %5499 = vmatprep.subr.mxu0 0.0
    %5500 = vmatpush1.msra.mxu0 0.0
    %5501 = vmatprep.subr.mxu0 0.0
    %5502 = vmatpush1.msra.mxu0 0.0
    %5503 = vmatprep.subr.mxu0 0.0
    %5504 = vmatpush1.msra.mxu0 0.0
    %5505 = vmatprep.subr.mxu0 0.0
    %5506 = vmatpush1.msra.mxu0 0.0
    %5507 = vmatprep.subr.mxu0 0.0
    %5508 = vmatpush1.msra.mxu0 0.0
    %5509 = vmatprep.subr.mxu0 0.0
    %5510 = vmatpush1.msra.mxu0 0.0
    %5511 = vmatprep.subr.mxu0 0.0
    %5512 = vmatpush1.msra.mxu0 0.0
    %5513 = vmatprep.subr.mxu0 0.0
    %5514 = vmatpush1.msra.mxu0 0.0
    %5515 = vmatprep.subr.mxu0 0.0
    %5516 = vmatpush1.msra.mxu0 0.0
    %5517 = vmatprep.subr.mxu0 0.0
    %5518 = vmatpush1.msra.mxu0 0.0
    %5519 = vmatprep.subr.mxu0 0.0
    %5520 = vmatpush1.msra.mxu0 0.0
    %5521 = vmatprep.mubr.f32.mxu0 0.0
    %5522 = vmatmul.mubr.f32.gmra.mrb[0].mxu0 %v5245
    %v5523 = vpop.f32.mrb[0].mxu0
    %v5524 = vadd.f32 %v2966, %v5523
    %v5525 = vpop.f32.mrb[0].mxu0
    %5526 = vdwg.mxu0
    %v5527 = vxor.u32 %v5384, 2147483648
    %v5528 = vmul.f32 %v5527, 1.442695
    %v5529 = vpow.pop %v5528
    %v5530 = vadd.f32 %v5529, 1.0
    %v5531 = vrcp.pop %v5530
    %v5532 = vmul.f32 1.0, %v5531
    %v5533 = vmul.f32 %v5532, %v4901
    %v5534 = vxor.u32 %v5314, 2147483648
    %v5535 = vmul.f32 %v5534, 1.442695
    %v5536 = vpow.pop %v5535
    %v5537 = vadd.f32 %v5536, 1.0
    %v5538 = vrcp.pop %v5537
    %v5539 = vmul.f32 1.0, %v5538
    %v5540 = vtanh.pop %v5454
    %v5541 = vmul.f32 %v5539, %v5540
    %v5542 = vadd.f32 %v5533, %v5541
    %v5543 = vxor.u32 %v5524, 2147483648
    %v5544 = vmul.f32 %v5543, 1.442695
    %v5545 = vpow.pop %v5544
    %v5546 = vadd.f32 %v5545, 1.0
    %v5547 = vrcp.pop %v5546
    %v5548 = vmul.f32 1.0, %v5547
    %v5549 = vtanh.pop %v5542
    %v5550 = vmul.f32 %v5548, %v5549
    %v5552 = vrot.slane %v5236, 6
    %v5553 = vsel %vm2979, %v5552, 0
    %5555 = vmatprep.subr.mxu0 0.0
    %5556 = vmatpush1.msra.mxu0 %v2874
    %5557 = vmatprep.subr.mxu0 0.0
    %5558 = vmatpush1.msra.mxu0 %v2875
    %5559 = vmatprep.subr.mxu0 0.0
    %5560 = vmatpush1.msra.mxu0 %v2876
    %5561 = vmatprep.subr.mxu0 0.0
    %5562 = vmatpush1.msra.mxu0 %v2877
    %5563 = vmatprep.subr.mxu0 0.0
    %5564 = vmatpush1.msra.mxu0 %v2878
    %5565 = vmatprep.subr.mxu0 0.0
    %5566 = vmatpush1.msra.mxu0 %v2879
    %5567 = vmatprep.subr.mxu0 0.0
    %5568 = vmatpush1.msra.mxu0 %v2984
    %5569 = vmatprep.subr.mxu0 0.0
    %5570 = vmatpush1.msra.mxu0 0.0
    %5571 = vmatprep.subr.mxu0 0.0
    %5572 = vmatpush1.msra.mxu0 0.0
    %5573 = vmatprep.subr.mxu0 0.0
    %5574 = vmatpush1.msra.mxu0 0.0
    %5575 = vmatprep.subr.mxu0 0.0
    %5576 = vmatpush1.msra.mxu0 0.0
    %5577 = vmatprep.subr.mxu0 0.0
    %5578 = vmatpush1.msra.mxu0 0.0
    %5579 = vmatprep.subr.mxu0 0.0
    %5580 = vmatpush1.msra.mxu0 0.0
    %5581 = vmatprep.subr.mxu0 0.0
    %5582 = vmatpush1.msra.mxu0 0.0
    %5583 = vmatprep.subr.mxu0 0.0
    %5584 = vmatpush1.msra.mxu0 0.0
    %5585 = vmatprep.subr.mxu0 0.0
    %5586 = vmatpush1.msra.mxu0 0.0
    %5587 = vmatprep.subr.mxu0 0.0
    %5588 = vmatpush1.msra.mxu0 0.0
    %5589 = vmatprep.subr.mxu0 0.0
    %5590 = vmatpush1.msra.mxu0 0.0
    %5591 = vmatprep.subr.mxu0 0.0
    %5592 = vmatpush1.msra.mxu0 0.0
    %5593 = vmatprep.subr.mxu0 0.0
    %5594 = vmatpush1.msra.mxu0 0.0
    %5595 = vmatprep.subr.mxu0 0.0
    %5596 = vmatpush1.msra.mxu0 0.0
    %5597 = vmatprep.subr.mxu0 0.0
    %5598 = vmatpush1.msra.mxu0 0.0
    %5599 = vmatprep.subr.mxu0 0.0
    %5600 = vmatpush1.msra.mxu0 0.0
    %5601 = vmatprep.subr.mxu0 0.0
    %5602 = vmatpush1.msra.mxu0 0.0
    %5603 = vmatprep.subr.mxu0 0.0
    %5604 = vmatpush1.msra.mxu0 0.0
    %5605 = vmatprep.subr.mxu0 0.0
    %5606 = vmatpush1.msra.mxu0 0.0
    %5607 = vmatprep.subr.mxu0 0.0
    %5608 = vmatpush1.msra.mxu0 0.0
    %5609 = vmatprep.subr.mxu0 0.0
    %5610 = vmatpush1.msra.mxu0 0.0
    %5611 = vmatprep.subr.mxu0 0.0
    %5612 = vmatpush1.msra.mxu0 0.0
    %5613 = vmatprep.subr.mxu0 0.0
    %5614 = vmatpush1.msra.mxu0 0.0
    %5615 = vmatprep.subr.mxu0 0.0
    %5616 = vmatpush1.msra.mxu0 0.0
    %5617 = vmatprep.subr.mxu0 0.0
    %5618 = vmatpush1.msra.mxu0 0.0
    %5619 = vmatprep.mubr.f32.mxu0 0.0
    %5620 = vmatmul.mubr.f32.gmra.mrb[0].mxu0 %v5553
    %v5621 = vpop.f32.mrb[0].mxu0
    %v5622 = vadd.f32 0.0, %v5621
    %v5623 = vpop.f32.mrb[0].mxu0
    %5624 = vdwg.mxu0
    %v5625 = vadd.f32 %v2601, %v5622
    %5626 = vmatprep.subr.mxu0 0.0
    %5627 = vmatpush1.msra.mxu0 %v2882
    %5628 = vmatprep.subr.mxu0 0.0
    %5629 = vmatpush1.msra.mxu0 %v2883
    %5630 = vmatprep.subr.mxu0 0.0
    %5631 = vmatpush1.msra.mxu0 %v2884
    %5632 = vmatprep.subr.mxu0 0.0
    %5633 = vmatpush1.msra.mxu0 %v2885
    %5634 = vmatprep.subr.mxu0 0.0
    %5635 = vmatpush1.msra.mxu0 %v2886
    %5636 = vmatprep.subr.mxu0 0.0
    %5637 = vmatpush1.msra.mxu0 %v2887
    %5638 = vmatprep.subr.mxu0 0.0
    %5639 = vmatpush1.msra.mxu0 %v3058
    %5640 = vmatprep.subr.mxu0 0.0
    %5641 = vmatpush1.msra.mxu0 0.0
    %5642 = vmatprep.subr.mxu0 0.0
    %5643 = vmatpush1.msra.mxu0 0.0
    %5644 = vmatprep.subr.mxu0 0.0
    %5645 = vmatpush1.msra.mxu0 0.0
    %5646 = vmatprep.subr.mxu0 0.0
    %5647 = vmatpush1.msra.mxu0 0.0
    %5648 = vmatprep.subr.mxu0 0.0
    %5649 = vmatpush1.msra.mxu0 0.0
    %5650 = vmatprep.subr.mxu0 0.0
    %5651 = vmatpush1.msra.mxu0 0.0
    %5652 = vmatprep.subr.mxu0 0.0
    %5653 = vmatpush1.msra.mxu0 0.0
    %5654 = vmatprep.subr.mxu0 0.0
    %5655 = vmatpush1.msra.mxu0 0.0
    %5656 = vmatprep.subr.mxu0 0.0
    %5657 = vmatpush1.msra.mxu0 0.0
    %5658 = vmatprep.subr.mxu0 0.0
    %5659 = vmatpush1.msra.mxu0 0.0
    %5660 = vmatprep.subr.mxu0 0.0
    %5661 = vmatpush1.msra.mxu0 0.0
    %5662 = vmatprep.subr.mxu0 0.0
    %5663 = vmatpush1.msra.mxu0 0.0
    %5664 = vmatprep.subr.mxu0 0.0
    %5665 = vmatpush1.msra.mxu0 0.0
    %5666 = vmatprep.subr.mxu0 0.0
    %5667 = vmatpush1.msra.mxu0 0.0
    %5668 = vmatprep.subr.mxu0 0.0
    %5669 = vmatpush1.msra.mxu0 0.0
    %5670 = vmatprep.subr.mxu0 0.0
    %5671 = vmatpush1.msra.mxu0 0.0
    %5672 = vmatprep.subr.mxu0 0.0
    %5673 = vmatpush1.msra.mxu0 0.0
    %5674 = vmatprep.subr.mxu0 0.0
    %5675 = vmatpush1.msra.mxu0 0.0
    %5676 = vmatprep.subr.mxu0 0.0
    %5677 = vmatpush1.msra.mxu0 0.0
    %5678 = vmatprep.subr.mxu0 0.0
    %5679 = vmatpush1.msra.mxu0 0.0
    %5680 = vmatprep.subr.mxu0 0.0
    %5681 = vmatpush1.msra.mxu0 0.0
    %5682 = vmatprep.subr.mxu0 0.0
    %5683 = vmatpush1.msra.mxu0 0.0
    %5684 = vmatprep.subr.mxu0 0.0
    %5685 = vmatpush1.msra.mxu0 0.0
    %5686 = vmatprep.subr.mxu0 0.0
    %5687 = vmatpush1.msra.mxu0 0.0
    %5688 = vmatprep.subr.mxu0 0.0
    %5689 = vmatpush1.msra.mxu0 0.0
    %5690 = vmatprep.mubr.f32.mxu0 0.0
    %5691 = vmatmul.mubr.f32.gmra.mrb[0].mxu0 %v5553
    %v5692 = vpop.f32.mrb[0].mxu0
    %v5693 = vadd.f32 0.0, %v5692
    %v5694 = vpop.f32.mrb[0].mxu0
    %5695 = vdwg.mxu0
    %v5696 = vadd.f32 %v2691, %v5693
    %5697 = vmatprep.subr.mxu0 0.0
    %5698 = vmatpush1.msra.mxu0 %v2890
    %5699 = vmatprep.subr.mxu0 0.0
    %5700 = vmatpush1.msra.mxu0 %v2891
    %5701 = vmatprep.subr.mxu0 0.0
    %5702 = vmatpush1.msra.mxu0 %v2892
    %5703 = vmatprep.subr.mxu0 0.0
    %5704 = vmatpush1.msra.mxu0 %v2893
    %5705 = vmatprep.subr.mxu0 0.0
    %5706 = vmatpush1.msra.mxu0 %v2894
    %5707 = vmatprep.subr.mxu0 0.0
    %5708 = vmatpush1.msra.mxu0 %v2895
    %5709 = vmatprep.subr.mxu0 0.0
    %5710 = vmatpush1.msra.mxu0 %v3132
    %5711 = vmatprep.subr.mxu0 0.0
    %5712 = vmatpush1.msra.mxu0 0.0
    %5713 = vmatprep.subr.mxu0 0.0
    %5714 = vmatpush1.msra.mxu0 0.0
    %5715 = vmatprep.subr.mxu0 0.0
    %5716 = vmatpush1.msra.mxu0 0.0
    %5717 = vmatprep.subr.mxu0 0.0
    %5718 = vmatpush1.msra.mxu0 0.0
    %5719 = vmatprep.subr.mxu0 0.0
    %5720 = vmatpush1.msra.mxu0 0.0
    %5721 = vmatprep.subr.mxu0 0.0
    %5722 = vmatpush1.msra.mxu0 0.0
    %5723 = vmatprep.subr.mxu0 0.0
    %5724 = vmatpush1.msra.mxu0 0.0
    %5725 = vmatprep.subr.mxu0 0.0
    %5726 = vmatpush1.msra.mxu0 0.0
    %5727 = vmatprep.subr.mxu0 0.0
    %5728 = vmatpush1.msra.mxu0 0.0
    %5729 = vmatprep.subr.mxu0 0.0
    %5730 = vmatpush1.msra.mxu0 0.0
    %5731 = vmatprep.subr.mxu0 0.0
    %5732 = vmatpush1.msra.mxu0 0.0
    %5733 = vmatprep.subr.mxu0 0.0
    %5734 = vmatpush1.msra.mxu0 0.0
    %5735 = vmatprep.subr.mxu0 0.0
    %5736 = vmatpush1.msra.mxu0 0.0
    %5737 = vmatprep.subr.mxu0 0.0
    %5738 = vmatpush1.msra.mxu0 0.0
    %5739 = vmatprep.subr.mxu0 0.0
    %5740 = vmatpush1.msra.mxu0 0.0
    %5741 = vmatprep.subr.mxu0 0.0
    %5742 = vmatpush1.msra.mxu0 0.0
    %5743 = vmatprep.subr.mxu0 0.0
    %5744 = vmatpush1.msra.mxu0 0.0
    %5745 = vmatprep.subr.mxu0 0.0
    %5746 = vmatpush1.msra.mxu0 0.0
    %5747 = vmatprep.subr.mxu0 0.0
    %5748 = vmatpush1.msra.mxu0 0.0
    %5749 = vmatprep.subr.mxu0 0.0
    %5750 = vmatpush1.msra.mxu0 0.0
    %5751 = vmatprep.subr.mxu0 0.0
    %5752 = vmatpush1.msra.mxu0 0.0
    %5753 = vmatprep.subr.mxu0 0.0
    %5754 = vmatpush1.msra.mxu0 0.0
    %5755 = vmatprep.subr.mxu0 0.0
    %5756 = vmatpush1.msra.mxu0 0.0
    %5757 = vmatprep.subr.mxu0 0.0
    %5758 = vmatpush1.msra.mxu0 0.0
    %5759 = vmatprep.subr.mxu0 0.0
    %5760 = vmatpush1.msra.mxu0 0.0
    %5761 = vmatprep.mubr.f32.mxu0 0.0
    %5762 = vmatmul.mubr.f32.gmra.mrb[0].mxu0 %v5553
    %v5763 = vpop.f32.mrb[0].mxu0
    %v5764 = vadd.f32 0.0, %v5763
    %v5765 = vpop.f32.mrb[0].mxu0
    %5766 = vdwg.mxu0
    %v5767 = vadd.f32 %v2781, %v5764
    %5768 = vmatprep.subr.mxu0 0.0
    %5769 = vmatpush1.msra.mxu0 %v2898
    %5770 = vmatprep.subr.mxu0 0.0
    %5771 = vmatpush1.msra.mxu0 %v2899
    %5772 = vmatprep.subr.mxu0 0.0
    %5773 = vmatpush1.msra.mxu0 %v2900
    %5774 = vmatprep.subr.mxu0 0.0
    %5775 = vmatpush1.msra.mxu0 %v2901
    %5776 = vmatprep.subr.mxu0 0.0
    %5777 = vmatpush1.msra.mxu0 %v2902
    %5778 = vmatprep.subr.mxu0 0.0
    %5779 = vmatpush1.msra.mxu0 %v2903
    %5780 = vmatprep.subr.mxu0 0.0
    %5781 = vmatpush1.msra.mxu0 %v3206
    %5782 = vmatprep.subr.mxu0 0.0
    %5783 = vmatpush1.msra.mxu0 0.0
    %5784 = vmatprep.subr.mxu0 0.0
    %5785 = vmatpush1.msra.mxu0 0.0
    %5786 = vmatprep.subr.mxu0 0.0
    %5787 = vmatpush1.msra.mxu0 0.0
    %5788 = vmatprep.subr.mxu0 0.0
    %5789 = vmatpush1.msra.mxu0 0.0
    %5790 = vmatprep.subr.mxu0 0.0
    %5791 = vmatpush1.msra.mxu0 0.0
    %5792 = vmatprep.subr.mxu0 0.0
    %5793 = vmatpush1.msra.mxu0 0.0
    %5794 = vmatprep.subr.mxu0 0.0
    %5795 = vmatpush1.msra.mxu0 0.0
    %5796 = vmatprep.subr.mxu0 0.0
    %5797 = vmatpush1.msra.mxu0 0.0
    %5798 = vmatprep.subr.mxu0 0.0
    %5799 = vmatpush1.msra.mxu0 0.0
    %5800 = vmatprep.subr.mxu0 0.0
    %5801 = vmatpush1.msra.mxu0 0.0
    %5802 = vmatprep.subr.mxu0 0.0
    %5803 = vmatpush1.msra.mxu0 0.0
    %5804 = vmatprep.subr.mxu0 0.0
    %5805 = vmatpush1.msra.mxu0 0.0
    %5806 = vmatprep.subr.mxu0 0.0
    %5807 = vmatpush1.msra.mxu0 0.0
    %5808 = vmatprep.subr.mxu0 0.0
    %5809 = vmatpush1.msra.mxu0 0.0
    %5810 = vmatprep.subr.mxu0 0.0
    %5811 = vmatpush1.msra.mxu0 0.0
    %5812 = vmatprep.subr.mxu0 0.0
    %5813 = vmatpush1.msra.mxu0 0.0
    %5814 = vmatprep.subr.mxu0 0.0
    %5815 = vmatpush1.msra.mxu0 0.0
    %5816 = vmatprep.subr.mxu0 0.0
    %5817 = vmatpush1.msra.mxu0 0.0
    %5818 = vmatprep.subr.mxu0 0.0
    %5819 = vmatpush1.msra.mxu0 0.0
    %5820 = vmatprep.subr.mxu0 0.0
    %5821 = vmatpush1.msra.mxu0 0.0
    %5822 = vmatprep.subr.mxu0 0.0
    %5823 = vmatpush1.msra.mxu0 0.0
    %5824 = vmatprep.subr.mxu0 0.0
    %5825 = vmatpush1.msra.mxu0 0.0
    %5826 = vmatprep.subr.mxu0 0.0
    %5827 = vmatpush1.msra.mxu0 0.0
    %5828 = vmatprep.subr.mxu0 0.0
    %5829 = vmatpush1.msra.mxu0 0.0
    %5830 = vmatprep.subr.mxu0 0.0
    %5831 = vmatpush1.msra.mxu0 0.0
    %5832 = vmatprep.mubr.f32.mxu0 0.0
    %5833 = vmatmul.mubr.f32.gmra.mrb[0].mxu0 %v5553
    %v5834 = vpop.f32.mrb[0].mxu0
    %v5835 = vadd.f32 0.0, %v5834
    %v5836 = vpop.f32.mrb[0].mxu0
    %5837 = vdwg.mxu0
    %v5838 = vadd.f32 %v2871, %v5835
    %v5839 = vxor.u32 %v5696, 2147483648
    %v5840 = vmul.f32 %v5839, 1.442695
    %v5841 = vpow.pop %v5840
    %v5842 = vadd.f32 %v5841, 1.0
    %v5843 = vrcp.pop %v5842
    %v5844 = vmul.f32 1.0, %v5843
    %v5846 = vrot.slane %v5228, 6
    %v5848 = vmul.f32 %v5844, %v5846
    %v5849 = vxor.u32 %v5625, 2147483648
    %v5850 = vmul.f32 %v5849, 1.442695
    %v5851 = vpow.pop %v5850
    %v5852 = vadd.f32 %v5851, 1.0
    %v5853 = vrcp.pop %v5852
    %v5854 = vmul.f32 1.0, %v5853
    %v5855 = vtanh.pop %v5767
    %v5856 = vmul.f32 %v5854, %v5855
    %v5857 = vadd.f32 %v5848, %v5856
    %v5858 = vxor.u32 %v5838, 2147483648
    %v5859 = vmul.f32 %v5858, 1.442695
    %v5860 = vpow.pop %v5859
    %v5861 = vadd.f32 %v5860, 1.0
    %v5862 = vrcp.pop %v5861
    %v5863 = vmul.f32 1.0, %v5862
    %v5864 = vtanh.pop %v5857
    %v5865 = vmul.f32 %v5863, %v5864
    %5867 = vrot.lane.b32.xlu0 %v5550, 50
    %v5868 = vpop.permute.xlu0 %5867
    %v5870 = vsel %vm2979, %v5865, %v5868
    %v5872 = vsel %vm3308, %v5870, 0
    %5874 = vmatprep.subr.mxu0 0.0
    %5875 = vmatpush1.msra.mxu0 %v2905
    %5876 = vmatprep.subr.mxu0 0.0
    %5877 = vmatpush1.msra.mxu0 %v2906
    %5878 = vmatprep.subr.mxu0 0.0
    %5879 = vmatpush1.msra.mxu0 %v2907
    %5880 = vmatprep.subr.mxu0 0.0
    %5881 = vmatpush1.msra.mxu0 %v2908
    %5882 = vmatprep.subr.mxu0 0.0
    %5883 = vmatpush1.msra.mxu0 %v2909
    %5884 = vmatprep.subr.mxu0 0.0
    %5885 = vmatpush1.msra.mxu0 %v2910
    %5886 = vmatprep.subr.mxu0 0.0
    %5887 = vmatpush1.msra.mxu0 %v2911
    %5888 = vmatprep.subr.mxu0 0.0
    %5889 = vmatpush1.msra.mxu0 %v2912
    %5890 = vmatprep.subr.mxu0 0.0
    %5891 = vmatpush1.msra.mxu0 %v2913
    %5892 = vmatprep.subr.mxu0 0.0
    %5893 = vmatpush1.msra.mxu0 %v2914
    %5894 = vmatprep.subr.mxu0 0.0
    %5895 = vmatpush1.msra.mxu0 %v2915
    %5896 = vmatprep.subr.mxu0 0.0
    %5897 = vmatpush1.msra.mxu0 %v2916
    %5898 = vmatprep.subr.mxu0 0.0
    %5899 = vmatpush1.msra.mxu0 %v3314
    %5900 = vmatprep.subr.mxu0 0.0
    %5901 = vmatpush1.msra.mxu0 0.0
    %5902 = vmatprep.subr.mxu0 0.0
    %5903 = vmatpush1.msra.mxu0 0.0
    %5904 = vmatprep.subr.mxu0 0.0
    %5905 = vmatpush1.msra.mxu0 0.0
    %5906 = vmatprep.subr.mxu0 0.0
    %5907 = vmatpush1.msra.mxu0 0.0
    %5908 = vmatprep.subr.mxu0 0.0
    %5909 = vmatpush1.msra.mxu0 0.0
    %5910 = vmatprep.subr.mxu0 0.0
    %5911 = vmatpush1.msra.mxu0 0.0
    %5912 = vmatprep.subr.mxu0 0.0
    %5913 = vmatpush1.msra.mxu0 0.0
    %5914 = vmatprep.subr.mxu0 0.0
    %5915 = vmatpush1.msra.mxu0 0.0
    %5916 = vmatprep.subr.mxu0 0.0
    %5917 = vmatpush1.msra.mxu0 0.0
    %5918 = vmatprep.subr.mxu0 0.0
    %5919 = vmatpush1.msra.mxu0 0.0
    %5920 = vmatprep.subr.mxu0 0.0
    %5921 = vmatpush1.msra.mxu0 0.0
    %5922 = vmatprep.subr.mxu0 0.0
    %5923 = vmatpush1.msra.mxu0 0.0
    %5924 = vmatprep.subr.mxu0 0.0
    %5925 = vmatpush1.msra.mxu0 0.0
    %5926 = vmatprep.subr.mxu0 0.0
    %5927 = vmatpush1.msra.mxu0 0.0
    %5928 = vmatprep.subr.mxu0 0.0
    %5929 = vmatpush1.msra.mxu0 0.0
    %5930 = vmatprep.subr.mxu0 0.0
    %5931 = vmatpush1.msra.mxu0 0.0
    %5932 = vmatprep.subr.mxu0 0.0
    %5933 = vmatpush1.msra.mxu0 0.0
    %5934 = vmatprep.subr.mxu0 0.0
    %5935 = vmatpush1.msra.mxu0 0.0
    %5936 = vmatprep.subr.mxu0 0.0
    %5937 = vmatpush1.msra.mxu0 0.0
    %5938 = vmatprep.mubr.f32.mxu0 0.0
    %5939 = vmatmul.mubr.f32.gmra.mrb[0].mxu0 %v5872
    %v5940 = vpop.f32.mrb[0].mxu0
    %v5941 = vadd.f32 %v2960, %v5940
    %v5942 = vpop.f32.mrb[0].mxu0
    %5943 = vdwg.mxu0
    %5944 = vmatprep.subr.mxu0 0.0
    %5945 = vmatpush1.msra.mxu0 %v2919
    %5946 = vmatprep.subr.mxu0 0.0
    %5947 = vmatpush1.msra.mxu0 %v2920
    %5948 = vmatprep.subr.mxu0 0.0
    %5949 = vmatpush1.msra.mxu0 %v2921
    %5950 = vmatprep.subr.mxu0 0.0
    %5951 = vmatpush1.msra.mxu0 %v2922
    %5952 = vmatprep.subr.mxu0 0.0
    %5953 = vmatpush1.msra.mxu0 %v2923
    %5954 = vmatprep.subr.mxu0 0.0
    %5955 = vmatpush1.msra.mxu0 %v2924
    %5956 = vmatprep.subr.mxu0 0.0
    %5957 = vmatpush1.msra.mxu0 %v2925
    %5958 = vmatprep.subr.mxu0 0.0
    %5959 = vmatpush1.msra.mxu0 %v2926
    %5960 = vmatprep.subr.mxu0 0.0
    %5961 = vmatpush1.msra.mxu0 %v2927
    %5962 = vmatprep.subr.mxu0 0.0
    %5963 = vmatpush1.msra.mxu0 %v2928
    %5964 = vmatprep.subr.mxu0 0.0
    %5965 = vmatpush1.msra.mxu0 %v2929
    %5966 = vmatprep.subr.mxu0 0.0
    %5967 = vmatpush1.msra.mxu0 %v2930
    %5968 = vmatprep.subr.mxu0 0.0
    %5969 = vmatpush1.msra.mxu0 %v3387
    %5970 = vmatprep.subr.mxu0 0.0
    %5971 = vmatpush1.msra.mxu0 0.0
    %5972 = vmatprep.subr.mxu0 0.0
    %5973 = vmatpush1.msra.mxu0 0.0
    %5974 = vmatprep.subr.mxu0 0.0
    %5975 = vmatpush1.msra.mxu0 0.0
    %5976 = vmatprep.subr.mxu0 0.0
    %5977 = vmatpush1.msra.mxu0 0.0
    %5978 = vmatprep.subr.mxu0 0.0
    %5979 = vmatpush1.msra.mxu0 0.0
    %5980 = vmatprep.subr.mxu0 0.0
    %5981 = vmatpush1.msra.mxu0 0.0
    %5982 = vmatprep.subr.mxu0 0.0
    %5983 = vmatpush1.msra.mxu0 0.0
    %5984 = vmatprep.subr.mxu0 0.0
    %5985 = vmatpush1.msra.mxu0 0.0
    %5986 = vmatprep.subr.mxu0 0.0
    %5987 = vmatpush1.msra.mxu0 0.0
    %5988 = vmatprep.subr.mxu0 0.0
    %5989 = vmatpush1.msra.mxu0 0.0
    %5990 = vmatprep.subr.mxu0 0.0
    %5991 = vmatpush1.msra.mxu0 0.0
    %5992 = vmatprep.subr.mxu0 0.0
    %5993 = vmatpush1.msra.mxu0 0.0
    %5994 = vmatprep.subr.mxu0 0.0
    %5995 = vmatpush1.msra.mxu0 0.0
    %5996 = vmatprep.subr.mxu0 0.0
    %5997 = vmatpush1.msra.mxu0 0.0
    %5998 = vmatprep.subr.mxu0 0.0
    %5999 = vmatpush1.msra.mxu0 0.0
    %6000 = vmatprep.subr.mxu0 0.0
    %6001 = vmatpush1.msra.mxu0 0.0
    %6002 = vmatprep.subr.mxu0 0.0
    %6003 = vmatpush1.msra.mxu0 0.0
    %6004 = vmatprep.subr.mxu0 0.0
    %6005 = vmatpush1.msra.mxu0 0.0
    %6006 = vmatprep.subr.mxu0 0.0
    %6007 = vmatpush1.msra.mxu0 0.0
    %6008 = vmatprep.mubr.f32.mxu0 0.0
    %6009 = vmatmul.mubr.f32.gmra.mrb[0].mxu0 %v5872
    %v6010 = vpop.f32.mrb[0].mxu0
    %v6011 = vadd.f32 %v2962, %v6010
    %v6012 = vpop.f32.mrb[0].mxu0
    %6013 = vdwg.mxu0
    %6014 = vmatprep.subr.mxu0 0.0
    %6015 = vmatpush1.msra.mxu0 %v2933
    %6016 = vmatprep.subr.mxu0 0.0
    %6017 = vmatpush1.msra.mxu0 %v2934
    %6018 = vmatprep.subr.mxu0 0.0
    %6019 = vmatpush1.msra.mxu0 %v2935
    %6020 = vmatprep.subr.mxu0 0.0
    %6021 = vmatpush1.msra.mxu0 %v2936
    %6022 = vmatprep.subr.mxu0 0.0
    %6023 = vmatpush1.msra.mxu0 %v2937
    %6024 = vmatprep.subr.mxu0 0.0
    %6025 = vmatpush1.msra.mxu0 %v2938
    %6026 = vmatprep.subr.mxu0 0.0
    %6027 = vmatpush1.msra.mxu0 %v2939
    %6028 = vmatprep.subr.mxu0 0.0
    %6029 = vmatpush1.msra.mxu0 %v2940
    %6030 = vmatprep.subr.mxu0 0.0
    %6031 = vmatpush1.msra.mxu0 %v2941
    %6032 = vmatprep.subr.mxu0 0.0
    %6033 = vmatpush1.msra.mxu0 %v2942
    %6034 = vmatprep.subr.mxu0 0.0
    %6035 = vmatpush1.msra.mxu0 %v2943
    %6036 = vmatprep.subr.mxu0 0.0
    %6037 = vmatpush1.msra.mxu0 %v2944
    %6038 = vmatprep.subr.mxu0 0.0
    %6039 = vmatpush1.msra.mxu0 %v3460
    %6040 = vmatprep.subr.mxu0 0.0
    %6041 = vmatpush1.msra.mxu0 0.0
    %6042 = vmatprep.subr.mxu0 0.0
    %6043 = vmatpush1.msra.mxu0 0.0
    %6044 = vmatprep.subr.mxu0 0.0
    %6045 = vmatpush1.msra.mxu0 0.0
    %6046 = vmatprep.subr.mxu0 0.0
    %6047 = vmatpush1.msra.mxu0 0.0
    %6048 = vmatprep.subr.mxu0 0.0
    %6049 = vmatpush1.msra.mxu0 0.0
    %6050 = vmatprep.subr.mxu0 0.0
    %6051 = vmatpush1.msra.mxu0 0.0
    %6052 = vmatprep.subr.mxu0 0.0
    %6053 = vmatpush1.msra.mxu0 0.0
    %6054 = vmatprep.subr.mxu0 0.0
    %6055 = vmatpush1.msra.mxu0 0.0
    %6056 = vmatprep.subr.mxu0 0.0
    %6057 = vmatpush1.msra.mxu0 0.0
    %6058 = vmatprep.subr.mxu0 0.0
    %6059 = vmatpush1.msra.mxu0 0.0
    %6060 = vmatprep.subr.mxu0 0.0
    %6061 = vmatpush1.msra.mxu0 0.0
    %6062 = vmatprep.subr.mxu0 0.0
    %6063 = vmatpush1.msra.mxu0 0.0
    %6064 = vmatprep.subr.mxu0 0.0
    %6065 = vmatpush1.msra.mxu0 0.0
    %6066 = vmatprep.subr.mxu0 0.0
    %6067 = vmatpush1.msra.mxu0 0.0
    %6068 = vmatprep.subr.mxu0 0.0
    %6069 = vmatpush1.msra.mxu0 0.0
    %6070 = vmatprep.subr.mxu0 0.0
    %6071 = vmatpush1.msra.mxu0 0.0
    %6072 = vmatprep.subr.mxu0 0.0
    %6073 = vmatpush1.msra.mxu0 0.0
    %6074 = vmatprep.subr.mxu0 0.0
    %6075 = vmatpush1.msra.mxu0 0.0
    %6076 = vmatprep.subr.mxu0 0.0
    %6077 = vmatpush1.msra.mxu0 0.0
    %6078 = vmatprep.mubr.f32.mxu0 0.0
    %6079 = vmatmul.mubr.f32.gmra.mrb[0].mxu0 %v5872
    %v6080 = vpop.f32.mrb[0].mxu0
    %v6081 = vadd.f32 %v2964, %v6080
    %v6082 = vpop.f32.mrb[0].mxu0
    %6083 = vdwg.mxu0
    %6084 = vmatprep.subr.mxu0 0.0
    %6085 = vmatpush1.msra.mxu0 %v2947
    %6086 = vmatprep.subr.mxu0 0.0
    %6087 = vmatpush1.msra.mxu0 %v2948
    %6088 = vmatprep.subr.mxu0 0.0
    %6089 = vmatpush1.msra.mxu0 %v2949
    %6090 = vmatprep.subr.mxu0 0.0
    %6091 = vmatpush1.msra.mxu0 %v2950
    %6092 = vmatprep.subr.mxu0 0.0
    %6093 = vmatpush1.msra.mxu0 %v2951
    %6094 = vmatprep.subr.mxu0 0.0
    %6095 = vmatpush1.msra.mxu0 %v2952
    %6096 = vmatprep.subr.mxu0 0.0
    %6097 = vmatpush1.msra.mxu0 %v2953
    %6098 = vmatprep.subr.mxu0 0.0
    %6099 = vmatpush1.msra.mxu0 %v2954
    %6100 = vmatprep.subr.mxu0 0.0
    %6101 = vmatpush1.msra.mxu0 %v2955
    %6102 = vmatprep.subr.mxu0 0.0
    %6103 = vmatpush1.msra.mxu0 %v2956
    %6104 = vmatprep.subr.mxu0 0.0
    %6105 = vmatpush1.msra.mxu0 %v2957
    %6106 = vmatprep.subr.mxu0 0.0
    %6107 = vmatpush1.msra.mxu0 %v2958
    %6108 = vmatprep.subr.mxu0 0.0
    %6109 = vmatpush1.msra.mxu0 %v3533
    %6110 = vmatprep.subr.mxu0 0.0
    %6111 = vmatpush1.msra.mxu0 0.0
    %6112 = vmatprep.subr.mxu0 0.0
    %6113 = vmatpush1.msra.mxu0 0.0
    %6114 = vmatprep.subr.mxu0 0.0
    %6115 = vmatpush1.msra.mxu0 0.0
    %6116 = vmatprep.subr.mxu0 0.0
    %6117 = vmatpush1.msra.mxu0 0.0
    %6118 = vmatprep.subr.mxu0 0.0
    %6119 = vmatpush1.msra.mxu0 0.0
    %6120 = vmatprep.subr.mxu0 0.0
    %6121 = vmatpush1.msra.mxu0 0.0
    %6122 = vmatprep.subr.mxu0 0.0
    %6123 = vmatpush1.msra.mxu0 0.0
    %6124 = vmatprep.subr.mxu0 0.0
    %6125 = vmatpush1.msra.mxu0 0.0
    %6126 = vmatprep.subr.mxu0 0.0
    %6127 = vmatpush1.msra.mxu0 0.0
    %6128 = vmatprep.subr.mxu0 0.0
    %6129 = vmatpush1.msra.mxu0 0.0
    %6130 = vmatprep.subr.mxu0 0.0
    %6131 = vmatpush1.msra.mxu0 0.0
    %6132 = vmatprep.subr.mxu0 0.0
    %6133 = vmatpush1.msra.mxu0 0.0
    %6134 = vmatprep.subr.mxu0 0.0
    %6135 = vmatpush1.msra.mxu0 0.0
    %6136 = vmatprep.subr.mxu0 0.0
    %6137 = vmatpush1.msra.mxu0 0.0
    %6138 = vmatprep.subr.mxu0 0.0
    %6139 = vmatpush1.msra.mxu0 0.0
    %6140 = vmatprep.subr.mxu0 0.0
    %6141 = vmatpush1.msra.mxu0 0.0
    %6142 = vmatprep.subr.mxu0 0.0
    %6143 = vmatpush1.msra.mxu0 0.0
    %6144 = vmatprep.subr.mxu0 0.0
    %6145 = vmatpush1.msra.mxu0 0.0
    %6146 = vmatprep.subr.mxu0 0.0
    %6147 = vmatpush1.msra.mxu0 0.0
    %6148 = vmatprep.mubr.f32.mxu0 0.0
    %6149 = vmatmul.mubr.f32.gmra.mrb[0].mxu0 %v5872
    %v6150 = vpop.f32.mrb[0].mxu0
    %v6151 = vadd.f32 %v2966, %v6150
    %v6152 = vpop.f32.mrb[0].mxu0
    %6153 = vdwg.mxu0
    %v6154 = vxor.u32 %v6011, 2147483648
    %v6155 = vmul.f32 %v6154, 1.442695
    %v6156 = vpow.pop %v6155
    %v6157 = vadd.f32 %v6156, 1.0
    %v6158 = vrcp.pop %v6157
    %v6159 = vmul.f32 1.0, %v6158
    %v6160 = vmul.f32 %v6159, %v5542
    %v6161 = vxor.u32 %v5941, 2147483648
    %v6162 = vmul.f32 %v6161, 1.442695
    %v6163 = vpow.pop %v6162
    %v6164 = vadd.f32 %v6163, 1.0
    %v6165 = vrcp.pop %v6164
    %v6166 = vmul.f32 1.0, %v6165
    %v6167 = vtanh.pop %v6081
    %v6168 = vmul.f32 %v6166, %v6167
    %v6169 = vadd.f32 %v6160, %v6168
    %v6170 = vxor.u32 %v6151, 2147483648
    %v6171 = vmul.f32 %v6170, 1.442695
    %v6172 = vpow.pop %v6171
    %v6173 = vadd.f32 %v6172, 1.0
    %v6174 = vrcp.pop %v6173
    %v6175 = vmul.f32 1.0, %v6174
    %v6176 = vtanh.pop %v6169
    %v6177 = vmul.f32 %v6175, %v6176
    %v6179 = vsel %vm2979, %v5865, 0
    %6181 = vmatprep.subr.mxu0 0.0
    %6182 = vmatpush1.msra.mxu0 %v2874
    %6183 = vmatprep.subr.mxu0 0.0
    %6184 = vmatpush1.msra.mxu0 %v2875
    %6185 = vmatprep.subr.mxu0 0.0
    %6186 = vmatpush1.msra.mxu0 %v2876
    %6187 = vmatprep.subr.mxu0 0.0
    %6188 = vmatpush1.msra.mxu0 %v2877
    %6189 = vmatprep.subr.mxu0 0.0
    %6190 = vmatpush1.msra.mxu0 %v2878
    %6191 = vmatprep.subr.mxu0 0.0
    %6192 = vmatpush1.msra.mxu0 %v2879
    %6193 = vmatprep.subr.mxu0 0.0
    %6194 = vmatpush1.msra.mxu0 %v2984
    %6195 = vmatprep.subr.mxu0 0.0
    %6196 = vmatpush1.msra.mxu0 0.0
    %6197 = vmatprep.subr.mxu0 0.0
    %6198 = vmatpush1.msra.mxu0 0.0
    %6199 = vmatprep.subr.mxu0 0.0
    %6200 = vmatpush1.msra.mxu0 0.0
    %6201 = vmatprep.subr.mxu0 0.0
    %6202 = vmatpush1.msra.mxu0 0.0
    %6203 = vmatprep.subr.mxu0 0.0
    %6204 = vmatpush1.msra.mxu0 0.0
    %6205 = vmatprep.subr.mxu0 0.0
    %6206 = vmatpush1.msra.mxu0 0.0
    %6207 = vmatprep.subr.mxu0 0.0
    %6208 = vmatpush1.msra.mxu0 0.0
    %6209 = vmatprep.subr.mxu0 0.0
    %6210 = vmatpush1.msra.mxu0 0.0
    %6211 = vmatprep.subr.mxu0 0.0
    %6212 = vmatpush1.msra.mxu0 0.0
    %6213 = vmatprep.subr.mxu0 0.0
    %6214 = vmatpush1.msra.mxu0 0.0
    %6215 = vmatprep.subr.mxu0 0.0
    %6216 = vmatpush1.msra.mxu0 0.0
    %6217 = vmatprep.subr.mxu0 0.0
    %6218 = vmatpush1.msra.mxu0 0.0
    %6219 = vmatprep.subr.mxu0 0.0
    %6220 = vmatpush1.msra.mxu0 0.0
    %6221 = vmatprep.subr.mxu0 0.0
    %6222 = vmatpush1.msra.mxu0 0.0
    %6223 = vmatprep.subr.mxu0 0.0
    %6224 = vmatpush1.msra.mxu0 0.0
    %6225 = vmatprep.subr.mxu0 0.0
    %6226 = vmatpush1.msra.mxu0 0.0
    %6227 = vmatprep.subr.mxu0 0.0
    %6228 = vmatpush1.msra.mxu0 0.0
    %6229 = vmatprep.subr.mxu0 0.0
    %6230 = vmatpush1.msra.mxu0 0.0
    %6231 = vmatprep.subr.mxu0 0.0
    %6232 = vmatpush1.msra.mxu0 0.0
    %6233 = vmatprep.subr.mxu0 0.0
    %6234 = vmatpush1.msra.mxu0 0.0
    %6235 = vmatprep.subr.mxu0 0.0
    %6236 = vmatpush1.msra.mxu0 0.0
    %6237 = vmatprep.subr.mxu0 0.0
    %6238 = vmatpush1.msra.mxu0 0.0
    %6239 = vmatprep.subr.mxu0 0.0
    %6240 = vmatpush1.msra.mxu0 0.0
    %6241 = vmatprep.subr.mxu0 0.0
    %6242 = vmatpush1.msra.mxu0 0.0
    %6243 = vmatprep.subr.mxu0 0.0
    %6244 = vmatpush1.msra.mxu0 0.0
    %6245 = vmatprep.mubr.f32.mxu0 0.0
    %6246 = vmatmul.mubr.f32.gmra.mrb[0].mxu0 %v6179
    %v6247 = vpop.f32.mrb[0].mxu0
    %v6248 = vadd.f32 0.0, %v6247
    %v6249 = vpop.f32.mrb[0].mxu0
    %6250 = vdwg.mxu0
    %v6252 = vrot.slane %v6248, 6
    %v6254 = vadd.f32 %v2601, %v6252
    %6255 = vmatprep.subr.mxu0 0.0
    %6256 = vmatpush1.msra.mxu0 %v2882
    %6257 = vmatprep.subr.mxu0 0.0
    %6258 = vmatpush1.msra.mxu0 %v2883
    %6259 = vmatprep.subr.mxu0 0.0
    %6260 = vmatpush1.msra.mxu0 %v2884
    %6261 = vmatprep.subr.mxu0 0.0
    %6262 = vmatpush1.msra.mxu0 %v2885
    %6263 = vmatprep.subr.mxu0 0.0
    %6264 = vmatpush1.msra.mxu0 %v2886
    %6265 = vmatprep.subr.mxu0 0.0
    %6266 = vmatpush1.msra.mxu0 %v2887
    %6267 = vmatprep.subr.mxu0 0.0
    %6268 = vmatpush1.msra.mxu0 %v3058
    %6269 = vmatprep.subr.mxu0 0.0
    %6270 = vmatpush1.msra.mxu0 0.0
    %6271 = vmatprep.subr.mxu0 0.0
    %6272 = vmatpush1.msra.mxu0 0.0
    %6273 = vmatprep.subr.mxu0 0.0
    %6274 = vmatpush1.msra.mxu0 0.0
    %6275 = vmatprep.subr.mxu0 0.0
    %6276 = vmatpush1.msra.mxu0 0.0
    %6277 = vmatprep.subr.mxu0 0.0
    %6278 = vmatpush1.msra.mxu0 0.0
    %6279 = vmatprep.subr.mxu0 0.0
    %6280 = vmatpush1.msra.mxu0 0.0
    %6281 = vmatprep.subr.mxu0 0.0
    %6282 = vmatpush1.msra.mxu0 0.0
    %6283 = vmatprep.subr.mxu0 0.0
    %6284 = vmatpush1.msra.mxu0 0.0
    %6285 = vmatprep.subr.mxu0 0.0
    %6286 = vmatpush1.msra.mxu0 0.0
    %6287 = vmatprep.subr.mxu0 0.0
    %6288 = vmatpush1.msra.mxu0 0.0
    %6289 = vmatprep.subr.mxu0 0.0
    %6290 = vmatpush1.msra.mxu0 0.0
    %6291 = vmatprep.subr.mxu0 0.0
    %6292 = vmatpush1.msra.mxu0 0.0
    %6293 = vmatprep.subr.mxu0 0.0
    %6294 = vmatpush1.msra.mxu0 0.0
    %6295 = vmatprep.subr.mxu0 0.0
    %6296 = vmatpush1.msra.mxu0 0.0
    %6297 = vmatprep.subr.mxu0 0.0
    %6298 = vmatpush1.msra.mxu0 0.0
    %6299 = vmatprep.subr.mxu0 0.0
    %6300 = vmatpush1.msra.mxu0 0.0
    %6301 = vmatprep.subr.mxu0 0.0
    %6302 = vmatpush1.msra.mxu0 0.0
    %6303 = vmatprep.subr.mxu0 0.0
    %6304 = vmatpush1.msra.mxu0 0.0
    %6305 = vmatprep.subr.mxu0 0.0
    %6306 = vmatpush1.msra.mxu0 0.0
    %6307 = vmatprep.subr.mxu0 0.0
    %6308 = vmatpush1.msra.mxu0 0.0
    %6309 = vmatprep.subr.mxu0 0.0
    %6310 = vmatpush1.msra.mxu0 0.0
    %6311 = vmatprep.subr.mxu0 0.0
    %6312 = vmatpush1.msra.mxu0 0.0
    %6313 = vmatprep.subr.mxu0 0.0
    %6314 = vmatpush1.msra.mxu0 0.0
    %6315 = vmatprep.subr.mxu0 0.0
    %6316 = vmatpush1.msra.mxu0 0.0
    %6317 = vmatprep.subr.mxu0 0.0
    %6318 = vmatpush1.msra.mxu0 0.0
    %6319 = vmatprep.mubr.f32.mxu0 0.0
    %6320 = vmatmul.mubr.f32.gmra.mrb[0].mxu0 %v6179
    %v6321 = vpop.f32.mrb[0].mxu0
    %v6322 = vadd.f32 0.0, %v6321
    %v6323 = vpop.f32.mrb[0].mxu0
    %6324 = vdwg.mxu0
    %v6326 = vrot.slane %v6322, 6
    %v6328 = vadd.f32 %v2691, %v6326
    %6329 = vmatprep.subr.mxu0 0.0
    %6330 = vmatpush1.msra.mxu0 %v2890
    %6331 = vmatprep.subr.mxu0 0.0
    %6332 = vmatpush1.msra.mxu0 %v2891
    %6333 = vmatprep.subr.mxu0 0.0
    %6334 = vmatpush1.msra.mxu0 %v2892
    %6335 = vmatprep.subr.mxu0 0.0
    %6336 = vmatpush1.msra.mxu0 %v2893
    %6337 = vmatprep.subr.mxu0 0.0
    %6338 = vmatpush1.msra.mxu0 %v2894
    %6339 = vmatprep.subr.mxu0 0.0
    %6340 = vmatpush1.msra.mxu0 %v2895
    %6341 = vmatprep.subr.mxu0 0.0
    %6342 = vmatpush1.msra.mxu0 %v3132
    %6343 = vmatprep.subr.mxu0 0.0
    %6344 = vmatpush1.msra.mxu0 0.0
    %6345 = vmatprep.subr.mxu0 0.0
    %6346 = vmatpush1.msra.mxu0 0.0
    %6347 = vmatprep.subr.mxu0 0.0
    %6348 = vmatpush1.msra.mxu0 0.0
    %6349 = vmatprep.subr.mxu0 0.0
    %6350 = vmatpush1.msra.mxu0 0.0
    %6351 = vmatprep.subr.mxu0 0.0
    %6352 = vmatpush1.msra.mxu0 0.0
    %6353 = vmatprep.subr.mxu0 0.0
    %6354 = vmatpush1.msra.mxu0 0.0
    %6355 = vmatprep.subr.mxu0 0.0
    %6356 = vmatpush1.msra.mxu0 0.0
    %6357 = vmatprep.subr.mxu0 0.0
    %6358 = vmatpush1.msra.mxu0 0.0
    %6359 = vmatprep.subr.mxu0 0.0
    %6360 = vmatpush1.msra.mxu0 0.0
    %6361 = vmatprep.subr.mxu0 0.0
    %6362 = vmatpush1.msra.mxu0 0.0
    %6363 = vmatprep.subr.mxu0 0.0
    %6364 = vmatpush1.msra.mxu0 0.0
    %6365 = vmatprep.subr.mxu0 0.0
    %6366 = vmatpush1.msra.mxu0 0.0
    %6367 = vmatprep.subr.mxu0 0.0
    %6368 = vmatpush1.msra.mxu0 0.0
    %6369 = vmatprep.subr.mxu0 0.0
    %6370 = vmatpush1.msra.mxu0 0.0
    %6371 = vmatprep.subr.mxu0 0.0
    %6372 = vmatpush1.msra.mxu0 0.0
    %6373 = vmatprep.subr.mxu0 0.0
    %6374 = vmatpush1.msra.mxu0 0.0
    %6375 = vmatprep.subr.mxu0 0.0
    %6376 = vmatpush1.msra.mxu0 0.0
    %6377 = vmatprep.subr.mxu0 0.0
    %6378 = vmatpush1.msra.mxu0 0.0
    %6379 = vmatprep.subr.mxu0 0.0
    %6380 = vmatpush1.msra.mxu0 0.0
    %6381 = vmatprep.subr.mxu0 0.0
    %6382 = vmatpush1.msra.mxu0 0.0
    %6383 = vmatprep.subr.mxu0 0.0
    %6384 = vmatpush1.msra.mxu0 0.0
    %6385 = vmatprep.subr.mxu0 0.0
    %6386 = vmatpush1.msra.mxu0 0.0
    %6387 = vmatprep.subr.mxu0 0.0
    %6388 = vmatpush1.msra.mxu0 0.0
    %6389 = vmatprep.subr.mxu0 0.0
    %6390 = vmatpush1.msra.mxu0 0.0
    %6391 = vmatprep.subr.mxu0 0.0
    %6392 = vmatpush1.msra.mxu0 0.0
    %6393 = vmatprep.mubr.f32.mxu0 0.0
    %6394 = vmatmul.mubr.f32.gmra.mrb[0].mxu0 %v6179
    %v6395 = vpop.f32.mrb[0].mxu0
    %v6396 = vadd.f32 0.0, %v6395
    %v6397 = vpop.f32.mrb[0].mxu0
    %6398 = vdwg.mxu0
    %v6400 = vrot.slane %v6396, 6
    %v6402 = vadd.f32 %v2781, %v6400
    %6403 = vmatprep.subr.mxu0 0.0
    %6404 = vmatpush1.msra.mxu0 %v2898
    %6405 = vmatprep.subr.mxu0 0.0
    %6406 = vmatpush1.msra.mxu0 %v2899
    %6407 = vmatprep.subr.mxu0 0.0
    %6408 = vmatpush1.msra.mxu0 %v2900
    %6409 = vmatprep.subr.mxu0 0.0
    %6410 = vmatpush1.msra.mxu0 %v2901
    %6411 = vmatprep.subr.mxu0 0.0
    %6412 = vmatpush1.msra.mxu0 %v2902
    %6413 = vmatprep.subr.mxu0 0.0
    %6414 = vmatpush1.msra.mxu0 %v2903
    %6415 = vmatprep.subr.mxu0 0.0
    %6416 = vmatpush1.msra.mxu0 %v3206
    %6417 = vmatprep.subr.mxu0 0.0
    %6418 = vmatpush1.msra.mxu0 0.0
    %6419 = vmatprep.subr.mxu0 0.0
    %6420 = vmatpush1.msra.mxu0 0.0
    %6421 = vmatprep.subr.mxu0 0.0
    %6422 = vmatpush1.msra.mxu0 0.0
    %6423 = vmatprep.subr.mxu0 0.0
    %6424 = vmatpush1.msra.mxu0 0.0
    %6425 = vmatprep.subr.mxu0 0.0
    %6426 = vmatpush1.msra.mxu0 0.0
    %6427 = vmatprep.subr.mxu0 0.0
    %6428 = vmatpush1.msra.mxu0 0.0
    %6429 = vmatprep.subr.mxu0 0.0
    %6430 = vmatpush1.msra.mxu0 0.0
    %6431 = vmatprep.subr.mxu0 0.0
    %6432 = vmatpush1.msra.mxu0 0.0
    %6433 = vmatprep.subr.mxu0 0.0
    %6434 = vmatpush1.msra.mxu0 0.0
    %6435 = vmatprep.subr.mxu0 0.0
    %6436 = vmatpush1.msra.mxu0 0.0
    %6437 = vmatprep.subr.mxu0 0.0
    %6438 = vmatpush1.msra.mxu0 0.0
    %6439 = vmatprep.subr.mxu0 0.0
    %6440 = vmatpush1.msra.mxu0 0.0
    %6441 = vmatprep.subr.mxu0 0.0
    %6442 = vmatpush1.msra.mxu0 0.0
    %6443 = vmatprep.subr.mxu0 0.0
    %6444 = vmatpush1.msra.mxu0 0.0
    %6445 = vmatprep.subr.mxu0 0.0
    %6446 = vmatpush1.msra.mxu0 0.0
    %6447 = vmatprep.subr.mxu0 0.0
    %6448 = vmatpush1.msra.mxu0 0.0
    %6449 = vmatprep.subr.mxu0 0.0
    %6450 = vmatpush1.msra.mxu0 0.0
    %6451 = vmatprep.subr.mxu0 0.0
    %6452 = vmatpush1.msra.mxu0 0.0
    %6453 = vmatprep.subr.mxu0 0.0
    %6454 = vmatpush1.msra.mxu0 0.0
    %6455 = vmatprep.subr.mxu0 0.0
    %6456 = vmatpush1.msra.mxu0 0.0
    %6457 = vmatprep.subr.mxu0 0.0
    %6458 = vmatpush1.msra.mxu0 0.0
    %6459 = vmatprep.subr.mxu0 0.0
    %6460 = vmatpush1.msra.mxu0 0.0
    %6461 = vmatprep.subr.mxu0 0.0
    %6462 = vmatpush1.msra.mxu0 0.0
    %6463 = vmatprep.subr.mxu0 0.0
    %6464 = vmatpush1.msra.mxu0 0.0
    %6465 = vmatprep.subr.mxu0 0.0
    %6466 = vmatpush1.msra.mxu0 0.0
    %6467 = vmatprep.mubr.f32.mxu0 0.0
    %6468 = vmatmul.mubr.f32.gmra.mrb[0].mxu0 %v6179
    %v6469 = vpop.f32.mrb[0].mxu0
    %v6470 = vadd.f32 0.0, %v6469
    %v6471 = vpop.f32.mrb[0].mxu0
    %6472 = vdwg.mxu0
    %v6474 = vrot.slane %v6470, 6
    %v6476 = vadd.f32 %v2871, %v6474
    %v6477 = vxor.u32 %v6328, 2147483648
    %v6478 = vmul.f32 %v6477, 1.442695
    %v6479 = vpow.pop %v6478
    %v6480 = vadd.f32 %v6479, 1.0
    %v6481 = vrcp.pop %v6480
    %v6482 = vmul.f32 1.0, %v6481
    %v6484 = vrot.slane %v5857, 6
    %v6486 = vmul.f32 %v6482, %v6484
    %v6487 = vxor.u32 %v6254, 2147483648
    %v6488 = vmul.f32 %v6487, 1.442695
    %v6489 = vpow.pop %v6488
    %v6490 = vadd.f32 %v6489, 1.0
    %v6491 = vrcp.pop %v6490
    %v6492 = vmul.f32 1.0, %v6491
    %v6493 = vtanh.pop %v6402
    %v6494 = vmul.f32 %v6492, %v6493
    %v6495 = vadd.f32 %v6486, %v6494
    %v6496 = vxor.u32 %v6476, 2147483648
    %v6497 = vmul.f32 %v6496, 1.442695
    %v6498 = vpow.pop %v6497
    %v6499 = vadd.f32 %v6498, 1.0
    %v6500 = vrcp.pop %v6499
    %v6501 = vmul.f32 1.0, %v6500
    %v6502 = vtanh.pop %v6495
    %v6503 = vmul.f32 %v6501, %v6502
    %v6505 = vrot.slane %v6177, 6
    %6506 = vrot.lane.b32.xlu0 %v6505, 50
    %v6507 = vpop.permute.xlu0 %6506
    %v6509 = vsel %vm2979, %v6503, %v6507
    %v6511 = vrot.slane %v6509, 2
    %v6512 = vsel %vm3308, %v6511, 0
    %6514 = vmatprep.subr.mxu0 0.0
    %6515 = vmatpush1.msra.mxu0 %v2905
    %6516 = vmatprep.subr.mxu0 0.0
    %6517 = vmatpush1.msra.mxu0 %v2906
    %6518 = vmatprep.subr.mxu0 0.0
    %6519 = vmatpush1.msra.mxu0 %v2907
    %6520 = vmatprep.subr.mxu0 0.0
    %6521 = vmatpush1.msra.mxu0 %v2908
    %6522 = vmatprep.subr.mxu0 0.0
    %6523 = vmatpush1.msra.mxu0 %v2909
    %6524 = vmatprep.subr.mxu0 0.0
    %6525 = vmatpush1.msra.mxu0 %v2910
    %6526 = vmatprep.subr.mxu0 0.0
    %6527 = vmatpush1.msra.mxu0 %v2911
    %6528 = vmatprep.subr.mxu0 0.0
    %6529 = vmatpush1.msra.mxu0 %v2912
    %6530 = vmatprep.subr.mxu0 0.0
    %6531 = vmatpush1.msra.mxu0 %v2913
    %6532 = vmatprep.subr.mxu0 0.0
    %6533 = vmatpush1.msra.mxu0 %v2914
    %6534 = vmatprep.subr.mxu0 0.0
    %6535 = vmatpush1.msra.mxu0 %v2915
    %6536 = vmatprep.subr.mxu0 0.0
    %6537 = vmatpush1.msra.mxu0 %v2916
    %6538 = vmatprep.subr.mxu0 0.0
    %6539 = vmatpush1.msra.mxu0 %v3314
    %6540 = vmatprep.subr.mxu0 0.0
    %6541 = vmatpush1.msra.mxu0 0.0
    %6542 = vmatprep.subr.mxu0 0.0
    %6543 = vmatpush1.msra.mxu0 0.0
    %6544 = vmatprep.subr.mxu0 0.0
    %6545 = vmatpush1.msra.mxu0 0.0
    %6546 = vmatprep.subr.mxu0 0.0
    %6547 = vmatpush1.msra.mxu0 0.0
    %6548 = vmatprep.subr.mxu0 0.0
    %6549 = vmatpush1.msra.mxu0 0.0
    %6550 = vmatprep.subr.mxu0 0.0
    %6551 = vmatpush1.msra.mxu0 0.0
    %6552 = vmatprep.subr.mxu0 0.0
    %6553 = vmatpush1.msra.mxu0 0.0
    %6554 = vmatprep.subr.mxu0 0.0
    %6555 = vmatpush1.msra.mxu0 0.0
    %6556 = vmatprep.subr.mxu0 0.0
    %6557 = vmatpush1.msra.mxu0 0.0
    %6558 = vmatprep.subr.mxu0 0.0
    %6559 = vmatpush1.msra.mxu0 0.0
    %6560 = vmatprep.subr.mxu0 0.0
    %6561 = vmatpush1.msra.mxu0 0.0
    %6562 = vmatprep.subr.mxu0 0.0
    %6563 = vmatpush1.msra.mxu0 0.0
    %6564 = vmatprep.subr.mxu0 0.0
    %6565 = vmatpush1.msra.mxu0 0.0
    %6566 = vmatprep.subr.mxu0 0.0
    %6567 = vmatpush1.msra.mxu0 0.0
    %6568 = vmatprep.subr.mxu0 0.0
    %6569 = vmatpush1.msra.mxu0 0.0
    %6570 = vmatprep.subr.mxu0 0.0
    %6571 = vmatpush1.msra.mxu0 0.0
    %6572 = vmatprep.subr.mxu0 0.0
    %6573 = vmatpush1.msra.mxu0 0.0
    %6574 = vmatprep.subr.mxu0 0.0
    %6575 = vmatpush1.msra.mxu0 0.0
    %6576 = vmatprep.subr.mxu0 0.0
    %6577 = vmatpush1.msra.mxu0 0.0
    %6578 = vmatprep.mubr.f32.mxu0 0.0
    %6579 = vmatmul.mubr.f32.gmra.mrb[0].mxu0 %v6512
    %v6580 = vpop.f32.mrb[0].mxu0
    %v6581 = vadd.f32 %v2960, %v6580
    %v6582 = vpop.f32.mrb[0].mxu0
    %6583 = vdwg.mxu0
    %6584 = vmatprep.subr.mxu0 0.0
    %6585 = vmatpush1.msra.mxu0 %v2919
    %6586 = vmatprep.subr.mxu0 0.0
    %6587 = vmatpush1.msra.mxu0 %v2920
    %6588 = vmatprep.subr.mxu0 0.0
    %6589 = vmatpush1.msra.mxu0 %v2921
    %6590 = vmatprep.subr.mxu0 0.0
    %6591 = vmatpush1.msra.mxu0 %v2922
    %6592 = vmatprep.subr.mxu0 0.0
    %6593 = vmatpush1.msra.mxu0 %v2923
    %6594 = vmatprep.subr.mxu0 0.0
    %6595 = vmatpush1.msra.mxu0 %v2924
    %6596 = vmatprep.subr.mxu0 0.0
    %6597 = vmatpush1.msra.mxu0 %v2925
    %6598 = vmatprep.subr.mxu0 0.0
    %6599 = vmatpush1.msra.mxu0 %v2926
    %6600 = vmatprep.subr.mxu0 0.0
    %6601 = vmatpush1.msra.mxu0 %v2927
    %6602 = vmatprep.subr.mxu0 0.0
    %6603 = vmatpush1.msra.mxu0 %v2928
    %6604 = vmatprep.subr.mxu0 0.0
    %6605 = vmatpush1.msra.mxu0 %v2929
    %6606 = vmatprep.subr.mxu0 0.0
    %6607 = vmatpush1.msra.mxu0 %v2930
    %6608 = vmatprep.subr.mxu0 0.0
    %6609 = vmatpush1.msra.mxu0 %v3387
    %6610 = vmatprep.subr.mxu0 0.0
    %6611 = vmatpush1.msra.mxu0 0.0
    %6612 = vmatprep.subr.mxu0 0.0
    %6613 = vmatpush1.msra.mxu0 0.0
    %6614 = vmatprep.subr.mxu0 0.0
    %6615 = vmatpush1.msra.mxu0 0.0
    %6616 = vmatprep.subr.mxu0 0.0
    %6617 = vmatpush1.msra.mxu0 0.0
    %6618 = vmatprep.subr.mxu0 0.0
    %6619 = vmatpush1.msra.mxu0 0.0
    %6620 = vmatprep.subr.mxu0 0.0
    %6621 = vmatpush1.msra.mxu0 0.0
    %6622 = vmatprep.subr.mxu0 0.0
    %6623 = vmatpush1.msra.mxu0 0.0
    %6624 = vmatprep.subr.mxu0 0.0
    %6625 = vmatpush1.msra.mxu0 0.0
    %6626 = vmatprep.subr.mxu0 0.0
    %6627 = vmatpush1.msra.mxu0 0.0
    %6628 = vmatprep.subr.mxu0 0.0
    %6629 = vmatpush1.msra.mxu0 0.0
    %6630 = vmatprep.subr.mxu0 0.0
    %6631 = vmatpush1.msra.mxu0 0.0
    %6632 = vmatprep.subr.mxu0 0.0
    %6633 = vmatpush1.msra.mxu0 0.0
    %6634 = vmatprep.subr.mxu0 0.0
    %6635 = vmatpush1.msra.mxu0 0.0
    %6636 = vmatprep.subr.mxu0 0.0
    %6637 = vmatpush1.msra.mxu0 0.0
    %6638 = vmatprep.subr.mxu0 0.0
    %6639 = vmatpush1.msra.mxu0 0.0
    %6640 = vmatprep.subr.mxu0 0.0
    %6641 = vmatpush1.msra.mxu0 0.0
    %6642 = vmatprep.subr.mxu0 0.0
    %6643 = vmatpush1.msra.mxu0 0.0
    %6644 = vmatprep.subr.mxu0 0.0
    %6645 = vmatpush1.msra.mxu0 0.0
    %6646 = vmatprep.subr.mxu0 0.0
    %6647 = vmatpush1.msra.mxu0 0.0
    %6648 = vmatprep.mubr.f32.mxu0 0.0
    %6649 = vmatmul.mubr.f32.gmra.mrb[0].mxu0 %v6512
    %v6650 = vpop.f32.mrb[0].mxu0
    %v6651 = vadd.f32 %v2962, %v6650
    %v6652 = vpop.f32.mrb[0].mxu0
    %6653 = vdwg.mxu0
    %6654 = vmatprep.subr.mxu0 0.0
    %6655 = vmatpush1.msra.mxu0 %v2933
    %6656 = vmatprep.subr.mxu0 0.0
    %6657 = vmatpush1.msra.mxu0 %v2934
    %6658 = vmatprep.subr.mxu0 0.0
    %6659 = vmatpush1.msra.mxu0 %v2935
    %6660 = vmatprep.subr.mxu0 0.0
    %6661 = vmatpush1.msra.mxu0 %v2936
    %6662 = vmatprep.subr.mxu0 0.0
    %6663 = vmatpush1.msra.mxu0 %v2937
    %6664 = vmatprep.subr.mxu0 0.0
    %6665 = vmatpush1.msra.mxu0 %v2938
    %6666 = vmatprep.subr.mxu0 0.0
    %6667 = vmatpush1.msra.mxu0 %v2939
    %6668 = vmatprep.subr.mxu0 0.0
    %6669 = vmatpush1.msra.mxu0 %v2940
    %6670 = vmatprep.subr.mxu0 0.0
    %6671 = vmatpush1.msra.mxu0 %v2941
    %6672 = vmatprep.subr.mxu0 0.0
    %6673 = vmatpush1.msra.mxu0 %v2942
    %6674 = vmatprep.subr.mxu0 0.0
    %6675 = vmatpush1.msra.mxu0 %v2943
    %6676 = vmatprep.subr.mxu0 0.0
    %6677 = vmatpush1.msra.mxu0 %v2944
    %6678 = vmatprep.subr.mxu0 0.0
    %6679 = vmatpush1.msra.mxu0 %v3460
    %6680 = vmatprep.subr.mxu0 0.0
    %6681 = vmatpush1.msra.mxu0 0.0
    %6682 = vmatprep.subr.mxu0 0.0
    %6683 = vmatpush1.msra.mxu0 0.0
    %6684 = vmatprep.subr.mxu0 0.0
    %6685 = vmatpush1.msra.mxu0 0.0
    %6686 = vmatprep.subr.mxu0 0.0
    %6687 = vmatpush1.msra.mxu0 0.0
    %6688 = vmatprep.subr.mxu0 0.0
    %6689 = vmatpush1.msra.mxu0 0.0
    %6690 = vmatprep.subr.mxu0 0.0
    %6691 = vmatpush1.msra.mxu0 0.0
    %6692 = vmatprep.subr.mxu0 0.0
    %6693 = vmatpush1.msra.mxu0 0.0
    %6694 = vmatprep.subr.mxu0 0.0
    %6695 = vmatpush1.msra.mxu0 0.0
    %6696 = vmatprep.subr.mxu0 0.0
    %6697 = vmatpush1.msra.mxu0 0.0
    %6698 = vmatprep.subr.mxu0 0.0
    %6699 = vmatpush1.msra.mxu0 0.0
    %6700 = vmatprep.subr.mxu0 0.0
    %6701 = vmatpush1.msra.mxu0 0.0
    %6702 = vmatprep.subr.mxu0 0.0
    %6703 = vmatpush1.msra.mxu0 0.0
    %6704 = vmatprep.subr.mxu0 0.0
    %6705 = vmatpush1.msra.mxu0 0.0
    %6706 = vmatprep.subr.mxu0 0.0
    %6707 = vmatpush1.msra.mxu0 0.0
    %6708 = vmatprep.subr.mxu0 0.0
    %6709 = vmatpush1.msra.mxu0 0.0
    %6710 = vmatprep.subr.mxu0 0.0
    %6711 = vmatpush1.msra.mxu0 0.0
    %6712 = vmatprep.subr.mxu0 0.0
    %6713 = vmatpush1.msra.mxu0 0.0
    %6714 = vmatprep.subr.mxu0 0.0
    %6715 = vmatpush1.msra.mxu0 0.0
    %6716 = vmatprep.subr.mxu0 0.0
    %6717 = vmatpush1.msra.mxu0 0.0
    %6718 = vmatprep.mubr.f32.mxu0 0.0
    %6719 = vmatmul.mubr.f32.gmra.mrb[0].mxu0 %v6512
    %v6720 = vpop.f32.mrb[0].mxu0
    %v6721 = vadd.f32 %v2964, %v6720
    %v6722 = vpop.f32.mrb[0].mxu0
    %6723 = vdwg.mxu0
    %6724 = vmatprep.subr.mxu0 0.0
    %6725 = vmatpush1.msra.mxu0 %v2947
    %6726 = vmatprep.subr.mxu0 0.0
    %6727 = vmatpush1.msra.mxu0 %v2948
    %6728 = vmatprep.subr.mxu0 0.0
    %6729 = vmatpush1.msra.mxu0 %v2949
    %6730 = vmatprep.subr.mxu0 0.0
    %6731 = vmatpush1.msra.mxu0 %v2950
    %6732 = vmatprep.subr.mxu0 0.0
    %6733 = vmatpush1.msra.mxu0 %v2951
    %6734 = vmatprep.subr.mxu0 0.0
    %6735 = vmatpush1.msra.mxu0 %v2952
    %6736 = vmatprep.subr.mxu0 0.0
    %6737 = vmatpush1.msra.mxu0 %v2953
    %6738 = vmatprep.subr.mxu0 0.0
    %6739 = vmatpush1.msra.mxu0 %v2954
    %6740 = vmatprep.subr.mxu0 0.0
    %6741 = vmatpush1.msra.mxu0 %v2955
    %6742 = vmatprep.subr.mxu0 0.0
    %6743 = vmatpush1.msra.mxu0 %v2956
    %6744 = vmatprep.subr.mxu0 0.0
    %6745 = vmatpush1.msra.mxu0 %v2957
    %6746 = vmatprep.subr.mxu0 0.0
    %6747 = vmatpush1.msra.mxu0 %v2958
    %6748 = vmatprep.subr.mxu0 0.0
    %6749 = vmatpush1.msra.mxu0 %v3533
    %6750 = vmatprep.subr.mxu0 0.0
    %6751 = vmatpush1.msra.mxu0 0.0
    %6752 = vmatprep.subr.mxu0 0.0
    %6753 = vmatpush1.msra.mxu0 0.0
    %6754 = vmatprep.subr.mxu0 0.0
    %6755 = vmatpush1.msra.mxu0 0.0
    %6756 = vmatprep.subr.mxu0 0.0
    %6757 = vmatpush1.msra.mxu0 0.0
    %6758 = vmatprep.subr.mxu0 0.0
    %6759 = vmatpush1.msra.mxu0 0.0
    %6760 = vmatprep.subr.mxu0 0.0
    %6761 = vmatpush1.msra.mxu0 0.0
    %6762 = vmatprep.subr.mxu0 0.0
    %6763 = vmatpush1.msra.mxu0 0.0
    %6764 = vmatprep.subr.mxu0 0.0
    %6765 = vmatpush1.msra.mxu0 0.0
    %6766 = vmatprep.subr.mxu0 0.0
    %6767 = vmatpush1.msra.mxu0 0.0
    %6768 = vmatprep.subr.mxu0 0.0
    %6769 = vmatpush1.msra.mxu0 0.0
    %6770 = vmatprep.subr.mxu0 0.0
    %6771 = vmatpush1.msra.mxu0 0.0
    %6772 = vmatprep.subr.mxu0 0.0
    %6773 = vmatpush1.msra.mxu0 0.0
    %6774 = vmatprep.subr.mxu0 0.0
    %6775 = vmatpush1.msra.mxu0 0.0
    %6776 = vmatprep.subr.mxu0 0.0
    %6777 = vmatpush1.msra.mxu0 0.0
    %6778 = vmatprep.subr.mxu0 0.0
    %6779 = vmatpush1.msra.mxu0 0.0
    %6780 = vmatprep.subr.mxu0 0.0
    %6781 = vmatpush1.msra.mxu0 0.0
    %6782 = vmatprep.subr.mxu0 0.0
    %6783 = vmatpush1.msra.mxu0 0.0
    %6784 = vmatprep.subr.mxu0 0.0
    %6785 = vmatpush1.msra.mxu0 0.0
    %6786 = vmatprep.subr.mxu0 0.0
    %6787 = vmatpush1.msra.mxu0 0.0
    %6788 = vmatprep.mubr.f32.mxu0 0.0
    %6789 = vmatmul.mubr.f32.gmra.mrb[0].mxu0 %v6512
    %v6790 = vpop.f32.mrb[0].mxu0
    %v6791 = vadd.f32 %v2966, %v6790
    %v6792 = vpop.f32.mrb[0].mxu0
    %6793 = vdwg.mxu0
    %v6794 = vxor.u32 %v6651, 2147483648
    %v6795 = vmul.f32 %v6794, 1.442695
    %v6796 = vpow.pop %v6795
    %v6797 = vadd.f32 %v6796, 1.0
    %v6798 = vrcp.pop %v6797
    %v6799 = vmul.f32 1.0, %v6798
    %v6800 = vmul.f32 %v6799, %v6169
    %v6801 = vxor.u32 %v6581, 2147483648
    %v6802 = vmul.f32 %v6801, 1.442695
    %v6803 = vpow.pop %v6802
    %v6804 = vadd.f32 %v6803, 1.0
    %v6805 = vrcp.pop %v6804
    %v6806 = vmul.f32 1.0, %v6805
    %v6807 = vtanh.pop %v6721
    %v6808 = vmul.f32 %v6806, %v6807
    %v6809 = vadd.f32 %v6800, %v6808
    %v6810 = vxor.u32 %v6791, 2147483648
    %v6811 = vmul.f32 %v6810, 1.442695
    %v6812 = vpow.pop %v6811
    %v6813 = vadd.f32 %v6812, 1.0
    %v6814 = vrcp.pop %v6813
    %v6815 = vmul.f32 1.0, %v6814
    %v6816 = vtanh.pop %v6809
    %v6817 = vmul.f32 %v6815, %v6816
    %v6819 = vrot.slane %v6503, 2
    %v6820 = vsel %vm2979, %v6819, 0
    %6822 = vmatprep.subr.mxu0 0.0
    %6823 = vmatpush1.msra.mxu0 %v2874
    %6824 = vmatprep.subr.mxu0 0.0
    %6825 = vmatpush1.msra.mxu0 %v2875
    %6826 = vmatprep.subr.mxu0 0.0
    %6827 = vmatpush1.msra.mxu0 %v2876
    %6828 = vmatprep.subr.mxu0 0.0
    %6829 = vmatpush1.msra.mxu0 %v2877
    %6830 = vmatprep.subr.mxu0 0.0
    %6831 = vmatpush1.msra.mxu0 %v2878
    %6832 = vmatprep.subr.mxu0 0.0
    %6833 = vmatpush1.msra.mxu0 %v2879
    %6834 = vmatprep.subr.mxu0 0.0
    %6835 = vmatpush1.msra.mxu0 %v2984
    %6836 = vmatprep.subr.mxu0 0.0
    %6837 = vmatpush1.msra.mxu0 0.0
    %6838 = vmatprep.subr.mxu0 0.0
    %6839 = vmatpush1.msra.mxu0 0.0
    %6840 = vmatprep.subr.mxu0 0.0
    %6841 = vmatpush1.msra.mxu0 0.0
    %6842 = vmatprep.subr.mxu0 0.0
    %6843 = vmatpush1.msra.mxu0 0.0
    %6844 = vmatprep.subr.mxu0 0.0
    %6845 = vmatpush1.msra.mxu0 0.0
    %6846 = vmatprep.subr.mxu0 0.0
    %6847 = vmatpush1.msra.mxu0 0.0
    %6848 = vmatprep.subr.mxu0 0.0
    %6849 = vmatpush1.msra.mxu0 0.0
    %6850 = vmatprep.subr.mxu0 0.0
    %6851 = vmatpush1.msra.mxu0 0.0
    %6852 = vmatprep.subr.mxu0 0.0
    %6853 = vmatpush1.msra.mxu0 0.0
    %6854 = vmatprep.subr.mxu0 0.0
    %6855 = vmatpush1.msra.mxu0 0.0
    %6856 = vmatprep.subr.mxu0 0.0
    %6857 = vmatpush1.msra.mxu0 0.0
    %6858 = vmatprep.subr.mxu0 0.0
    %6859 = vmatpush1.msra.mxu0 0.0
    %6860 = vmatprep.subr.mxu0 0.0
    %6861 = vmatpush1.msra.mxu0 0.0
    %6862 = vmatprep.subr.mxu0 0.0
    %6863 = vmatpush1.msra.mxu0 0.0
    %6864 = vmatprep.subr.mxu0 0.0
    %6865 = vmatpush1.msra.mxu0 0.0
    %6866 = vmatprep.subr.mxu0 0.0
    %6867 = vmatpush1.msra.mxu0 0.0
    %6868 = vmatprep.subr.mxu0 0.0
    %6869 = vmatpush1.msra.mxu0 0.0
    %6870 = vmatprep.subr.mxu0 0.0
    %6871 = vmatpush1.msra.mxu0 0.0
    %6872 = vmatprep.subr.mxu0 0.0
    %6873 = vmatpush1.msra.mxu0 0.0
    %6874 = vmatprep.subr.mxu0 0.0
    %6875 = vmatpush1.msra.mxu0 0.0
    %6876 = vmatprep.subr.mxu0 0.0
    %6877 = vmatpush1.msra.mxu0 0.0
    %6878 = vmatprep.subr.mxu0 0.0
    %6879 = vmatpush1.msra.mxu0 0.0
    %6880 = vmatprep.subr.mxu0 0.0
    %6881 = vmatpush1.msra.mxu0 0.0
    %6882 = vmatprep.subr.mxu0 0.0
    %6883 = vmatpush1.msra.mxu0 0.0
    %6884 = vmatprep.subr.mxu0 0.0
    %6885 = vmatpush1.msra.mxu0 0.0
    %6886 = vmatprep.mubr.f32.mxu0 0.0
    %6887 = vmatmul.mubr.f32.gmra.mrb[0].mxu0 %v6820
    %v6888 = vpop.f32.mrb[0].mxu0
    %v6889 = vadd.f32 0.0, %v6888
    %v6890 = vpop.f32.mrb[0].mxu0
    %6891 = vdwg.mxu0
    %v6893 = vrot.slane %v6889, 4
    %v6895 = vadd.f32 %v2601, %v6893
    %6896 = vmatprep.subr.mxu0 0.0
    %6897 = vmatpush1.msra.mxu0 %v2882
    %6898 = vmatprep.subr.mxu0 0.0
    %6899 = vmatpush1.msra.mxu0 %v2883
    %6900 = vmatprep.subr.mxu0 0.0
    %6901 = vmatpush1.msra.mxu0 %v2884
    %6902 = vmatprep.subr.mxu0 0.0
    %6903 = vmatpush1.msra.mxu0 %v2885
    %6904 = vmatprep.subr.mxu0 0.0
    %6905 = vmatpush1.msra.mxu0 %v2886
    %6906 = vmatprep.subr.mxu0 0.0
    %6907 = vmatpush1.msra.mxu0 %v2887
    %6908 = vmatprep.subr.mxu0 0.0
    %6909 = vmatpush1.msra.mxu0 %v3058
    %6910 = vmatprep.subr.mxu0 0.0
    %6911 = vmatpush1.msra.mxu0 0.0
    %6912 = vmatprep.subr.mxu0 0.0
    %6913 = vmatpush1.msra.mxu0 0.0
    %6914 = vmatprep.subr.mxu0 0.0
    %6915 = vmatpush1.msra.mxu0 0.0
    %6916 = vmatprep.subr.mxu0 0.0
    %6917 = vmatpush1.msra.mxu0 0.0
    %6918 = vmatprep.subr.mxu0 0.0
    %6919 = vmatpush1.msra.mxu0 0.0
    %6920 = vmatprep.subr.mxu0 0.0
    %6921 = vmatpush1.msra.mxu0 0.0
    %6922 = vmatprep.subr.mxu0 0.0
    %6923 = vmatpush1.msra.mxu0 0.0
    %6924 = vmatprep.subr.mxu0 0.0
    %6925 = vmatpush1.msra.mxu0 0.0
    %6926 = vmatprep.subr.mxu0 0.0
    %6927 = vmatpush1.msra.mxu0 0.0
    %6928 = vmatprep.subr.mxu0 0.0
    %6929 = vmatpush1.msra.mxu0 0.0
    %6930 = vmatprep.subr.mxu0 0.0
    %6931 = vmatpush1.msra.mxu0 0.0
    %6932 = vmatprep.subr.mxu0 0.0
    %6933 = vmatpush1.msra.mxu0 0.0
    %6934 = vmatprep.subr.mxu0 0.0
    %6935 = vmatpush1.msra.mxu0 0.0
    %6936 = vmatprep.subr.mxu0 0.0
    %6937 = vmatpush1.msra.mxu0 0.0
    %6938 = vmatprep.subr.mxu0 0.0
    %6939 = vmatpush1.msra.mxu0 0.0
    %6940 = vmatprep.subr.mxu0 0.0
    %6941 = vmatpush1.msra.mxu0 0.0
    %6942 = vmatprep.subr.mxu0 0.0
    %6943 = vmatpush1.msra.mxu0 0.0
    %6944 = vmatprep.subr.mxu0 0.0
    %6945 = vmatpush1.msra.mxu0 0.0
    %6946 = vmatprep.subr.mxu0 0.0
    %6947 = vmatpush1.msra.mxu0 0.0
    %6948 = vmatprep.subr.mxu0 0.0
    %6949 = vmatpush1.msra.mxu0 0.0
    %6950 = vmatprep.subr.mxu0 0.0
    %6951 = vmatpush1.msra.mxu0 0.0
    %6952 = vmatprep.subr.mxu0 0.0
    %6953 = vmatpush1.msra.mxu0 0.0
    %6954 = vmatprep.subr.mxu0 0.0
    %6955 = vmatpush1.msra.mxu0 0.0
    %6956 = vmatprep.subr.mxu0 0.0
    %6957 = vmatpush1.msra.mxu0 0.0
    %6958 = vmatprep.subr.mxu0 0.0
    %6959 = vmatpush1.msra.mxu0 0.0
    %6960 = vmatprep.mubr.f32.mxu0 0.0
    %6961 = vmatmul.mubr.f32.gmra.mrb[0].mxu0 %v6820
    %v6962 = vpop.f32.mrb[0].mxu0
    %v6963 = vadd.f32 0.0, %v6962
    %v6964 = vpop.f32.mrb[0].mxu0
    %6965 = vdwg.mxu0
    %v6967 = vrot.slane %v6963, 4
    %v6969 = vadd.f32 %v2691, %v6967
    %6970 = vmatprep.subr.mxu0 0.0
    %6971 = vmatpush1.msra.mxu0 %v2890
    %6972 = vmatprep.subr.mxu0 0.0
    %6973 = vmatpush1.msra.mxu0 %v2891
    %6974 = vmatprep.subr.mxu0 0.0
    %6975 = vmatpush1.msra.mxu0 %v2892
    %6976 = vmatprep.subr.mxu0 0.0
    %6977 = vmatpush1.msra.mxu0 %v2893
    %6978 = vmatprep.subr.mxu0 0.0
    %6979 = vmatpush1.msra.mxu0 %v2894
    %6980 = vmatprep.subr.mxu0 0.0
    %6981 = vmatpush1.msra.mxu0 %v2895
    %6982 = vmatprep.subr.mxu0 0.0
    %6983 = vmatpush1.msra.mxu0 %v3132
    %6984 = vmatprep.subr.mxu0 0.0
    %6985 = vmatpush1.msra.mxu0 0.0
    %6986 = vmatprep.subr.mxu0 0.0
    %6987 = vmatpush1.msra.mxu0 0.0
    %6988 = vmatprep.subr.mxu0 0.0
    %6989 = vmatpush1.msra.mxu0 0.0
    %6990 = vmatprep.subr.mxu0 0.0
    %6991 = vmatpush1.msra.mxu0 0.0
    %6992 = vmatprep.subr.mxu0 0.0
    %6993 = vmatpush1.msra.mxu0 0.0
    %6994 = vmatprep.subr.mxu0 0.0
    %6995 = vmatpush1.msra.mxu0 0.0
    %6996 = vmatprep.subr.mxu0 0.0
    %6997 = vmatpush1.msra.mxu0 0.0
    %6998 = vmatprep.subr.mxu0 0.0
    %6999 = vmatpush1.msra.mxu0 0.0
    %7000 = vmatprep.subr.mxu0 0.0
    %7001 = vmatpush1.msra.mxu0 0.0
    %7002 = vmatprep.subr.mxu0 0.0
    %7003 = vmatpush1.msra.mxu0 0.0
    %7004 = vmatprep.subr.mxu0 0.0
    %7005 = vmatpush1.msra.mxu0 0.0
    %7006 = vmatprep.subr.mxu0 0.0
    %7007 = vmatpush1.msra.mxu0 0.0
    %7008 = vmatprep.subr.mxu0 0.0
    %7009 = vmatpush1.msra.mxu0 0.0
    %7010 = vmatprep.subr.mxu0 0.0
    %7011 = vmatpush1.msra.mxu0 0.0
    %7012 = vmatprep.subr.mxu0 0.0
    %7013 = vmatpush1.msra.mxu0 0.0
    %7014 = vmatprep.subr.mxu0 0.0
    %7015 = vmatpush1.msra.mxu0 0.0
    %7016 = vmatprep.subr.mxu0 0.0
    %7017 = vmatpush1.msra.mxu0 0.0
    %7018 = vmatprep.subr.mxu0 0.0
    %7019 = vmatpush1.msra.mxu0 0.0
    %7020 = vmatprep.subr.mxu0 0.0
    %7021 = vmatpush1.msra.mxu0 0.0
    %7022 = vmatprep.subr.mxu0 0.0
    %7023 = vmatpush1.msra.mxu0 0.0
    %7024 = vmatprep.subr.mxu0 0.0
    %7025 = vmatpush1.msra.mxu0 0.0
    %7026 = vmatprep.subr.mxu0 0.0
    %7027 = vmatpush1.msra.mxu0 0.0
    %7028 = vmatprep.subr.mxu0 0.0
    %7029 = vmatpush1.msra.mxu0 0.0
    %7030 = vmatprep.subr.mxu0 0.0
    %7031 = vmatpush1.msra.mxu0 0.0
    %7032 = vmatprep.subr.mxu0 0.0
    %7033 = vmatpush1.msra.mxu0 0.0
    %7034 = vmatprep.mubr.f32.mxu0 0.0
    %7035 = vmatmul.mubr.f32.gmra.mrb[0].mxu0 %v6820
    %v7036 = vpop.f32.mrb[0].mxu0
    %v7037 = vadd.f32 0.0, %v7036
    %v7038 = vpop.f32.mrb[0].mxu0
    %7039 = vdwg.mxu0
    %v7041 = vrot.slane %v7037, 4
    %v7043 = vadd.f32 %v2781, %v7041
    %7044 = vmatprep.subr.mxu0 0.0
    %7045 = vmatpush1.msra.mxu0 %v2898
    %7046 = vmatprep.subr.mxu0 0.0
    %7047 = vmatpush1.msra.mxu0 %v2899
    %7048 = vmatprep.subr.mxu0 0.0
    %7049 = vmatpush1.msra.mxu0 %v2900
    %7050 = vmatprep.subr.mxu0 0.0
    %7051 = vmatpush1.msra.mxu0 %v2901
    %7052 = vmatprep.subr.mxu0 0.0
    %7053 = vmatpush1.msra.mxu0 %v2902
    %7054 = vmatprep.subr.mxu0 0.0
    %7055 = vmatpush1.msra.mxu0 %v2903
    %7056 = vmatprep.subr.mxu0 0.0
    %7057 = vmatpush1.msra.mxu0 %v3206
    %7058 = vmatprep.subr.mxu0 0.0
    %7059 = vmatpush1.msra.mxu0 0.0
    %7060 = vmatprep.subr.mxu0 0.0
    %7061 = vmatpush1.msra.mxu0 0.0
    %7062 = vmatprep.subr.mxu0 0.0
    %7063 = vmatpush1.msra.mxu0 0.0
    %7064 = vmatprep.subr.mxu0 0.0
    %7065 = vmatpush1.msra.mxu0 0.0
    %7066 = vmatprep.subr.mxu0 0.0
    %7067 = vmatpush1.msra.mxu0 0.0
    %7068 = vmatprep.subr.mxu0 0.0
    %7069 = vmatpush1.msra.mxu0 0.0
    %7070 = vmatprep.subr.mxu0 0.0
    %7071 = vmatpush1.msra.mxu0 0.0
    %7072 = vmatprep.subr.mxu0 0.0
    %7073 = vmatpush1.msra.mxu0 0.0
    %7074 = vmatprep.subr.mxu0 0.0
    %7075 = vmatpush1.msra.mxu0 0.0
    %7076 = vmatprep.subr.mxu0 0.0
    %7077 = vmatpush1.msra.mxu0 0.0
    %7078 = vmatprep.subr.mxu0 0.0
    %7079 = vmatpush1.msra.mxu0 0.0
    %7080 = vmatprep.subr.mxu0 0.0
    %7081 = vmatpush1.msra.mxu0 0.0
    %7082 = vmatprep.subr.mxu0 0.0
    %7083 = vmatpush1.msra.mxu0 0.0
    %7084 = vmatprep.subr.mxu0 0.0
    %7085 = vmatpush1.msra.mxu0 0.0
    %7086 = vmatprep.subr.mxu0 0.0
    %7087 = vmatpush1.msra.mxu0 0.0
    %7088 = vmatprep.subr.mxu0 0.0
    %7089 = vmatpush1.msra.mxu0 0.0
    %7090 = vmatprep.subr.mxu0 0.0
    %7091 = vmatpush1.msra.mxu0 0.0
    %7092 = vmatprep.subr.mxu0 0.0
    %7093 = vmatpush1.msra.mxu0 0.0
    %7094 = vmatprep.subr.mxu0 0.0
    %7095 = vmatpush1.msra.mxu0 0.0
    %7096 = vmatprep.subr.mxu0 0.0
    %7097 = vmatpush1.msra.mxu0 0.0
    %7098 = vmatprep.subr.mxu0 0.0
    %7099 = vmatpush1.msra.mxu0 0.0
    %7100 = vmatprep.subr.mxu0 0.0
    %7101 = vmatpush1.msra.mxu0 0.0
    %7102 = vmatprep.subr.mxu0 0.0
    %7103 = vmatpush1.msra.mxu0 0.0
    %7104 = vmatprep.subr.mxu0 0.0
    %7105 = vmatpush1.msra.mxu0 0.0
    %7106 = vmatprep.subr.mxu0 0.0
    %7107 = vmatpush1.msra.mxu0 0.0
    %7108 = vmatprep.mubr.f32.mxu0 0.0
    %7109 = vmatmul.mubr.f32.gmra.mrb[0].mxu0 %v6820
    %v7110 = vpop.f32.mrb[0].mxu0
    %v7111 = vadd.f32 0.0, %v7110
    %v7112 = vpop.f32.mrb[0].mxu0
    %7113 = vdwg.mxu0
    %v7115 = vrot.slane %v7111, 4
    %v7117 = vadd.f32 %v2871, %v7115
    %v7118 = vxor.u32 %v6969, 2147483648
    %v7119 = vmul.f32 %v7118, 1.442695
    %v7120 = vpow.pop %v7119
    %v7121 = vadd.f32 %v7120, 1.0
    %v7122 = vrcp.pop %v7121
    %v7123 = vmul.f32 1.0, %v7122
    %v7125 = vrot.slane %v6495, 6
    %v7127 = vmul.f32 %v7123, %v7125
    %v7128 = vxor.u32 %v6895, 2147483648
    %v7129 = vmul.f32 %v7128, 1.442695
    %v7130 = vpow.pop %v7129
    %v7131 = vadd.f32 %v7130, 1.0
    %v7132 = vrcp.pop %v7131
    %v7133 = vmul.f32 1.0, %v7132
    %v7134 = vtanh.pop %v7043
    %v7135 = vmul.f32 %v7133, %v7134
    %v7136 = vadd.f32 %v7127, %v7135
    %v7137 = vxor.u32 %v7117, 2147483648
    %v7138 = vmul.f32 %v7137, 1.442695
    %v7139 = vpow.pop %v7138
    %v7140 = vadd.f32 %v7139, 1.0
    %v7141 = vrcp.pop %v7140
    %v7142 = vmul.f32 1.0, %v7141
    %v7143 = vtanh.pop %v7136
    %v7144 = vmul.f32 %v7142, %v7143
    %v7146 = vrot.slane %v6817, 4
    %7147 = vrot.lane.b32.xlu0 %v7146, 50
    %v7148 = vpop.permute.xlu0 %7147
    %v7150 = vsel %vm2979, %v7144, %v7148
    %v7152 = vrot.slane %v7150, 4
    %v7153 = vsel %vm3308, %v7152, 0
    %7155 = vmatprep.subr.mxu0 0.0
    %7156 = vmatpush1.msra.mxu0 %v2905
    %7157 = vmatprep.subr.mxu0 0.0
    %7158 = vmatpush1.msra.mxu0 %v2906
    %7159 = vmatprep.subr.mxu0 0.0
    %7160 = vmatpush1.msra.mxu0 %v2907
    %7161 = vmatprep.subr.mxu0 0.0
    %7162 = vmatpush1.msra.mxu0 %v2908
    %7163 = vmatprep.subr.mxu0 0.0
    %7164 = vmatpush1.msra.mxu0 %v2909
    %7165 = vmatprep.subr.mxu0 0.0
    %7166 = vmatpush1.msra.mxu0 %v2910
    %7167 = vmatprep.subr.mxu0 0.0
    %7168 = vmatpush1.msra.mxu0 %v2911
    %7169 = vmatprep.subr.mxu0 0.0
    %7170 = vmatpush1.msra.mxu0 %v2912
    %7171 = vmatprep.subr.mxu0 0.0
    %7172 = vmatpush1.msra.mxu0 %v2913
    %7173 = vmatprep.subr.mxu0 0.0
    %7174 = vmatpush1.msra.mxu0 %v2914
    %7175 = vmatprep.subr.mxu0 0.0
    %7176 = vmatpush1.msra.mxu0 %v2915
    %7177 = vmatprep.subr.mxu0 0.0
    %7178 = vmatpush1.msra.mxu0 %v2916
    %7179 = vmatprep.subr.mxu0 0.0
    %7180 = vmatpush1.msra.mxu0 %v3314
    %7181 = vmatprep.subr.mxu0 0.0
    %7182 = vmatpush1.msra.mxu0 0.0
    %7183 = vmatprep.subr.mxu0 0.0
    %7184 = vmatpush1.msra.mxu0 0.0
    %7185 = vmatprep.subr.mxu0 0.0
    %7186 = vmatpush1.msra.mxu0 0.0
    %7187 = vmatprep.subr.mxu0 0.0
    %7188 = vmatpush1.msra.mxu0 0.0
    %7189 = vmatprep.subr.mxu0 0.0
    %7190 = vmatpush1.msra.mxu0 0.0
    %7191 = vmatprep.subr.mxu0 0.0
    %7192 = vmatpush1.msra.mxu0 0.0
    %7193 = vmatprep.subr.mxu0 0.0
    %7194 = vmatpush1.msra.mxu0 0.0
    %7195 = vmatprep.subr.mxu0 0.0
    %7196 = vmatpush1.msra.mxu0 0.0
    %7197 = vmatprep.subr.mxu0 0.0
    %7198 = vmatpush1.msra.mxu0 0.0
    %7199 = vmatprep.subr.mxu0 0.0
    %7200 = vmatpush1.msra.mxu0 0.0
    %7201 = vmatprep.subr.mxu0 0.0
    %7202 = vmatpush1.msra.mxu0 0.0
    %7203 = vmatprep.subr.mxu0 0.0
    %7204 = vmatpush1.msra.mxu0 0.0
    %7205 = vmatprep.subr.mxu0 0.0
    %7206 = vmatpush1.msra.mxu0 0.0
    %7207 = vmatprep.subr.mxu0 0.0
    %7208 = vmatpush1.msra.mxu0 0.0
    %7209 = vmatprep.subr.mxu0 0.0
    %7210 = vmatpush1.msra.mxu0 0.0
    %7211 = vmatprep.subr.mxu0 0.0
    %7212 = vmatpush1.msra.mxu0 0.0
    %7213 = vmatprep.subr.mxu0 0.0
    %7214 = vmatpush1.msra.mxu0 0.0
    %7215 = vmatprep.subr.mxu0 0.0
    %7216 = vmatpush1.msra.mxu0 0.0
    %7217 = vmatprep.subr.mxu0 0.0
    %7218 = vmatpush1.msra.mxu0 0.0
    %7219 = vmatprep.mubr.f32.mxu0 0.0
    %7220 = vmatmul.mubr.f32.gmra.mrb[0].mxu0 %v7153
    %v7221 = vpop.f32.mrb[0].mxu0
    %v7222 = vadd.f32 %v2960, %v7221
    %v7223 = vpop.f32.mrb[0].mxu0
    %7224 = vdwg.mxu0
    %7225 = vmatprep.subr.mxu0 0.0
    %7226 = vmatpush1.msra.mxu0 %v2919
    %7227 = vmatprep.subr.mxu0 0.0
    %7228 = vmatpush1.msra.mxu0 %v2920
    %7229 = vmatprep.subr.mxu0 0.0
    %7230 = vmatpush1.msra.mxu0 %v2921
    %7231 = vmatprep.subr.mxu0 0.0
    %7232 = vmatpush1.msra.mxu0 %v2922
    %7233 = vmatprep.subr.mxu0 0.0
    %7234 = vmatpush1.msra.mxu0 %v2923
    %7235 = vmatprep.subr.mxu0 0.0
    %7236 = vmatpush1.msra.mxu0 %v2924
    %7237 = vmatprep.subr.mxu0 0.0
    %7238 = vmatpush1.msra.mxu0 %v2925
    %7239 = vmatprep.subr.mxu0 0.0
    %7240 = vmatpush1.msra.mxu0 %v2926
    %7241 = vmatprep.subr.mxu0 0.0
    %7242 = vmatpush1.msra.mxu0 %v2927
    %7243 = vmatprep.subr.mxu0 0.0
    %7244 = vmatpush1.msra.mxu0 %v2928
    %7245 = vmatprep.subr.mxu0 0.0
    %7246 = vmatpush1.msra.mxu0 %v2929
    %7247 = vmatprep.subr.mxu0 0.0
    %7248 = vmatpush1.msra.mxu0 %v2930
    %7249 = vmatprep.subr.mxu0 0.0
    %7250 = vmatpush1.msra.mxu0 %v3387
    %7251 = vmatprep.subr.mxu0 0.0
    %7252 = vmatpush1.msra.mxu0 0.0
    %7253 = vmatprep.subr.mxu0 0.0
    %7254 = vmatpush1.msra.mxu0 0.0
    %7255 = vmatprep.subr.mxu0 0.0
    %7256 = vmatpush1.msra.mxu0 0.0
    %7257 = vmatprep.subr.mxu0 0.0
    %7258 = vmatpush1.msra.mxu0 0.0
    %7259 = vmatprep.subr.mxu0 0.0
    %7260 = vmatpush1.msra.mxu0 0.0
    %7261 = vmatprep.subr.mxu0 0.0
    %7262 = vmatpush1.msra.mxu0 0.0
    %7263 = vmatprep.subr.mxu0 0.0
    %7264 = vmatpush1.msra.mxu0 0.0
    %7265 = vmatprep.subr.mxu0 0.0
    %7266 = vmatpush1.msra.mxu0 0.0
    %7267 = vmatprep.subr.mxu0 0.0
    %7268 = vmatpush1.msra.mxu0 0.0
    %7269 = vmatprep.subr.mxu0 0.0
    %7270 = vmatpush1.msra.mxu0 0.0
    %7271 = vmatprep.subr.mxu0 0.0
    %7272 = vmatpush1.msra.mxu0 0.0
    %7273 = vmatprep.subr.mxu0 0.0
    %7274 = vmatpush1.msra.mxu0 0.0
    %7275 = vmatprep.subr.mxu0 0.0
    %7276 = vmatpush1.msra.mxu0 0.0
    %7277 = vmatprep.subr.mxu0 0.0
    %7278 = vmatpush1.msra.mxu0 0.0
    %7279 = vmatprep.subr.mxu0 0.0
    %7280 = vmatpush1.msra.mxu0 0.0
    %7281 = vmatprep.subr.mxu0 0.0
    %7282 = vmatpush1.msra.mxu0 0.0
    %7283 = vmatprep.subr.mxu0 0.0
    %7284 = vmatpush1.msra.mxu0 0.0
    %7285 = vmatprep.subr.mxu0 0.0
    %7286 = vmatpush1.msra.mxu0 0.0
    %7287 = vmatprep.subr.mxu0 0.0
    %7288 = vmatpush1.msra.mxu0 0.0
    %7289 = vmatprep.mubr.f32.mxu0 0.0
    %7290 = vmatmul.mubr.f32.gmra.mrb[0].mxu0 %v7153
    %v7291 = vpop.f32.mrb[0].mxu0
    %v7292 = vadd.f32 %v2962, %v7291
    %v7293 = vpop.f32.mrb[0].mxu0
    %7294 = vdwg.mxu0
    %7295 = vmatprep.subr.mxu0 0.0
    %7296 = vmatpush1.msra.mxu0 %v2933
    %7297 = vmatprep.subr.mxu0 0.0
    %7298 = vmatpush1.msra.mxu0 %v2934
    %7299 = vmatprep.subr.mxu0 0.0
    %7300 = vmatpush1.msra.mxu0 %v2935
    %7301 = vmatprep.subr.mxu0 0.0
    %7302 = vmatpush1.msra.mxu0 %v2936
    %7303 = vmatprep.subr.mxu0 0.0
    %7304 = vmatpush1.msra.mxu0 %v2937
    %7305 = vmatprep.subr.mxu0 0.0
    %7306 = vmatpush1.msra.mxu0 %v2938
    %7307 = vmatprep.subr.mxu0 0.0
    %7308 = vmatpush1.msra.mxu0 %v2939
    %7309 = vmatprep.subr.mxu0 0.0
    %7310 = vmatpush1.msra.mxu0 %v2940
    %7311 = vmatprep.subr.mxu0 0.0
    %7312 = vmatpush1.msra.mxu0 %v2941
    %7313 = vmatprep.subr.mxu0 0.0
    %7314 = vmatpush1.msra.mxu0 %v2942
    %7315 = vmatprep.subr.mxu0 0.0
    %7316 = vmatpush1.msra.mxu0 %v2943
    %7317 = vmatprep.subr.mxu0 0.0
    %7318 = vmatpush1.msra.mxu0 %v2944
    %7319 = vmatprep.subr.mxu0 0.0
    %7320 = vmatpush1.msra.mxu0 %v3460
    %7321 = vmatprep.subr.mxu0 0.0
    %7322 = vmatpush1.msra.mxu0 0.0
    %7323 = vmatprep.subr.mxu0 0.0
    %7324 = vmatpush1.msra.mxu0 0.0
    %7325 = vmatprep.subr.mxu0 0.0
    %7326 = vmatpush1.msra.mxu0 0.0
    %7327 = vmatprep.subr.mxu0 0.0
    %7328 = vmatpush1.msra.mxu0 0.0
    %7329 = vmatprep.subr.mxu0 0.0
    %7330 = vmatpush1.msra.mxu0 0.0
    %7331 = vmatprep.subr.mxu0 0.0
    %7332 = vmatpush1.msra.mxu0 0.0
    %7333 = vmatprep.subr.mxu0 0.0
    %7334 = vmatpush1.msra.mxu0 0.0
    %7335 = vmatprep.subr.mxu0 0.0
    %7336 = vmatpush1.msra.mxu0 0.0
    %7337 = vmatprep.subr.mxu0 0.0
    %7338 = vmatpush1.msra.mxu0 0.0
    %7339 = vmatprep.subr.mxu0 0.0
    %7340 = vmatpush1.msra.mxu0 0.0
    %7341 = vmatprep.subr.mxu0 0.0
    %7342 = vmatpush1.msra.mxu0 0.0
    %7343 = vmatprep.subr.mxu0 0.0
    %7344 = vmatpush1.msra.mxu0 0.0
    %7345 = vmatprep.subr.mxu0 0.0
    %7346 = vmatpush1.msra.mxu0 0.0
    %7347 = vmatprep.subr.mxu0 0.0
    %7348 = vmatpush1.msra.mxu0 0.0
    %7349 = vmatprep.subr.mxu0 0.0
    %7350 = vmatpush1.msra.mxu0 0.0
    %7351 = vmatprep.subr.mxu0 0.0
    %7352 = vmatpush1.msra.mxu0 0.0
    %7353 = vmatprep.subr.mxu0 0.0
    %7354 = vmatpush1.msra.mxu0 0.0
    %7355 = vmatprep.subr.mxu0 0.0
    %7356 = vmatpush1.msra.mxu0 0.0
    %7357 = vmatprep.subr.mxu0 0.0
    %7358 = vmatpush1.msra.mxu0 0.0
    %7359 = vmatprep.mubr.f32.mxu0 0.0
    %7360 = vmatmul.mubr.f32.gmra.mrb[0].mxu0 %v7153
    %v7361 = vpop.f32.mrb[0].mxu0
    %v7362 = vadd.f32 %v2964, %v7361
    %v7363 = vpop.f32.mrb[0].mxu0
    %7364 = vdwg.mxu0
    %7365 = vmatprep.subr.mxu0 0.0
    %7366 = vmatpush1.msra.mxu0 %v2947
    %7367 = vmatprep.subr.mxu0 0.0
    %7368 = vmatpush1.msra.mxu0 %v2948
    %7369 = vmatprep.subr.mxu0 0.0
    %7370 = vmatpush1.msra.mxu0 %v2949
    %7371 = vmatprep.subr.mxu0 0.0
    %7372 = vmatpush1.msra.mxu0 %v2950
    %7373 = vmatprep.subr.mxu0 0.0
    %7374 = vmatpush1.msra.mxu0 %v2951
    %7375 = vmatprep.subr.mxu0 0.0
    %7376 = vmatpush1.msra.mxu0 %v2952
    %7377 = vmatprep.subr.mxu0 0.0
    %7378 = vmatpush1.msra.mxu0 %v2953
    %7379 = vmatprep.subr.mxu0 0.0
    %7380 = vmatpush1.msra.mxu0 %v2954
    %7381 = vmatprep.subr.mxu0 0.0
    %7382 = vmatpush1.msra.mxu0 %v2955
    %7383 = vmatprep.subr.mxu0 0.0
    %7384 = vmatpush1.msra.mxu0 %v2956
    %7385 = vmatprep.subr.mxu0 0.0
    %7386 = vmatpush1.msra.mxu0 %v2957
    %7387 = vmatprep.subr.mxu0 0.0
    %7388 = vmatpush1.msra.mxu0 %v2958
    %7389 = vmatprep.subr.mxu0 0.0
    %7390 = vmatpush1.msra.mxu0 %v3533
    %7391 = vmatprep.subr.mxu0 0.0
    %7392 = vmatpush1.msra.mxu0 0.0
    %7393 = vmatprep.subr.mxu0 0.0
    %7394 = vmatpush1.msra.mxu0 0.0
    %7395 = vmatprep.subr.mxu0 0.0
    %7396 = vmatpush1.msra.mxu0 0.0
    %7397 = vmatprep.subr.mxu0 0.0
    %7398 = vmatpush1.msra.mxu0 0.0
    %7399 = vmatprep.subr.mxu0 0.0
    %7400 = vmatpush1.msra.mxu0 0.0
    %7401 = vmatprep.subr.mxu0 0.0
    %7402 = vmatpush1.msra.mxu0 0.0
    %7403 = vmatprep.subr.mxu0 0.0
    %7404 = vmatpush1.msra.mxu0 0.0
    %7405 = vmatprep.subr.mxu0 0.0
    %7406 = vmatpush1.msra.mxu0 0.0
    %7407 = vmatprep.subr.mxu0 0.0
    %7408 = vmatpush1.msra.mxu0 0.0
    %7409 = vmatprep.subr.mxu0 0.0
    %7410 = vmatpush1.msra.mxu0 0.0
    %7411 = vmatprep.subr.mxu0 0.0
    %7412 = vmatpush1.msra.mxu0 0.0
    %7413 = vmatprep.subr.mxu0 0.0
    %7414 = vmatpush1.msra.mxu0 0.0
    %7415 = vmatprep.subr.mxu0 0.0
    %7416 = vmatpush1.msra.mxu0 0.0
    %7417 = vmatprep.subr.mxu0 0.0
    %7418 = vmatpush1.msra.mxu0 0.0
    %7419 = vmatprep.subr.mxu0 0.0
    %7420 = vmatpush1.msra.mxu0 0.0
    %7421 = vmatprep.subr.mxu0 0.0
    %7422 = vmatpush1.msra.mxu0 0.0
    %7423 = vmatprep.subr.mxu0 0.0
    %7424 = vmatpush1.msra.mxu0 0.0
    %7425 = vmatprep.subr.mxu0 0.0
    %7426 = vmatpush1.msra.mxu0 0.0
    %7427 = vmatprep.subr.mxu0 0.0
    %7428 = vmatpush1.msra.mxu0 0.0
    %7429 = vmatprep.mubr.f32.mxu0 0.0
    %7430 = vmatmul.mubr.f32.gmra.mrb[0].mxu0 %v7153
    %v7431 = vpop.f32.mrb[0].mxu0
    %v7432 = vadd.f32 %v2966, %v7431
    %v7433 = vpop.f32.mrb[0].mxu0
    %7434 = vdwg.mxu0
    %v7435 = vxor.u32 %v7292, 2147483648
    %v7436 = vmul.f32 %v7435, 1.442695
    %v7437 = vpow.pop %v7436
    %v7438 = vadd.f32 %v7437, 1.0
    %v7439 = vrcp.pop %v7438
    %v7440 = vmul.f32 1.0, %v7439
    %v7441 = vmul.f32 %v7440, %v6809
    %v7442 = vxor.u32 %v7222, 2147483648
    %v7443 = vmul.f32 %v7442, 1.442695
    %v7444 = vpow.pop %v7443
    %v7445 = vadd.f32 %v7444, 1.0
    %v7446 = vrcp.pop %v7445
    %v7447 = vmul.f32 1.0, %v7446
    %v7448 = vtanh.pop %v7362
    %v7449 = vmul.f32 %v7447, %v7448
    %v7450 = vadd.f32 %v7441, %v7449
    %v7451 = vxor.u32 %v7432, 2147483648
    %v7452 = vmul.f32 %v7451, 1.442695
    %v7453 = vpow.pop %v7452
    %v7454 = vadd.f32 %v7453, 1.0
    %v7455 = vrcp.pop %v7454
    %v7456 = vmul.f32 1.0, %v7455
    %v7457 = vtanh.pop %v7450
    %v7458 = vmul.f32 %v7456, %v7457
    %v7460 = vrot.slane %v7144, 4
    %v7461 = vsel %vm2979, %v7460, 0
    %7463 = vmatprep.subr.mxu0 0.0
    %7464 = vmatpush1.msra.mxu0 %v2874
    %7465 = vmatprep.subr.mxu0 0.0
    %7466 = vmatpush1.msra.mxu0 %v2875
    %7467 = vmatprep.subr.mxu0 0.0
    %7468 = vmatpush1.msra.mxu0 %v2876
    %7469 = vmatprep.subr.mxu0 0.0
    %7470 = vmatpush1.msra.mxu0 %v2877
    %7471 = vmatprep.subr.mxu0 0.0
    %7472 = vmatpush1.msra.mxu0 %v2878
    %7473 = vmatprep.subr.mxu0 0.0
    %7474 = vmatpush1.msra.mxu0 %v2879
    %7475 = vmatprep.subr.mxu0 0.0
    %7476 = vmatpush1.msra.mxu0 %v2984
    %7477 = vmatprep.subr.mxu0 0.0
    %7478 = vmatpush1.msra.mxu0 0.0
    %7479 = vmatprep.subr.mxu0 0.0
    %7480 = vmatpush1.msra.mxu0 0.0
    %7481 = vmatprep.subr.mxu0 0.0
    %7482 = vmatpush1.msra.mxu0 0.0
    %7483 = vmatprep.subr.mxu0 0.0
    %7484 = vmatpush1.msra.mxu0 0.0
    %7485 = vmatprep.subr.mxu0 0.0
    %7486 = vmatpush1.msra.mxu0 0.0
    %7487 = vmatprep.subr.mxu0 0.0
    %7488 = vmatpush1.msra.mxu0 0.0
    %7489 = vmatprep.subr.mxu0 0.0
    %7490 = vmatpush1.msra.mxu0 0.0
    %7491 = vmatprep.subr.mxu0 0.0
    %7492 = vmatpush1.msra.mxu0 0.0
    %7493 = vmatprep.subr.mxu0 0.0
    %7494 = vmatpush1.msra.mxu0 0.0
    %7495 = vmatprep.subr.mxu0 0.0
    %7496 = vmatpush1.msra.mxu0 0.0
    %7497 = vmatprep.subr.mxu0 0.0
    %7498 = vmatpush1.msra.mxu0 0.0
    %7499 = vmatprep.subr.mxu0 0.0
    %7500 = vmatpush1.msra.mxu0 0.0
    %7501 = vmatprep.subr.mxu0 0.0
    %7502 = vmatpush1.msra.mxu0 0.0
    %7503 = vmatprep.subr.mxu0 0.0
    %7504 = vmatpush1.msra.mxu0 0.0
    %7505 = vmatprep.subr.mxu0 0.0
    %7506 = vmatpush1.msra.mxu0 0.0
    %7507 = vmatprep.subr.mxu0 0.0
    %7508 = vmatpush1.msra.mxu0 0.0
    %7509 = vmatprep.subr.mxu0 0.0
    %7510 = vmatpush1.msra.mxu0 0.0
    %7511 = vmatprep.subr.mxu0 0.0
    %7512 = vmatpush1.msra.mxu0 0.0
    %7513 = vmatprep.subr.mxu0 0.0
    %7514 = vmatpush1.msra.mxu0 0.0
    %7515 = vmatprep.subr.mxu0 0.0
    %7516 = vmatpush1.msra.mxu0 0.0
    %7517 = vmatprep.subr.mxu0 0.0
    %7518 = vmatpush1.msra.mxu0 0.0
    %7519 = vmatprep.subr.mxu0 0.0
    %7520 = vmatpush1.msra.mxu0 0.0
    %7521 = vmatprep.subr.mxu0 0.0
    %7522 = vmatpush1.msra.mxu0 0.0
    %7523 = vmatprep.subr.mxu0 0.0
    %7524 = vmatpush1.msra.mxu0 0.0
    %7525 = vmatprep.subr.mxu0 0.0
    %7526 = vmatpush1.msra.mxu0 0.0
    %7527 = vmatprep.mubr.f32.mxu0 0.0
    %7528 = vmatmul.mubr.f32.gmra.mrb[0].mxu0 %v7461
    %v7529 = vpop.f32.mrb[0].mxu0
    %v7530 = vadd.f32 0.0, %v7529
    %v7531 = vpop.f32.mrb[0].mxu0
    %7532 = vdwg.mxu0
    %v7534 = vrot.slane %v7530, 2
    %v7536 = vadd.f32 %v2601, %v7534
    %7537 = vmatprep.subr.mxu0 0.0
    %7538 = vmatpush1.msra.mxu0 %v2882
    %7539 = vmatprep.subr.mxu0 0.0
    %7540 = vmatpush1.msra.mxu0 %v2883
    %7541 = vmatprep.subr.mxu0 0.0
    %7542 = vmatpush1.msra.mxu0 %v2884
    %7543 = vmatprep.subr.mxu0 0.0
    %7544 = vmatpush1.msra.mxu0 %v2885
    %7545 = vmatprep.subr.mxu0 0.0
    %7546 = vmatpush1.msra.mxu0 %v2886
    %7547 = vmatprep.subr.mxu0 0.0
    %7548 = vmatpush1.msra.mxu0 %v2887
    %7549 = vmatprep.subr.mxu0 0.0
    %7550 = vmatpush1.msra.mxu0 %v3058
    %7551 = vmatprep.subr.mxu0 0.0
    %7552 = vmatpush1.msra.mxu0 0.0
    %7553 = vmatprep.subr.mxu0 0.0
    %7554 = vmatpush1.msra.mxu0 0.0
    %7555 = vmatprep.subr.mxu0 0.0
    %7556 = vmatpush1.msra.mxu0 0.0
    %7557 = vmatprep.subr.mxu0 0.0
    %7558 = vmatpush1.msra.mxu0 0.0
    %7559 = vmatprep.subr.mxu0 0.0
    %7560 = vmatpush1.msra.mxu0 0.0
    %7561 = vmatprep.subr.mxu0 0.0
    %7562 = vmatpush1.msra.mxu0 0.0
    %7563 = vmatprep.subr.mxu0 0.0
    %7564 = vmatpush1.msra.mxu0 0.0
    %7565 = vmatprep.subr.mxu0 0.0
    %7566 = vmatpush1.msra.mxu0 0.0
    %7567 = vmatprep.subr.mxu0 0.0
    %7568 = vmatpush1.msra.mxu0 0.0
    %7569 = vmatprep.subr.mxu0 0.0
    %7570 = vmatpush1.msra.mxu0 0.0
    %7571 = vmatprep.subr.mxu0 0.0
    %7572 = vmatpush1.msra.mxu0 0.0
    %7573 = vmatprep.subr.mxu0 0.0
    %7574 = vmatpush1.msra.mxu0 0.0
    %7575 = vmatprep.subr.mxu0 0.0
    %7576 = vmatpush1.msra.mxu0 0.0
    %7577 = vmatprep.subr.mxu0 0.0
    %7578 = vmatpush1.msra.mxu0 0.0
    %7579 = vmatprep.subr.mxu0 0.0
    %7580 = vmatpush1.msra.mxu0 0.0
    %7581 = vmatprep.subr.mxu0 0.0
    %7582 = vmatpush1.msra.mxu0 0.0
    %7583 = vmatprep.subr.mxu0 0.0
    %7584 = vmatpush1.msra.mxu0 0.0
    %7585 = vmatprep.subr.mxu0 0.0
    %7586 = vmatpush1.msra.mxu0 0.0
    %7587 = vmatprep.subr.mxu0 0.0
    %7588 = vmatpush1.msra.mxu0 0.0
    %7589 = vmatprep.subr.mxu0 0.0
    %7590 = vmatpush1.msra.mxu0 0.0
    %7591 = vmatprep.subr.mxu0 0.0
    %7592 = vmatpush1.msra.mxu0 0.0
    %7593 = vmatprep.subr.mxu0 0.0
    %7594 = vmatpush1.msra.mxu0 0.0
    %7595 = vmatprep.subr.mxu0 0.0
    %7596 = vmatpush1.msra.mxu0 0.0
    %7597 = vmatprep.subr.mxu0 0.0
    %7598 = vmatpush1.msra.mxu0 0.0
    %7599 = vmatprep.subr.mxu0 0.0
    %7600 = vmatpush1.msra.mxu0 0.0
    %7601 = vmatprep.mubr.f32.mxu0 0.0
    %7602 = vmatmul.mubr.f32.gmra.mrb[0].mxu0 %v7461
    %v7603 = vpop.f32.mrb[0].mxu0
    %v7604 = vadd.f32 0.0, %v7603
    %v7605 = vpop.f32.mrb[0].mxu0
    %7606 = vdwg.mxu0
    %v7608 = vrot.slane %v7604, 2
    %v7610 = vadd.f32 %v2691, %v7608
    %7611 = vmatprep.subr.mxu0 0.0
    %7612 = vmatpush1.msra.mxu0 %v2890
    %7613 = vmatprep.subr.mxu0 0.0
    %7614 = vmatpush1.msra.mxu0 %v2891
    %7615 = vmatprep.subr.mxu0 0.0
    %7616 = vmatpush1.msra.mxu0 %v2892
    %7617 = vmatprep.subr.mxu0 0.0
    %7618 = vmatpush1.msra.mxu0 %v2893
    %7619 = vmatprep.subr.mxu0 0.0
    %7620 = vmatpush1.msra.mxu0 %v2894
    %7621 = vmatprep.subr.mxu0 0.0
    %7622 = vmatpush1.msra.mxu0 %v2895
    %7623 = vmatprep.subr.mxu0 0.0
    %7624 = vmatpush1.msra.mxu0 %v3132
    %7625 = vmatprep.subr.mxu0 0.0
    %7626 = vmatpush1.msra.mxu0 0.0
    %7627 = vmatprep.subr.mxu0 0.0
    %7628 = vmatpush1.msra.mxu0 0.0
    %7629 = vmatprep.subr.mxu0 0.0
    %7630 = vmatpush1.msra.mxu0 0.0
    %7631 = vmatprep.subr.mxu0 0.0
    %7632 = vmatpush1.msra.mxu0 0.0
    %7633 = vmatprep.subr.mxu0 0.0
    %7634 = vmatpush1.msra.mxu0 0.0
    %7635 = vmatprep.subr.mxu0 0.0
    %7636 = vmatpush1.msra.mxu0 0.0
    %7637 = vmatprep.subr.mxu0 0.0
    %7638 = vmatpush1.msra.mxu0 0.0
    %7639 = vmatprep.subr.mxu0 0.0
    %7640 = vmatpush1.msra.mxu0 0.0
    %7641 = vmatprep.subr.mxu0 0.0
    %7642 = vmatpush1.msra.mxu0 0.0
    %7643 = vmatprep.subr.mxu0 0.0
    %7644 = vmatpush1.msra.mxu0 0.0
    %7645 = vmatprep.subr.mxu0 0.0
    %7646 = vmatpush1.msra.mxu0 0.0
    %7647 = vmatprep.subr.mxu0 0.0
    %7648 = vmatpush1.msra.mxu0 0.0
    %7649 = vmatprep.subr.mxu0 0.0
    %7650 = vmatpush1.msra.mxu0 0.0
    %7651 = vmatprep.subr.mxu0 0.0
    %7652 = vmatpush1.msra.mxu0 0.0
    %7653 = vmatprep.subr.mxu0 0.0
    %7654 = vmatpush1.msra.mxu0 0.0
    %7655 = vmatprep.subr.mxu0 0.0
    %7656 = vmatpush1.msra.mxu0 0.0
    %7657 = vmatprep.subr.mxu0 0.0
    %7658 = vmatpush1.msra.mxu0 0.0
    %7659 = vmatprep.subr.mxu0 0.0
    %7660 = vmatpush1.msra.mxu0 0.0
    %7661 = vmatprep.subr.mxu0 0.0
    %7662 = vmatpush1.msra.mxu0 0.0
    %7663 = vmatprep.subr.mxu0 0.0
    %7664 = vmatpush1.msra.mxu0 0.0
    %7665 = vmatprep.subr.mxu0 0.0
    %7666 = vmatpush1.msra.mxu0 0.0
    %7667 = vmatprep.subr.mxu0 0.0
    %7668 = vmatpush1.msra.mxu0 0.0
    %7669 = vmatprep.subr.mxu0 0.0
    %7670 = vmatpush1.msra.mxu0 0.0
    %7671 = vmatprep.subr.mxu0 0.0
    %7672 = vmatpush1.msra.mxu0 0.0
    %7673 = vmatprep.subr.mxu0 0.0
    %7674 = vmatpush1.msra.mxu0 0.0
    %7675 = vmatprep.mubr.f32.mxu0 0.0
    %7676 = vmatmul.mubr.f32.gmra.mrb[0].mxu0 %v7461
    %v7677 = vpop.f32.mrb[0].mxu0
    %v7678 = vadd.f32 0.0, %v7677
    %v7679 = vpop.f32.mrb[0].mxu0
    %7680 = vdwg.mxu0
    %v7682 = vrot.slane %v7678, 2
    %v7684 = vadd.f32 %v2781, %v7682
    %7685 = vmatprep.subr.mxu0 0.0
    %7686 = vmatpush1.msra.mxu0 %v2898
    %7687 = vmatprep.subr.mxu0 0.0
    %7688 = vmatpush1.msra.mxu0 %v2899
    %7689 = vmatprep.subr.mxu0 0.0
    %7690 = vmatpush1.msra.mxu0 %v2900
    %7691 = vmatprep.subr.mxu0 0.0
    %7692 = vmatpush1.msra.mxu0 %v2901
    %7693 = vmatprep.subr.mxu0 0.0
    %7694 = vmatpush1.msra.mxu0 %v2902
    %7695 = vmatprep.subr.mxu0 0.0
    %7696 = vmatpush1.msra.mxu0 %v2903
    %7697 = vmatprep.subr.mxu0 0.0
    %7698 = vmatpush1.msra.mxu0 %v3206
    %7699 = vmatprep.subr.mxu0 0.0
    %7700 = vmatpush1.msra.mxu0 0.0
    %7701 = vmatprep.subr.mxu0 0.0
    %7702 = vmatpush1.msra.mxu0 0.0
    %7703 = vmatprep.subr.mxu0 0.0
    %7704 = vmatpush1.msra.mxu0 0.0
    %7705 = vmatprep.subr.mxu0 0.0
    %7706 = vmatpush1.msra.mxu0 0.0
    %7707 = vmatprep.subr.mxu0 0.0
    %7708 = vmatpush1.msra.mxu0 0.0
    %7709 = vmatprep.subr.mxu0 0.0
    %7710 = vmatpush1.msra.mxu0 0.0
    %7711 = vmatprep.subr.mxu0 0.0
    %7712 = vmatpush1.msra.mxu0 0.0
    %7713 = vmatprep.subr.mxu0 0.0
    %7714 = vmatpush1.msra.mxu0 0.0
    %7715 = vmatprep.subr.mxu0 0.0
    %7716 = vmatpush1.msra.mxu0 0.0
    %7717 = vmatprep.subr.mxu0 0.0
    %7718 = vmatpush1.msra.mxu0 0.0
    %7719 = vmatprep.subr.mxu0 0.0
    %7720 = vmatpush1.msra.mxu0 0.0
    %7721 = vmatprep.subr.mxu0 0.0
    %7722 = vmatpush1.msra.mxu0 0.0
    %7723 = vmatprep.subr.mxu0 0.0
    %7724 = vmatpush1.msra.mxu0 0.0
    %7725 = vmatprep.subr.mxu0 0.0
    %7726 = vmatpush1.msra.mxu0 0.0
    %7727 = vmatprep.subr.mxu0 0.0
    %7728 = vmatpush1.msra.mxu0 0.0
    %7729 = vmatprep.subr.mxu0 0.0
    %7730 = vmatpush1.msra.mxu0 0.0
    %7731 = vmatprep.subr.mxu0 0.0
    %7732 = vmatpush1.msra.mxu0 0.0
    %7733 = vmatprep.subr.mxu0 0.0
    %7734 = vmatpush1.msra.mxu0 0.0
    %7735 = vmatprep.subr.mxu0 0.0
    %7736 = vmatpush1.msra.mxu0 0.0
    %7737 = vmatprep.subr.mxu0 0.0
    %7738 = vmatpush1.msra.mxu0 0.0
    %7739 = vmatprep.subr.mxu0 0.0
    %7740 = vmatpush1.msra.mxu0 0.0
    %7741 = vmatprep.subr.mxu0 0.0
    %7742 = vmatpush1.msra.mxu0 0.0
    %7743 = vmatprep.subr.mxu0 0.0
    %7744 = vmatpush1.msra.mxu0 0.0
    %7745 = vmatprep.subr.mxu0 0.0
    %7746 = vmatpush1.msra.mxu0 0.0
    %7747 = vmatprep.subr.mxu0 0.0
    %7748 = vmatpush1.msra.mxu0 0.0
    %7749 = vmatprep.mubr.f32.mxu0 0.0
    %7750 = vmatmul.mubr.f32.gmra.mrb[0].mxu0 %v7461
    %v7751 = vpop.f32.mrb[0].mxu0
    %v7752 = vadd.f32 0.0, %v7751
    %v7753 = vpop.f32.mrb[0].mxu0
    %7754 = vdwg.mxu0
    %v7756 = vrot.slane %v7752, 2
    %v7758 = vadd.f32 %v2871, %v7756
    %v7759 = vxor.u32 %v7610, 2147483648
    %v7760 = vmul.f32 %v7759, 1.442695
    %v7761 = vpow.pop %v7760
    %v7762 = vadd.f32 %v7761, 1.0
    %v7763 = vrcp.pop %v7762
    %v7764 = vmul.f32 1.0, %v7763
    %v7766 = vrot.slane %v7136, 6
    %v7768 = vmul.f32 %v7764, %v7766
    %v7769 = vxor.u32 %v7536, 2147483648
    %v7770 = vmul.f32 %v7769, 1.442695
    %v7771 = vpow.pop %v7770
    %v7772 = vadd.f32 %v7771, 1.0
    %v7773 = vrcp.pop %v7772
    %v7774 = vmul.f32 1.0, %v7773
    %v7775 = vtanh.pop %v7684
    %v7776 = vmul.f32 %v7774, %v7775
    %v7777 = vadd.f32 %v7768, %v7776
    %v7778 = vxor.u32 %v7758, 2147483648
    %v7779 = vmul.f32 %v7778, 1.442695
    %v7780 = vpow.pop %v7779
    %v7781 = vadd.f32 %v7780, 1.0
    %v7782 = vrcp.pop %v7781
    %v7783 = vmul.f32 1.0, %v7782
    %v7784 = vtanh.pop %v7777
    %v7785 = vmul.f32 %v7783, %v7784
    %v7787 = vrot.slane %v7458, 2
    %7788 = vrot.lane.b32.xlu0 %v7787, 50
    %v7789 = vpop.permute.xlu0 %7788
    %v7791 = vsel %vm2979, %v7785, %v7789
    %v7793 = vrot.slane %v7791, 6
    %v7794 = vsel %vm3308, %v7793, 0
    %7796 = vmatprep.subr.mxu0 0.0
    %7797 = vmatpush1.msra.mxu0 %v2905
    %7798 = vmatprep.subr.mxu0 0.0
    %7799 = vmatpush1.msra.mxu0 %v2906
    %7800 = vmatprep.subr.mxu0 0.0
    %7801 = vmatpush1.msra.mxu0 %v2907
    %7802 = vmatprep.subr.mxu0 0.0
    %7803 = vmatpush1.msra.mxu0 %v2908
    %7804 = vmatprep.subr.mxu0 0.0
    %7805 = vmatpush1.msra.mxu0 %v2909
    %7806 = vmatprep.subr.mxu0 0.0
    %7807 = vmatpush1.msra.mxu0 %v2910
    %7808 = vmatprep.subr.mxu0 0.0
    %7809 = vmatpush1.msra.mxu0 %v2911
    %7810 = vmatprep.subr.mxu0 0.0
    %7811 = vmatpush1.msra.mxu0 %v2912
    %7812 = vmatprep.subr.mxu0 0.0
    %7813 = vmatpush1.msra.mxu0 %v2913
    %7814 = vmatprep.subr.mxu0 0.0
    %7815 = vmatpush1.msra.mxu0 %v2914
    %7816 = vmatprep.subr.mxu0 0.0
    %7817 = vmatpush1.msra.mxu0 %v2915
    %7818 = vmatprep.subr.mxu0 0.0
    %7819 = vmatpush1.msra.mxu0 %v2916
    %7820 = vmatprep.subr.mxu0 0.0
    %7821 = vmatpush1.msra.mxu0 %v3314
    %7822 = vmatprep.subr.mxu0 0.0
    %7823 = vmatpush1.msra.mxu0 0.0
    %7824 = vmatprep.subr.mxu0 0.0
    %7825 = vmatpush1.msra.mxu0 0.0
    %7826 = vmatprep.subr.mxu0 0.0
    %7827 = vmatpush1.msra.mxu0 0.0
    %7828 = vmatprep.subr.mxu0 0.0
    %7829 = vmatpush1.msra.mxu0 0.0
    %7830 = vmatprep.subr.mxu0 0.0
    %7831 = vmatpush1.msra.mxu0 0.0
    %7832 = vmatprep.subr.mxu0 0.0
    %7833 = vmatpush1.msra.mxu0 0.0
    %7834 = vmatprep.subr.mxu0 0.0
    %7835 = vmatpush1.msra.mxu0 0.0
    %7836 = vmatprep.subr.mxu0 0.0
    %7837 = vmatpush1.msra.mxu0 0.0
    %7838 = vmatprep.subr.mxu0 0.0
    %7839 = vmatpush1.msra.mxu0 0.0
    %7840 = vmatprep.subr.mxu0 0.0
    %7841 = vmatpush1.msra.mxu0 0.0
    %7842 = vmatprep.subr.mxu0 0.0
    %7843 = vmatpush1.msra.mxu0 0.0
    %7844 = vmatprep.subr.mxu0 0.0
    %7845 = vmatpush1.msra.mxu0 0.0
    %7846 = vmatprep.subr.mxu0 0.0
    %7847 = vmatpush1.msra.mxu0 0.0
    %7848 = vmatprep.subr.mxu0 0.0
    %7849 = vmatpush1.msra.mxu0 0.0
    %7850 = vmatprep.subr.mxu0 0.0
    %7851 = vmatpush1.msra.mxu0 0.0
    %7852 = vmatprep.subr.mxu0 0.0
    %7853 = vmatpush1.msra.mxu0 0.0
    %7854 = vmatprep.subr.mxu0 0.0
    %7855 = vmatpush1.msra.mxu0 0.0
    %7856 = vmatprep.subr.mxu0 0.0
    %7857 = vmatpush1.msra.mxu0 0.0
    %7858 = vmatprep.subr.mxu0 0.0
    %7859 = vmatpush1.msra.mxu0 0.0
    %7860 = vmatprep.mubr.f32.mxu0 0.0
    %7861 = vmatmul.mubr.f32.gmra.mrb[0].mxu0 %v7794
    %v7862 = vpop.f32.mrb[0].mxu0
    %v7863 = vadd.f32 %v2960, %v7862
    %v7864 = vpop.f32.mrb[0].mxu0
    %7865 = vdwg.mxu0
    %7866 = vmatprep.subr.mxu0 0.0
    %7867 = vmatpush1.msra.mxu0 %v2919
    %7868 = vmatprep.subr.mxu0 0.0
    %7869 = vmatpush1.msra.mxu0 %v2920
    %7870 = vmatprep.subr.mxu0 0.0
    %7871 = vmatpush1.msra.mxu0 %v2921
    %7872 = vmatprep.subr.mxu0 0.0
    %7873 = vmatpush1.msra.mxu0 %v2922
    %7874 = vmatprep.subr.mxu0 0.0
    %7875 = vmatpush1.msra.mxu0 %v2923
    %7876 = vmatprep.subr.mxu0 0.0
    %7877 = vmatpush1.msra.mxu0 %v2924
    %7878 = vmatprep.subr.mxu0 0.0
    %7879 = vmatpush1.msra.mxu0 %v2925
    %7880 = vmatprep.subr.mxu0 0.0
    %7881 = vmatpush1.msra.mxu0 %v2926
    %7882 = vmatprep.subr.mxu0 0.0
    %7883 = vmatpush1.msra.mxu0 %v2927
    %7884 = vmatprep.subr.mxu0 0.0
    %7885 = vmatpush1.msra.mxu0 %v2928
    %7886 = vmatprep.subr.mxu0 0.0
    %7887 = vmatpush1.msra.mxu0 %v2929
    %7888 = vmatprep.subr.mxu0 0.0
    %7889 = vmatpush1.msra.mxu0 %v2930
    %7890 = vmatprep.subr.mxu0 0.0
    %7891 = vmatpush1.msra.mxu0 %v3387
    %7892 = vmatprep.subr.mxu0 0.0
    %7893 = vmatpush1.msra.mxu0 0.0
    %7894 = vmatprep.subr.mxu0 0.0
    %7895 = vmatpush1.msra.mxu0 0.0
    %7896 = vmatprep.subr.mxu0 0.0
    %7897 = vmatpush1.msra.mxu0 0.0
    %7898 = vmatprep.subr.mxu0 0.0
    %7899 = vmatpush1.msra.mxu0 0.0
    %7900 = vmatprep.subr.mxu0 0.0
    %7901 = vmatpush1.msra.mxu0 0.0
    %7902 = vmatprep.subr.mxu0 0.0
    %7903 = vmatpush1.msra.mxu0 0.0
    %7904 = vmatprep.subr.mxu0 0.0
    %7905 = vmatpush1.msra.mxu0 0.0
    %7906 = vmatprep.subr.mxu0 0.0
    %7907 = vmatpush1.msra.mxu0 0.0
    %7908 = vmatprep.subr.mxu0 0.0
    %7909 = vmatpush1.msra.mxu0 0.0
    %7910 = vmatprep.subr.mxu0 0.0
    %7911 = vmatpush1.msra.mxu0 0.0
    %7912 = vmatprep.subr.mxu0 0.0
    %7913 = vmatpush1.msra.mxu0 0.0
    %7914 = vmatprep.subr.mxu0 0.0
    %7915 = vmatpush1.msra.mxu0 0.0
    %7916 = vmatprep.subr.mxu0 0.0
    %7917 = vmatpush1.msra.mxu0 0.0
    %7918 = vmatprep.subr.mxu0 0.0
    %7919 = vmatpush1.msra.mxu0 0.0
    %7920 = vmatprep.subr.mxu0 0.0
    %7921 = vmatpush1.msra.mxu0 0.0
    %7922 = vmatprep.subr.mxu0 0.0
    %7923 = vmatpush1.msra.mxu0 0.0
    %7924 = vmatprep.subr.mxu0 0.0
    %7925 = vmatpush1.msra.mxu0 0.0
    %7926 = vmatprep.subr.mxu0 0.0
    %7927 = vmatpush1.msra.mxu0 0.0
    %7928 = vmatprep.subr.mxu0 0.0
    %7929 = vmatpush1.msra.mxu0 0.0
    %7930 = vmatprep.mubr.f32.mxu0 0.0
    %7931 = vmatmul.mubr.f32.gmra.mrb[0].mxu0 %v7794
    %v7932 = vpop.f32.mrb[0].mxu0
    %v7933 = vadd.f32 %v2962, %v7932
    %v7934 = vpop.f32.mrb[0].mxu0
    %7935 = vdwg.mxu0
    %7936 = vmatprep.subr.mxu0 0.0
    %7937 = vmatpush1.msra.mxu0 %v2933
    %7938 = vmatprep.subr.mxu0 0.0
    %7939 = vmatpush1.msra.mxu0 %v2934
    %7940 = vmatprep.subr.mxu0 0.0
    %7941 = vmatpush1.msra.mxu0 %v2935
    %7942 = vmatprep.subr.mxu0 0.0
    %7943 = vmatpush1.msra.mxu0 %v2936
    %7944 = vmatprep.subr.mxu0 0.0
    %7945 = vmatpush1.msra.mxu0 %v2937
    %7946 = vmatprep.subr.mxu0 0.0
    %7947 = vmatpush1.msra.mxu0 %v2938
    %7948 = vmatprep.subr.mxu0 0.0
    %7949 = vmatpush1.msra.mxu0 %v2939
    %7950 = vmatprep.subr.mxu0 0.0
    %7951 = vmatpush1.msra.mxu0 %v2940
    %7952 = vmatprep.subr.mxu0 0.0
    %7953 = vmatpush1.msra.mxu0 %v2941
    %7954 = vmatprep.subr.mxu0 0.0
    %7955 = vmatpush1.msra.mxu0 %v2942
    %7956 = vmatprep.subr.mxu0 0.0
    %7957 = vmatpush1.msra.mxu0 %v2943
    %7958 = vmatprep.subr.mxu0 0.0
    %7959 = vmatpush1.msra.mxu0 %v2944
    %7960 = vmatprep.subr.mxu0 0.0
    %7961 = vmatpush1.msra.mxu0 %v3460
    %7962 = vmatprep.subr.mxu0 0.0
    %7963 = vmatpush1.msra.mxu0 0.0
    %7964 = vmatprep.subr.mxu0 0.0
    %7965 = vmatpush1.msra.mxu0 0.0
    %7966 = vmatprep.subr.mxu0 0.0
    %7967 = vmatpush1.msra.mxu0 0.0
    %7968 = vmatprep.subr.mxu0 0.0
    %7969 = vmatpush1.msra.mxu0 0.0
    %7970 = vmatprep.subr.mxu0 0.0
    %7971 = vmatpush1.msra.mxu0 0.0
    %7972 = vmatprep.subr.mxu0 0.0
    %7973 = vmatpush1.msra.mxu0 0.0
    %7974 = vmatprep.subr.mxu0 0.0
    %7975 = vmatpush1.msra.mxu0 0.0
    %7976 = vmatprep.subr.mxu0 0.0
    %7977 = vmatpush1.msra.mxu0 0.0
    %7978 = vmatprep.subr.mxu0 0.0
    %7979 = vmatpush1.msra.mxu0 0.0
    %7980 = vmatprep.subr.mxu0 0.0
    %7981 = vmatpush1.msra.mxu0 0.0
    %7982 = vmatprep.subr.mxu0 0.0
    %7983 = vmatpush1.msra.mxu0 0.0
    %7984 = vmatprep.subr.mxu0 0.0
    %7985 = vmatpush1.msra.mxu0 0.0
    %7986 = vmatprep.subr.mxu0 0.0
    %7987 = vmatpush1.msra.mxu0 0.0
    %7988 = vmatprep.subr.mxu0 0.0
    %7989 = vmatpush1.msra.mxu0 0.0
    %7990 = vmatprep.subr.mxu0 0.0
    %7991 = vmatpush1.msra.mxu0 0.0
    %7992 = vmatprep.subr.mxu0 0.0
    %7993 = vmatpush1.msra.mxu0 0.0
    %7994 = vmatprep.subr.mxu0 0.0
    %7995 = vmatpush1.msra.mxu0 0.0
    %7996 = vmatprep.subr.mxu0 0.0
    %7997 = vmatpush1.msra.mxu0 0.0
    %7998 = vmatprep.subr.mxu0 0.0
    %7999 = vmatpush1.msra.mxu0 0.0
    %8000 = vmatprep.mubr.f32.mxu0 0.0
    %8001 = vmatmul.mubr.f32.gmra.mrb[0].mxu0 %v7794
    %v8002 = vpop.f32.mrb[0].mxu0
    %v8003 = vadd.f32 %v2964, %v8002
    %v8004 = vpop.f32.mrb[0].mxu0
    %8005 = vdwg.mxu0
    %8006 = vmatprep.subr.mxu0 0.0
    %8007 = vmatpush1.msra.mxu0 %v2947
    %8008 = vmatprep.subr.mxu0 0.0
    %8009 = vmatpush1.msra.mxu0 %v2948
    %8010 = vmatprep.subr.mxu0 0.0
    %8011 = vmatpush1.msra.mxu0 %v2949
    %8012 = vmatprep.subr.mxu0 0.0
    %8013 = vmatpush1.msra.mxu0 %v2950
    %8014 = vmatprep.subr.mxu0 0.0
    %8015 = vmatpush1.msra.mxu0 %v2951
    %8016 = vmatprep.subr.mxu0 0.0
    %8017 = vmatpush1.msra.mxu0 %v2952
    %8018 = vmatprep.subr.mxu0 0.0
    %8019 = vmatpush1.msra.mxu0 %v2953
    %8020 = vmatprep.subr.mxu0 0.0
    %8021 = vmatpush1.msra.mxu0 %v2954
    %8022 = vmatprep.subr.mxu0 0.0
    %8023 = vmatpush1.msra.mxu0 %v2955
    %8024 = vmatprep.subr.mxu0 0.0
    %8025 = vmatpush1.msra.mxu0 %v2956
    %8026 = vmatprep.subr.mxu0 0.0
    %8027 = vmatpush1.msra.mxu0 %v2957
    %8028 = vmatprep.subr.mxu0 0.0
    %8029 = vmatpush1.msra.mxu0 %v2958
    %8030 = vmatprep.subr.mxu0 0.0
    %8031 = vmatpush1.msra.mxu0 %v3533
    %8032 = vmatprep.subr.mxu0 0.0
    %8033 = vmatpush1.msra.mxu0 0.0
    %8034 = vmatprep.subr.mxu0 0.0
    %8035 = vmatpush1.msra.mxu0 0.0
    %8036 = vmatprep.subr.mxu0 0.0
    %8037 = vmatpush1.msra.mxu0 0.0
    %8038 = vmatprep.subr.mxu0 0.0
    %8039 = vmatpush1.msra.mxu0 0.0
    %8040 = vmatprep.subr.mxu0 0.0
    %8041 = vmatpush1.msra.mxu0 0.0
    %8042 = vmatprep.subr.mxu0 0.0
    %8043 = vmatpush1.msra.mxu0 0.0
    %8044 = vmatprep.subr.mxu0 0.0
    %8045 = vmatpush1.msra.mxu0 0.0
    %8046 = vmatprep.subr.mxu0 0.0
    %8047 = vmatpush1.msra.mxu0 0.0
    %8048 = vmatprep.subr.mxu0 0.0
    %8049 = vmatpush1.msra.mxu0 0.0
    %8050 = vmatprep.subr.mxu0 0.0
    %8051 = vmatpush1.msra.mxu0 0.0
    %8052 = vmatprep.subr.mxu0 0.0
    %8053 = vmatpush1.msra.mxu0 0.0
    %8054 = vmatprep.subr.mxu0 0.0
    %8055 = vmatpush1.msra.mxu0 0.0
    %8056 = vmatprep.subr.mxu0 0.0
    %8057 = vmatpush1.msra.mxu0 0.0
    %8058 = vmatprep.subr.mxu0 0.0
    %8059 = vmatpush1.msra.mxu0 0.0
    %8060 = vmatprep.subr.mxu0 0.0
    %8061 = vmatpush1.msra.mxu0 0.0
    %8062 = vmatprep.subr.mxu0 0.0
    %8063 = vmatpush1.msra.mxu0 0.0
    %8064 = vmatprep.subr.mxu0 0.0
    %8065 = vmatpush1.msra.mxu0 0.0
    %8066 = vmatprep.subr.mxu0 0.0
    %8067 = vmatpush1.msra.mxu0 0.0
    %8068 = vmatprep.subr.mxu0 0.0
    %8069 = vmatpush1.msra.mxu0 0.0
    %8070 = vmatprep.mubr.f32.mxu0 0.0
    %8071 = vmatmul.mubr.f32.gmra.mrb[0].mxu0 %v7794
    %v8072 = vpop.f32.mrb[0].mxu0
    %v8073 = vadd.f32 %v2966, %v8072
    %v8074 = vpop.f32.mrb[0].mxu0
    %8075 = vdwg.mxu0
    %v8076 = vxor.u32 %v7933, 2147483648
    %v8077 = vmul.f32 %v8076, 1.442695
    %v8078 = vpow.pop %v8077
    %v8079 = vadd.f32 %v8078, 1.0
    %v8080 = vrcp.pop %v8079
    %v8081 = vmul.f32 1.0, %v8080
    %v8082 = vmul.f32 %v8081, %v7450
    %v8083 = vxor.u32 %v7863, 2147483648
    %v8084 = vmul.f32 %v8083, 1.442695
    %v8085 = vpow.pop %v8084
    %v8086 = vadd.f32 %v8085, 1.0
    %v8087 = vrcp.pop %v8086
    %v8088 = vmul.f32 1.0, %v8087
    %v8089 = vtanh.pop %v8003
    %v8090 = vmul.f32 %v8088, %v8089
    %v8091 = vadd.f32 %v8082, %v8090
    %v8092 = vxor.u32 %v8073, 2147483648
    %v8093 = vmul.f32 %v8092, 1.442695
    %v8094 = vpow.pop %v8093
    %v8095 = vadd.f32 %v8094, 1.0
    %v8096 = vrcp.pop %v8095
    %v8097 = vmul.f32 1.0, %v8096
    %v8098 = vtanh.pop %v8091
    %v8099 = vmul.f32 %v8097, %v8098
    %v8101 = vlaneseq
    %v8102 = vshrl.u32 %v8101, 7
    %v8103 = vsub.s32 0, %v8102
    %v8104 = vrot.slane %v2974, %v8103
    %v8107 = vsel %vm2979, %v8099, 0
    %v8110 = vsel %vm2525, %v2973, 0
    %8112 = vmatprep.subr.mxu0 0.0
    %8113 = vmatpush1.msra.mxu0 %v2967
    %8114 = vmatprep.subr.mxu0 0.0
    %8115 = vmatpush1.msra.mxu0 %v2968
    %8116 = vmatprep.subr.mxu0 0.0
    %8117 = vmatpush1.msra.mxu0 %v2969
    %8118 = vmatprep.subr.mxu0 0.0
    %8119 = vmatpush1.msra.mxu0 %v2970
    %8120 = vmatprep.subr.mxu0 0.0
    %8121 = vmatpush1.msra.mxu0 %v2971
    %8122 = vmatprep.subr.mxu0 0.0
    %8123 = vmatpush1.msra.mxu0 %v2972
    %8124 = vmatprep.subr.mxu0 0.0
    %8125 = vmatpush1.msra.mxu0 %v8110
    %8126 = vmatprep.subr.mxu0 0.0
    %8127 = vmatpush1.msra.mxu0 0.0
    %8128 = vmatprep.subr.mxu0 0.0
    %8129 = vmatpush1.msra.mxu0 0.0
    %8130 = vmatprep.subr.mxu0 0.0
    %8131 = vmatpush1.msra.mxu0 0.0
    %8132 = vmatprep.subr.mxu0 0.0
    %8133 = vmatpush1.msra.mxu0 0.0
    %8134 = vmatprep.subr.mxu0 0.0
    %8135 = vmatpush1.msra.mxu0 0.0
    %8136 = vmatprep.subr.mxu0 0.0
    %8137 = vmatpush1.msra.mxu0 0.0
    %8138 = vmatprep.subr.mxu0 0.0
    %8139 = vmatpush1.msra.mxu0 0.0
    %8140 = vmatprep.subr.mxu0 0.0
    %8141 = vmatpush1.msra.mxu0 0.0
    %8142 = vmatprep.subr.mxu0 0.0
    %8143 = vmatpush1.msra.mxu0 0.0
    %8144 = vmatprep.subr.mxu0 0.0
    %8145 = vmatpush1.msra.mxu0 0.0
    %8146 = vmatprep.subr.mxu0 0.0
    %8147 = vmatpush1.msra.mxu0 0.0
    %8148 = vmatprep.subr.mxu0 0.0
    %8149 = vmatpush1.msra.mxu0 0.0
    %8150 = vmatprep.subr.mxu0 0.0
    %8151 = vmatpush1.msra.mxu0 0.0
    %8152 = vmatprep.subr.mxu0 0.0
    %8153 = vmatpush1.msra.mxu0 0.0
    %8154 = vmatprep.subr.mxu0 0.0
    %8155 = vmatpush1.msra.mxu0 0.0
    %8156 = vmatprep.subr.mxu0 0.0
    %8157 = vmatpush1.msra.mxu0 0.0
    %8158 = vmatprep.subr.mxu0 0.0
    %8159 = vmatpush1.msra.mxu0 0.0
    %8160 = vmatprep.subr.mxu0 0.0
    %8161 = vmatpush1.msra.mxu0 0.0
    %8162 = vmatprep.subr.mxu0 0.0
    %8163 = vmatpush1.msra.mxu0 0.0
    %8164 = vmatprep.subr.mxu0 0.0
    %8165 = vmatpush1.msra.mxu0 0.0
    %8166 = vmatprep.subr.mxu0 0.0
    %8167 = vmatpush1.msra.mxu0 0.0
    %8168 = vmatprep.subr.mxu0 0.0
    %8169 = vmatpush1.msra.mxu0 0.0
    %8170 = vmatprep.subr.mxu0 0.0
    %8171 = vmatpush1.msra.mxu0 0.0
    %8172 = vmatprep.subr.mxu0 0.0
    %8173 = vmatpush1.msra.mxu0 0.0
    %8174 = vmatprep.subr.mxu0 0.0
    %8175 = vmatpush1.msra.mxu0 0.0
    %8176 = vmatprep.mubr.f32.mxu0 0.0
    %8177 = vmatmul.mubr.f32.gmra.mrb[0].mxu0 %v8107
    %v8178 = vpop.f32.mrb[0].mxu0
    %v8179 = vadd.f32 %v8104, %v8178
    %v8180 = vpop.f32.mrb[0].mxu0
    %8181 = vdwg.mxu0
    %vm8182 = vcmask 164864
    %v8183 = vsel %vm8182, %v8179, -inf
    %8184 = vmax.xlane.f32.xlu0 %v8183
    %v8185 = vpop.xlane.xlu0 %8184
    %v8186 = vsub.f32 %v8179, %v8185
    %v8187 = vmul.f32 %v8186, 1.442695
    %v8188 = vpow.pop %v8187
    %v8189 = vsel %vm8182, %v8188, 0.0
    %8190 = vadd.xlane.f32.xlu0 %v8189
    %v8191 = vpop.xlane.xlu0 %8190
    %v8192 = vlog2.pop %v8191
    %v8193 = vmul.f32 %v8192, 0.6931472
    %v8194 = vadd.f32 %v8193, %v8185
    %v8195 = vsub.f32 %v8179, %v8194
    %8196 = vst.msk [vmem:[#allocation2] sm:$0x3] %vm8182, %v8195
    // Predicated region
    $region74: #{biocnn_lstm_forward.1} parent=1 // pred_check
      _
    $region75: #{biocnn_lstm_forward.1} parent=1 // pred_check_branch
      %8198 = sbr.rel (0) target = $region77
    $region76: #{biocnn_lstm_forward.1} parent=1 // pred_region
      %s8200 = ssub.s32 32, 32
      %8201 = vsyncadd [#allocation3], %s8200
      %s8203 = sshll.u32 [#allocation2], 4
      %s8204 = int_to_ptr.vmem [resolvable:$true] %s8203
      %8206 = dma.vmem_to_hbm [thread:$0]  %s8204, 32, %s18, [#allocation3]
    $region77: #{biocnn_lstm_forward.1} parent=1 // pred_fallthru
      _
    // Predicated region
    $region78: #{biocnn_lstm_forward.1} parent=1 // pred_check
      _
    $region79: #{biocnn_lstm_forward.1} parent=1 // pred_check_branch
      %8208 = sbr.rel (0) target = $region81
    $region80: #{biocnn_lstm_forward.1} parent=1 // pred_region
      %8209 = dma.done [#allocation3], 32
    $region81: #{biocnn_lstm_forward.1} parent=1 // pred_fallthru
      _
    %8210 = vsyncpa [#allocation3], 1

</llo_original>
